<compile_context>
chip_gen: v7x
topology: tpu7x:2x2x1
jax: 0.10.0
libtpu: 0.0.40
codegen_flags: <defaults>
</compile_context>

<pallas_src>
import jax
import jax.numpy as jnp
from jax.experimental import pallas as pl
from jax.experimental.pallas import tpu as pltpu

VOCAB_SIZE = 512      # TODO(synk): original uses len(chars); lane-friendly fixed stand-in.
BLOCK_SIZE = 48       # block_size in the original script
N_EMBD = 32           # TODO(synk): n_embd/n_head/n_layer/dropout are undefined globals upstream.
N_HEAD = 4
HEAD_SIZE = N_EMBD // N_HEAD
N_LAYER = 2
EPS = 1e-5            # nn.LayerNorm default
NEG_BIG = -1e30       # finite causal-mask bias (NaN-safe; no row is ever fully masked)
ROWS_PER_LAYER = 7    # packed vector rows per layer: ln1w ln1b bp ln2w ln2b b1 b2


# --------------------------- fused forward kernel ---------------------------

def fused_forward_kernel(idx_ref, pos_ref, mask_ref, tok_ref, vecs_ref,
                         wqkv_ref, wp_ref, w1_ref, w2_ref, lmwb_ref, o_ref):
    C, H, hs = N_EMBD, N_HEAD, HEAD_SIZE
    ids = idx_ref[0]                       # (R, 1) int32 token ids for this grid step
    R = ids.shape[0]
    T = mask_ref.shape[0]
    nb = R // T                            # sequences folded into this grid step
    V = tok_ref.shape[0]

    def vrow(r, n):                        # one packed parameter row -> (1, n)
        return vecs_ref[r:r + 1, :n]

    def layernorm(x, w, b):
        mu = jnp.mean(x, axis=-1, keepdims=True)
        var = jnp.mean((x - mu) ** 2, axis=-1, keepdims=True)
        return (x - mu) * jax.lax.rsqrt(var + EPS) * w + b

    # --- token-embedding gather as one-hot @ table (MXU) + positional embedding ---
    # TODO(synk): a bf16 one-hot + bf16 token table would halve this intermediate
    # (perf-review option); kept f32 so the kernel matches the reference bit-tightly.
    vocab_iota = jax.lax.broadcasted_iota(jnp.int32, (R, V), 1)
    onehot = (vocab_iota == ids).astype(jnp.float32)                       # (R, V)
    x = jnp.dot(onehot, tok_ref[...], preferred_element_type=jnp.float32)  # (R, C)
    x = x + pos_ref[...]

    mask_bias = mask_ref[...]              # (T, T) additive causal bias (constant input)

    for li in range(N_LAYER):
        base = ROWS_PER_LAYER * li
        ln1w, ln1b = vrow(base + 0, C), vrow(base + 1, C)
        bp = vrow(base + 2, C)
        ln2w, ln2b = vrow(base + 3, C), vrow(base + 4, C)
        b1 = vrow(base + 5, 4 * C)
        b2 = vrow(base + 6, C)
        wqkv = wqkv_ref[li]                # (C, 3C); attention scale pre-folded into q cols
        wp = wp_ref[li]                    # (C, C)

        # ---- multi-head causal self-attention on ln1(x) ----
        h = layernorm(x, ln1w, ln1b)
        qkv = jnp.dot(h, wqkv, preferred_element_type=jnp.float32)   # (R, 3C), lane-dense

        sa_parts = []
        for s in range(nb):                # sequences in this block (static unroll)
            r0 = s * T
            sa_s = None
            for hd in range(H):            # heads (static unroll)
                c0 = hd * hs
                qh = qkv[r0:r0 + T, c0:c0 + hs]                       # (T, hs), pre-scaled
                kh = qkv[r0:r0 + T, C + c0:C + c0 + hs]
                vh = qkv[r0:r0 + T, 2 * C + c0:2 * C + c0 + hs]
                wei = jnp.einsum('td,sd->ts', qh, kh,
                                 preferred_element_type=jnp.float32)  # (T, T)
                wei = wei + mask_bias
                wei = wei - wei.max(axis=-1, keepdims=True)
                p = jnp.exp(wei)
                inv = pl.reciprocal(p.sum(axis=-1, keepdims=True), approx=True)
                # deferred softmax normalization: scale the (T, hs) result, not (T, T)
                att = jnp.dot(p, vh, preferred_element_type=jnp.float32) * inv
                part = jnp.dot(att, wp[c0:c0 + hs, :],
                               preferred_element_type=jnp.float32)    # (T, C)
                sa_s = part if sa_s is None else sa_s + part
            sa_parts.append(sa_s)
        sa = sa_parts[0] if nb == 1 else jnp.concatenate(sa_parts, axis=0)
        x = x + sa + bp                                               # residual 1

        # ---- feed-forward on ln2(x) ----
        h2 = layernorm(x, ln2w, ln2b)
        ff = jnp.dot(h2, w1_ref[li], preferred_element_type=jnp.float32) + b1
        ff = jnp.maximum(ff, 0.0)
        x = x + jnp.dot(ff, w2_ref[li], preferred_element_type=jnp.float32) + b2

    # ---- ln_f + lm_head (V = 512 -> lane-dense unmasked stores) ----
    fbase = ROWS_PER_LAYER * N_LAYER
    hf = layernorm(x, vrow(fbase + 0, C), vrow(fbase + 1, C))
    o_ref[0] = (jnp.dot(hf, lmwb_ref[:C, :], preferred_element_type=jnp.float32)
                + lmwb_ref[C:C + 1, :])


# ------------------------------- wrapper ----------------------------------

def _seqs_per_block(batch):
    """Fold the whole batch into one grid step on single-TensorCore chips (v5e/v6e);
    keep grid=(B,) + 'parallel' so a two-TC chip (v7x) takes one batch element per core."""
    try:
        kind = jax.devices()[0].device_kind.lower()
    except Exception:
        return 1
    single_tc = any(t in kind for t in ("v5e", "v5 lite", "v5litepod", "v6e", "v6 lite"))
    return batch if single_tc else 1


@jax.jit
def bigram_lm_forward(idx, packed):
    """Forward pass (targets=None path): returns logits (B, T, VOCAB_SIZE)."""
    B, T = idx.shape
    C = N_EMBD
    V = packed['tok'].shape[0]

    nb = _seqs_per_block(B)
    if B % nb:
        nb = 1
    n_blocks = B // nb
    R = nb * T

    idx3 = idx.astype(jnp.int32).reshape(n_blocks, R, 1)
    pos = jnp.tile(packed['pos'][:T], (nb, 1))                        # (R, C)
    row = jax.lax.broadcasted_iota(jnp.int32, (T, T), 0)
    col = jax.lax.broadcasted_iota(jnp.int32, (T, T), 1)
    mask = jnp.where(col <= row, 0.0, NEG_BIG).astype(jnp.float32)    # (T, T)

    flat_args = [idx3, pos, mask, packed['tok'], packed['vecs'], packed['wqkv'],
                 packed['wp'], packed['w1'], packed['w2'], packed['lm_wb']]

    in_specs = ([pl.BlockSpec((1, R, 1), lambda b: (b, 0, 0))] +
                [pl.BlockSpec(a.shape, lambda b, nd=a.ndim: (0,) * nd)
                 for a in flat_args[1:]])
    out_specs = pl.BlockSpec((1, R, V), lambda b: (b, 0, 0))

    # Advisory cost estimate so XLA schedules the tiny custom call sensibly.
    per_layer = (2 * B * T * C * 3 * C                       # fused QKV
                 + 2 * B * N_HEAD * T * T * HEAD_SIZE * 2    # qk^T and p@v
                 + 2 * B * T * C * C                         # out projection
                 + 2 * B * T * C * 4 * C * 2)                # FFN
    flops = N_LAYER * per_layer + 2 * B * T * V * C * 2      # + embedding + lm_head
    transcendentals = B * N_LAYER * N_HEAD * T * T           # exp in softmax
    bytes_accessed = (sum(a.size * a.dtype.itemsize for a in flat_args)
                      + B * T * V * 4)

    out = pl.pallas_call(
        fused_forward_kernel,
        out_shape=jax.ShapeDtypeStruct((n_blocks, R, V), jnp.float32),
        grid=(n_blocks,),
        in_specs=in_specs,
        out_specs=out_specs,
        compiler_params=pltpu.CompilerParams(dimension_semantics=("parallel",)),
        cost_estimate=pl.CostEstimate(flops=flops,
                                      transcendentals=transcendentals,
                                      bytes_accessed=bytes_accessed),
    )(*flat_args)
    return out.reshape(B, T, V)


# ----------------------------- parameter init ------------------------------

def init_params(key):
    keys = iter(jax.random.split(key, 9 * N_LAYER + 8))

    def nrm(shape, scale=0.02):
        return jax.random.normal(next(keys), shape, jnp.float32) * scale

    params = {
        'tok': nrm((VOCAB_SIZE, N_EMBD), 1.0),
        'pos': nrm((BLOCK_SIZE, N_EMBD), 1.0),
        'lnf_w': jnp.ones((1, N_EMBD), jnp.float32),
        'lnf_b': jnp.zeros((1, N_EMBD), jnp.float32),
        'lm_w': nrm((N_EMBD, VOCAB_SIZE)),
        'lm_b': nrm((1, VOCAB_SIZE)),
        'layers': [],
    }
    for _ in range(N_LAYER):
        params['layers'].append({
            'ln1w': jnp.ones((1, N_EMBD), jnp.float32),
            'ln1b': jnp.zeros((1, N_EMBD), jnp.float32),
            'wq': nrm((N_EMBD, N_EMBD)),
            'wk': nrm((N_EMBD, N_EMBD)),
            'wv': nrm((N_EMBD, N_EMBD)),
            'wp': nrm((N_EMBD, N_EMBD)),
            'bp': nrm((1, N_EMBD)),
            'ln2w': jnp.ones((1, N_EMBD), jnp.float32),
            'ln2b': jnp.zeros((1, N_EMBD), jnp.float32),
            'w1': nrm((N_EMBD, 4 * N_EMBD)),
            'b1': nrm((1, 4 * N_EMBD)),
            'w2': nrm((4 * N_EMBD, N_EMBD)),
            'b2': nrm((1, N_EMBD)),
        })
    return params


def pack_params(params):
    """One-time host-side repack into the kernel layout:
       * fused per-layer (C, 3C) QKV weight, attention scale folded into q columns,
       * all tiny vectors packed into one (7*L+2, 128) table,
       * per-layer matrices stacked along a leading layer axis,
       * lm_head weight and bias stacked into one (C+1, V) matrix."""
    C = N_EMBD
    scale = jnp.float32(C) ** -0.5   # matches `C ** (-0.5)` in Head.forward (NOT hs**-0.5)

    def row128(v):
        v = jnp.asarray(v, jnp.float32).reshape(-1)
        return jnp.pad(v, (0, 128 - v.shape[0]))

    rows, wqkv, wp, w1, w2 = [], [], [], [], []
    for lp in params['layers']:
        rows += [row128(lp['ln1w']), row128(lp['ln1b']), row128(lp['bp']),
                 row128(lp['ln2w']), row128(lp['ln2b']), row128(lp['b1']),
                 row128(lp['b2'])]
        wqkv.append(jnp.concatenate([lp['wq'] * scale, lp['wk'], lp['wv']], axis=1))
        wp.append(lp['wp'])
        w1.append(lp['w1'])
        w2.append(lp['w2'])
    rows += [row128(params['lnf_w']), row128(params['lnf_b'])]

    return {
        'tok': params['tok'],                                          # (V, C)
        'pos': params['pos'],                                          # (block, C)
        'vecs': jnp.stack(rows),                                       # (7*L+2, 128)
        'wqkv': jnp.stack(wqkv),                                       # (L, C, 3C)
        'wp': jnp.stack(wp),                                           # (L, C, C)
        'w1': jnp.stack(w1),                                           # (L, C, 4C)
        'w2': jnp.stack(w2),                                           # (L, 4C, C)
        'lm_wb': jnp.concatenate([params['lm_w'], params['lm_b']], 0), # (C+1, V)
    }


# ----------------------------- pure-JAX reference ---------------------------

def _ref_ln(x, w, b):
    mu = jnp.mean(x, axis=-1, keepdims=True)
    var = jnp.mean((x - mu) ** 2, axis=-1, keepdims=True)
    return (x - mu) / jnp.sqrt(var + EPS) * w + b


def ref_forward(idx, params):
    B, T = idx.shape
    x = jnp.take(params['tok'], idx, axis=0) + params['pos'][:T]
    mask = jnp.tril(jnp.ones((T, T), bool))
    for lp in params['layers']:
        h = _ref_ln(x, lp['ln1w'][0], lp['ln1b'][0])
        q = h @ lp['wq']; k = h @ lp['wk']; v = h @ lp['wv']
        outs = []
        for hd in range(N_HEAD):
            s = hd * HEAD_SIZE
            qh, kh, vh = q[..., s:s + HEAD_SIZE], k[..., s:s + HEAD_SIZE], v[..., s:s + HEAD_SIZE]
            wei = jnp.einsum('btd,bsd->bts', qh, kh) * (N_EMBD ** -0.5)
            wei = jnp.where(mask, wei, -jnp.inf)
            wei = jax.nn.softmax(wei, axis=-1)
            outs.append(jnp.einsum('bts,bsd->btd', wei, vh))
        sa = jnp.concatenate(outs, axis=-1) @ lp['wp'] + lp['bp'][0]
        x = x + sa
        h2 = _ref_ln(x, lp['ln2w'][0], lp['ln2b'][0])
        ff = jnp.maximum(h2 @ lp['w1'] + lp['b1'][0], 0.0) @ lp['w2'] + lp['b2'][0]
        x = x + ff
    x = _ref_ln(x, params['lnf_w'][0], params['lnf_b'][0])
    return x @ params['lm_w'] + params['lm_b'][0]


# ---------------------------------- main ------------------------------------

if __name__ == "__main__":
    key = jax.random.PRNGKey(0)
    k_idx, k_params = jax.random.split(key)

    B, T = 2, BLOCK_SIZE   # (2, 48) token ids
    idx = jax.random.randint(k_idx, (B, T), 0, VOCAB_SIZE, dtype=jnp.int32)
    params = init_params(k_params)
    packed = pack_params(params)

    logits = jax.block_until_ready(bigram_lm_forward(idx, packed))
    assert logits.shape == (B, T, VOCAB_SIZE)

    ref = ref_forward(idx, params)
    max_err = float(jnp.max(jnp.abs(logits - ref)))
    assert max_err < 5e-2, f"mismatch vs reference: {max_err}"

    print("KERNEL_OK")
</pallas_src>

<mosaic_0001>
module attributes {stable_mosaic.version = 11 : i64} {
  func.func @fused_forward_kernel(%arg0: i32, %arg1: memref<1x48x1xi32, #tpu.memory_space<vmem>>, %arg2: memref<48x32xf32, #tpu.memory_space<vmem>>, %arg3: memref<48x48xf32, #tpu.memory_space<vmem>>, %arg4: memref<512x32xf32, #tpu.memory_space<vmem>>, %arg5: memref<16x128xf32, #tpu.memory_space<vmem>>, %arg6: memref<2x32x96xf32, #tpu.memory_space<vmem>>, %arg7: memref<2x32x32xf32, #tpu.memory_space<vmem>>, %arg8: memref<2x32x128xf32, #tpu.memory_space<vmem>>, %arg9: memref<2x128x32xf32, #tpu.memory_space<vmem>>, %arg10: memref<33x512xf32, #tpu.memory_space<vmem>>, %arg11: memref<1x48x512xf32, #tpu.memory_space<vmem>>) attributes {dimension_semantics = [#tpu.dimension_semantics<parallel>], iteration_bounds = array<i64: 2>, scalar_prefetch = 0 : i64, scratch_operands = 0 : i64, tpu.core_type = #tpu.core_type<tc>, window_params = [{transform_indices = @transform_0, window_bounds = array<i64: 1, 48, 1>}, {pipeline_mode = #tpu.pipeline_mode<synchronous>, transform_indices = @transform_1, window_bounds = array<i64: 48, 32>}, {pipeline_mode = #tpu.pipeline_mode<synchronous>, transform_indices = @transform_2, window_bounds = array<i64: 48, 48>}, {pipeline_mode = #tpu.pipeline_mode<synchronous>, transform_indices = @transform_3, window_bounds = array<i64: 512, 32>}, {pipeline_mode = #tpu.pipeline_mode<synchronous>, transform_indices = @transform_4, window_bounds = array<i64: 16, 128>}, {pipeline_mode = #tpu.pipeline_mode<synchronous>, transform_indices = @transform_5, window_bounds = array<i64: 2, 32, 96>}, {pipeline_mode = #tpu.pipeline_mode<synchronous>, transform_indices = @transform_6, window_bounds = array<i64: 2, 32, 32>}, {pipeline_mode = #tpu.pipeline_mode<synchronous>, transform_indices = @transform_7, window_bounds = array<i64: 2, 32, 128>}, {pipeline_mode = #tpu.pipeline_mode<synchronous>, transform_indices = @transform_8, window_bounds = array<i64: 2, 128, 32>}, {pipeline_mode = #tpu.pipeline_mode<synchronous>, transform_indices = @transform_9, window_bounds = array<i64: 33, 512>}, {transform_indices = @transform_10, window_bounds = array<i64: 1, 48, 512>}]} {
    %c0 = arith.constant 0 : index
    %c0_0 = arith.constant 0 : index
    %c0_1 = arith.constant 0 : index
    %0 = vector.load %arg1[%c0, %c0_0, %c0_1] : memref<1x48x1xi32, #tpu.memory_space<vmem>>, vector<1x48x1xi32>
    %1 = vector.shape_cast %0 : vector<1x48x1xi32> to vector<48x1xi32>
    %2 = tpu.iota {dimensions = array<i32: 1>} : vector<48x512xi32>
    %3 = vector.broadcast %1 : vector<48x1xi32> to vector<48x512xi32>
    %4 = arith.cmpi eq, %2, %3 : vector<48x512xi32>
    %5 = arith.extui %4 : vector<48x512xi1> to vector<48x512xi32>
    %6 = arith.sitofp %5 : vector<48x512xi32> to vector<48x512xf32>
    %c0_2 = arith.constant 0 : index
    %c0_3 = arith.constant 0 : index
    %7 = vector.load %arg4[%c0_2, %c0_3] : memref<512x32xf32, #tpu.memory_space<vmem>>, vector<512x32xf32>
    %cst = arith.constant dense<0.000000e+00> : vector<48x32xf32>
    %8 = tpu.matmul %6, %7, %cst {dimension_numbers = #tpu.dot_dimension_numbers<[1], [0], [0], [1], [0, 0, 1, 1], [], []>} : vector<48x512xf32>, vector<512x32xf32>, vector<48x32xf32> -> vector<48x32xf32>
    %c0_4 = arith.constant 0 : index
    %c0_5 = arith.constant 0 : index
    %9 = vector.load %arg2[%c0_4, %c0_5] : memref<48x32xf32, #tpu.memory_space<vmem>>, vector<48x32xf32>
    %10 = arith.addf %8, %9 : vector<48x32xf32>
    %c0_6 = arith.constant 0 : index
    %c0_7 = arith.constant 0 : index
    %11 = vector.load %arg3[%c0_6, %c0_7] : memref<48x48xf32, #tpu.memory_space<vmem>>, vector<48x48xf32>
    %c0_8 = arith.constant 0 : index
    %c0_9 = arith.constant 0 : index
    %12 = vector.load %arg5[%c0_8, %c0_9] : memref<16x128xf32, #tpu.memory_space<vmem>>, vector<1x32xf32>
    %c1 = arith.constant 1 : index
    %c0_10 = arith.constant 0 : index
    %13 = vector.load %arg5[%c1, %c0_10] : memref<16x128xf32, #tpu.memory_space<vmem>>, vector<1x32xf32>
    %c2 = arith.constant 2 : index
    %c0_11 = arith.constant 0 : index
    %14 = vector.load %arg5[%c2, %c0_11] : memref<16x128xf32, #tpu.memory_space<vmem>>, vector<1x32xf32>
    %c3 = arith.constant 3 : index
    %c0_12 = arith.constant 0 : index
    %15 = vector.load %arg5[%c3, %c0_12] : memref<16x128xf32, #tpu.memory_space<vmem>>, vector<1x32xf32>
    %c4 = arith.constant 4 : index
    %c0_13 = arith.constant 0 : index
    %16 = vector.load %arg5[%c4, %c0_13] : memref<16x128xf32, #tpu.memory_space<vmem>>, vector<1x32xf32>
    %c5 = arith.constant 5 : index
    %c0_14 = arith.constant 0 : index
    %17 = vector.load %arg5[%c5, %c0_14] : memref<16x128xf32, #tpu.memory_space<vmem>>, vector<1x128xf32>
    %c6 = arith.constant 6 : index
    %c0_15 = arith.constant 0 : index
    %18 = vector.load %arg5[%c6, %c0_15] : memref<16x128xf32, #tpu.memory_space<vmem>>, vector<1x32xf32>
    %c0_16 = arith.constant 0 : index
    %c0_17 = arith.constant 0 : index
    %c0_18 = arith.constant 0 : index
    %19 = vector.load %arg6[%c0_16, %c0_17, %c0_18] : memref<2x32x96xf32, #tpu.memory_space<vmem>>, vector<1x32x96xf32>
    %20 = vector.shape_cast %19 : vector<1x32x96xf32> to vector<32x96xf32>
    %c0_19 = arith.constant 0 : index
    %c0_20 = arith.constant 0 : index
    %c0_21 = arith.constant 0 : index
    %21 = vector.load %arg7[%c0_19, %c0_20, %c0_21] : memref<2x32x32xf32, #tpu.memory_space<vmem>>, vector<1x32x32xf32>
    %22 = vector.shape_cast %21 : vector<1x32x32xf32> to vector<32x32xf32>
    %cst_22 = arith.constant dense<0.000000e+00> : vector<48xf32>
    %23 = vector.multi_reduction <add>, %10, %cst_22 [1] : vector<48x32xf32> to vector<48xf32>
    %24 = vector.shape_cast %23 : vector<48xf32> to vector<48x1xf32>
    %cst_23 = arith.constant 3.200000e+01 : f32
    %25 = vector.broadcast %cst_23 : f32 to vector<48x1xf32>
    %26 = arith.divf %24, %25 : vector<48x1xf32>
    %27 = vector.broadcast %26 : vector<48x1xf32> to vector<48x32xf32>
    %28 = arith.subf %10, %27 : vector<48x32xf32>
    %29 = arith.mulf %28, %28 : vector<48x32xf32>
    %cst_24 = arith.constant dense<0.000000e+00> : vector<48xf32>
    %30 = vector.multi_reduction <add>, %29, %cst_24 [1] : vector<48x32xf32> to vector<48xf32>
    %31 = vector.shape_cast %30 : vector<48xf32> to vector<48x1xf32>
    %cst_25 = arith.constant 3.200000e+01 : f32
    %32 = vector.broadcast %cst_25 : f32 to vector<48x1xf32>
    %33 = arith.divf %31, %32 : vector<48x1xf32>
    %34 = vector.broadcast %26 : vector<48x1xf32> to vector<48x32xf32>
    %35 = arith.subf %10, %34 : vector<48x32xf32>
    %cst_26 = arith.constant 9.99999974E-6 : f32
    %36 = vector.broadcast %cst_26 : f32 to vector<48x1xf32>
    %37 = arith.addf %33, %36 : vector<48x1xf32>
    %38 = math.rsqrt %37 : vector<48x1xf32>
    %39 = vector.broadcast %38 : vector<48x1xf32> to vector<48x32xf32>
    %40 = arith.mulf %35, %39 : vector<48x32xf32>
    %41 = vector.broadcast %12 : vector<1x32xf32> to vector<48x32xf32>
    %42 = arith.mulf %40, %41 : vector<48x32xf32>
    %43 = vector.broadcast %13 : vector<1x32xf32> to vector<48x32xf32>
    %44 = arith.addf %42, %43 : vector<48x32xf32>
    %cst_27 = arith.constant dense<0.000000e+00> : vector<48x96xf32>
    %45 = tpu.matmul %44, %20, %cst_27 {dimension_numbers = #tpu.dot_dimension_numbers<[1], [0], [0], [1], [0, 0, 1, 1], [], []>} : vector<48x32xf32>, vector<32x96xf32>, vector<48x96xf32> -> vector<48x96xf32>
    %46 = vector.extract_strided_slice %45 {offsets = [0, 0], sizes = [48, 8], strides = [1, 1]} : vector<48x96xf32> to vector<48x8xf32>
    %47 = vector.extract_strided_slice %45 {offsets = [0, 32], sizes = [48, 8], strides = [1, 1]} : vector<48x96xf32> to vector<48x8xf32>
    %48 = vector.extract_strided_slice %45 {offsets = [0, 64], sizes = [48, 8], strides = [1, 1]} : vector<48x96xf32> to vector<48x8xf32>
    "tpu.trace_start"() <{level = 10 : i32, message = "td,sd->ts"}> : () -> ()
    %cst_28 = arith.constant dense<0.000000e+00> : vector<48x48xf32>
    %49 = tpu.matmul %46, %47, %cst_28 {dimension_numbers = #tpu.dot_dimension_numbers<[1], [1], [0], [0], [0, 0, 1, 0], [], []>} : vector<48x8xf32>, vector<48x8xf32>, vector<48x48xf32> -> vector<48x48xf32>
    "tpu.trace_stop"() : () -> ()
    %50 = arith.addf %49, %11 : vector<48x48xf32>
    %cst_29 = arith.constant dense<0xFF800000> : vector<48xf32>
    %51 = vector.multi_reduction <maximumf>, %50, %cst_29 [1] : vector<48x48xf32> to vector<48xf32>
    %52 = vector.shape_cast %51 : vector<48xf32> to vector<48x1xf32>
    %53 = vector.broadcast %52 : vector<48x1xf32> to vector<48x48xf32>
    %54 = arith.subf %50, %53 : vector<48x48xf32>
    %55 = math.exp %54 : vector<48x48xf32>
    %cst_30 = arith.constant dense<0.000000e+00> : vector<48xf32>
    %56 = vector.multi_reduction <add>, %55, %cst_30 [1] : vector<48x48xf32> to vector<48xf32>
    %57 = vector.shape_cast %56 : vector<48xf32> to vector<48x1xf32>
    %58 = tpu.reciprocal %57 {approx = true} : vector<48x1xf32> -> vector<48x1xf32>
    %cst_31 = arith.constant dense<0.000000e+00> : vector<48x8xf32>
    %59 = tpu.matmul %55, %48, %cst_31 {dimension_numbers = #tpu.dot_dimension_numbers<[1], [0], [0], [1], [0, 0, 1, 1], [], []>} : vector<48x48xf32>, vector<48x8xf32>, vector<48x8xf32> -> vector<48x8xf32>
    %60 = vector.broadcast %58 : vector<48x1xf32> to vector<48x8xf32>
    %61 = arith.mulf %59, %60 : vector<48x8xf32>
    %62 = vector.extract_strided_slice %22 {offsets = [0, 0], sizes = [8, 32], strides = [1, 1]} : vector<32x32xf32> to vector<8x32xf32>
    %cst_32 = arith.constant dense<0.000000e+00> : vector<48x32xf32>
    %63 = tpu.matmul %61, %62, %cst_32 {dimension_numbers = #tpu.dot_dimension_numbers<[1], [0], [0], [1], [0, 0, 1, 1], [], []>} : vector<48x8xf32>, vector<8x32xf32>, vector<48x32xf32> -> vector<48x32xf32>
    %64 = vector.extract_strided_slice %45 {offsets = [0, 8], sizes = [48, 8], strides = [1, 1]} : vector<48x96xf32> to vector<48x8xf32>
    %65 = vector.extract_strided_slice %45 {offsets = [0, 40], sizes = [48, 8], strides = [1, 1]} : vector<48x96xf32> to vector<48x8xf32>
    %66 = vector.extract_strided_slice %45 {offsets = [0, 72], sizes = [48, 8], strides = [1, 1]} : vector<48x96xf32> to vector<48x8xf32>
    "tpu.trace_start"() <{level = 10 : i32, message = "td,sd->ts"}> : () -> ()
    %cst_33 = arith.constant dense<0.000000e+00> : vector<48x48xf32>
    %67 = tpu.matmul %64, %65, %cst_33 {dimension_numbers = #tpu.dot_dimension_numbers<[1], [1], [0], [0], [0, 0, 1, 0], [], []>} : vector<48x8xf32>, vector<48x8xf32>, vector<48x48xf32> -> vector<48x48xf32>
    "tpu.trace_stop"() : () -> ()
    %68 = arith.addf %67, %11 : vector<48x48xf32>
    %cst_34 = arith.constant dense<0xFF800000> : vector<48xf32>
    %69 = vector.multi_reduction <maximumf>, %68, %cst_34 [1] : vector<48x48xf32> to vector<48xf32>
    %70 = vector.shape_cast %69 : vector<48xf32> to vector<48x1xf32>
    %71 = vector.broadcast %70 : vector<48x1xf32> to vector<48x48xf32>
    %72 = arith.subf %68, %71 : vector<48x48xf32>
    %73 = math.exp %72 : vector<48x48xf32>
    %cst_35 = arith.constant dense<0.000000e+00> : vector<48xf32>
    %74 = vector.multi_reduction <add>, %73, %cst_35 [1] : vector<48x48xf32> to vector<48xf32>
    %75 = vector.shape_cast %74 : vector<48xf32> to vector<48x1xf32>
    %76 = tpu.reciprocal %75 {approx = true} : vector<48x1xf32> -> vector<48x1xf32>
    %cst_36 = arith.constant dense<0.000000e+00> : vector<48x8xf32>
    %77 = tpu.matmul %73, %66, %cst_36 {dimension_numbers = #tpu.dot_dimension_numbers<[1], [0], [0], [1], [0, 0, 1, 1], [], []>} : vector<48x48xf32>, vector<48x8xf32>, vector<48x8xf32> -> vector<48x8xf32>
    %78 = vector.broadcast %76 : vector<48x1xf32> to vector<48x8xf32>
    %79 = arith.mulf %77, %78 : vector<48x8xf32>
    %80 = vector.extract_strided_slice %22 {offsets = [8, 0], sizes = [8, 32], strides = [1, 1]} : vector<32x32xf32> to vector<8x32xf32>
    %cst_37 = arith.constant dense<0.000000e+00> : vector<48x32xf32>
    %81 = tpu.matmul %79, %80, %cst_37 {dimension_numbers = #tpu.dot_dimension_numbers<[1], [0], [0], [1], [0, 0, 1, 1], [], []>} : vector<48x8xf32>, vector<8x32xf32>, vector<48x32xf32> -> vector<48x32xf32>
    %82 = arith.addf %63, %81 : vector<48x32xf32>
    %83 = vector.extract_strided_slice %45 {offsets = [0, 16], sizes = [48, 8], strides = [1, 1]} : vector<48x96xf32> to vector<48x8xf32>
    %84 = vector.extract_strided_slice %45 {offsets = [0, 48], sizes = [48, 8], strides = [1, 1]} : vector<48x96xf32> to vector<48x8xf32>
    %85 = vector.extract_strided_slice %45 {offsets = [0, 80], sizes = [48, 8], strides = [1, 1]} : vector<48x96xf32> to vector<48x8xf32>
    "tpu.trace_start"() <{level = 10 : i32, message = "td,sd->ts"}> : () -> ()
    %cst_38 = arith.constant dense<0.000000e+00> : vector<48x48xf32>
    %86 = tpu.matmul %83, %84, %cst_38 {dimension_numbers = #tpu.dot_dimension_numbers<[1], [1], [0], [0], [0, 0, 1, 0], [], []>} : vector<48x8xf32>, vector<48x8xf32>, vector<48x48xf32> -> vector<48x48xf32>
    "tpu.trace_stop"() : () -> ()
    %87 = arith.addf %86, %11 : vector<48x48xf32>
    %cst_39 = arith.constant dense<0xFF800000> : vector<48xf32>
    %88 = vector.multi_reduction <maximumf>, %87, %cst_39 [1] : vector<48x48xf32> to vector<48xf32>
    %89 = vector.shape_cast %88 : vector<48xf32> to vector<48x1xf32>
    %90 = vector.broadcast %89 : vector<48x1xf32> to vector<48x48xf32>
    %91 = arith.subf %87, %90 : vector<48x48xf32>
    %92 = math.exp %91 : vector<48x48xf32>
    %cst_40 = arith.constant dense<0.000000e+00> : vector<48xf32>
    %93 = vector.multi_reduction <add>, %92, %cst_40 [1] : vector<48x48xf32> to vector<48xf32>
    %94 = vector.shape_cast %93 : vector<48xf32> to vector<48x1xf32>
    %95 = tpu.reciprocal %94 {approx = true} : vector<48x1xf32> -> vector<48x1xf32>
    %cst_41 = arith.constant dense<0.000000e+00> : vector<48x8xf32>
    %96 = tpu.matmul %92, %85, %cst_41 {dimension_numbers = #tpu.dot_dimension_numbers<[1], [0], [0], [1], [0, 0, 1, 1], [], []>} : vector<48x48xf32>, vector<48x8xf32>, vector<48x8xf32> -> vector<48x8xf32>
    %97 = vector.broadcast %95 : vector<48x1xf32> to vector<48x8xf32>
    %98 = arith.mulf %96, %97 : vector<48x8xf32>
    %99 = vector.extract_strided_slice %22 {offsets = [16, 0], sizes = [8, 32], strides = [1, 1]} : vector<32x32xf32> to vector<8x32xf32>
    %cst_42 = arith.constant dense<0.000000e+00> : vector<48x32xf32>
    %100 = tpu.matmul %98, %99, %cst_42 {dimension_numbers = #tpu.dot_dimension_numbers<[1], [0], [0], [1], [0, 0, 1, 1], [], []>} : vector<48x8xf32>, vector<8x32xf32>, vector<48x32xf32> -> vector<48x32xf32>
    %101 = arith.addf %82, %100 : vector<48x32xf32>
    %102 = vector.extract_strided_slice %45 {offsets = [0, 24], sizes = [48, 8], strides = [1, 1]} : vector<48x96xf32> to vector<48x8xf32>
    %103 = vector.extract_strided_slice %45 {offsets = [0, 56], sizes = [48, 8], strides = [1, 1]} : vector<48x96xf32> to vector<48x8xf32>
    %104 = vector.extract_strided_slice %45 {offsets = [0, 88], sizes = [48, 8], strides = [1, 1]} : vector<48x96xf32> to vector<48x8xf32>
    "tpu.trace_start"() <{level = 10 : i32, message = "td,sd->ts"}> : () -> ()
    %cst_43 = arith.constant dense<0.000000e+00> : vector<48x48xf32>
    %105 = tpu.matmul %102, %103, %cst_43 {dimension_numbers = #tpu.dot_dimension_numbers<[1], [1], [0], [0], [0, 0, 1, 0], [], []>} : vector<48x8xf32>, vector<48x8xf32>, vector<48x48xf32> -> vector<48x48xf32>
    "tpu.trace_stop"() : () -> ()
    %106 = arith.addf %105, %11 : vector<48x48xf32>
    %cst_44 = arith.constant dense<0xFF800000> : vector<48xf32>
    %107 = vector.multi_reduction <maximumf>, %106, %cst_44 [1] : vector<48x48xf32> to vector<48xf32>
    %108 = vector.shape_cast %107 : vector<48xf32> to vector<48x1xf32>
    %109 = vector.broadcast %108 : vector<48x1xf32> to vector<48x48xf32>
    %110 = arith.subf %106, %109 : vector<48x48xf32>
    %111 = math.exp %110 : vector<48x48xf32>
    %cst_45 = arith.constant dense<0.000000e+00> : vector<48xf32>
    %112 = vector.multi_reduction <add>, %111, %cst_45 [1] : vector<48x48xf32> to vector<48xf32>
    %113 = vector.shape_cast %112 : vector<48xf32> to vector<48x1xf32>
    %114 = tpu.reciprocal %113 {approx = true} : vector<48x1xf32> -> vector<48x1xf32>
    %cst_46 = arith.constant dense<0.000000e+00> : vector<48x8xf32>
    %115 = tpu.matmul %111, %104, %cst_46 {dimension_numbers = #tpu.dot_dimension_numbers<[1], [0], [0], [1], [0, 0, 1, 1], [], []>} : vector<48x48xf32>, vector<48x8xf32>, vector<48x8xf32> -> vector<48x8xf32>
    %116 = vector.broadcast %114 : vector<48x1xf32> to vector<48x8xf32>
    %117 = arith.mulf %115, %116 : vector<48x8xf32>
    %118 = vector.extract_strided_slice %22 {offsets = [24, 0], sizes = [8, 32], strides = [1, 1]} : vector<32x32xf32> to vector<8x32xf32>
    %cst_47 = arith.constant dense<0.000000e+00> : vector<48x32xf32>
    %119 = tpu.matmul %117, %118, %cst_47 {dimension_numbers = #tpu.dot_dimension_numbers<[1], [0], [0], [1], [0, 0, 1, 1], [], []>} : vector<48x8xf32>, vector<8x32xf32>, vector<48x32xf32> -> vector<48x32xf32>
    %120 = arith.addf %101, %119 : vector<48x32xf32>
    %121 = arith.addf %10, %120 : vector<48x32xf32>
    %122 = vector.broadcast %14 : vector<1x32xf32> to vector<48x32xf32>
    %123 = arith.addf %121, %122 : vector<48x32xf32>
    %cst_48 = arith.constant dense<0.000000e+00> : vector<48xf32>
    %124 = vector.multi_reduction <add>, %123, %cst_48 [1] : vector<48x32xf32> to vector<48xf32>
    %125 = vector.shape_cast %124 : vector<48xf32> to vector<48x1xf32>
    %cst_49 = arith.constant 3.200000e+01 : f32
    %126 = vector.broadcast %cst_49 : f32 to vector<48x1xf32>
    %127 = arith.divf %125, %126 : vector<48x1xf32>
    %128 = vector.broadcast %127 : vector<48x1xf32> to vector<48x32xf32>
    %129 = arith.subf %123, %128 : vector<48x32xf32>
    %130 = arith.mulf %129, %129 : vector<48x32xf32>
    %cst_50 = arith.constant dense<0.000000e+00> : vector<48xf32>
    %131 = vector.multi_reduction <add>, %130, %cst_50 [1] : vector<48x32xf32> to vector<48xf32>
    %132 = vector.shape_cast %131 : vector<48xf32> to vector<48x1xf32>
    %cst_51 = arith.constant 3.200000e+01 : f32
    %133 = vector.broadcast %cst_51 : f32 to vector<48x1xf32>
    %134 = arith.divf %132, %133 : vector<48x1xf32>
    %135 = vector.broadcast %127 : vector<48x1xf32> to vector<48x32xf32>
    %136 = arith.subf %123, %135 : vector<48x32xf32>
    %cst_52 = arith.constant 9.99999974E-6 : f32
    %137 = vector.broadcast %cst_52 : f32 to vector<48x1xf32>
    %138 = arith.addf %134, %137 : vector<48x1xf32>
    %139 = math.rsqrt %138 : vector<48x1xf32>
    %140 = vector.broadcast %139 : vector<48x1xf32> to vector<48x32xf32>
    %141 = arith.mulf %136, %140 : vector<48x32xf32>
    %142 = vector.broadcast %15 : vector<1x32xf32> to vector<48x32xf32>
    %143 = arith.mulf %141, %142 : vector<48x32xf32>
    %144 = vector.broadcast %16 : vector<1x32xf32> to vector<48x32xf32>
    %145 = arith.addf %143, %144 : vector<48x32xf32>
    %c0_53 = arith.constant 0 : index
    %c0_54 = arith.constant 0 : index
    %c0_55 = arith.constant 0 : index
    %146 = vector.load %arg8[%c0_53, %c0_54, %c0_55] : memref<2x32x128xf32, #tpu.memory_space<vmem>>, vector<1x32x128xf32>
    %147 = vector.shape_cast %146 : vector<1x32x128xf32> to vector<32x128xf32>
    %cst_56 = arith.constant dense<0.000000e+00> : vector<48x128xf32>
    %148 = tpu.matmul %145, %147, %cst_56 {dimension_numbers = #tpu.dot_dimension_numbers<[1], [0], [0], [1], [0, 0, 1, 1], [], []>} : vector<48x32xf32>, vector<32x128xf32>, vector<48x128xf32> -> vector<48x128xf32>
    %149 = vector.broadcast %17 : vector<1x128xf32> to vector<48x128xf32>
    %150 = arith.addf %148, %149 : vector<48x128xf32>
    %cst_57 = arith.constant 0.000000e+00 : f32
    %151 = vector.broadcast %cst_57 : f32 to vector<48x128xf32>
    %152 = arith.maximumf %150, %151 : vector<48x128xf32>
    %c0_58 = arith.constant 0 : index
    %c0_59 = arith.constant 0 : index
    %c0_60 = arith.constant 0 : index
    %153 = vector.load %arg9[%c0_58, %c0_59, %c0_60] : memref<2x128x32xf32, #tpu.memory_space<vmem>>, vector<1x128x32xf32>
    %154 = vector.shape_cast %153 : vector<1x128x32xf32> to vector<128x32xf32>
    %cst_61 = arith.constant dense<0.000000e+00> : vector<48x32xf32>
    %155 = tpu.matmul %152, %154, %cst_61 {dimension_numbers = #tpu.dot_dimension_numbers<[1], [0], [0], [1], [0, 0, 1, 1], [], []>} : vector<48x128xf32>, vector<128x32xf32>, vector<48x32xf32> -> vector<48x32xf32>
    %156 = arith.addf %123, %155 : vector<48x32xf32>
    %157 = vector.broadcast %18 : vector<1x32xf32> to vector<48x32xf32>
    %158 = arith.addf %156, %157 : vector<48x32xf32>
    %c7 = arith.constant 7 : index
    %c0_62 = arith.constant 0 : index
    %159 = vector.load %arg5[%c7, %c0_62] : memref<16x128xf32, #tpu.memory_space<vmem>>, vector<1x32xf32>
    %c8 = arith.constant 8 : index
    %c0_63 = arith.constant 0 : index
    %160 = vector.load %arg5[%c8, %c0_63] : memref<16x128xf32, #tpu.memory_space<vmem>>, vector<1x32xf32>
    %c9 = arith.constant 9 : index
    %c0_64 = arith.constant 0 : index
    %161 = vector.load %arg5[%c9, %c0_64] : memref<16x128xf32, #tpu.memory_space<vmem>>, vector<1x32xf32>
    %c10 = arith.constant 10 : index
    %c0_65 = arith.constant 0 : index
    %162 = vector.load %arg5[%c10, %c0_65] : memref<16x128xf32, #tpu.memory_space<vmem>>, vector<1x32xf32>
    %c11 = arith.constant 11 : index
    %c0_66 = arith.constant 0 : index
    %163 = vector.load %arg5[%c11, %c0_66] : memref<16x128xf32, #tpu.memory_space<vmem>>, vector<1x32xf32>
    %c12 = arith.constant 12 : index
    %c0_67 = arith.constant 0 : index
    %164 = vector.load %arg5[%c12, %c0_67] : memref<16x128xf32, #tpu.memory_space<vmem>>, vector<1x128xf32>
    %c13 = arith.constant 13 : index
    %c0_68 = arith.constant 0 : index
    %165 = vector.load %arg5[%c13, %c0_68] : memref<16x128xf32, #tpu.memory_space<vmem>>, vector<1x32xf32>
    %c1_69 = arith.constant 1 : index
    %c0_70 = arith.constant 0 : index
    %c0_71 = arith.constant 0 : index
    %166 = vector.load %arg6[%c1_69, %c0_70, %c0_71] : memref<2x32x96xf32, #tpu.memory_space<vmem>>, vector<1x32x96xf32>
    %167 = vector.shape_cast %166 : vector<1x32x96xf32> to vector<32x96xf32>
    %c1_72 = arith.constant 1 : index
    %c0_73 = arith.constant 0 : index
    %c0_74 = arith.constant 0 : index
    %168 = vector.load %arg7[%c1_72, %c0_73, %c0_74] : memref<2x32x32xf32, #tpu.memory_space<vmem>>, vector<1x32x32xf32>
    %169 = vector.shape_cast %168 : vector<1x32x32xf32> to vector<32x32xf32>
    %cst_75 = arith.constant dense<0.000000e+00> : vector<48xf32>
    %170 = vector.multi_reduction <add>, %158, %cst_75 [1] : vector<48x32xf32> to vector<48xf32>
    %171 = vector.shape_cast %170 : vector<48xf32> to vector<48x1xf32>
    %cst_76 = arith.constant 3.200000e+01 : f32
    %172 = vector.broadcast %cst_76 : f32 to vector<48x1xf32>
    %173 = arith.divf %171, %172 : vector<48x1xf32>
    %174 = vector.broadcast %173 : vector<48x1xf32> to vector<48x32xf32>
    %175 = arith.subf %158, %174 : vector<48x32xf32>
    %176 = arith.mulf %175, %175 : vector<48x32xf32>
    %cst_77 = arith.constant dense<0.000000e+00> : vector<48xf32>
    %177 = vector.multi_reduction <add>, %176, %cst_77 [1] : vector<48x32xf32> to vector<48xf32>
    %178 = vector.shape_cast %177 : vector<48xf32> to vector<48x1xf32>
    %cst_78 = arith.constant 3.200000e+01 : f32
    %179 = vector.broadcast %cst_78 : f32 to vector<48x1xf32>
    %180 = arith.divf %178, %179 : vector<48x1xf32>
    %181 = vector.broadcast %173 : vector<48x1xf32> to vector<48x32xf32>
    %182 = arith.subf %158, %181 : vector<48x32xf32>
    %cst_79 = arith.constant 9.99999974E-6 : f32
    %183 = vector.broadcast %cst_79 : f32 to vector<48x1xf32>
    %184 = arith.addf %180, %183 : vector<48x1xf32>
    %185 = math.rsqrt %184 : vector<48x1xf32>
    %186 = vector.broadcast %185 : vector<48x1xf32> to vector<48x32xf32>
    %187 = arith.mulf %182, %186 : vector<48x32xf32>
    %188 = vector.broadcast %159 : vector<1x32xf32> to vector<48x32xf32>
    %189 = arith.mulf %187, %188 : vector<48x32xf32>
    %190 = vector.broadcast %160 : vector<1x32xf32> to vector<48x32xf32>
    %191 = arith.addf %189, %190 : vector<48x32xf32>
    %cst_80 = arith.constant dense<0.000000e+00> : vector<48x96xf32>
    %192 = tpu.matmul %191, %167, %cst_80 {dimension_numbers = #tpu.dot_dimension_numbers<[1], [0], [0], [1], [0, 0, 1, 1], [], []>} : vector<48x32xf32>, vector<32x96xf32>, vector<48x96xf32> -> vector<48x96xf32>
    %193 = vector.extract_strided_slice %192 {offsets = [0, 0], sizes = [48, 8], strides = [1, 1]} : vector<48x96xf32> to vector<48x8xf32>
    %194 = vector.extract_strided_slice %192 {offsets = [0, 32], sizes = [48, 8], strides = [1, 1]} : vector<48x96xf32> to vector<48x8xf32>
    %195 = vector.extract_strided_slice %192 {offsets = [0, 64], sizes = [48, 8], strides = [1, 1]} : vector<48x96xf32> to vector<48x8xf32>
    "tpu.trace_start"() <{level = 10 : i32, message = "td,sd->ts"}> : () -> ()
    %cst_81 = arith.constant dense<0.000000e+00> : vector<48x48xf32>
    %196 = tpu.matmul %193, %194, %cst_81 {dimension_numbers = #tpu.dot_dimension_numbers<[1], [1], [0], [0], [0, 0, 1, 0], [], []>} : vector<48x8xf32>, vector<48x8xf32>, vector<48x48xf32> -> vector<48x48xf32>
    "tpu.trace_stop"() : () -> ()
    %197 = arith.addf %196, %11 : vector<48x48xf32>
    %cst_82 = arith.constant dense<0xFF800000> : vector<48xf32>
    %198 = vector.multi_reduction <maximumf>, %197, %cst_82 [1] : vector<48x48xf32> to vector<48xf32>
    %199 = vector.shape_cast %198 : vector<48xf32> to vector<48x1xf32>
    %200 = vector.broadcast %199 : vector<48x1xf32> to vector<48x48xf32>
    %201 = arith.subf %197, %200 : vector<48x48xf32>
    %202 = math.exp %201 : vector<48x48xf32>
    %cst_83 = arith.constant dense<0.000000e+00> : vector<48xf32>
    %203 = vector.multi_reduction <add>, %202, %cst_83 [1] : vector<48x48xf32> to vector<48xf32>
    %204 = vector.shape_cast %203 : vector<48xf32> to vector<48x1xf32>
    %205 = tpu.reciprocal %204 {approx = true} : vector<48x1xf32> -> vector<48x1xf32>
    %cst_84 = arith.constant dense<0.000000e+00> : vector<48x8xf32>
    %206 = tpu.matmul %202, %195, %cst_84 {dimension_numbers = #tpu.dot_dimension_numbers<[1], [0], [0], [1], [0, 0, 1, 1], [], []>} : vector<48x48xf32>, vector<48x8xf32>, vector<48x8xf32> -> vector<48x8xf32>
    %207 = vector.broadcast %205 : vector<48x1xf32> to vector<48x8xf32>
    %208 = arith.mulf %206, %207 : vector<48x8xf32>
    %209 = vector.extract_strided_slice %169 {offsets = [0, 0], sizes = [8, 32], strides = [1, 1]} : vector<32x32xf32> to vector<8x32xf32>
    %cst_85 = arith.constant dense<0.000000e+00> : vector<48x32xf32>
    %210 = tpu.matmul %208, %209, %cst_85 {dimension_numbers = #tpu.dot_dimension_numbers<[1], [0], [0], [1], [0, 0, 1, 1], [], []>} : vector<48x8xf32>, vector<8x32xf32>, vector<48x32xf32> -> vector<48x32xf32>
    %211 = vector.extract_strided_slice %192 {offsets = [0, 8], sizes = [48, 8], strides = [1, 1]} : vector<48x96xf32> to vector<48x8xf32>
    %212 = vector.extract_strided_slice %192 {offsets = [0, 40], sizes = [48, 8], strides = [1, 1]} : vector<48x96xf32> to vector<48x8xf32>
    %213 = vector.extract_strided_slice %192 {offsets = [0, 72], sizes = [48, 8], strides = [1, 1]} : vector<48x96xf32> to vector<48x8xf32>
    "tpu.trace_start"() <{level = 10 : i32, message = "td,sd->ts"}> : () -> ()
    %cst_86 = arith.constant dense<0.000000e+00> : vector<48x48xf32>
    %214 = tpu.matmul %211, %212, %cst_86 {dimension_numbers = #tpu.dot_dimension_numbers<[1], [1], [0], [0], [0, 0, 1, 0], [], []>} : vector<48x8xf32>, vector<48x8xf32>, vector<48x48xf32> -> vector<48x48xf32>
    "tpu.trace_stop"() : () -> ()
    %215 = arith.addf %214, %11 : vector<48x48xf32>
    %cst_87 = arith.constant dense<0xFF800000> : vector<48xf32>
    %216 = vector.multi_reduction <maximumf>, %215, %cst_87 [1] : vector<48x48xf32> to vector<48xf32>
    %217 = vector.shape_cast %216 : vector<48xf32> to vector<48x1xf32>
    %218 = vector.broadcast %217 : vector<48x1xf32> to vector<48x48xf32>
    %219 = arith.subf %215, %218 : vector<48x48xf32>
    %220 = math.exp %219 : vector<48x48xf32>
    %cst_88 = arith.constant dense<0.000000e+00> : vector<48xf32>
    %221 = vector.multi_reduction <add>, %220, %cst_88 [1] : vector<48x48xf32> to vector<48xf32>
    %222 = vector.shape_cast %221 : vector<48xf32> to vector<48x1xf32>
    %223 = tpu.reciprocal %222 {approx = true} : vector<48x1xf32> -> vector<48x1xf32>
    %cst_89 = arith.constant dense<0.000000e+00> : vector<48x8xf32>
    %224 = tpu.matmul %220, %213, %cst_89 {dimension_numbers = #tpu.dot_dimension_numbers<[1], [0], [0], [1], [0, 0, 1, 1], [], []>} : vector<48x48xf32>, vector<48x8xf32>, vector<48x8xf32> -> vector<48x8xf32>
    %225 = vector.broadcast %223 : vector<48x1xf32> to vector<48x8xf32>
    %226 = arith.mulf %224, %225 : vector<48x8xf32>
    %227 = vector.extract_strided_slice %169 {offsets = [8, 0], sizes = [8, 32], strides = [1, 1]} : vector<32x32xf32> to vector<8x32xf32>
    %cst_90 = arith.constant dense<0.000000e+00> : vector<48x32xf32>
    %228 = tpu.matmul %226, %227, %cst_90 {dimension_numbers = #tpu.dot_dimension_numbers<[1], [0], [0], [1], [0, 0, 1, 1], [], []>} : vector<48x8xf32>, vector<8x32xf32>, vector<48x32xf32> -> vector<48x32xf32>
    %229 = arith.addf %210, %228 : vector<48x32xf32>
    %230 = vector.extract_strided_slice %192 {offsets = [0, 16], sizes = [48, 8], strides = [1, 1]} : vector<48x96xf32> to vector<48x8xf32>
    %231 = vector.extract_strided_slice %192 {offsets = [0, 48], sizes = [48, 8], strides = [1, 1]} : vector<48x96xf32> to vector<48x8xf32>
    %232 = vector.extract_strided_slice %192 {offsets = [0, 80], sizes = [48, 8], strides = [1, 1]} : vector<48x96xf32> to vector<48x8xf32>
    "tpu.trace_start"() <{level = 10 : i32, message = "td,sd->ts"}> : () -> ()
    %cst_91 = arith.constant dense<0.000000e+00> : vector<48x48xf32>
    %233 = tpu.matmul %230, %231, %cst_91 {dimension_numbers = #tpu.dot_dimension_numbers<[1], [1], [0], [0], [0, 0, 1, 0], [], []>} : vector<48x8xf32>, vector<48x8xf32>, vector<48x48xf32> -> vector<48x48xf32>
    "tpu.trace_stop"() : () -> ()
    %234 = arith.addf %233, %11 : vector<48x48xf32>
    %cst_92 = arith.constant dense<0xFF800000> : vector<48xf32>
    %235 = vector.multi_reduction <maximumf>, %234, %cst_92 [1] : vector<48x48xf32> to vector<48xf32>
    %236 = vector.shape_cast %235 : vector<48xf32> to vector<48x1xf32>
    %237 = vector.broadcast %236 : vector<48x1xf32> to vector<48x48xf32>
    %238 = arith.subf %234, %237 : vector<48x48xf32>
    %239 = math.exp %238 : vector<48x48xf32>
    %cst_93 = arith.constant dense<0.000000e+00> : vector<48xf32>
    %240 = vector.multi_reduction <add>, %239, %cst_93 [1] : vector<48x48xf32> to vector<48xf32>
    %241 = vector.shape_cast %240 : vector<48xf32> to vector<48x1xf32>
    %242 = tpu.reciprocal %241 {approx = true} : vector<48x1xf32> -> vector<48x1xf32>
    %cst_94 = arith.constant dense<0.000000e+00> : vector<48x8xf32>
    %243 = tpu.matmul %239, %232, %cst_94 {dimension_numbers = #tpu.dot_dimension_numbers<[1], [0], [0], [1], [0, 0, 1, 1], [], []>} : vector<48x48xf32>, vector<48x8xf32>, vector<48x8xf32> -> vector<48x8xf32>
    %244 = vector.broadcast %242 : vector<48x1xf32> to vector<48x8xf32>
    %245 = arith.mulf %243, %244 : vector<48x8xf32>
    %246 = vector.extract_strided_slice %169 {offsets = [16, 0], sizes = [8, 32], strides = [1, 1]} : vector<32x32xf32> to vector<8x32xf32>
    %cst_95 = arith.constant dense<0.000000e+00> : vector<48x32xf32>
    %247 = tpu.matmul %245, %246, %cst_95 {dimension_numbers = #tpu.dot_dimension_numbers<[1], [0], [0], [1], [0, 0, 1, 1], [], []>} : vector<48x8xf32>, vector<8x32xf32>, vector<48x32xf32> -> vector<48x32xf32>
    %248 = arith.addf %229, %247 : vector<48x32xf32>
    %249 = vector.extract_strided_slice %192 {offsets = [0, 24], sizes = [48, 8], strides = [1, 1]} : vector<48x96xf32> to vector<48x8xf32>
    %250 = vector.extract_strided_slice %192 {offsets = [0, 56], sizes = [48, 8], strides = [1, 1]} : vector<48x96xf32> to vector<48x8xf32>
    %251 = vector.extract_strided_slice %192 {offsets = [0, 88], sizes = [48, 8], strides = [1, 1]} : vector<48x96xf32> to vector<48x8xf32>
    "tpu.trace_start"() <{level = 10 : i32, message = "td,sd->ts"}> : () -> ()
    %cst_96 = arith.constant dense<0.000000e+00> : vector<48x48xf32>
    %252 = tpu.matmul %249, %250, %cst_96 {dimension_numbers = #tpu.dot_dimension_numbers<[1], [1], [0], [0], [0, 0, 1, 0], [], []>} : vector<48x8xf32>, vector<48x8xf32>, vector<48x48xf32> -> vector<48x48xf32>
    "tpu.trace_stop"() : () -> ()
    %253 = arith.addf %252, %11 : vector<48x48xf32>
    %cst_97 = arith.constant dense<0xFF800000> : vector<48xf32>
    %254 = vector.multi_reduction <maximumf>, %253, %cst_97 [1] : vector<48x48xf32> to vector<48xf32>
    %255 = vector.shape_cast %254 : vector<48xf32> to vector<48x1xf32>
    %256 = vector.broadcast %255 : vector<48x1xf32> to vector<48x48xf32>
    %257 = arith.subf %253, %256 : vector<48x48xf32>
    %258 = math.exp %257 : vector<48x48xf32>
    %cst_98 = arith.constant dense<0.000000e+00> : vector<48xf32>
    %259 = vector.multi_reduction <add>, %258, %cst_98 [1] : vector<48x48xf32> to vector<48xf32>
    %260 = vector.shape_cast %259 : vector<48xf32> to vector<48x1xf32>
    %261 = tpu.reciprocal %260 {approx = true} : vector<48x1xf32> -> vector<48x1xf32>
    %cst_99 = arith.constant dense<0.000000e+00> : vector<48x8xf32>
    %262 = tpu.matmul %258, %251, %cst_99 {dimension_numbers = #tpu.dot_dimension_numbers<[1], [0], [0], [1], [0, 0, 1, 1], [], []>} : vector<48x48xf32>, vector<48x8xf32>, vector<48x8xf32> -> vector<48x8xf32>
    %263 = vector.broadcast %261 : vector<48x1xf32> to vector<48x8xf32>
    %264 = arith.mulf %262, %263 : vector<48x8xf32>
    %265 = vector.extract_strided_slice %169 {offsets = [24, 0], sizes = [8, 32], strides = [1, 1]} : vector<32x32xf32> to vector<8x32xf32>
    %cst_100 = arith.constant dense<0.000000e+00> : vector<48x32xf32>
    %266 = tpu.matmul %264, %265, %cst_100 {dimension_numbers = #tpu.dot_dimension_numbers<[1], [0], [0], [1], [0, 0, 1, 1], [], []>} : vector<48x8xf32>, vector<8x32xf32>, vector<48x32xf32> -> vector<48x32xf32>
    %267 = arith.addf %248, %266 : vector<48x32xf32>
    %268 = arith.addf %158, %267 : vector<48x32xf32>
    %269 = vector.broadcast %161 : vector<1x32xf32> to vector<48x32xf32>
    %270 = arith.addf %268, %269 : vector<48x32xf32>
    %cst_101 = arith.constant dense<0.000000e+00> : vector<48xf32>
    %271 = vector.multi_reduction <add>, %270, %cst_101 [1] : vector<48x32xf32> to vector<48xf32>
    %272 = vector.shape_cast %271 : vector<48xf32> to vector<48x1xf32>
    %cst_102 = arith.constant 3.200000e+01 : f32
    %273 = vector.broadcast %cst_102 : f32 to vector<48x1xf32>
    %274 = arith.divf %272, %273 : vector<48x1xf32>
    %275 = vector.broadcast %274 : vector<48x1xf32> to vector<48x32xf32>
    %276 = arith.subf %270, %275 : vector<48x32xf32>
    %277 = arith.mulf %276, %276 : vector<48x32xf32>
    %cst_103 = arith.constant dense<0.000000e+00> : vector<48xf32>
    %278 = vector.multi_reduction <add>, %277, %cst_103 [1] : vector<48x32xf32> to vector<48xf32>
    %279 = vector.shape_cast %278 : vector<48xf32> to vector<48x1xf32>
    %cst_104 = arith.constant 3.200000e+01 : f32
    %280 = vector.broadcast %cst_104 : f32 to vector<48x1xf32>
    %281 = arith.divf %279, %280 : vector<48x1xf32>
    %282 = vector.broadcast %274 : vector<48x1xf32> to vector<48x32xf32>
    %283 = arith.subf %270, %282 : vector<48x32xf32>
    %cst_105 = arith.constant 9.99999974E-6 : f32
    %284 = vector.broadcast %cst_105 : f32 to vector<48x1xf32>
    %285 = arith.addf %281, %284 : vector<48x1xf32>
    %286 = math.rsqrt %285 : vector<48x1xf32>
    %287 = vector.broadcast %286 : vector<48x1xf32> to vector<48x32xf32>
    %288 = arith.mulf %283, %287 : vector<48x32xf32>
    %289 = vector.broadcast %162 : vector<1x32xf32> to vector<48x32xf32>
    %290 = arith.mulf %288, %289 : vector<48x32xf32>
    %291 = vector.broadcast %163 : vector<1x32xf32> to vector<48x32xf32>
    %292 = arith.addf %290, %291 : vector<48x32xf32>
    %c1_106 = arith.constant 1 : index
    %c0_107 = arith.constant 0 : index
    %c0_108 = arith.constant 0 : index
    %293 = vector.load %arg8[%c1_106, %c0_107, %c0_108] : memref<2x32x128xf32, #tpu.memory_space<vmem>>, vector<1x32x128xf32>
    %294 = vector.shape_cast %293 : vector<1x32x128xf32> to vector<32x128xf32>
    %cst_109 = arith.constant dense<0.000000e+00> : vector<48x128xf32>
    %295 = tpu.matmul %292, %294, %cst_109 {dimension_numbers = #tpu.dot_dimension_numbers<[1], [0], [0], [1], [0, 0, 1, 1], [], []>} : vector<48x32xf32>, vector<32x128xf32>, vector<48x128xf32> -> vector<48x128xf32>
    %296 = vector.broadcast %164 : vector<1x128xf32> to vector<48x128xf32>
    %297 = arith.addf %295, %296 : vector<48x128xf32>
    %cst_110 = arith.constant 0.000000e+00 : f32
    %298 = vector.broadcast %cst_110 : f32 to vector<48x128xf32>
    %299 = arith.maximumf %297, %298 : vector<48x128xf32>
    %c1_111 = arith.constant 1 : index
    %c0_112 = arith.constant 0 : index
    %c0_113 = arith.constant 0 : index
    %300 = vector.load %arg9[%c1_111, %c0_112, %c0_113] : memref<2x128x32xf32, #tpu.memory_space<vmem>>, vector<1x128x32xf32>
    %301 = vector.shape_cast %300 : vector<1x128x32xf32> to vector<128x32xf32>
    %cst_114 = arith.constant dense<0.000000e+00> : vector<48x32xf32>
    %302 = tpu.matmul %299, %301, %cst_114 {dimension_numbers = #tpu.dot_dimension_numbers<[1], [0], [0], [1], [0, 0, 1, 1], [], []>} : vector<48x128xf32>, vector<128x32xf32>, vector<48x32xf32> -> vector<48x32xf32>
    %303 = arith.addf %270, %302 : vector<48x32xf32>
    %304 = vector.broadcast %165 : vector<1x32xf32> to vector<48x32xf32>
    %305 = arith.addf %303, %304 : vector<48x32xf32>
    %c14 = arith.constant 14 : index
    %c0_115 = arith.constant 0 : index
    %306 = vector.load %arg5[%c14, %c0_115] : memref<16x128xf32, #tpu.memory_space<vmem>>, vector<1x32xf32>
    %c15 = arith.constant 15 : index
    %c0_116 = arith.constant 0 : index
    %307 = vector.load %arg5[%c15, %c0_116] : memref<16x128xf32, #tpu.memory_space<vmem>>, vector<1x32xf32>
    %cst_117 = arith.constant dense<0.000000e+00> : vector<48xf32>
    %308 = vector.multi_reduction <add>, %305, %cst_117 [1] : vector<48x32xf32> to vector<48xf32>
    %309 = vector.shape_cast %308 : vector<48xf32> to vector<48x1xf32>
    %cst_118 = arith.constant 3.200000e+01 : f32
    %310 = vector.broadcast %cst_118 : f32 to vector<48x1xf32>
    %311 = arith.divf %309, %310 : vector<48x1xf32>
    %312 = vector.broadcast %311 : vector<48x1xf32> to vector<48x32xf32>
    %313 = arith.subf %305, %312 : vector<48x32xf32>
    %314 = arith.mulf %313, %313 : vector<48x32xf32>
    %cst_119 = arith.constant dense<0.000000e+00> : vector<48xf32>
    %315 = vector.multi_reduction <add>, %314, %cst_119 [1] : vector<48x32xf32> to vector<48xf32>
    %316 = vector.shape_cast %315 : vector<48xf32> to vector<48x1xf32>
    %cst_120 = arith.constant 3.200000e+01 : f32
    %317 = vector.broadcast %cst_120 : f32 to vector<48x1xf32>
    %318 = arith.divf %316, %317 : vector<48x1xf32>
    %319 = vector.broadcast %311 : vector<48x1xf32> to vector<48x32xf32>
    %320 = arith.subf %305, %319 : vector<48x32xf32>
    %cst_121 = arith.constant 9.99999974E-6 : f32
    %321 = vector.broadcast %cst_121 : f32 to vector<48x1xf32>
    %322 = arith.addf %318, %321 : vector<48x1xf32>
    %323 = math.rsqrt %322 : vector<48x1xf32>
    %324 = vector.broadcast %323 : vector<48x1xf32> to vector<48x32xf32>
    %325 = arith.mulf %320, %324 : vector<48x32xf32>
    %326 = vector.broadcast %306 : vector<1x32xf32> to vector<48x32xf32>
    %327 = arith.mulf %325, %326 : vector<48x32xf32>
    %328 = vector.broadcast %307 : vector<1x32xf32> to vector<48x32xf32>
    %329 = arith.addf %327, %328 : vector<48x32xf32>
    %c0_122 = arith.constant 0 : index
    %c0_123 = arith.constant 0 : index
    %330 = vector.load %arg10[%c0_122, %c0_123] : memref<33x512xf32, #tpu.memory_space<vmem>>, vector<32x512xf32>
    %cst_124 = arith.constant dense<0.000000e+00> : vector<48x512xf32>
    %331 = tpu.matmul %329, %330, %cst_124 {dimension_numbers = #tpu.dot_dimension_numbers<[1], [0], [0], [1], [0, 0, 1, 1], [], []>} : vector<48x32xf32>, vector<32x512xf32>, vector<48x512xf32> -> vector<48x512xf32>
    %c32 = arith.constant 32 : index
    %c0_125 = arith.constant 0 : index
    %332 = vector.load %arg10[%c32, %c0_125] : memref<33x512xf32, #tpu.memory_space<vmem>>, vector<1x512xf32>
    %333 = vector.broadcast %332 : vector<1x512xf32> to vector<48x512xf32>
    %334 = arith.addf %331, %333 : vector<48x512xf32>
    %c0_126 = arith.constant 0 : index
    %c0_127 = arith.constant 0 : index
    %c0_128 = arith.constant 0 : index
    %335 = vector.load %arg11[%c0_126, %c0_127, %c0_128] : memref<1x48x512xf32, #tpu.memory_space<vmem>>, vector<1x48x512xf32>
    %336 = vector.shape_cast %335 : vector<1x48x512xf32> to vector<48x512xf32>
    %337 = vector.shape_cast %334 : vector<48x512xf32> to vector<1x48x512xf32>
    tpu.vector_store %arg11[%c0_126, %c0_127, %c0_128], %337 {strides = array<i32>} : memref<1x48x512xf32, #tpu.memory_space<vmem>>, vector<1x48x512xf32>,
    return
  }
  func.func @transform_0(%arg0: i32) -> (i32, i32, i32) {
    %c0_i32 = arith.constant 0 : i32
    %c0_i32_0 = arith.constant 0 : i32
    %c0_i32_1 = arith.constant 0 : i32
    return %arg0, %c0_i32, %c0_i32_0 : i32, i32, i32
  }
  func.func @transform_1(%arg0: i32) -> (i32, i32) {
    %c0_i32 = arith.constant 0 : i32
    %c0_i32_0 = arith.constant 0 : i32
    %c0_i32_1 = arith.constant 0 : i32
    return %c0_i32, %c0_i32_0 : i32, i32
  }
  func.func @transform_2(%arg0: i32) -> (i32, i32) {
    %c0_i32 = arith.constant 0 : i32
    %c0_i32_0 = arith.constant 0 : i32
    %c0_i32_1 = arith.constant 0 : i32
    return %c0_i32, %c0_i32_0 : i32, i32
  }
  func.func @transform_3(%arg0: i32) -> (i32, i32) {
    %c0_i32 = arith.constant 0 : i32
    %c0_i32_0 = arith.constant 0 : i32
    %c0_i32_1 = arith.constant 0 : i32
    return %c0_i32, %c0_i32_0 : i32, i32
  }
  func.func @transform_4(%arg0: i32) -> (i32, i32) {
    %c0_i32 = arith.constant 0 : i32
    %c0_i32_0 = arith.constant 0 : i32
    %c0_i32_1 = arith.constant 0 : i32
    return %c0_i32, %c0_i32_0 : i32, i32
  }
  func.func @transform_5(%arg0: i32) -> (i32, i32, i32) {
    %c0_i32 = arith.constant 0 : i32
    %c0_i32_0 = arith.constant 0 : i32
    %c0_i32_1 = arith.constant 0 : i32
    %c0_i32_2 = arith.constant 0 : i32
    return %c0_i32, %c0_i32_0, %c0_i32_1 : i32, i32, i32
  }
  func.func @transform_6(%arg0: i32) -> (i32, i32, i32) {
    %c0_i32 = arith.constant 0 : i32
    %c0_i32_0 = arith.constant 0 : i32
    %c0_i32_1 = arith.constant 0 : i32
    %c0_i32_2 = arith.constant 0 : i32
    return %c0_i32, %c0_i32_0, %c0_i32_1 : i32, i32, i32
  }
  func.func @transform_7(%arg0: i32) -> (i32, i32, i32) {
    %c0_i32 = arith.constant 0 : i32
    %c0_i32_0 = arith.constant 0 : i32
    %c0_i32_1 = arith.constant 0 : i32
    %c0_i32_2 = arith.constant 0 : i32
    return %c0_i32, %c0_i32_0, %c0_i32_1 : i32, i32, i32
  }
  func.func @transform_8(%arg0: i32) -> (i32, i32, i32) {
    %c0_i32 = arith.constant 0 : i32
    %c0_i32_0 = arith.constant 0 : i32
    %c0_i32_1 = arith.constant 0 : i32
    %c0_i32_2 = arith.constant 0 : i32
    return %c0_i32, %c0_i32_0, %c0_i32_1 : i32, i32, i32
  }
  func.func @transform_9(%arg0: i32) -> (i32, i32) {
    %c0_i32 = arith.constant 0 : i32
    %c0_i32_0 = arith.constant 0 : i32
    %c0_i32_1 = arith.constant 0 : i32
    return %c0_i32, %c0_i32_0 : i32, i32
  }
  func.func @transform_10(%arg0: i32) -> (i32, i32, i32) {
    %c0_i32 = arith.constant 0 : i32
    %c0_i32_0 = arith.constant 0 : i32
    %c0_i32_1 = arith.constant 0 : i32
    return %arg0, %c0_i32, %c0_i32_0 : i32, i32, i32
  }
}

</mosaic_0001>

<llo_original>
// kernel: bigram_lm_forward.1
$region0: #{bigram_lm_forward.1}
  #allocation0 [shape = 'u32[]', space=smem, size = 0x4, offset = 0x4, fixed_abs, tag = 'smem constant byte address 0x4 - core index']
  #allocation1 [shape = 'u32[144,128]{1,0:T(1,128)}', space=vmem, size = 0x12000, scoped, tag = 'internal scratch']
  %s0 = inlined_call_operand.vmem [shape: s32[2,48,1], index: 0, kind: input, shape index: {}]
  %s1 = inlined_call_operand.vmem [shape: f32[48,32], index: 1, kind: input, shape index: {}]
  %s2 = inlined_call_operand.vmem [shape: f32[48,48], index: 2, kind: input, shape index: {}]
  %s3 = inlined_call_operand.vmem [shape: f32[512,32], index: 3, kind: input, shape index: {}]
  %s4 = inlined_call_operand.vmem [shape: f32[16,128], index: 4, kind: input, shape index: {}]
  %s5 = inlined_call_operand.vmem [shape: f32[2,32,96], index: 5, kind: input, shape index: {}]
  %s6 = inlined_call_operand.vmem [shape: f32[2,32,32], index: 6, kind: input, shape index: {}]
  %s7 = inlined_call_operand.vmem [shape: f32[2,32,128], index: 7, kind: input, shape index: {}]
  %s8 = inlined_call_operand.vmem [shape: f32[2,128,32], index: 8, kind: input, shape index: {}]
  %s9 = inlined_call_operand.vmem [shape: f32[33,512], index: 9, kind: input, shape index: {}]
  %s10 = inlined_call_operand.hbm [shape: f32[2,48,512], index: 10, kind: output, shape index: {}]
  %s11 = sld [smem:[#allocation0]]
  $region73: #{bigram_lm_forward.1} parent=0
    _
  %s13 = ssub.s32 1, %s11
  %s14 = scalar_select 0, %s13, %s11
  $region1: #{bigram_lm_forward.1} parent=0
    #allocation2 [shape = 'u8[196608]{0}', space=vmem, size = 0x30000, scoped, tag = 'output window, operand 0']
    #allocation3 [shape = 's32[2]{0}', space=sflag, size = 0x8, scoped, tag = 'scoped memory for bigram_lm_forward.1']
    %15 = vsyncpa [#allocation3], 0
    %s16 = scalar_lea.sflag [#allocation3], 1
    %17 = vsyncpa %s16, 0
    loop: start=0, step=1, limit=4
    $region2: #{bigram_lm_forward.1} parent=1 // loop_pre_header
      _
    $region3: #{bigram_lm_forward.1} parent=1 // loop_header
      %s19 = sphi 0, %s23
      %p20 = scmp.ge.s32.totalorder %s19, 4
      %s29 = sphi 0, %s31
      %s32 = sphi 0, %s29
      %s33 = sphi 0, %s32
      %s49 = sphi 0, %s33
      %s53 = sphi 0, %s53
      %s55 = sphi 0, %s53
      %s56 = sphi 0, %s55
      %s70 = sphi 0, %s56
      %s74 = sphi 0, %s74
      %s76 = sphi 0, %s74
      %s77 = sphi 0, %s76
      %s91 = sphi 0, %s77
      %s95 = sphi 0, %s95
      %s97 = sphi 0, %s95
      %s98 = sphi 0, %s97
      %s112 = sphi 0, %s98
      %s116 = sphi 0, %s116
      %s118 = sphi 0, %s116
      %s119 = sphi 0, %s118
      %s133 = sphi 0, %s119
      %s137 = sphi 0, %s137
      %s139 = sphi 0, %s137
      %s140 = sphi 0, %s139
      %s154 = sphi 0, %s140
      %s158 = sphi 0, %s158
      %s160 = sphi 0, %s158
      %s161 = sphi 0, %s160
      %s175 = sphi 0, %s161
      %s179 = sphi 0, %s179
      %s181 = sphi 0, %s179
      %s182 = sphi 0, %s181
      %s196 = sphi 0, %s182
      %s200 = sphi 0, %s200
      %s202 = sphi 0, %s200
      %s203 = sphi 0, %s202
      %s217 = sphi 0, %s203
      %s221 = sphi 0, %s221
      %s223 = sphi 0, %s221
      %s224 = sphi 0, %s223
      %s238 = sphi 0, %s224
      %s244 = sphi 0, %s246
      %s247 = sphi 0, %s244
      %s248 = sphi 0, %s247
      %s264 = sphi 0, %s248
    $region4: #{bigram_lm_forward.1} parent=1 // loop_header_branch
      %22 = sbr.rel (%p20) target = $region8
    $region5: #{bigram_lm_forward.1} parent=1 // loop_body
      %s24 = ssub.s32 %s19, 1
      %s25 = ssub.s32 %s19, 2
      %s26 = sadd.s32 %s19, 1
      %s27 = ssub.s32 %s19, %s26
      %p28 = scmp.eq.s32.totalorder %s27, 0
      %s30 = sadd.s32 %s29, 1
      %s31 = scalar_select %p28, %s29, %s30
      %p34 = pneg %p28
      %p35 = scmp.eq.s32.totalorder %s19, 1
      %p36 = por %p34, %p35
      %p37 = scmp.ne.s32.totalorder %s29, %s32
      %p38 = scmp.eq.s32.totalorder %s19, 0
      %p39 = por %p37, %p38
      %p40 = scmp.ne.s32.totalorder %s29, %s32
      %p41 = scmp.eq.s32.totalorder %s24, 1
      %p42 = por %p40, %p41
      %p43 = scmp.ne.s32.totalorder %s32, %s33
      %p44 = scmp.eq.s32.totalorder %s24, 0
      %p45 = por %p43, %p44
      %p46 = scmp.ne.s32.totalorder %s32, %s33
      %p47 = scmp.eq.s32.totalorder %s25, 1
      %p48 = por %p46, %p47
      %p50 = scmp.ne.s32.totalorder %s33, %s49
      %p51 = scmp.eq.s32.totalorder %s25, 0
      %p52 = por %p50, %p51
      %s54 = sadd.s32 %s53, 1
      %p57 = scmp.eq.s32.totalorder %s19, 1
      %p58 = scmp.ne.s32.totalorder %s53, %s55
      %p59 = scmp.eq.s32.totalorder %s19, 0
      %p60 = por %p58, %p59
      %p61 = scmp.ne.s32.totalorder %s53, %s55
      %p62 = scmp.eq.s32.totalorder %s24, 1
      %p63 = por %p61, %p62
      %p64 = scmp.ne.s32.totalorder %s55, %s56
      %p65 = scmp.eq.s32.totalorder %s24, 0
      %p66 = por %p64, %p65
      %p67 = scmp.ne.s32.totalorder %s55, %s56
      %p68 = scmp.eq.s32.totalorder %s25, 1
      %p69 = por %p67, %p68
      %p71 = scmp.ne.s32.totalorder %s56, %s70
      %p72 = scmp.eq.s32.totalorder %s25, 0
      %p73 = por %p71, %p72
      %s75 = sadd.s32 %s74, 1
      %p78 = scmp.eq.s32.totalorder %s19, 1
      %p79 = scmp.ne.s32.totalorder %s74, %s76
      %p80 = scmp.eq.s32.totalorder %s19, 0
      %p81 = por %p79, %p80
      %p82 = scmp.ne.s32.totalorder %s74, %s76
      %p83 = scmp.eq.s32.totalorder %s24, 1
      %p84 = por %p82, %p83
      %p85 = scmp.ne.s32.totalorder %s76, %s77
      %p86 = scmp.eq.s32.totalorder %s24, 0
      %p87 = por %p85, %p86
      %p88 = scmp.ne.s32.totalorder %s76, %s77
      %p89 = scmp.eq.s32.totalorder %s25, 1
      %p90 = por %p88, %p89
      %p92 = scmp.ne.s32.totalorder %s77, %s91
      %p93 = scmp.eq.s32.totalorder %s25, 0
      %p94 = por %p92, %p93
      %s96 = sadd.s32 %s95, 1
      %p99 = scmp.eq.s32.totalorder %s19, 1
      %p100 = scmp.ne.s32.totalorder %s95, %s97
      %p101 = scmp.eq.s32.totalorder %s19, 0
      %p102 = por %p100, %p101
      %p103 = scmp.ne.s32.totalorder %s95, %s97
      %p104 = scmp.eq.s32.totalorder %s24, 1
      %p105 = por %p103, %p104
      %p106 = scmp.ne.s32.totalorder %s97, %s98
      %p107 = scmp.eq.s32.totalorder %s24, 0
      %p108 = por %p106, %p107
      %p109 = scmp.ne.s32.totalorder %s97, %s98
      %p110 = scmp.eq.s32.totalorder %s25, 1
      %p111 = por %p109, %p110
      %p113 = scmp.ne.s32.totalorder %s98, %s112
      %p114 = scmp.eq.s32.totalorder %s25, 0
      %p115 = por %p113, %p114
      %s117 = sadd.s32 %s116, 1
      %p120 = scmp.eq.s32.totalorder %s19, 1
      %p121 = scmp.ne.s32.totalorder %s116, %s118
      %p122 = scmp.eq.s32.totalorder %s19, 0
      %p123 = por %p121, %p122
      %p124 = scmp.ne.s32.totalorder %s116, %s118
      %p125 = scmp.eq.s32.totalorder %s24, 1
      %p126 = por %p124, %p125
      %p127 = scmp.ne.s32.totalorder %s118, %s119
      %p128 = scmp.eq.s32.totalorder %s24, 0
      %p129 = por %p127, %p128
      %p130 = scmp.ne.s32.totalorder %s118, %s119
      %p131 = scmp.eq.s32.totalorder %s25, 1
      %p132 = por %p130, %p131
      %p134 = scmp.ne.s32.totalorder %s119, %s133
      %p135 = scmp.eq.s32.totalorder %s25, 0
      %p136 = por %p134, %p135
      %s138 = sadd.s32 %s137, 1
      %p141 = scmp.eq.s32.totalorder %s19, 1
      %p142 = scmp.ne.s32.totalorder %s137, %s139
      %p143 = scmp.eq.s32.totalorder %s19, 0
      %p144 = por %p142, %p143
      %p145 = scmp.ne.s32.totalorder %s137, %s139
      %p146 = scmp.eq.s32.totalorder %s24, 1
      %p147 = por %p145, %p146
      %p148 = scmp.ne.s32.totalorder %s139, %s140
      %p149 = scmp.eq.s32.totalorder %s24, 0
      %p150 = por %p148, %p149
      %p151 = scmp.ne.s32.totalorder %s139, %s140
      %p152 = scmp.eq.s32.totalorder %s25, 1
      %p153 = por %p151, %p152
      %p155 = scmp.ne.s32.totalorder %s140, %s154
      %p156 = scmp.eq.s32.totalorder %s25, 0
      %p157 = por %p155, %p156
      %s159 = sadd.s32 %s158, 1
      %p162 = scmp.eq.s32.totalorder %s19, 1
      %p163 = scmp.ne.s32.totalorder %s158, %s160
      %p164 = scmp.eq.s32.totalorder %s19, 0
      %p165 = por %p163, %p164
      %p166 = scmp.ne.s32.totalorder %s158, %s160
      %p167 = scmp.eq.s32.totalorder %s24, 1
      %p168 = por %p166, %p167
      %p169 = scmp.ne.s32.totalorder %s160, %s161
      %p170 = scmp.eq.s32.totalorder %s24, 0
      %p171 = por %p169, %p170
      %p172 = scmp.ne.s32.totalorder %s160, %s161
      %p173 = scmp.eq.s32.totalorder %s25, 1
      %p174 = por %p172, %p173
      %p176 = scmp.ne.s32.totalorder %s161, %s175
      %p177 = scmp.eq.s32.totalorder %s25, 0
      %p178 = por %p176, %p177
      %s180 = sadd.s32 %s179, 1
      %p183 = scmp.eq.s32.totalorder %s19, 1
      %p184 = scmp.ne.s32.totalorder %s179, %s181
      %p185 = scmp.eq.s32.totalorder %s19, 0
      %p186 = por %p184, %p185
      %p187 = scmp.ne.s32.totalorder %s179, %s181
      %p188 = scmp.eq.s32.totalorder %s24, 1
      %p189 = por %p187, %p188
      %p190 = scmp.ne.s32.totalorder %s181, %s182
      %p191 = scmp.eq.s32.totalorder %s24, 0
      %p192 = por %p190, %p191
      %p193 = scmp.ne.s32.totalorder %s181, %s182
      %p194 = scmp.eq.s32.totalorder %s25, 1
      %p195 = por %p193, %p194
      %p197 = scmp.ne.s32.totalorder %s182, %s196
      %p198 = scmp.eq.s32.totalorder %s25, 0
      %p199 = por %p197, %p198
      %s201 = sadd.s32 %s200, 1
      %p204 = scmp.eq.s32.totalorder %s19, 1
      %p205 = scmp.ne.s32.totalorder %s200, %s202
      %p206 = scmp.eq.s32.totalorder %s19, 0
      %p207 = por %p205, %p206
      %p208 = scmp.ne.s32.totalorder %s200, %s202
      %p209 = scmp.eq.s32.totalorder %s24, 1
      %p210 = por %p208, %p209
      %p211 = scmp.ne.s32.totalorder %s202, %s203
      %p212 = scmp.eq.s32.totalorder %s24, 0
      %p213 = por %p211, %p212
      %p214 = scmp.ne.s32.totalorder %s202, %s203
      %p215 = scmp.eq.s32.totalorder %s25, 1
      %p216 = por %p214, %p215
      %p218 = scmp.ne.s32.totalorder %s203, %s217
      %p219 = scmp.eq.s32.totalorder %s25, 0
      %p220 = por %p218, %p219
      %s222 = sadd.s32 %s221, 1
      %p225 = scmp.eq.s32.totalorder %s19, 1
      %p226 = scmp.ne.s32.totalorder %s221, %s223
      %p227 = scmp.eq.s32.totalorder %s19, 0
      %p228 = por %p226, %p227
      %p229 = scmp.ne.s32.totalorder %s221, %s223
      %p230 = scmp.eq.s32.totalorder %s24, 1
      %p231 = por %p229, %p230
      %p232 = scmp.ne.s32.totalorder %s223, %s224
      %p233 = scmp.eq.s32.totalorder %s24, 0
      %p234 = por %p232, %p233
      %p235 = scmp.ne.s32.totalorder %s223, %s224
      %p236 = scmp.eq.s32.totalorder %s25, 1
      %p237 = por %p235, %p236
      %p239 = scmp.ne.s32.totalorder %s224, %s238
      %p240 = scmp.eq.s32.totalorder %s25, 0
      %p241 = por %p239, %p240
      %s242 = ssub.s32 %s19, %s26
      %p243 = scmp.eq.s32.totalorder %s242, 0
      %s245 = sadd.s32 %s244, 1
      %s246 = scalar_select %p243, %s244, %s245
      %p249 = pneg %p243
      %p250 = scmp.eq.s32.totalorder %s19, 1
      %p251 = por %p249, %p250
      %p252 = scmp.ne.s32.totalorder %s244, %s247
      %p253 = scmp.eq.s32.totalorder %s19, 0
      %p254 = por %p252, %p253
      %p255 = scmp.ne.s32.totalorder %s244, %s247
      %p256 = scmp.eq.s32.totalorder %s24, 1
      %p257 = por %p255, %p256
      %p258 = scmp.ne.s32.totalorder %s247, %s248
      %p259 = scmp.eq.s32.totalorder %s24, 0
      %p260 = por %p258, %p259
      %p261 = scmp.ne.s32.totalorder %s247, %s248
      %p262 = scmp.eq.s32.totalorder %s25, 1
      %p263 = por %p261, %p262
      %p265 = scmp.ne.s32.totalorder %s248, %s264
      %p266 = scmp.eq.s32.totalorder %s25, 0
      %p267 = por %p265, %p266
      %p268 = scmp.le.s32.totalorder 1, %s19
      %p269 = scmp.lt.s32.totalorder %s19, 3
      %p270 = pnand %p268, %p269
      %p271 = pneg %p270
      // Predicated region
      $region9: #{bigram_lm_forward.1} parent=5 // pred_check
        _
      $region10: #{bigram_lm_forward.1} parent=5 // pred_check_branch
        %273 = sbr.rel (%p270) target = $region12
      $region11: #{bigram_lm_forward.1} parent=5 // pred_region
        %s274 = ssub.s32 %s19, 1
        // Predicated region
        $region13: #{bigram_lm_forward.1} parent=11 // pred_check
          %p275 = pneg %p66
        $region14: #{bigram_lm_forward.1} parent=11 // pred_check_branch
          %277 = sbr.rel (%p275) target = $region16
        $region15: #{bigram_lm_forward.1} parent=11 // pred_region
          _
        $region16: #{bigram_lm_forward.1} parent=11 // pred_fallthru
          _
        // Predicated region
        $region17: #{bigram_lm_forward.1} parent=11 // pred_check
          %p278 = pneg %p87
        $region18: #{bigram_lm_forward.1} parent=11 // pred_check_branch
          %280 = sbr.rel (%p278) target = $region20
        $region19: #{bigram_lm_forward.1} parent=11 // pred_region
          _
        $region20: #{bigram_lm_forward.1} parent=11 // pred_fallthru
          _
        // Predicated region
        $region21: #{bigram_lm_forward.1} parent=11 // pred_check
          %p281 = pneg %p108
        $region22: #{bigram_lm_forward.1} parent=11 // pred_check_branch
          %283 = sbr.rel (%p281) target = $region24
        $region23: #{bigram_lm_forward.1} parent=11 // pred_region
          _
        $region24: #{bigram_lm_forward.1} parent=11 // pred_fallthru
          _
        // Predicated region
        $region25: #{bigram_lm_forward.1} parent=11 // pred_check
          %p284 = pneg %p129
        $region26: #{bigram_lm_forward.1} parent=11 // pred_check_branch
          %286 = sbr.rel (%p284) target = $region28
        $region27: #{bigram_lm_forward.1} parent=11 // pred_region
          _
        $region28: #{bigram_lm_forward.1} parent=11 // pred_fallthru
          _
        // Predicated region
        $region29: #{bigram_lm_forward.1} parent=11 // pred_check
          %p287 = pneg %p150
        $region30: #{bigram_lm_forward.1} parent=11 // pred_check_branch
          %289 = sbr.rel (%p287) target = $region32
        $region31: #{bigram_lm_forward.1} parent=11 // pred_region
          _
        $region32: #{bigram_lm_forward.1} parent=11 // pred_fallthru
          _
        // Predicated region
        $region33: #{bigram_lm_forward.1} parent=11 // pred_check
          %p290 = pneg %p171
        $region34: #{bigram_lm_forward.1} parent=11 // pred_check_branch
          %292 = sbr.rel (%p290) target = $region36
        $region35: #{bigram_lm_forward.1} parent=11 // pred_region
          _
        $region36: #{bigram_lm_forward.1} parent=11 // pred_fallthru
          _
        // Predicated region
        $region37: #{bigram_lm_forward.1} parent=11 // pred_check
          %p293 = pneg %p192
        $region38: #{bigram_lm_forward.1} parent=11 // pred_check_branch
          %295 = sbr.rel (%p293) target = $region40
        $region39: #{bigram_lm_forward.1} parent=11 // pred_region
          _
        $region40: #{bigram_lm_forward.1} parent=11 // pred_fallthru
          _
        // Predicated region
        $region41: #{bigram_lm_forward.1} parent=11 // pred_check
          %p296 = pneg %p213
        $region42: #{bigram_lm_forward.1} parent=11 // pred_check_branch
          %298 = sbr.rel (%p296) target = $region44
        $region43: #{bigram_lm_forward.1} parent=11 // pred_region
          _
        $region44: #{bigram_lm_forward.1} parent=11 // pred_fallthru
          _
        // Predicated region
        $region45: #{bigram_lm_forward.1} parent=11 // pred_check
          %p299 = pneg %p234
        $region46: #{bigram_lm_forward.1} parent=11 // pred_check_branch
          %301 = sbr.rel (%p299) target = $region48
        $region47: #{bigram_lm_forward.1} parent=11 // pred_region
          _
        $region48: #{bigram_lm_forward.1} parent=11 // pred_fallthru
          _
      $region12: #{bigram_lm_forward.1} parent=5 // pred_fallthru
        _
      %p302 = scmp.lt.s32.totalorder %s19, 2
      // Predicated region
      $region49: #{bigram_lm_forward.1} parent=5 // pred_check
        %p303 = pneg %p302
      $region50: #{bigram_lm_forward.1} parent=5 // pred_check_branch
        %305 = sbr.rel (%p303) target = $region52
      $region51: #{bigram_lm_forward.1} parent=5 // pred_region
        // Predicated region
        $region53: #{bigram_lm_forward.1} parent=51 // pred_check
          %p306 = pneg %p39
        $region54: #{bigram_lm_forward.1} parent=51 // pred_check_branch
          %308 = sbr.rel (%p306) target = $region56
        $region55: #{bigram_lm_forward.1} parent=51 // pred_region
          %p309 = scmp.lt.s32.totalorder %s19, 1
          %s310 = scalar_select %p309, %s19, 1
          %s311 = smul.addr %s310, 6
          %s312 = smul.addr %s311, 8
          %s313 = scalar_lea.vmem %s0, %s312
        $region56: #{bigram_lm_forward.1} parent=51 // pred_fallthru
          _
      $region52: #{bigram_lm_forward.1} parent=5 // pred_fallthru
        _
      %p314 = scmp.le.s32.totalorder 1, %s19
      %p315 = scmp.lt.s32.totalorder %s19, 3
      %p316 = pnand %p314, %p315
      %p317 = pneg %p316
      // Predicated region
      $region57: #{bigram_lm_forward.1} parent=5 // pred_check
        _
      $region58: #{bigram_lm_forward.1} parent=5 // pred_check_branch
        %319 = sbr.rel (%p316) target = $region60
      $region59: #{bigram_lm_forward.1} parent=5 // pred_region
        %s320 = ssub.s32 %s19, 1
        %p321 = scmp.lt.s32.totalorder %s24, 1
        %s322 = scalar_select %p321, %s24, 1
        %s323 = smul.addr %s322, 6
        %s324 = smul.addr %s323, 8
        %s325 = scalar_lea.vmem %s0, %s324
        %p326 = pneg %p45
        %p327 = pneg %p42
        %p328 = pneg %p66
        %p329 = pneg %p63
        %p330 = pneg %p87
        %p331 = pneg %p84
        %p332 = pneg %p108
        %p333 = pneg %p105
        %p334 = pneg %p129
        %p335 = pneg %p126
        %p336 = pneg %p150
        %p337 = pneg %p147
        %p338 = pneg %p171
        %p339 = pneg %p168
        %p340 = pneg %p192
        %p341 = pneg %p189
        %p342 = pneg %p213
        %p343 = pneg %p210
        %p344 = pneg %p234
        %p345 = pneg %p231
        %p346 = pneg %p260
        %p347 = pneg %p257
        %s348 = sand.u32 %s247, 1
        %s349 = scalar_lea.sflag [#allocation3], %s348
        %s350 = sand.u32 %s247, 1
        %s351 = smul.addr %s350, 192
        %s352 = scalar_lea.vmem [#allocation2], %s351
        %p353 = scmp.lt.s32.totalorder %s24, 1
        %s354 = scalar_select %p353, %s24, 1
        %s355 = smul.addr %s354, 6
        %s356 = smul.addr %s355, 8
        %s357 = scalar_lea.vmem %s0, %s356
        %v358 = vld [vmem:[%s357] sm:$0xff]
        %v359 = vld [vmem:[%s357 + $0x8] sm:$0xff]
        %v360 = vld [vmem:[%s357 + $0x10] sm:$0xff]
        %v361 = vld [vmem:[%s357 + $0x18] sm:$0xff]
        %v362 = vld [vmem:[%s357 + $0x20] sm:$0xff]
        %v363 = vld [vmem:[%s357 + $0x28] sm:$0xff]
        %v364 = vlaneseq
        %v365 = vand.u32 %v364, 127
        %v366 = vadd.s32 %v365, 128
        %v367 = vadd.s32 %v365, 256
        %v368 = vadd.s32 %v365, 384
        %369 = vset.pattern.permute.xlu0 0
        %370 = vperm.xlu0 %369, %v358
        %v371 = vpop.permute.xlu0 %370
        %372 = vset.pattern.permute.xlu0 0
        %373 = vperm.xlu0 %372, %v359
        %v374 = vpop.permute.xlu0 %373
        %375 = vset.pattern.permute.xlu0 0
        %376 = vperm.xlu0 %375, %v360
        %v377 = vpop.permute.xlu0 %376
        %378 = vset.pattern.permute.xlu0 0
        %379 = vperm.xlu0 %378, %v361
        %v380 = vpop.permute.xlu0 %379
        %381 = vset.pattern.permute.xlu0 0
        %382 = vperm.xlu0 %381, %v362
        %v383 = vpop.permute.xlu0 %382
        %384 = vset.pattern.permute.xlu0 0
        %385 = vperm.xlu0 %384, %v363
        %v386 = vpop.permute.xlu0 %385
        %vm387 = vcmp.eq.s32.totalorder %v365, %v371
        %vm388 = vcmp.eq.s32.totalorder %v366, %v371
        %vm389 = vcmp.eq.s32.totalorder %v367, %v371
        %vm390 = vcmp.eq.s32.totalorder %v368, %v371
        %vm391 = vcmp.eq.s32.totalorder %v365, %v374
        %vm392 = vcmp.eq.s32.totalorder %v366, %v374
        %vm393 = vcmp.eq.s32.totalorder %v367, %v374
        %vm394 = vcmp.eq.s32.totalorder %v368, %v374
        %vm395 = vcmp.eq.s32.totalorder %v365, %v377
        %vm396 = vcmp.eq.s32.totalorder %v366, %v377
        %vm397 = vcmp.eq.s32.totalorder %v367, %v377
        %vm398 = vcmp.eq.s32.totalorder %v368, %v377
        %vm399 = vcmp.eq.s32.totalorder %v365, %v380
        %vm400 = vcmp.eq.s32.totalorder %v366, %v380
        %vm401 = vcmp.eq.s32.totalorder %v367, %v380
        %vm402 = vcmp.eq.s32.totalorder %v368, %v380
        %vm403 = vcmp.eq.s32.totalorder %v365, %v383
        %vm404 = vcmp.eq.s32.totalorder %v366, %v383
        %vm405 = vcmp.eq.s32.totalorder %v367, %v383
        %vm406 = vcmp.eq.s32.totalorder %v368, %v383
        %vm407 = vcmp.eq.s32.totalorder %v365, %v386
        %vm408 = vcmp.eq.s32.totalorder %v366, %v386
        %vm409 = vcmp.eq.s32.totalorder %v367, %v386
        %vm410 = vcmp.eq.s32.totalorder %v368, %v386
        %v411 = vsel %vm387, 1, 0
        %v412 = vsel %vm388, 1, 0
        %v413 = vsel %vm389, 1, 0
        %v414 = vsel %vm390, 1, 0
        %v415 = vsel %vm391, 1, 0
        %v416 = vsel %vm392, 1, 0
        %v417 = vsel %vm393, 1, 0
        %v418 = vsel %vm394, 1, 0
        %v419 = vsel %vm395, 1, 0
        %v420 = vsel %vm396, 1, 0
        %v421 = vsel %vm397, 1, 0
        %v422 = vsel %vm398, 1, 0
        %v423 = vsel %vm399, 1, 0
        %v424 = vsel %vm400, 1, 0
        %v425 = vsel %vm401, 1, 0
        %v426 = vsel %vm402, 1, 0
        %v427 = vsel %vm403, 1, 0
        %v428 = vsel %vm404, 1, 0
        %v429 = vsel %vm405, 1, 0
        %v430 = vsel %vm406, 1, 0
        %v431 = vsel %vm407, 1, 0
        %v432 = vsel %vm408, 1, 0
        %v433 = vsel %vm409, 1, 0
        %v434 = vsel %vm410, 1, 0
        %v435 = vcvt.s32.f32 %v411
        %v436 = vcvt.s32.f32 %v412
        %v437 = vcvt.s32.f32 %v413
        %v438 = vcvt.s32.f32 %v414
        %v439 = vcvt.s32.f32 %v415
        %v440 = vcvt.s32.f32 %v416
        %v441 = vcvt.s32.f32 %v417
        %v442 = vcvt.s32.f32 %v418
        %v443 = vcvt.s32.f32 %v419
        %v444 = vcvt.s32.f32 %v420
        %v445 = vcvt.s32.f32 %v421
        %v446 = vcvt.s32.f32 %v422
        %v447 = vcvt.s32.f32 %v423
        %v448 = vcvt.s32.f32 %v424
        %v449 = vcvt.s32.f32 %v425
        %v450 = vcvt.s32.f32 %v426
        %v451 = vcvt.s32.f32 %v427
        %v452 = vcvt.s32.f32 %v428
        %v453 = vcvt.s32.f32 %v429
        %v454 = vcvt.s32.f32 %v430
        %v455 = vcvt.s32.f32 %v431
        %v456 = vcvt.s32.f32 %v432
        %v457 = vcvt.s32.f32 %v433
        %v458 = vcvt.s32.f32 %v434
        %v459 = vld [vmem:[%s3] sm:$0xff]
        %v460 = vld [vmem:[%s3 + $0x8] sm:$0xff]
        %v461 = vld [vmem:[%s3 + $0x10] sm:$0xff]
        %v462 = vld [vmem:[%s3 + $0x18] sm:$0xff]
        %v463 = vld [vmem:[%s3 + $0x20] sm:$0xff]
        %v464 = vld [vmem:[%s3 + $0x28] sm:$0xff]
        %v465 = vld [vmem:[%s3 + $0x30] sm:$0xff]
        %v466 = vld [vmem:[%s3 + $0x38] sm:$0xff]
        %v467 = vld [vmem:[%s3 + $0x40] sm:$0xff]
        %v468 = vld [vmem:[%s3 + $0x48] sm:$0xff]
        %v469 = vld [vmem:[%s3 + $0x50] sm:$0xff]
        %v470 = vld [vmem:[%s3 + $0x58] sm:$0xff]
        %v471 = vld [vmem:[%s3 + $0x60] sm:$0xff]
        %v472 = vld [vmem:[%s3 + $0x68] sm:$0xff]
        %v473 = vld [vmem:[%s3 + $0x70] sm:$0xff]
        %v474 = vld [vmem:[%s3 + $0x78] sm:$0xff]
        %v475 = vld [vmem:[%s3 + $0x80] sm:$0xff]
        %v476 = vld [vmem:[%s3 + $0x88] sm:$0xff]
        %v477 = vld [vmem:[%s3 + $0x90] sm:$0xff]
        %v478 = vld [vmem:[%s3 + $0x98] sm:$0xff]
        %v479 = vld [vmem:[%s3 + $0xa0] sm:$0xff]
        %v480 = vld [vmem:[%s3 + $0xa8] sm:$0xff]
        %v481 = vld [vmem:[%s3 + $0xb0] sm:$0xff]
        %v482 = vld [vmem:[%s3 + $0xb8] sm:$0xff]
        %v483 = vld [vmem:[%s3 + $0xc0] sm:$0xff]
        %v484 = vld [vmem:[%s3 + $0xc8] sm:$0xff]
        %v485 = vld [vmem:[%s3 + $0xd0] sm:$0xff]
        %v486 = vld [vmem:[%s3 + $0xd8] sm:$0xff]
        %v487 = vld [vmem:[%s3 + $0xe0] sm:$0xff]
        %v488 = vld [vmem:[%s3 + $0xe8] sm:$0xff]
        %v489 = vld [vmem:[%s3 + $0xf0] sm:$0xff]
        %v490 = vld [vmem:[%s3 + $0xf8] sm:$0xff]
        %v491 = vld [vmem:[%s3 + $0x100] sm:$0xff]
        %v492 = vld [vmem:[%s3 + $0x108] sm:$0xff]
        %v493 = vld [vmem:[%s3 + $0x110] sm:$0xff]
        %v494 = vld [vmem:[%s3 + $0x118] sm:$0xff]
        %v495 = vld [vmem:[%s3 + $0x120] sm:$0xff]
        %v496 = vld [vmem:[%s3 + $0x128] sm:$0xff]
        %v497 = vld [vmem:[%s3 + $0x130] sm:$0xff]
        %v498 = vld [vmem:[%s3 + $0x138] sm:$0xff]
        %v499 = vld [vmem:[%s3 + $0x140] sm:$0xff]
        %v500 = vld [vmem:[%s3 + $0x148] sm:$0xff]
        %v501 = vld [vmem:[%s3 + $0x150] sm:$0xff]
        %v502 = vld [vmem:[%s3 + $0x158] sm:$0xff]
        %v503 = vld [vmem:[%s3 + $0x160] sm:$0xff]
        %v504 = vld [vmem:[%s3 + $0x168] sm:$0xff]
        %v505 = vld [vmem:[%s3 + $0x170] sm:$0xff]
        %v506 = vld [vmem:[%s3 + $0x178] sm:$0xff]
        %v507 = vld [vmem:[%s3 + $0x180] sm:$0xff]
        %v508 = vld [vmem:[%s3 + $0x188] sm:$0xff]
        %v509 = vld [vmem:[%s3 + $0x190] sm:$0xff]
        %v510 = vld [vmem:[%s3 + $0x198] sm:$0xff]
        %v511 = vld [vmem:[%s3 + $0x1a0] sm:$0xff]
        %v512 = vld [vmem:[%s3 + $0x1a8] sm:$0xff]
        %v513 = vld [vmem:[%s3 + $0x1b0] sm:$0xff]
        %v514 = vld [vmem:[%s3 + $0x1b8] sm:$0xff]
        %v515 = vld [vmem:[%s3 + $0x1c0] sm:$0xff]
        %v516 = vld [vmem:[%s3 + $0x1c8] sm:$0xff]
        %v517 = vld [vmem:[%s3 + $0x1d0] sm:$0xff]
        %v518 = vld [vmem:[%s3 + $0x1d8] sm:$0xff]
        %v519 = vld [vmem:[%s3 + $0x1e0] sm:$0xff]
        %v520 = vld [vmem:[%s3 + $0x1e8] sm:$0xff]
        %v521 = vld [vmem:[%s3 + $0x1f0] sm:$0xff]
        %v522 = vld [vmem:[%s3 + $0x1f8] sm:$0xff]
        %v523 = vld [vmem:[%s1] sm:$0xff]
        %v524 = vld [vmem:[%s1 + $0x8] sm:$0xff]
        %v525 = vld [vmem:[%s1 + $0x10] sm:$0xff]
        %v526 = vld [vmem:[%s1 + $0x18] sm:$0xff]
        %v527 = vld [vmem:[%s1 + $0x20] sm:$0xff]
        %v528 = vld [vmem:[%s1 + $0x28] sm:$0xff]
        %529 = vmatprep.subr.mxu0 0.0
        %530 = vmatpush1.msra.mxu0 %v459
        %531 = vmatprep.subr.mxu0 0.0
        %532 = vmatpush1.msra.mxu0 %v460
        %533 = vmatprep.subr.mxu0 0.0
        %534 = vmatpush1.msra.mxu0 %v461
        %535 = vmatprep.subr.mxu0 0.0
        %536 = vmatpush1.msra.mxu0 %v462
        %537 = vmatprep.subr.mxu0 0.0
        %538 = vmatpush1.msra.mxu0 %v463
        %539 = vmatprep.subr.mxu0 0.0
        %540 = vmatpush1.msra.mxu0 %v464
        %541 = vmatprep.subr.mxu0 0.0
        %542 = vmatpush1.msra.mxu0 %v465
        %543 = vmatprep.subr.mxu0 0.0
        %544 = vmatpush1.msra.mxu0 %v466
        %545 = vmatprep.subr.mxu0 0.0
        %546 = vmatpush1.msra.mxu0 %v467
        %547 = vmatprep.subr.mxu0 0.0
        %548 = vmatpush1.msra.mxu0 %v468
        %549 = vmatprep.subr.mxu0 0.0
        %550 = vmatpush1.msra.mxu0 %v469
        %551 = vmatprep.subr.mxu0 0.0
        %552 = vmatpush1.msra.mxu0 %v470
        %553 = vmatprep.subr.mxu0 0.0
        %554 = vmatpush1.msra.mxu0 %v471
        %555 = vmatprep.subr.mxu0 0.0
        %556 = vmatpush1.msra.mxu0 %v472
        %557 = vmatprep.subr.mxu0 0.0
        %558 = vmatpush1.msra.mxu0 %v473
        %559 = vmatprep.subr.mxu0 0.0
        %560 = vmatpush1.msra.mxu0 %v474
        %561 = vmatprep.subr.mxu0 0.0
        %562 = vmatpush1.msra.mxu0 %v475
        %563 = vmatprep.subr.mxu0 0.0
        %564 = vmatpush1.msra.mxu0 %v476
        %565 = vmatprep.subr.mxu0 0.0
        %566 = vmatpush1.msra.mxu0 %v477
        %567 = vmatprep.subr.mxu0 0.0
        %568 = vmatpush1.msra.mxu0 %v478
        %569 = vmatprep.subr.mxu0 0.0
        %570 = vmatpush1.msra.mxu0 %v479
        %571 = vmatprep.subr.mxu0 0.0
        %572 = vmatpush1.msra.mxu0 %v480
        %573 = vmatprep.subr.mxu0 0.0
        %574 = vmatpush1.msra.mxu0 %v481
        %575 = vmatprep.subr.mxu0 0.0
        %576 = vmatpush1.msra.mxu0 %v482
        %577 = vmatprep.subr.mxu0 0.0
        %578 = vmatpush1.msra.mxu0 %v483
        %579 = vmatprep.subr.mxu0 0.0
        %580 = vmatpush1.msra.mxu0 %v484
        %581 = vmatprep.subr.mxu0 0.0
        %582 = vmatpush1.msra.mxu0 %v485
        %583 = vmatprep.subr.mxu0 0.0
        %584 = vmatpush1.msra.mxu0 %v486
        %585 = vmatprep.subr.mxu0 0.0
        %586 = vmatpush1.msra.mxu0 %v487
        %587 = vmatprep.subr.mxu0 0.0
        %588 = vmatpush1.msra.mxu0 %v488
        %589 = vmatprep.subr.mxu0 0.0
        %590 = vmatpush1.msra.mxu0 %v489
        %591 = vmatprep.subr.mxu0 0.0
        %592 = vmatpush1.msra.mxu0 %v490
        %593 = vmatprep.mubr.f32.mxu0 %v436
        %594 = vmatmul.mubr.f32.gmra.mrb[0].mxu0 %v435
        %v595 = vpop.f32.mrb[0].mxu0
        %v596 = vadd.f32 %v523, %v595
        %v597 = vpop.f32.mrb[0].mxu0
        %598 = vmatprep.mubr.f32.mxu0 %v440
        %599 = vmatmul.mubr.f32.gmra.mrb[0].mxu0 %v439
        %v600 = vpop.f32.mrb[0].mxu0
        %v601 = vadd.f32 %v524, %v600
        %v602 = vpop.f32.mrb[0].mxu0
        %603 = vmatprep.mubr.f32.mxu0 %v444
        %604 = vmatmul.mubr.f32.gmra.mrb[0].mxu0 %v443
        %v605 = vpop.f32.mrb[0].mxu0
        %v606 = vadd.f32 %v525, %v605
        %v607 = vpop.f32.mrb[0].mxu0
        %608 = vmatprep.mubr.f32.mxu0 %v448
        %609 = vmatmul.mubr.f32.gmra.mrb[0].mxu0 %v447
        %v610 = vpop.f32.mrb[0].mxu0
        %v611 = vadd.f32 %v526, %v610
        %v612 = vpop.f32.mrb[0].mxu0
        %613 = vmatprep.mubr.f32.mxu0 %v452
        %614 = vmatmul.mubr.f32.gmra.mrb[0].mxu0 %v451
        %v615 = vpop.f32.mrb[0].mxu0
        %v616 = vadd.f32 %v527, %v615
        %v617 = vpop.f32.mrb[0].mxu0
        %618 = vmatprep.mubr.f32.mxu0 %v456
        %619 = vmatmul.mubr.f32.gmra.mrb[0].mxu0 %v455
        %v620 = vpop.f32.mrb[0].mxu0
        %v621 = vadd.f32 %v528, %v620
        %v622 = vpop.f32.mrb[0].mxu0
        %623 = vdwg.mxu0
        %624 = vmatprep.subr.mxu0 0.0
        %625 = vmatpush1.msra.mxu0 %v491
        %626 = vmatprep.subr.mxu0 0.0
        %627 = vmatpush1.msra.mxu0 %v492
        %628 = vmatprep.subr.mxu0 0.0
        %629 = vmatpush1.msra.mxu0 %v493
        %630 = vmatprep.subr.mxu0 0.0
        %631 = vmatpush1.msra.mxu0 %v494
        %632 = vmatprep.subr.mxu0 0.0
        %633 = vmatpush1.msra.mxu0 %v495
        %634 = vmatprep.subr.mxu0 0.0
        %635 = vmatpush1.msra.mxu0 %v496
        %636 = vmatprep.subr.mxu0 0.0
        %637 = vmatpush1.msra.mxu0 %v497
        %638 = vmatprep.subr.mxu0 0.0
        %639 = vmatpush1.msra.mxu0 %v498
        %640 = vmatprep.subr.mxu0 0.0
        %641 = vmatpush1.msra.mxu0 %v499
        %642 = vmatprep.subr.mxu0 0.0
        %643 = vmatpush1.msra.mxu0 %v500
        %644 = vmatprep.subr.mxu0 0.0
        %645 = vmatpush1.msra.mxu0 %v501
        %646 = vmatprep.subr.mxu0 0.0
        %647 = vmatpush1.msra.mxu0 %v502
        %648 = vmatprep.subr.mxu0 0.0
        %649 = vmatpush1.msra.mxu0 %v503
        %650 = vmatprep.subr.mxu0 0.0
        %651 = vmatpush1.msra.mxu0 %v504
        %652 = vmatprep.subr.mxu0 0.0
        %653 = vmatpush1.msra.mxu0 %v505
        %654 = vmatprep.subr.mxu0 0.0
        %655 = vmatpush1.msra.mxu0 %v506
        %656 = vmatprep.subr.mxu0 0.0
        %657 = vmatpush1.msra.mxu0 %v507
        %658 = vmatprep.subr.mxu0 0.0
        %659 = vmatpush1.msra.mxu0 %v508
        %660 = vmatprep.subr.mxu0 0.0
        %661 = vmatpush1.msra.mxu0 %v509
        %662 = vmatprep.subr.mxu0 0.0
        %663 = vmatpush1.msra.mxu0 %v510
        %664 = vmatprep.subr.mxu0 0.0
        %665 = vmatpush1.msra.mxu0 %v511
        %666 = vmatprep.subr.mxu0 0.0
        %667 = vmatpush1.msra.mxu0 %v512
        %668 = vmatprep.subr.mxu0 0.0
        %669 = vmatpush1.msra.mxu0 %v513
        %670 = vmatprep.subr.mxu0 0.0
        %671 = vmatpush1.msra.mxu0 %v514
        %672 = vmatprep.subr.mxu0 0.0
        %673 = vmatpush1.msra.mxu0 %v515
        %674 = vmatprep.subr.mxu0 0.0
        %675 = vmatpush1.msra.mxu0 %v516
        %676 = vmatprep.subr.mxu0 0.0
        %677 = vmatpush1.msra.mxu0 %v517
        %678 = vmatprep.subr.mxu0 0.0
        %679 = vmatpush1.msra.mxu0 %v518
        %680 = vmatprep.subr.mxu0 0.0
        %681 = vmatpush1.msra.mxu0 %v519
        %682 = vmatprep.subr.mxu0 0.0
        %683 = vmatpush1.msra.mxu0 %v520
        %684 = vmatprep.subr.mxu0 0.0
        %685 = vmatpush1.msra.mxu0 %v521
        %686 = vmatprep.subr.mxu0 0.0
        %687 = vmatpush1.msra.mxu0 %v522
        %688 = vmatprep.mubr.f32.mxu0 %v438
        %689 = vmatmul.mubr.f32.gmra.mrb[0].mxu0 %v437
        %v690 = vpop.f32.mrb[0].mxu0
        %v691 = vadd.f32 %v596, %v690
        %v692 = vpop.f32.mrb[0].mxu0
        %693 = vmatprep.mubr.f32.mxu0 %v442
        %694 = vmatmul.mubr.f32.gmra.mrb[0].mxu0 %v441
        %v695 = vpop.f32.mrb[0].mxu0
        %v696 = vadd.f32 %v601, %v695
        %v697 = vpop.f32.mrb[0].mxu0
        %698 = vmatprep.mubr.f32.mxu0 %v446
        %699 = vmatmul.mubr.f32.gmra.mrb[0].mxu0 %v445
        %v700 = vpop.f32.mrb[0].mxu0
        %v701 = vadd.f32 %v606, %v700
        %v702 = vpop.f32.mrb[0].mxu0
        %703 = vmatprep.mubr.f32.mxu0 %v450
        %704 = vmatmul.mubr.f32.gmra.mrb[0].mxu0 %v449
        %v705 = vpop.f32.mrb[0].mxu0
        %v706 = vadd.f32 %v611, %v705
        %v707 = vpop.f32.mrb[0].mxu0
        %708 = vmatprep.mubr.f32.mxu0 %v454
        %709 = vmatmul.mubr.f32.gmra.mrb[0].mxu0 %v453
        %v710 = vpop.f32.mrb[0].mxu0
        %v711 = vadd.f32 %v616, %v710
        %v712 = vpop.f32.mrb[0].mxu0
        %713 = vmatprep.mubr.f32.mxu0 %v458
        %714 = vmatmul.mubr.f32.gmra.mrb[0].mxu0 %v457
        %v715 = vpop.f32.mrb[0].mxu0
        %v716 = vadd.f32 %v621, %v715
        %v717 = vpop.f32.mrb[0].mxu0
        %718 = vdwg.mxu0
        %v719 = vld [vmem:[%s2] sm:$0xff]
        %v720 = vld [vmem:[%s2 + $0x8] sm:$0xff]
        %v721 = vld [vmem:[%s2 + $0x10] sm:$0xff]
        %v722 = vld [vmem:[%s2 + $0x18] sm:$0xff]
        %v723 = vld [vmem:[%s2 + $0x20] sm:$0xff]
        %v724 = vld [vmem:[%s2 + $0x28] sm:$0xff]
        %v725 = vld [vmem:[%s4] sm:$0x1]
        %v726 = vld [vmem:[%s4 + $0x1] sm:$0x1]
        %v727 = vld [vmem:[%s4 + $0x2] sm:$0x1]
        %v728 = vld [vmem:[%s4 + $0x3] sm:$0x1]
        %v729 = vld [vmem:[%s4 + $0x4] sm:$0x1]
        %v730 = vld [vmem:[%s4 + $0x5] sm:$0x1]
        %v731 = vld [vmem:[%s4 + $0x6] sm:$0x1]
        %v732 = vld [vmem:[%s5] sm:$0xff]
        %v733 = vld [vmem:[%s5 + $0x8] sm:$0xff]
        %v734 = vld [vmem:[%s5 + $0x10] sm:$0xff]
        %v735 = vld [vmem:[%s5 + $0x18] sm:$0xff]
        %v736 = vld [vmem:[%s6] sm:$0xff]
        %v737 = vld [vmem:[%s6 + $0x8] sm:$0xff]
        %v738 = vld [vmem:[%s6 + $0x10] sm:$0xff]
        %v739 = vld [vmem:[%s6 + $0x18] sm:$0xff]
        %vm740 = vcmask 261120
        %v741 = vsel %vm740, %v691, 0.0
        %742 = vadd.xlane.f32.xlu0 %v741
        %v743 = vpop.xlane.xlu0 %742
        %v744 = vsel %vm740, %v696, 0.0
        %745 = vadd.xlane.f32.xlu0 %v744
        %v746 = vpop.xlane.xlu0 %745
        %v747 = vsel %vm740, %v701, 0.0
        %748 = vadd.xlane.f32.xlu0 %v747
        %v749 = vpop.xlane.xlu0 %748
        %v750 = vsel %vm740, %v706, 0.0
        %751 = vadd.xlane.f32.xlu0 %v750
        %v752 = vpop.xlane.xlu0 %751
        %v753 = vsel %vm740, %v711, 0.0
        %754 = vadd.xlane.f32.xlu0 %v753
        %v755 = vpop.xlane.xlu0 %754
        %v756 = vsel %vm740, %v716, 0.0
        %757 = vadd.xlane.f32.xlu0 %v756
        %v758 = vpop.xlane.xlu0 %757
        %v759 = vrcp.pop 32.0
        %v760 = vmul.f32 %v743, %v759
        %v761 = vmul.f32 %v746, %v759
        %v762 = vmul.f32 %v749, %v759
        %v763 = vmul.f32 %v752, %v759
        %v764 = vmul.f32 %v755, %v759
        %v765 = vmul.f32 %v758, %v759
        %v766 = vsub.f32 %v691, %v760
        %v767 = vsub.f32 %v696, %v761
        %v768 = vsub.f32 %v701, %v762
        %v769 = vsub.f32 %v706, %v763
        %v770 = vsub.f32 %v711, %v764
        %v771 = vsub.f32 %v716, %v765
        %v772 = vmul.f32 %v766, %v766
        %v773 = vmul.f32 %v767, %v767
        %v774 = vmul.f32 %v768, %v768
        %v775 = vmul.f32 %v769, %v769
        %v776 = vmul.f32 %v770, %v770
        %v777 = vmul.f32 %v771, %v771
        %v778 = vsel %vm740, %v772, 0.0
        %779 = vadd.xlane.f32.xlu0 %v778
        %v780 = vpop.xlane.xlu0 %779
        %v781 = vsel %vm740, %v773, 0.0
        %782 = vadd.xlane.f32.xlu0 %v781
        %v783 = vpop.xlane.xlu0 %782
        %v784 = vsel %vm740, %v774, 0.0
        %785 = vadd.xlane.f32.xlu0 %v784
        %v786 = vpop.xlane.xlu0 %785
        %v787 = vsel %vm740, %v775, 0.0
        %788 = vadd.xlane.f32.xlu0 %v787
        %v789 = vpop.xlane.xlu0 %788
        %v790 = vsel %vm740, %v776, 0.0
        %791 = vadd.xlane.f32.xlu0 %v790
        %v792 = vpop.xlane.xlu0 %791
        %v793 = vsel %vm740, %v777, 0.0
        %794 = vadd.xlane.f32.xlu0 %v793
        %v795 = vpop.xlane.xlu0 %794
        %v796 = vmul.f32 %v780, %v759
        %v797 = vmul.f32 %v783, %v759
        %v798 = vmul.f32 %v786, %v759
        %v799 = vmul.f32 %v789, %v759
        %v800 = vmul.f32 %v792, %v759
        %v801 = vmul.f32 %v795, %v759
        %v802 = vadd.f32 %v796, 1e-05
        %v803 = vadd.f32 %v797, 1e-05
        %v804 = vadd.f32 %v798, 1e-05
        %v805 = vadd.f32 %v799, 1e-05
        %v806 = vadd.f32 %v800, 1e-05
        %v807 = vadd.f32 %v801, 1e-05
        %v808 = vrsqrt.pop %v802
        %v809 = vrsqrt.pop %v803
        %v810 = vrsqrt.pop %v804
        %v811 = vrsqrt.pop %v805
        %v812 = vrsqrt.pop %v806
        %v813 = vrsqrt.pop %v807
        %v814 = vmul.f32 %v766, %v808
        %v815 = vmul.f32 %v767, %v809
        %v816 = vmul.f32 %v768, %v810
        %v817 = vmul.f32 %v769, %v811
        %v818 = vmul.f32 %v770, %v812
        %v819 = vmul.f32 %v771, %v813
        %v820 = vlaneseq
        %v821 = vshrl.u32 %v820, 7
        %v822 = vsub.s32 0, %v821
        %v823 = vrot.slane %v725, %v822
        %v824 = vmul.f32 %v814, %v823
        %v825 = vmul.f32 %v815, %v823
        %v826 = vmul.f32 %v816, %v823
        %v827 = vmul.f32 %v817, %v823
        %v828 = vmul.f32 %v818, %v823
        %v829 = vmul.f32 %v819, %v823
        %v830 = vlaneseq
        %v831 = vshrl.u32 %v830, 7
        %v832 = vsub.s32 0, %v831
        %v833 = vrot.slane %v726, %v832
        %v834 = vadd.f32 %v824, %v833
        %v835 = vadd.f32 %v825, %v833
        %v836 = vadd.f32 %v826, %v833
        %v837 = vadd.f32 %v827, %v833
        %v838 = vadd.f32 %v828, %v833
        %v839 = vadd.f32 %v829, %v833
        %v841 = vsel %vm740, %v834, 0
        %v844 = vsel %vm740, %v835, 0
        %v847 = vsel %vm740, %v836, 0
        %v850 = vsel %vm740, %v837, 0
        %v853 = vsel %vm740, %v838, 0
        %v856 = vsel %vm740, %v839, 0
        %858 = vmatprep.subr.mxu0 0.0
        %859 = vmatpush1.msra.mxu0 %v732
        %860 = vmatprep.subr.mxu0 0.0
        %861 = vmatpush1.msra.mxu0 %v733
        %862 = vmatprep.subr.mxu0 0.0
        %863 = vmatpush1.msra.mxu0 %v734
        %864 = vmatprep.subr.mxu0 0.0
        %865 = vmatpush1.msra.mxu0 %v735
        %866 = vmatprep.subr.mxu0 0.0
        %867 = vmatpush1.msra.mxu0 0.0
        %868 = vmatprep.subr.mxu0 0.0
        %869 = vmatpush1.msra.mxu0 0.0
        %870 = vmatprep.subr.mxu0 0.0
        %871 = vmatpush1.msra.mxu0 0.0
        %872 = vmatprep.subr.mxu0 0.0
        %873 = vmatpush1.msra.mxu0 0.0
        %874 = vmatprep.subr.mxu0 0.0
        %875 = vmatpush1.msra.mxu0 0.0
        %876 = vmatprep.subr.mxu0 0.0
        %877 = vmatpush1.msra.mxu0 0.0
        %878 = vmatprep.subr.mxu0 0.0
        %879 = vmatpush1.msra.mxu0 0.0
        %880 = vmatprep.subr.mxu0 0.0
        %881 = vmatpush1.msra.mxu0 0.0
        %882 = vmatprep.subr.mxu0 0.0
        %883 = vmatpush1.msra.mxu0 0.0
        %884 = vmatprep.subr.mxu0 0.0
        %885 = vmatpush1.msra.mxu0 0.0
        %886 = vmatprep.subr.mxu0 0.0
        %887 = vmatpush1.msra.mxu0 0.0
        %888 = vmatprep.subr.mxu0 0.0
        %889 = vmatpush1.msra.mxu0 0.0
        %890 = vmatprep.subr.mxu0 0.0
        %891 = vmatpush1.msra.mxu0 0.0
        %892 = vmatprep.subr.mxu0 0.0
        %893 = vmatpush1.msra.mxu0 0.0
        %894 = vmatprep.subr.mxu0 0.0
        %895 = vmatpush1.msra.mxu0 0.0
        %896 = vmatprep.subr.mxu0 0.0
        %897 = vmatpush1.msra.mxu0 0.0
        %898 = vmatprep.subr.mxu0 0.0
        %899 = vmatpush1.msra.mxu0 0.0
        %900 = vmatprep.subr.mxu0 0.0
        %901 = vmatpush1.msra.mxu0 0.0
        %902 = vmatprep.subr.mxu0 0.0
        %903 = vmatpush1.msra.mxu0 0.0
        %904 = vmatprep.subr.mxu0 0.0
        %905 = vmatpush1.msra.mxu0 0.0
        %906 = vmatprep.subr.mxu0 0.0
        %907 = vmatpush1.msra.mxu0 0.0
        %908 = vmatprep.subr.mxu0 0.0
        %909 = vmatpush1.msra.mxu0 0.0
        %910 = vmatprep.subr.mxu0 0.0
        %911 = vmatpush1.msra.mxu0 0.0
        %912 = vmatprep.subr.mxu0 0.0
        %913 = vmatpush1.msra.mxu0 0.0
        %914 = vmatprep.subr.mxu0 0.0
        %915 = vmatpush1.msra.mxu0 0.0
        %916 = vmatprep.subr.mxu0 0.0
        %917 = vmatpush1.msra.mxu0 0.0
        %918 = vmatprep.subr.mxu0 0.0
        %919 = vmatpush1.msra.mxu0 0.0
        %920 = vmatprep.subr.mxu0 0.0
        %921 = vmatpush1.msra.mxu0 0.0
        %922 = vmatprep.mubr.f32.mxu0 0.0
        %923 = vmatmul.mubr.f32.gmra.mrb[0].mxu0 %v841
        %v924 = vpop.f32.mrb[0].mxu0
        %v925 = vadd.f32 0.0, %v924
        %v926 = vpop.f32.mrb[0].mxu0
        %927 = vmatprep.mubr.f32.mxu0 0.0
        %928 = vmatmul.mubr.f32.gmra.mrb[0].mxu0 %v844
        %v929 = vpop.f32.mrb[0].mxu0
        %v930 = vadd.f32 0.0, %v929
        %v931 = vpop.f32.mrb[0].mxu0
        %932 = vmatprep.mubr.f32.mxu0 0.0
        %933 = vmatmul.mubr.f32.gmra.mrb[0].mxu0 %v847
        %v934 = vpop.f32.mrb[0].mxu0
        %v935 = vadd.f32 0.0, %v934
        %v936 = vpop.f32.mrb[0].mxu0
        %937 = vmatprep.mubr.f32.mxu0 0.0
        %938 = vmatmul.mubr.f32.gmra.mrb[0].mxu0 %v850
        %v939 = vpop.f32.mrb[0].mxu0
        %v940 = vadd.f32 0.0, %v939
        %v941 = vpop.f32.mrb[0].mxu0
        %942 = vmatprep.mubr.f32.mxu0 0.0
        %943 = vmatmul.mubr.f32.gmra.mrb[0].mxu0 %v853
        %v944 = vpop.f32.mrb[0].mxu0
        %v945 = vadd.f32 0.0, %v944
        %v946 = vpop.f32.mrb[0].mxu0
        %947 = vmatprep.mubr.f32.mxu0 0.0
        %948 = vmatmul.mubr.f32.gmra.mrb[0].mxu0 %v856
        %v949 = vpop.f32.mrb[0].mxu0
        %v950 = vadd.f32 0.0, %v949
        %v951 = vpop.f32.mrb[0].mxu0
        %952 = vdwg.mxu0
        %959 = vrot.lane.b32.xlu0 %v925, 96
        %v960 = vpop.permute.xlu0 %959
        %961 = vrot.lane.b32.xlu0 %v930, 96
        %v962 = vpop.permute.xlu0 %961
        %963 = vrot.lane.b32.xlu0 %v935, 96
        %v964 = vpop.permute.xlu0 %963
        %965 = vrot.lane.b32.xlu0 %v940, 96
        %v966 = vpop.permute.xlu0 %965
        %967 = vrot.lane.b32.xlu0 %v945, 96
        %v968 = vpop.permute.xlu0 %967
        %969 = vrot.lane.b32.xlu0 %v950, 96
        %v970 = vpop.permute.xlu0 %969
        %vm971 = vcmask 64512
        %v972 = vsel %vm971, %v925, 0
        %v974 = vsel %vm971, %v930, 0
        %v976 = vsel %vm971, %v935, 0
        %v978 = vsel %vm971, %v940, 0
        %v980 = vsel %vm971, %v945, 0
        %v982 = vsel %vm971, %v950, 0
        %v984 = vsel %vm971, %v960, 0
        %v986 = vsel %vm971, %v962, 0
        %v988 = vsel %vm971, %v964, 0
        %v990 = vsel %vm971, %v966, 0
        %v992 = vsel %vm971, %v968, 0
        %v994 = vsel %vm971, %v970, 0
        %996 = vmatprep.subr.mxu0 0.0
        %997 = vmatpush1.xpose.msra.mxu0 %v984
        %998 = vmatprep.subr.mxu0 0.0
        %999 = vmatpush1.xpose.msra.mxu0 %v986
        %1000 = vmatprep.subr.mxu0 0.0
        %1001 = vmatpush1.xpose.msra.mxu0 %v988
        %1002 = vmatprep.subr.mxu0 0.0
        %1003 = vmatpush1.xpose.msra.mxu0 %v990
        %1004 = vmatprep.subr.mxu0 0.0
        %1005 = vmatpush1.xpose.msra.mxu0 %v992
        %1006 = vmatprep.subr.mxu0 0.0
        %1007 = vmatpush1.xpose.msra.mxu0 %v994
        %1008 = vmatprep.subr.mxu0 0.0
        %1009 = vmatpush1.xpose.msra.mxu0 0.0
        %1010 = vmatprep.subr.mxu0 0.0
        %1011 = vmatpush1.xpose.msra.mxu0 0.0
        %1012 = vmatprep.subr.mxu0 0.0
        %1013 = vmatpush1.xpose.msra.mxu0 0.0
        %1014 = vmatprep.subr.mxu0 0.0
        %1015 = vmatpush1.xpose.msra.mxu0 0.0
        %1016 = vmatprep.subr.mxu0 0.0
        %1017 = vmatpush1.xpose.msra.mxu0 0.0
        %1018 = vmatprep.subr.mxu0 0.0
        %1019 = vmatpush1.xpose.msra.mxu0 0.0
        %1020 = vmatprep.subr.mxu0 0.0
        %1021 = vmatpush1.xpose.msra.mxu0 0.0
        %1022 = vmatprep.subr.mxu0 0.0
        %1023 = vmatpush1.xpose.msra.mxu0 0.0
        %1024 = vmatprep.subr.mxu0 0.0
        %1025 = vmatpush1.xpose.msra.mxu0 0.0
        %1026 = vmatprep.subr.mxu0 0.0
        %1027 = vmatpush1.xpose.msra.mxu0 0.0
        %1028 = vmatprep.subr.mxu0 0.0
        %1029 = vmatpush1.xpose.msra.mxu0 0.0
        %1030 = vmatprep.subr.mxu0 0.0
        %1031 = vmatpush1.xpose.msra.mxu0 0.0
        %1032 = vmatprep.subr.mxu0 0.0
        %1033 = vmatpush1.xpose.msra.mxu0 0.0
        %1034 = vmatprep.subr.mxu0 0.0
        %1035 = vmatpush1.xpose.msra.mxu0 0.0
        %1036 = vmatprep.subr.mxu0 0.0
        %1037 = vmatpush1.xpose.msra.mxu0 0.0
        %1038 = vmatprep.subr.mxu0 0.0
        %1039 = vmatpush1.xpose.msra.mxu0 0.0
        %1040 = vmatprep.subr.mxu0 0.0
        %1041 = vmatpush1.xpose.msra.mxu0 0.0
        %1042 = vmatprep.subr.mxu0 0.0
        %1043 = vmatpush1.xpose.msra.mxu0 0.0
        %1044 = vmatprep.subr.mxu0 0.0
        %1045 = vmatpush1.xpose.msra.mxu0 0.0
        %1046 = vmatprep.subr.mxu0 0.0
        %1047 = vmatpush1.xpose.msra.mxu0 0.0
        %1048 = vmatprep.subr.mxu0 0.0
        %1049 = vmatpush1.xpose.msra.mxu0 0.0
        %1050 = vmatprep.subr.mxu0 0.0
        %1051 = vmatpush1.xpose.msra.mxu0 0.0
        %1052 = vmatprep.subr.mxu0 0.0
        %1053 = vmatpush1.xpose.msra.mxu0 0.0
        %1054 = vmatprep.subr.mxu0 0.0
        %1055 = vmatpush1.xpose.msra.mxu0 0.0
        %1056 = vmatprep.subr.mxu0 0.0
        %1057 = vmatpush1.xpose.msra.mxu0 0.0
        %1058 = vmatprep.subr.mxu0 0.0
        %1059 = vmatpush1.xpose.msra.mxu0 0.0
        %1060 = vmatprep.mubr.f32.mxu0 0.0
        %1061 = vmatmul.mubr.f32.gmra.mrb[0].mxu0 %v972
        %v1062 = vpop.f32.mrb[0].mxu0
        %v1063 = vadd.f32 %v719, %v1062
        %v1064 = vpop.f32.mrb[0].mxu0
        %1065 = vmatprep.mubr.f32.mxu0 0.0
        %1066 = vmatmul.mubr.f32.gmra.mrb[0].mxu0 %v974
        %v1067 = vpop.f32.mrb[0].mxu0
        %v1068 = vadd.f32 %v720, %v1067
        %v1069 = vpop.f32.mrb[0].mxu0
        %1070 = vmatprep.mubr.f32.mxu0 0.0
        %1071 = vmatmul.mubr.f32.gmra.mrb[0].mxu0 %v976
        %v1072 = vpop.f32.mrb[0].mxu0
        %v1073 = vadd.f32 %v721, %v1072
        %v1074 = vpop.f32.mrb[0].mxu0
        %1075 = vmatprep.mubr.f32.mxu0 0.0
        %1076 = vmatmul.mubr.f32.gmra.mrb[0].mxu0 %v978
        %v1077 = vpop.f32.mrb[0].mxu0
        %v1078 = vadd.f32 %v722, %v1077
        %v1079 = vpop.f32.mrb[0].mxu0
        %1080 = vmatprep.mubr.f32.mxu0 0.0
        %1081 = vmatmul.mubr.f32.gmra.mrb[0].mxu0 %v980
        %v1082 = vpop.f32.mrb[0].mxu0
        %v1083 = vadd.f32 %v723, %v1082
        %v1084 = vpop.f32.mrb[0].mxu0
        %1085 = vmatprep.mubr.f32.mxu0 0.0
        %1086 = vmatmul.mubr.f32.gmra.mrb[0].mxu0 %v982
        %v1087 = vpop.f32.mrb[0].mxu0
        %v1088 = vadd.f32 %v724, %v1087
        %v1089 = vpop.f32.mrb[0].mxu0
        %1090 = vdwg.mxu0
        %vm1091 = vcmask 392192
        %v1092 = vsel %vm1091, %v1063, -inf
        %1093 = vmax.xlane.f32.xlu0 %v1092
        %v1094 = vpop.xlane.xlu0 %1093
        %v1095 = vsel %vm1091, %v1068, -inf
        %1096 = vmax.xlane.f32.xlu0 %v1095
        %v1097 = vpop.xlane.xlu0 %1096
        %v1098 = vsel %vm1091, %v1073, -inf
        %1099 = vmax.xlane.f32.xlu0 %v1098
        %v1100 = vpop.xlane.xlu0 %1099
        %v1101 = vsel %vm1091, %v1078, -inf
        %1102 = vmax.xlane.f32.xlu0 %v1101
        %v1103 = vpop.xlane.xlu0 %1102
        %v1104 = vsel %vm1091, %v1083, -inf
        %1105 = vmax.xlane.f32.xlu0 %v1104
        %v1106 = vpop.xlane.xlu0 %1105
        %v1107 = vsel %vm1091, %v1088, -inf
        %1108 = vmax.xlane.f32.xlu0 %v1107
        %v1109 = vpop.xlane.xlu0 %1108
        %v1110 = vsub.f32 %v1063, %v1094
        %v1111 = vsub.f32 %v1068, %v1097
        %v1112 = vsub.f32 %v1073, %v1100
        %v1113 = vsub.f32 %v1078, %v1103
        %v1114 = vsub.f32 %v1083, %v1106
        %v1115 = vsub.f32 %v1088, %v1109
        %v1116 = vmul.f32 %v1110, 1.442695
        %v1117 = vpow.pop %v1116
        %v1118 = vmul.f32 %v1111, 1.442695
        %v1119 = vpow.pop %v1118
        %v1120 = vmul.f32 %v1112, 1.442695
        %v1121 = vpow.pop %v1120
        %v1122 = vmul.f32 %v1113, 1.442695
        %v1123 = vpow.pop %v1122
        %v1124 = vmul.f32 %v1114, 1.442695
        %v1125 = vpow.pop %v1124
        %v1126 = vmul.f32 %v1115, 1.442695
        %v1127 = vpow.pop %v1126
        %v1128 = vsel %vm1091, %v1117, 0.0
        %1129 = vadd.xlane.f32.xlu0 %v1128
        %v1130 = vpop.xlane.xlu0 %1129
        %v1131 = vsel %vm1091, %v1119, 0.0
        %1132 = vadd.xlane.f32.xlu0 %v1131
        %v1133 = vpop.xlane.xlu0 %1132
        %v1134 = vsel %vm1091, %v1121, 0.0
        %1135 = vadd.xlane.f32.xlu0 %v1134
        %v1136 = vpop.xlane.xlu0 %1135
        %v1137 = vsel %vm1091, %v1123, 0.0
        %1138 = vadd.xlane.f32.xlu0 %v1137
        %v1139 = vpop.xlane.xlu0 %1138
        %v1140 = vsel %vm1091, %v1125, 0.0
        %1141 = vadd.xlane.f32.xlu0 %v1140
        %v1142 = vpop.xlane.xlu0 %1141
        %v1143 = vsel %vm1091, %v1127, 0.0
        %1144 = vadd.xlane.f32.xlu0 %v1143
        %v1145 = vpop.xlane.xlu0 %1144
        %v1146 = vrcp.pop %v1130
        %v1147 = vrcp.pop %v1133
        %v1148 = vrcp.pop %v1136
        %v1149 = vrcp.pop %v1139
        %v1150 = vrcp.pop %v1142
        %v1151 = vrcp.pop %v1145
        %1152 = vrot.lane.b32.xlu0 %v925, 64
        %v1153 = vpop.permute.xlu0 %1152
        %1154 = vrot.lane.b32.xlu0 %v930, 64
        %v1155 = vpop.permute.xlu0 %1154
        %1156 = vrot.lane.b32.xlu0 %v935, 64
        %v1157 = vpop.permute.xlu0 %1156
        %1158 = vrot.lane.b32.xlu0 %v940, 64
        %v1159 = vpop.permute.xlu0 %1158
        %1160 = vrot.lane.b32.xlu0 %v945, 64
        %v1161 = vpop.permute.xlu0 %1160
        %1162 = vrot.lane.b32.xlu0 %v950, 64
        %v1163 = vpop.permute.xlu0 %1162
        %v1171 = vsel %vm1091, %v1117, 0
        %v1174 = vsel %vm1091, %v1119, 0
        %v1177 = vsel %vm1091, %v1121, 0
        %v1180 = vsel %vm1091, %v1123, 0
        %v1183 = vsel %vm1091, %v1125, 0
        %v1186 = vsel %vm1091, %v1127, 0
        %1188 = vmatprep.subr.mxu0 0.0
        %1189 = vmatpush1.msra.mxu0 %v1153
        %1190 = vmatprep.subr.mxu0 0.0
        %1191 = vmatpush1.msra.mxu0 %v1155
        %1192 = vmatprep.subr.mxu0 0.0
        %1193 = vmatpush1.msra.mxu0 %v1157
        %1194 = vmatprep.subr.mxu0 0.0
        %1195 = vmatpush1.msra.mxu0 %v1159
        %1196 = vmatprep.subr.mxu0 0.0
        %1197 = vmatpush1.msra.mxu0 %v1161
        %1198 = vmatprep.subr.mxu0 0.0
        %1199 = vmatpush1.msra.mxu0 %v1163
        %1200 = vmatprep.subr.mxu0 0.0
        %1201 = vmatpush1.msra.mxu0 0.0
        %1202 = vmatprep.subr.mxu0 0.0
        %1203 = vmatpush1.msra.mxu0 0.0
        %1204 = vmatprep.subr.mxu0 0.0
        %1205 = vmatpush1.msra.mxu0 0.0
        %1206 = vmatprep.subr.mxu0 0.0
        %1207 = vmatpush1.msra.mxu0 0.0
        %1208 = vmatprep.subr.mxu0 0.0
        %1209 = vmatpush1.msra.mxu0 0.0
        %1210 = vmatprep.subr.mxu0 0.0
        %1211 = vmatpush1.msra.mxu0 0.0
        %1212 = vmatprep.subr.mxu0 0.0
        %1213 = vmatpush1.msra.mxu0 0.0
        %1214 = vmatprep.subr.mxu0 0.0
        %1215 = vmatpush1.msra.mxu0 0.0
        %1216 = vmatprep.subr.mxu0 0.0
        %1217 = vmatpush1.msra.mxu0 0.0
        %1218 = vmatprep.subr.mxu0 0.0
        %1219 = vmatpush1.msra.mxu0 0.0
        %1220 = vmatprep.subr.mxu0 0.0
        %1221 = vmatpush1.msra.mxu0 0.0
        %1222 = vmatprep.subr.mxu0 0.0
        %1223 = vmatpush1.msra.mxu0 0.0
        %1224 = vmatprep.subr.mxu0 0.0
        %1225 = vmatpush1.msra.mxu0 0.0
        %1226 = vmatprep.subr.mxu0 0.0
        %1227 = vmatpush1.msra.mxu0 0.0
        %1228 = vmatprep.subr.mxu0 0.0
        %1229 = vmatpush1.msra.mxu0 0.0
        %1230 = vmatprep.subr.mxu0 0.0
        %1231 = vmatpush1.msra.mxu0 0.0
        %1232 = vmatprep.subr.mxu0 0.0
        %1233 = vmatpush1.msra.mxu0 0.0
        %1234 = vmatprep.subr.mxu0 0.0
        %1235 = vmatpush1.msra.mxu0 0.0
        %1236 = vmatprep.subr.mxu0 0.0
        %1237 = vmatpush1.msra.mxu0 0.0
        %1238 = vmatprep.subr.mxu0 0.0
        %1239 = vmatpush1.msra.mxu0 0.0
        %1240 = vmatprep.subr.mxu0 0.0
        %1241 = vmatpush1.msra.mxu0 0.0
        %1242 = vmatprep.subr.mxu0 0.0
        %1243 = vmatpush1.msra.mxu0 0.0
        %1244 = vmatprep.subr.mxu0 0.0
        %1245 = vmatpush1.msra.mxu0 0.0
        %1246 = vmatprep.subr.mxu0 0.0
        %1247 = vmatpush1.msra.mxu0 0.0
        %1248 = vmatprep.subr.mxu0 0.0
        %1249 = vmatpush1.msra.mxu0 0.0
        %1250 = vmatprep.subr.mxu0 0.0
        %1251 = vmatpush1.msra.mxu0 0.0
        %1252 = vmatprep.mubr.f32.mxu0 0.0
        %1253 = vmatmul.mubr.f32.gmra.mrb[0].mxu0 %v1171
        %v1254 = vpop.f32.mrb[0].mxu0
        %v1255 = vadd.f32 0.0, %v1254
        %v1256 = vpop.f32.mrb[0].mxu0
        %1257 = vmatprep.mubr.f32.mxu0 0.0
        %1258 = vmatmul.mubr.f32.gmra.mrb[0].mxu0 %v1174
        %v1259 = vpop.f32.mrb[0].mxu0
        %v1260 = vadd.f32 0.0, %v1259
        %v1261 = vpop.f32.mrb[0].mxu0
        %1262 = vmatprep.mubr.f32.mxu0 0.0
        %1263 = vmatmul.mubr.f32.gmra.mrb[0].mxu0 %v1177
        %v1264 = vpop.f32.mrb[0].mxu0
        %v1265 = vadd.f32 0.0, %v1264
        %v1266 = vpop.f32.mrb[0].mxu0
        %1267 = vmatprep.mubr.f32.mxu0 0.0
        %1268 = vmatmul.mubr.f32.gmra.mrb[0].mxu0 %v1180
        %v1269 = vpop.f32.mrb[0].mxu0
        %v1270 = vadd.f32 0.0, %v1269
        %v1271 = vpop.f32.mrb[0].mxu0
        %1272 = vmatprep.mubr.f32.mxu0 0.0
        %1273 = vmatmul.mubr.f32.gmra.mrb[0].mxu0 %v1183
        %v1274 = vpop.f32.mrb[0].mxu0
        %v1275 = vadd.f32 0.0, %v1274
        %v1276 = vpop.f32.mrb[0].mxu0
        %1277 = vmatprep.mubr.f32.mxu0 0.0
        %1278 = vmatmul.mubr.f32.gmra.mrb[0].mxu0 %v1186
        %v1279 = vpop.f32.mrb[0].mxu0
        %v1280 = vadd.f32 0.0, %v1279
        %v1281 = vpop.f32.mrb[0].mxu0
        %1282 = vdwg.mxu0
        %v1283 = vmul.f32 %v1255, %v1146
        %v1284 = vmul.f32 %v1260, %v1147
        %v1285 = vmul.f32 %v1265, %v1148
        %v1286 = vmul.f32 %v1270, %v1149
        %v1287 = vmul.f32 %v1275, %v1150
        %v1288 = vmul.f32 %v1280, %v1151
        %1289 = vrot.lane.b32.xlu0 %v925, 120
        %v1290 = vpop.permute.xlu0 %1289
        %1291 = vrot.lane.b32.xlu0 %v930, 120
        %v1292 = vpop.permute.xlu0 %1291
        %1293 = vrot.lane.b32.xlu0 %v935, 120
        %v1294 = vpop.permute.xlu0 %1293
        %1295 = vrot.lane.b32.xlu0 %v940, 120
        %v1296 = vpop.permute.xlu0 %1295
        %1297 = vrot.lane.b32.xlu0 %v945, 120
        %v1298 = vpop.permute.xlu0 %1297
        %1299 = vrot.lane.b32.xlu0 %v950, 120
        %v1300 = vpop.permute.xlu0 %1299
        %1301 = vrot.lane.b32.xlu0 %v925, 88
        %v1302 = vpop.permute.xlu0 %1301
        %1303 = vrot.lane.b32.xlu0 %v930, 88
        %v1304 = vpop.permute.xlu0 %1303
        %1305 = vrot.lane.b32.xlu0 %v935, 88
        %v1306 = vpop.permute.xlu0 %1305
        %1307 = vrot.lane.b32.xlu0 %v940, 88
        %v1308 = vpop.permute.xlu0 %1307
        %1309 = vrot.lane.b32.xlu0 %v945, 88
        %v1310 = vpop.permute.xlu0 %1309
        %1311 = vrot.lane.b32.xlu0 %v950, 88
        %v1312 = vpop.permute.xlu0 %1311
        %v1313 = vsel %vm971, %v1290, 0
        %v1315 = vsel %vm971, %v1292, 0
        %v1317 = vsel %vm971, %v1294, 0
        %v1319 = vsel %vm971, %v1296, 0
        %v1321 = vsel %vm971, %v1298, 0
        %v1323 = vsel %vm971, %v1300, 0
        %v1325 = vsel %vm971, %v1302, 0
        %v1327 = vsel %vm971, %v1304, 0
        %v1329 = vsel %vm971, %v1306, 0
        %v1331 = vsel %vm971, %v1308, 0
        %v1333 = vsel %vm971, %v1310, 0
        %v1335 = vsel %vm971, %v1312, 0
        %1337 = vmatprep.subr.mxu0 0.0
        %1338 = vmatpush1.xpose.msra.mxu0 %v1325
        %1339 = vmatprep.subr.mxu0 0.0
        %1340 = vmatpush1.xpose.msra.mxu0 %v1327
        %1341 = vmatprep.subr.mxu0 0.0
        %1342 = vmatpush1.xpose.msra.mxu0 %v1329
        %1343 = vmatprep.subr.mxu0 0.0
        %1344 = vmatpush1.xpose.msra.mxu0 %v1331
        %1345 = vmatprep.subr.mxu0 0.0
        %1346 = vmatpush1.xpose.msra.mxu0 %v1333
        %1347 = vmatprep.subr.mxu0 0.0
        %1348 = vmatpush1.xpose.msra.mxu0 %v1335
        %1349 = vmatprep.subr.mxu0 0.0
        %1350 = vmatpush1.xpose.msra.mxu0 0.0
        %1351 = vmatprep.subr.mxu0 0.0
        %1352 = vmatpush1.xpose.msra.mxu0 0.0
        %1353 = vmatprep.subr.mxu0 0.0
        %1354 = vmatpush1.xpose.msra.mxu0 0.0
        %1355 = vmatprep.subr.mxu0 0.0
        %1356 = vmatpush1.xpose.msra.mxu0 0.0
        %1357 = vmatprep.subr.mxu0 0.0
        %1358 = vmatpush1.xpose.msra.mxu0 0.0
        %1359 = vmatprep.subr.mxu0 0.0
        %1360 = vmatpush1.xpose.msra.mxu0 0.0
        %1361 = vmatprep.subr.mxu0 0.0
        %1362 = vmatpush1.xpose.msra.mxu0 0.0
        %1363 = vmatprep.subr.mxu0 0.0
        %1364 = vmatpush1.xpose.msra.mxu0 0.0
        %1365 = vmatprep.subr.mxu0 0.0
        %1366 = vmatpush1.xpose.msra.mxu0 0.0
        %1367 = vmatprep.subr.mxu0 0.0
        %1368 = vmatpush1.xpose.msra.mxu0 0.0
        %1369 = vmatprep.subr.mxu0 0.0
        %1370 = vmatpush1.xpose.msra.mxu0 0.0
        %1371 = vmatprep.subr.mxu0 0.0
        %1372 = vmatpush1.xpose.msra.mxu0 0.0
        %1373 = vmatprep.subr.mxu0 0.0
        %1374 = vmatpush1.xpose.msra.mxu0 0.0
        %1375 = vmatprep.subr.mxu0 0.0
        %1376 = vmatpush1.xpose.msra.mxu0 0.0
        %1377 = vmatprep.subr.mxu0 0.0
        %1378 = vmatpush1.xpose.msra.mxu0 0.0
        %1379 = vmatprep.subr.mxu0 0.0
        %1380 = vmatpush1.xpose.msra.mxu0 0.0
        %1381 = vmatprep.subr.mxu0 0.0
        %1382 = vmatpush1.xpose.msra.mxu0 0.0
        %1383 = vmatprep.subr.mxu0 0.0
        %1384 = vmatpush1.xpose.msra.mxu0 0.0
        %1385 = vmatprep.subr.mxu0 0.0
        %1386 = vmatpush1.xpose.msra.mxu0 0.0
        %1387 = vmatprep.subr.mxu0 0.0
        %1388 = vmatpush1.xpose.msra.mxu0 0.0
        %1389 = vmatprep.subr.mxu0 0.0
        %1390 = vmatpush1.xpose.msra.mxu0 0.0
        %1391 = vmatprep.subr.mxu0 0.0
        %1392 = vmatpush1.xpose.msra.mxu0 0.0
        %1393 = vmatprep.subr.mxu0 0.0
        %1394 = vmatpush1.xpose.msra.mxu0 0.0
        %1395 = vmatprep.subr.mxu0 0.0
        %1396 = vmatpush1.xpose.msra.mxu0 0.0
        %1397 = vmatprep.subr.mxu0 0.0
        %1398 = vmatpush1.xpose.msra.mxu0 0.0
        %1399 = vmatprep.subr.mxu0 0.0
        %1400 = vmatpush1.xpose.msra.mxu0 0.0
        %1401 = vmatprep.mubr.f32.mxu0 0.0
        %1402 = vmatmul.mubr.f32.gmra.mrb[0].mxu0 %v1313
        %v1403 = vpop.f32.mrb[0].mxu0
        %v1404 = vadd.f32 %v719, %v1403
        %v1405 = vpop.f32.mrb[0].mxu0
        %1406 = vmatprep.mubr.f32.mxu0 0.0
        %1407 = vmatmul.mubr.f32.gmra.mrb[0].mxu0 %v1315
        %v1408 = vpop.f32.mrb[0].mxu0
        %v1409 = vadd.f32 %v720, %v1408
        %v1410 = vpop.f32.mrb[0].mxu0
        %1411 = vmatprep.mubr.f32.mxu0 0.0
        %1412 = vmatmul.mubr.f32.gmra.mrb[0].mxu0 %v1317
        %v1413 = vpop.f32.mrb[0].mxu0
        %v1414 = vadd.f32 %v721, %v1413
        %v1415 = vpop.f32.mrb[0].mxu0
        %1416 = vmatprep.mubr.f32.mxu0 0.0
        %1417 = vmatmul.mubr.f32.gmra.mrb[0].mxu0 %v1319
        %v1418 = vpop.f32.mrb[0].mxu0
        %v1419 = vadd.f32 %v722, %v1418
        %v1420 = vpop.f32.mrb[0].mxu0
        %1421 = vmatprep.mubr.f32.mxu0 0.0
        %1422 = vmatmul.mubr.f32.gmra.mrb[0].mxu0 %v1321
        %v1423 = vpop.f32.mrb[0].mxu0
        %v1424 = vadd.f32 %v723, %v1423
        %v1425 = vpop.f32.mrb[0].mxu0
        %1426 = vmatprep.mubr.f32.mxu0 0.0
        %1427 = vmatmul.mubr.f32.gmra.mrb[0].mxu0 %v1323
        %v1428 = vpop.f32.mrb[0].mxu0
        %v1429 = vadd.f32 %v724, %v1428
        %v1430 = vpop.f32.mrb[0].mxu0
        %1431 = vdwg.mxu0
        %v1432 = vsel %vm1091, %v1404, -inf
        %1433 = vmax.xlane.f32.xlu0 %v1432
        %v1434 = vpop.xlane.xlu0 %1433
        %v1435 = vsel %vm1091, %v1409, -inf
        %1436 = vmax.xlane.f32.xlu0 %v1435
        %v1437 = vpop.xlane.xlu0 %1436
        %v1438 = vsel %vm1091, %v1414, -inf
        %1439 = vmax.xlane.f32.xlu0 %v1438
        %v1440 = vpop.xlane.xlu0 %1439
        %v1441 = vsel %vm1091, %v1419, -inf
        %1442 = vmax.xlane.f32.xlu0 %v1441
        %v1443 = vpop.xlane.xlu0 %1442
        %v1444 = vsel %vm1091, %v1424, -inf
        %1445 = vmax.xlane.f32.xlu0 %v1444
        %v1446 = vpop.xlane.xlu0 %1445
        %v1447 = vsel %vm1091, %v1429, -inf
        %1448 = vmax.xlane.f32.xlu0 %v1447
        %v1449 = vpop.xlane.xlu0 %1448
        %v1450 = vsub.f32 %v1404, %v1434
        %v1451 = vsub.f32 %v1409, %v1437
        %v1452 = vsub.f32 %v1414, %v1440
        %v1453 = vsub.f32 %v1419, %v1443
        %v1454 = vsub.f32 %v1424, %v1446
        %v1455 = vsub.f32 %v1429, %v1449
        %v1456 = vmul.f32 %v1450, 1.442695
        %v1457 = vpow.pop %v1456
        %v1458 = vmul.f32 %v1451, 1.442695
        %v1459 = vpow.pop %v1458
        %v1460 = vmul.f32 %v1452, 1.442695
        %v1461 = vpow.pop %v1460
        %v1462 = vmul.f32 %v1453, 1.442695
        %v1463 = vpow.pop %v1462
        %v1464 = vmul.f32 %v1454, 1.442695
        %v1465 = vpow.pop %v1464
        %v1466 = vmul.f32 %v1455, 1.442695
        %v1467 = vpow.pop %v1466
        %v1468 = vsel %vm1091, %v1457, 0.0
        %1469 = vadd.xlane.f32.xlu0 %v1468
        %v1470 = vpop.xlane.xlu0 %1469
        %v1471 = vsel %vm1091, %v1459, 0.0
        %1472 = vadd.xlane.f32.xlu0 %v1471
        %v1473 = vpop.xlane.xlu0 %1472
        %v1474 = vsel %vm1091, %v1461, 0.0
        %1475 = vadd.xlane.f32.xlu0 %v1474
        %v1476 = vpop.xlane.xlu0 %1475
        %v1477 = vsel %vm1091, %v1463, 0.0
        %1478 = vadd.xlane.f32.xlu0 %v1477
        %v1479 = vpop.xlane.xlu0 %1478
        %v1480 = vsel %vm1091, %v1465, 0.0
        %1481 = vadd.xlane.f32.xlu0 %v1480
        %v1482 = vpop.xlane.xlu0 %1481
        %v1483 = vsel %vm1091, %v1467, 0.0
        %1484 = vadd.xlane.f32.xlu0 %v1483
        %v1485 = vpop.xlane.xlu0 %1484
        %v1486 = vrcp.pop %v1470
        %v1487 = vrcp.pop %v1473
        %v1488 = vrcp.pop %v1476
        %v1489 = vrcp.pop %v1479
        %v1490 = vrcp.pop %v1482
        %v1491 = vrcp.pop %v1485
        %1492 = vrot.lane.b32.xlu0 %v925, 56
        %v1493 = vpop.permute.xlu0 %1492
        %1494 = vrot.lane.b32.xlu0 %v930, 56
        %v1495 = vpop.permute.xlu0 %1494
        %1496 = vrot.lane.b32.xlu0 %v935, 56
        %v1497 = vpop.permute.xlu0 %1496
        %1498 = vrot.lane.b32.xlu0 %v940, 56
        %v1499 = vpop.permute.xlu0 %1498
        %1500 = vrot.lane.b32.xlu0 %v945, 56
        %v1501 = vpop.permute.xlu0 %1500
        %1502 = vrot.lane.b32.xlu0 %v950, 56
        %v1503 = vpop.permute.xlu0 %1502
        %v1511 = vsel %vm1091, %v1457, 0
        %v1514 = vsel %vm1091, %v1459, 0
        %v1517 = vsel %vm1091, %v1461, 0
        %v1520 = vsel %vm1091, %v1463, 0
        %v1523 = vsel %vm1091, %v1465, 0
        %v1526 = vsel %vm1091, %v1467, 0
        %1528 = vmatprep.subr.mxu0 0.0
        %1529 = vmatpush1.msra.mxu0 %v1493
        %1530 = vmatprep.subr.mxu0 0.0
        %1531 = vmatpush1.msra.mxu0 %v1495
        %1532 = vmatprep.subr.mxu0 0.0
        %1533 = vmatpush1.msra.mxu0 %v1497
        %1534 = vmatprep.subr.mxu0 0.0
        %1535 = vmatpush1.msra.mxu0 %v1499
        %1536 = vmatprep.subr.mxu0 0.0
        %1537 = vmatpush1.msra.mxu0 %v1501
        %1538 = vmatprep.subr.mxu0 0.0
        %1539 = vmatpush1.msra.mxu0 %v1503
        %1540 = vmatprep.subr.mxu0 0.0
        %1541 = vmatpush1.msra.mxu0 0.0
        %1542 = vmatprep.subr.mxu0 0.0
        %1543 = vmatpush1.msra.mxu0 0.0
        %1544 = vmatprep.subr.mxu0 0.0
        %1545 = vmatpush1.msra.mxu0 0.0
        %1546 = vmatprep.subr.mxu0 0.0
        %1547 = vmatpush1.msra.mxu0 0.0
        %1548 = vmatprep.subr.mxu0 0.0
        %1549 = vmatpush1.msra.mxu0 0.0
        %1550 = vmatprep.subr.mxu0 0.0
        %1551 = vmatpush1.msra.mxu0 0.0
        %1552 = vmatprep.subr.mxu0 0.0
        %1553 = vmatpush1.msra.mxu0 0.0
        %1554 = vmatprep.subr.mxu0 0.0
        %1555 = vmatpush1.msra.mxu0 0.0
        %1556 = vmatprep.subr.mxu0 0.0
        %1557 = vmatpush1.msra.mxu0 0.0
        %1558 = vmatprep.subr.mxu0 0.0
        %1559 = vmatpush1.msra.mxu0 0.0
        %1560 = vmatprep.subr.mxu0 0.0
        %1561 = vmatpush1.msra.mxu0 0.0
        %1562 = vmatprep.subr.mxu0 0.0
        %1563 = vmatpush1.msra.mxu0 0.0
        %1564 = vmatprep.subr.mxu0 0.0
        %1565 = vmatpush1.msra.mxu0 0.0
        %1566 = vmatprep.subr.mxu0 0.0
        %1567 = vmatpush1.msra.mxu0 0.0
        %1568 = vmatprep.subr.mxu0 0.0
        %1569 = vmatpush1.msra.mxu0 0.0
        %1570 = vmatprep.subr.mxu0 0.0
        %1571 = vmatpush1.msra.mxu0 0.0
        %1572 = vmatprep.subr.mxu0 0.0
        %1573 = vmatpush1.msra.mxu0 0.0
        %1574 = vmatprep.subr.mxu0 0.0
        %1575 = vmatpush1.msra.mxu0 0.0
        %1576 = vmatprep.subr.mxu0 0.0
        %1577 = vmatpush1.msra.mxu0 0.0
        %1578 = vmatprep.subr.mxu0 0.0
        %1579 = vmatpush1.msra.mxu0 0.0
        %1580 = vmatprep.subr.mxu0 0.0
        %1581 = vmatpush1.msra.mxu0 0.0
        %1582 = vmatprep.subr.mxu0 0.0
        %1583 = vmatpush1.msra.mxu0 0.0
        %1584 = vmatprep.subr.mxu0 0.0
        %1585 = vmatpush1.msra.mxu0 0.0
        %1586 = vmatprep.subr.mxu0 0.0
        %1587 = vmatpush1.msra.mxu0 0.0
        %1588 = vmatprep.subr.mxu0 0.0
        %1589 = vmatpush1.msra.mxu0 0.0
        %1590 = vmatprep.subr.mxu0 0.0
        %1591 = vmatpush1.msra.mxu0 0.0
        %1592 = vmatprep.mubr.f32.mxu0 0.0
        %1593 = vmatmul.mubr.f32.gmra.mrb[0].mxu0 %v1511
        %v1594 = vpop.f32.mrb[0].mxu0
        %v1595 = vadd.f32 0.0, %v1594
        %v1596 = vpop.f32.mrb[0].mxu0
        %1597 = vmatprep.mubr.f32.mxu0 0.0
        %1598 = vmatmul.mubr.f32.gmra.mrb[0].mxu0 %v1514
        %v1599 = vpop.f32.mrb[0].mxu0
        %v1600 = vadd.f32 0.0, %v1599
        %v1601 = vpop.f32.mrb[0].mxu0
        %1602 = vmatprep.mubr.f32.mxu0 0.0
        %1603 = vmatmul.mubr.f32.gmra.mrb[0].mxu0 %v1517
        %v1604 = vpop.f32.mrb[0].mxu0
        %v1605 = vadd.f32 0.0, %v1604
        %v1606 = vpop.f32.mrb[0].mxu0
        %1607 = vmatprep.mubr.f32.mxu0 0.0
        %1608 = vmatmul.mubr.f32.gmra.mrb[0].mxu0 %v1520
        %v1609 = vpop.f32.mrb[0].mxu0
        %v1610 = vadd.f32 0.0, %v1609
        %v1611 = vpop.f32.mrb[0].mxu0
        %1612 = vmatprep.mubr.f32.mxu0 0.0
        %1613 = vmatmul.mubr.f32.gmra.mrb[0].mxu0 %v1523
        %v1614 = vpop.f32.mrb[0].mxu0
        %v1615 = vadd.f32 0.0, %v1614
        %v1616 = vpop.f32.mrb[0].mxu0
        %1617 = vmatprep.mubr.f32.mxu0 0.0
        %1618 = vmatmul.mubr.f32.gmra.mrb[0].mxu0 %v1526
        %v1619 = vpop.f32.mrb[0].mxu0
        %v1620 = vadd.f32 0.0, %v1619
        %v1621 = vpop.f32.mrb[0].mxu0
        %1622 = vdwg.mxu0
        %v1623 = vmul.f32 %v1595, %v1486
        %v1624 = vmul.f32 %v1600, %v1487
        %v1625 = vmul.f32 %v1605, %v1488
        %v1626 = vmul.f32 %v1610, %v1489
        %v1627 = vmul.f32 %v1615, %v1490
        %v1628 = vmul.f32 %v1620, %v1491
        %v1630 = vsel %vm971, %v1623, 0
        %v1633 = vsel %vm971, %v1624, 0
        %v1636 = vsel %vm971, %v1625, 0
        %v1639 = vsel %vm971, %v1626, 0
        %v1642 = vsel %vm971, %v1627, 0
        %v1645 = vsel %vm971, %v1628, 0
        %1647 = vmatprep.subr.mxu0 0.0
        %1648 = vmatpush1.msra.mxu0 %v737
        %1649 = vmatprep.subr.mxu0 0.0
        %1650 = vmatpush1.msra.mxu0 0.0
        %1651 = vmatprep.subr.mxu0 0.0
        %1652 = vmatpush1.msra.mxu0 0.0
        %1653 = vmatprep.subr.mxu0 0.0
        %1654 = vmatpush1.msra.mxu0 0.0
        %1655 = vmatprep.subr.mxu0 0.0
        %1656 = vmatpush1.msra.mxu0 0.0
        %1657 = vmatprep.subr.mxu0 0.0
        %1658 = vmatpush1.msra.mxu0 0.0
        %1659 = vmatprep.subr.mxu0 0.0
        %1660 = vmatpush1.msra.mxu0 0.0
        %1661 = vmatprep.subr.mxu0 0.0
        %1662 = vmatpush1.msra.mxu0 0.0
        %1663 = vmatprep.subr.mxu0 0.0
        %1664 = vmatpush1.msra.mxu0 0.0
        %1665 = vmatprep.subr.mxu0 0.0
        %1666 = vmatpush1.msra.mxu0 0.0
        %1667 = vmatprep.subr.mxu0 0.0
        %1668 = vmatpush1.msra.mxu0 0.0
        %1669 = vmatprep.subr.mxu0 0.0
        %1670 = vmatpush1.msra.mxu0 0.0
        %1671 = vmatprep.subr.mxu0 0.0
        %1672 = vmatpush1.msra.mxu0 0.0
        %1673 = vmatprep.subr.mxu0 0.0
        %1674 = vmatpush1.msra.mxu0 0.0
        %1675 = vmatprep.subr.mxu0 0.0
        %1676 = vmatpush1.msra.mxu0 0.0
        %1677 = vmatprep.subr.mxu0 0.0
        %1678 = vmatpush1.msra.mxu0 0.0
        %1679 = vmatprep.subr.mxu0 0.0
        %1680 = vmatpush1.msra.mxu0 0.0
        %1681 = vmatprep.subr.mxu0 0.0
        %1682 = vmatpush1.msra.mxu0 0.0
        %1683 = vmatprep.subr.mxu0 0.0
        %1684 = vmatpush1.msra.mxu0 0.0
        %1685 = vmatprep.subr.mxu0 0.0
        %1686 = vmatpush1.msra.mxu0 0.0
        %1687 = vmatprep.subr.mxu0 0.0
        %1688 = vmatpush1.msra.mxu0 0.0
        %1689 = vmatprep.subr.mxu0 0.0
        %1690 = vmatpush1.msra.mxu0 0.0
        %1691 = vmatprep.subr.mxu0 0.0
        %1692 = vmatpush1.msra.mxu0 0.0
        %1693 = vmatprep.subr.mxu0 0.0
        %1694 = vmatpush1.msra.mxu0 0.0
        %1695 = vmatprep.subr.mxu0 0.0
        %1696 = vmatpush1.msra.mxu0 0.0
        %1697 = vmatprep.subr.mxu0 0.0
        %1698 = vmatpush1.msra.mxu0 0.0
        %1699 = vmatprep.subr.mxu0 0.0
        %1700 = vmatpush1.msra.mxu0 0.0
        %1701 = vmatprep.subr.mxu0 0.0
        %1702 = vmatpush1.msra.mxu0 0.0
        %1703 = vmatprep.subr.mxu0 0.0
        %1704 = vmatpush1.msra.mxu0 0.0
        %1705 = vmatprep.subr.mxu0 0.0
        %1706 = vmatpush1.msra.mxu0 0.0
        %1707 = vmatprep.subr.mxu0 0.0
        %1708 = vmatpush1.msra.mxu0 0.0
        %1709 = vmatprep.subr.mxu0 0.0
        %1710 = vmatpush1.msra.mxu0 0.0
        %1711 = vmatprep.mubr.f32.mxu0 0.0
        %1712 = vmatmul.mubr.f32.gmra.mrb[0].mxu0 %v1630
        %v1713 = vpop.f32.mrb[0].mxu0
        %v1714 = vadd.f32 0.0, %v1713
        %v1715 = vpop.f32.mrb[0].mxu0
        %1716 = vmatprep.mubr.f32.mxu0 0.0
        %1717 = vmatmul.mubr.f32.gmra.mrb[0].mxu0 %v1633
        %v1718 = vpop.f32.mrb[0].mxu0
        %v1719 = vadd.f32 0.0, %v1718
        %v1720 = vpop.f32.mrb[0].mxu0
        %1721 = vmatprep.mubr.f32.mxu0 0.0
        %1722 = vmatmul.mubr.f32.gmra.mrb[0].mxu0 %v1636
        %v1723 = vpop.f32.mrb[0].mxu0
        %v1724 = vadd.f32 0.0, %v1723
        %v1725 = vpop.f32.mrb[0].mxu0
        %1726 = vmatprep.mubr.f32.mxu0 0.0
        %1727 = vmatmul.mubr.f32.gmra.mrb[0].mxu0 %v1639
        %v1728 = vpop.f32.mrb[0].mxu0
        %v1729 = vadd.f32 0.0, %v1728
        %v1730 = vpop.f32.mrb[0].mxu0
        %1731 = vmatprep.mubr.f32.mxu0 0.0
        %1732 = vmatmul.mubr.f32.gmra.mrb[0].mxu0 %v1642
        %v1733 = vpop.f32.mrb[0].mxu0
        %v1734 = vadd.f32 0.0, %v1733
        %v1735 = vpop.f32.mrb[0].mxu0
        %1736 = vmatprep.mubr.f32.mxu0 0.0
        %1737 = vmatmul.mubr.f32.gmra.mrb[0].mxu0 %v1645
        %v1738 = vpop.f32.mrb[0].mxu0
        %v1739 = vadd.f32 0.0, %v1738
        %v1740 = vpop.f32.mrb[0].mxu0
        %1741 = vdwg.mxu0
        %v1743 = vsel %vm971, %v1283, 0
        %v1746 = vsel %vm971, %v1284, 0
        %v1749 = vsel %vm971, %v1285, 0
        %v1752 = vsel %vm971, %v1286, 0
        %v1755 = vsel %vm971, %v1287, 0
        %v1758 = vsel %vm971, %v1288, 0
        %1760 = vmatprep.subr.mxu0 0.0
        %1761 = vmatpush1.msra.mxu0 %v736
        %1762 = vmatprep.subr.mxu0 0.0
        %1763 = vmatpush1.msra.mxu0 0.0
        %1764 = vmatprep.subr.mxu0 0.0
        %1765 = vmatpush1.msra.mxu0 0.0
        %1766 = vmatprep.subr.mxu0 0.0
        %1767 = vmatpush1.msra.mxu0 0.0
        %1768 = vmatprep.subr.mxu0 0.0
        %1769 = vmatpush1.msra.mxu0 0.0
        %1770 = vmatprep.subr.mxu0 0.0
        %1771 = vmatpush1.msra.mxu0 0.0
        %1772 = vmatprep.subr.mxu0 0.0
        %1773 = vmatpush1.msra.mxu0 0.0
        %1774 = vmatprep.subr.mxu0 0.0
        %1775 = vmatpush1.msra.mxu0 0.0
        %1776 = vmatprep.subr.mxu0 0.0
        %1777 = vmatpush1.msra.mxu0 0.0
        %1778 = vmatprep.subr.mxu0 0.0
        %1779 = vmatpush1.msra.mxu0 0.0
        %1780 = vmatprep.subr.mxu0 0.0
        %1781 = vmatpush1.msra.mxu0 0.0
        %1782 = vmatprep.subr.mxu0 0.0
        %1783 = vmatpush1.msra.mxu0 0.0
        %1784 = vmatprep.subr.mxu0 0.0
        %1785 = vmatpush1.msra.mxu0 0.0
        %1786 = vmatprep.subr.mxu0 0.0
        %1787 = vmatpush1.msra.mxu0 0.0
        %1788 = vmatprep.subr.mxu0 0.0
        %1789 = vmatpush1.msra.mxu0 0.0
        %1790 = vmatprep.subr.mxu0 0.0
        %1791 = vmatpush1.msra.mxu0 0.0
        %1792 = vmatprep.subr.mxu0 0.0
        %1793 = vmatpush1.msra.mxu0 0.0
        %1794 = vmatprep.subr.mxu0 0.0
        %1795 = vmatpush1.msra.mxu0 0.0
        %1796 = vmatprep.subr.mxu0 0.0
        %1797 = vmatpush1.msra.mxu0 0.0
        %1798 = vmatprep.subr.mxu0 0.0
        %1799 = vmatpush1.msra.mxu0 0.0
        %1800 = vmatprep.subr.mxu0 0.0
        %1801 = vmatpush1.msra.mxu0 0.0
        %1802 = vmatprep.subr.mxu0 0.0
        %1803 = vmatpush1.msra.mxu0 0.0
        %1804 = vmatprep.subr.mxu0 0.0
        %1805 = vmatpush1.msra.mxu0 0.0
        %1806 = vmatprep.subr.mxu0 0.0
        %1807 = vmatpush1.msra.mxu0 0.0
        %1808 = vmatprep.subr.mxu0 0.0
        %1809 = vmatpush1.msra.mxu0 0.0
        %1810 = vmatprep.subr.mxu0 0.0
        %1811 = vmatpush1.msra.mxu0 0.0
        %1812 = vmatprep.subr.mxu0 0.0
        %1813 = vmatpush1.msra.mxu0 0.0
        %1814 = vmatprep.subr.mxu0 0.0
        %1815 = vmatpush1.msra.mxu0 0.0
        %1816 = vmatprep.subr.mxu0 0.0
        %1817 = vmatpush1.msra.mxu0 0.0
        %1818 = vmatprep.subr.mxu0 0.0
        %1819 = vmatpush1.msra.mxu0 0.0
        %1820 = vmatprep.subr.mxu0 0.0
        %1821 = vmatpush1.msra.mxu0 0.0
        %1822 = vmatprep.subr.mxu0 0.0
        %1823 = vmatpush1.msra.mxu0 0.0
        %1824 = vmatprep.mubr.f32.mxu0 0.0
        %1825 = vmatmul.mubr.f32.gmra.mrb[0].mxu0 %v1743
        %v1826 = vpop.f32.mrb[0].mxu0
        %v1827 = vadd.f32 %v1714, %v1826
        %v1828 = vpop.f32.mrb[0].mxu0
        %1829 = vmatprep.mubr.f32.mxu0 0.0
        %1830 = vmatmul.mubr.f32.gmra.mrb[0].mxu0 %v1746
        %v1831 = vpop.f32.mrb[0].mxu0
        %v1832 = vadd.f32 %v1719, %v1831
        %v1833 = vpop.f32.mrb[0].mxu0
        %1834 = vmatprep.mubr.f32.mxu0 0.0
        %1835 = vmatmul.mubr.f32.gmra.mrb[0].mxu0 %v1749
        %v1836 = vpop.f32.mrb[0].mxu0
        %v1837 = vadd.f32 %v1724, %v1836
        %v1838 = vpop.f32.mrb[0].mxu0
        %1839 = vmatprep.mubr.f32.mxu0 0.0
        %1840 = vmatmul.mubr.f32.gmra.mrb[0].mxu0 %v1752
        %v1841 = vpop.f32.mrb[0].mxu0
        %v1842 = vadd.f32 %v1729, %v1841
        %v1843 = vpop.f32.mrb[0].mxu0
        %1844 = vmatprep.mubr.f32.mxu0 0.0
        %1845 = vmatmul.mubr.f32.gmra.mrb[0].mxu0 %v1755
        %v1846 = vpop.f32.mrb[0].mxu0
        %v1847 = vadd.f32 %v1734, %v1846
        %v1848 = vpop.f32.mrb[0].mxu0
        %1849 = vmatprep.mubr.f32.mxu0 0.0
        %1850 = vmatmul.mubr.f32.gmra.mrb[0].mxu0 %v1758
        %v1851 = vpop.f32.mrb[0].mxu0
        %v1852 = vadd.f32 %v1739, %v1851
        %v1853 = vpop.f32.mrb[0].mxu0
        %1854 = vdwg.mxu0
        %1855 = vrot.lane.b32.xlu0 %v925, 112
        %v1856 = vpop.permute.xlu0 %1855
        %1857 = vrot.lane.b32.xlu0 %v930, 112
        %v1858 = vpop.permute.xlu0 %1857
        %1859 = vrot.lane.b32.xlu0 %v935, 112
        %v1860 = vpop.permute.xlu0 %1859
        %1861 = vrot.lane.b32.xlu0 %v940, 112
        %v1862 = vpop.permute.xlu0 %1861
        %1863 = vrot.lane.b32.xlu0 %v945, 112
        %v1864 = vpop.permute.xlu0 %1863
        %1865 = vrot.lane.b32.xlu0 %v950, 112
        %v1866 = vpop.permute.xlu0 %1865
        %1867 = vrot.lane.b32.xlu0 %v925, 80
        %v1868 = vpop.permute.xlu0 %1867
        %1869 = vrot.lane.b32.xlu0 %v930, 80
        %v1870 = vpop.permute.xlu0 %1869
        %1871 = vrot.lane.b32.xlu0 %v935, 80
        %v1872 = vpop.permute.xlu0 %1871
        %1873 = vrot.lane.b32.xlu0 %v940, 80
        %v1874 = vpop.permute.xlu0 %1873
        %1875 = vrot.lane.b32.xlu0 %v945, 80
        %v1876 = vpop.permute.xlu0 %1875
        %1877 = vrot.lane.b32.xlu0 %v950, 80
        %v1878 = vpop.permute.xlu0 %1877
        %v1879 = vsel %vm971, %v1856, 0
        %v1881 = vsel %vm971, %v1858, 0
        %v1883 = vsel %vm971, %v1860, 0
        %v1885 = vsel %vm971, %v1862, 0
        %v1887 = vsel %vm971, %v1864, 0
        %v1889 = vsel %vm971, %v1866, 0
        %v1891 = vsel %vm971, %v1868, 0
        %v1893 = vsel %vm971, %v1870, 0
        %v1895 = vsel %vm971, %v1872, 0
        %v1897 = vsel %vm971, %v1874, 0
        %v1899 = vsel %vm971, %v1876, 0
        %v1901 = vsel %vm971, %v1878, 0
        %1903 = vmatprep.subr.mxu0 0.0
        %1904 = vmatpush1.xpose.msra.mxu0 %v1891
        %1905 = vmatprep.subr.mxu0 0.0
        %1906 = vmatpush1.xpose.msra.mxu0 %v1893
        %1907 = vmatprep.subr.mxu0 0.0
        %1908 = vmatpush1.xpose.msra.mxu0 %v1895
        %1909 = vmatprep.subr.mxu0 0.0
        %1910 = vmatpush1.xpose.msra.mxu0 %v1897
        %1911 = vmatprep.subr.mxu0 0.0
        %1912 = vmatpush1.xpose.msra.mxu0 %v1899
        %1913 = vmatprep.subr.mxu0 0.0
        %1914 = vmatpush1.xpose.msra.mxu0 %v1901
        %1915 = vmatprep.subr.mxu0 0.0
        %1916 = vmatpush1.xpose.msra.mxu0 0.0
        %1917 = vmatprep.subr.mxu0 0.0
        %1918 = vmatpush1.xpose.msra.mxu0 0.0
        %1919 = vmatprep.subr.mxu0 0.0
        %1920 = vmatpush1.xpose.msra.mxu0 0.0
        %1921 = vmatprep.subr.mxu0 0.0
        %1922 = vmatpush1.xpose.msra.mxu0 0.0
        %1923 = vmatprep.subr.mxu0 0.0
        %1924 = vmatpush1.xpose.msra.mxu0 0.0
        %1925 = vmatprep.subr.mxu0 0.0
        %1926 = vmatpush1.xpose.msra.mxu0 0.0
        %1927 = vmatprep.subr.mxu0 0.0
        %1928 = vmatpush1.xpose.msra.mxu0 0.0
        %1929 = vmatprep.subr.mxu0 0.0
        %1930 = vmatpush1.xpose.msra.mxu0 0.0
        %1931 = vmatprep.subr.mxu0 0.0
        %1932 = vmatpush1.xpose.msra.mxu0 0.0
        %1933 = vmatprep.subr.mxu0 0.0
        %1934 = vmatpush1.xpose.msra.mxu0 0.0
        %1935 = vmatprep.subr.mxu0 0.0
        %1936 = vmatpush1.xpose.msra.mxu0 0.0
        %1937 = vmatprep.subr.mxu0 0.0
        %1938 = vmatpush1.xpose.msra.mxu0 0.0
        %1939 = vmatprep.subr.mxu0 0.0
        %1940 = vmatpush1.xpose.msra.mxu0 0.0
        %1941 = vmatprep.subr.mxu0 0.0
        %1942 = vmatpush1.xpose.msra.mxu0 0.0
        %1943 = vmatprep.subr.mxu0 0.0
        %1944 = vmatpush1.xpose.msra.mxu0 0.0
        %1945 = vmatprep.subr.mxu0 0.0
        %1946 = vmatpush1.xpose.msra.mxu0 0.0
        %1947 = vmatprep.subr.mxu0 0.0
        %1948 = vmatpush1.xpose.msra.mxu0 0.0
        %1949 = vmatprep.subr.mxu0 0.0
        %1950 = vmatpush1.xpose.msra.mxu0 0.0
        %1951 = vmatprep.subr.mxu0 0.0
        %1952 = vmatpush1.xpose.msra.mxu0 0.0
        %1953 = vmatprep.subr.mxu0 0.0
        %1954 = vmatpush1.xpose.msra.mxu0 0.0
        %1955 = vmatprep.subr.mxu0 0.0
        %1956 = vmatpush1.xpose.msra.mxu0 0.0
        %1957 = vmatprep.subr.mxu0 0.0
        %1958 = vmatpush1.xpose.msra.mxu0 0.0
        %1959 = vmatprep.subr.mxu0 0.0
        %1960 = vmatpush1.xpose.msra.mxu0 0.0
        %1961 = vmatprep.subr.mxu0 0.0
        %1962 = vmatpush1.xpose.msra.mxu0 0.0
        %1963 = vmatprep.subr.mxu0 0.0
        %1964 = vmatpush1.xpose.msra.mxu0 0.0
        %1965 = vmatprep.subr.mxu0 0.0
        %1966 = vmatpush1.xpose.msra.mxu0 0.0
        %1967 = vmatprep.mubr.f32.mxu0 0.0
        %1968 = vmatmul.mubr.f32.gmra.mrb[0].mxu0 %v1879
        %v1969 = vpop.f32.mrb[0].mxu0
        %v1970 = vadd.f32 %v719, %v1969
        %v1971 = vpop.f32.mrb[0].mxu0
        %1972 = vmatprep.mubr.f32.mxu0 0.0
        %1973 = vmatmul.mubr.f32.gmra.mrb[0].mxu0 %v1881
        %v1974 = vpop.f32.mrb[0].mxu0
        %v1975 = vadd.f32 %v720, %v1974
        %v1976 = vpop.f32.mrb[0].mxu0
        %1977 = vmatprep.mubr.f32.mxu0 0.0
        %1978 = vmatmul.mubr.f32.gmra.mrb[0].mxu0 %v1883
        %v1979 = vpop.f32.mrb[0].mxu0
        %v1980 = vadd.f32 %v721, %v1979
        %v1981 = vpop.f32.mrb[0].mxu0
        %1982 = vmatprep.mubr.f32.mxu0 0.0
        %1983 = vmatmul.mubr.f32.gmra.mrb[0].mxu0 %v1885
        %v1984 = vpop.f32.mrb[0].mxu0
        %v1985 = vadd.f32 %v722, %v1984
        %v1986 = vpop.f32.mrb[0].mxu0
        %1987 = vmatprep.mubr.f32.mxu0 0.0
        %1988 = vmatmul.mubr.f32.gmra.mrb[0].mxu0 %v1887
        %v1989 = vpop.f32.mrb[0].mxu0
        %v1990 = vadd.f32 %v723, %v1989
        %v1991 = vpop.f32.mrb[0].mxu0
        %1992 = vmatprep.mubr.f32.mxu0 0.0
        %1993 = vmatmul.mubr.f32.gmra.mrb[0].mxu0 %v1889
        %v1994 = vpop.f32.mrb[0].mxu0
        %v1995 = vadd.f32 %v724, %v1994
        %v1996 = vpop.f32.mrb[0].mxu0
        %1997 = vdwg.mxu0
        %v1998 = vsel %vm1091, %v1970, -inf
        %1999 = vmax.xlane.f32.xlu0 %v1998
        %v2000 = vpop.xlane.xlu0 %1999
        %v2001 = vsel %vm1091, %v1975, -inf
        %2002 = vmax.xlane.f32.xlu0 %v2001
        %v2003 = vpop.xlane.xlu0 %2002
        %v2004 = vsel %vm1091, %v1980, -inf
        %2005 = vmax.xlane.f32.xlu0 %v2004
        %v2006 = vpop.xlane.xlu0 %2005
        %v2007 = vsel %vm1091, %v1985, -inf
        %2008 = vmax.xlane.f32.xlu0 %v2007
        %v2009 = vpop.xlane.xlu0 %2008
        %v2010 = vsel %vm1091, %v1990, -inf
        %2011 = vmax.xlane.f32.xlu0 %v2010
        %v2012 = vpop.xlane.xlu0 %2011
        %v2013 = vsel %vm1091, %v1995, -inf
        %2014 = vmax.xlane.f32.xlu0 %v2013
        %v2015 = vpop.xlane.xlu0 %2014
        %v2016 = vsub.f32 %v1970, %v2000
        %v2017 = vsub.f32 %v1975, %v2003
        %v2018 = vsub.f32 %v1980, %v2006
        %v2019 = vsub.f32 %v1985, %v2009
        %v2020 = vsub.f32 %v1990, %v2012
        %v2021 = vsub.f32 %v1995, %v2015
        %v2022 = vmul.f32 %v2016, 1.442695
        %v2023 = vpow.pop %v2022
        %v2024 = vmul.f32 %v2017, 1.442695
        %v2025 = vpow.pop %v2024
        %v2026 = vmul.f32 %v2018, 1.442695
        %v2027 = vpow.pop %v2026
        %v2028 = vmul.f32 %v2019, 1.442695
        %v2029 = vpow.pop %v2028
        %v2030 = vmul.f32 %v2020, 1.442695
        %v2031 = vpow.pop %v2030
        %v2032 = vmul.f32 %v2021, 1.442695
        %v2033 = vpow.pop %v2032
        %v2034 = vsel %vm1091, %v2023, 0.0
        %2035 = vadd.xlane.f32.xlu0 %v2034
        %v2036 = vpop.xlane.xlu0 %2035
        %v2037 = vsel %vm1091, %v2025, 0.0
        %2038 = vadd.xlane.f32.xlu0 %v2037
        %v2039 = vpop.xlane.xlu0 %2038
        %v2040 = vsel %vm1091, %v2027, 0.0
        %2041 = vadd.xlane.f32.xlu0 %v2040
        %v2042 = vpop.xlane.xlu0 %2041
        %v2043 = vsel %vm1091, %v2029, 0.0
        %2044 = vadd.xlane.f32.xlu0 %v2043
        %v2045 = vpop.xlane.xlu0 %2044
        %v2046 = vsel %vm1091, %v2031, 0.0
        %2047 = vadd.xlane.f32.xlu0 %v2046
        %v2048 = vpop.xlane.xlu0 %2047
        %v2049 = vsel %vm1091, %v2033, 0.0
        %2050 = vadd.xlane.f32.xlu0 %v2049
        %v2051 = vpop.xlane.xlu0 %2050
        %v2052 = vrcp.pop %v2036
        %v2053 = vrcp.pop %v2039
        %v2054 = vrcp.pop %v2042
        %v2055 = vrcp.pop %v2045
        %v2056 = vrcp.pop %v2048
        %v2057 = vrcp.pop %v2051
        %2058 = vrot.lane.b32.xlu0 %v925, 48
        %v2059 = vpop.permute.xlu0 %2058
        %2060 = vrot.lane.b32.xlu0 %v930, 48
        %v2061 = vpop.permute.xlu0 %2060
        %2062 = vrot.lane.b32.xlu0 %v935, 48
        %v2063 = vpop.permute.xlu0 %2062
        %2064 = vrot.lane.b32.xlu0 %v940, 48
        %v2065 = vpop.permute.xlu0 %2064
        %2066 = vrot.lane.b32.xlu0 %v945, 48
        %v2067 = vpop.permute.xlu0 %2066
        %2068 = vrot.lane.b32.xlu0 %v950, 48
        %v2069 = vpop.permute.xlu0 %2068
        %v2077 = vsel %vm1091, %v2023, 0
        %v2080 = vsel %vm1091, %v2025, 0
        %v2083 = vsel %vm1091, %v2027, 0
        %v2086 = vsel %vm1091, %v2029, 0
        %v2089 = vsel %vm1091, %v2031, 0
        %v2092 = vsel %vm1091, %v2033, 0
        %2094 = vmatprep.subr.mxu0 0.0
        %2095 = vmatpush1.msra.mxu0 %v2059
        %2096 = vmatprep.subr.mxu0 0.0
        %2097 = vmatpush1.msra.mxu0 %v2061
        %2098 = vmatprep.subr.mxu0 0.0
        %2099 = vmatpush1.msra.mxu0 %v2063
        %2100 = vmatprep.subr.mxu0 0.0
        %2101 = vmatpush1.msra.mxu0 %v2065
        %2102 = vmatprep.subr.mxu0 0.0
        %2103 = vmatpush1.msra.mxu0 %v2067
        %2104 = vmatprep.subr.mxu0 0.0
        %2105 = vmatpush1.msra.mxu0 %v2069
        %2106 = vmatprep.subr.mxu0 0.0
        %2107 = vmatpush1.msra.mxu0 0.0
        %2108 = vmatprep.subr.mxu0 0.0
        %2109 = vmatpush1.msra.mxu0 0.0
        %2110 = vmatprep.subr.mxu0 0.0
        %2111 = vmatpush1.msra.mxu0 0.0
        %2112 = vmatprep.subr.mxu0 0.0
        %2113 = vmatpush1.msra.mxu0 0.0
        %2114 = vmatprep.subr.mxu0 0.0
        %2115 = vmatpush1.msra.mxu0 0.0
        %2116 = vmatprep.subr.mxu0 0.0
        %2117 = vmatpush1.msra.mxu0 0.0
        %2118 = vmatprep.subr.mxu0 0.0
        %2119 = vmatpush1.msra.mxu0 0.0
        %2120 = vmatprep.subr.mxu0 0.0
        %2121 = vmatpush1.msra.mxu0 0.0
        %2122 = vmatprep.subr.mxu0 0.0
        %2123 = vmatpush1.msra.mxu0 0.0
        %2124 = vmatprep.subr.mxu0 0.0
        %2125 = vmatpush1.msra.mxu0 0.0
        %2126 = vmatprep.subr.mxu0 0.0
        %2127 = vmatpush1.msra.mxu0 0.0
        %2128 = vmatprep.subr.mxu0 0.0
        %2129 = vmatpush1.msra.mxu0 0.0
        %2130 = vmatprep.subr.mxu0 0.0
        %2131 = vmatpush1.msra.mxu0 0.0
        %2132 = vmatprep.subr.mxu0 0.0
        %2133 = vmatpush1.msra.mxu0 0.0
        %2134 = vmatprep.subr.mxu0 0.0
        %2135 = vmatpush1.msra.mxu0 0.0
        %2136 = vmatprep.subr.mxu0 0.0
        %2137 = vmatpush1.msra.mxu0 0.0
        %2138 = vmatprep.subr.mxu0 0.0
        %2139 = vmatpush1.msra.mxu0 0.0
        %2140 = vmatprep.subr.mxu0 0.0
        %2141 = vmatpush1.msra.mxu0 0.0
        %2142 = vmatprep.subr.mxu0 0.0
        %2143 = vmatpush1.msra.mxu0 0.0
        %2144 = vmatprep.subr.mxu0 0.0
        %2145 = vmatpush1.msra.mxu0 0.0
        %2146 = vmatprep.subr.mxu0 0.0
        %2147 = vmatpush1.msra.mxu0 0.0
        %2148 = vmatprep.subr.mxu0 0.0
        %2149 = vmatpush1.msra.mxu0 0.0
        %2150 = vmatprep.subr.mxu0 0.0
        %2151 = vmatpush1.msra.mxu0 0.0
        %2152 = vmatprep.subr.mxu0 0.0
        %2153 = vmatpush1.msra.mxu0 0.0
        %2154 = vmatprep.subr.mxu0 0.0
        %2155 = vmatpush1.msra.mxu0 0.0
        %2156 = vmatprep.subr.mxu0 0.0
        %2157 = vmatpush1.msra.mxu0 0.0
        %2158 = vmatprep.mubr.f32.mxu0 0.0
        %2159 = vmatmul.mubr.f32.gmra.mrb[0].mxu0 %v2077
        %v2160 = vpop.f32.mrb[0].mxu0
        %v2161 = vadd.f32 0.0, %v2160
        %v2162 = vpop.f32.mrb[0].mxu0
        %2163 = vmatprep.mubr.f32.mxu0 0.0
        %2164 = vmatmul.mubr.f32.gmra.mrb[0].mxu0 %v2080
        %v2165 = vpop.f32.mrb[0].mxu0
        %v2166 = vadd.f32 0.0, %v2165
        %v2167 = vpop.f32.mrb[0].mxu0
        %2168 = vmatprep.mubr.f32.mxu0 0.0
        %2169 = vmatmul.mubr.f32.gmra.mrb[0].mxu0 %v2083
        %v2170 = vpop.f32.mrb[0].mxu0
        %v2171 = vadd.f32 0.0, %v2170
        %v2172 = vpop.f32.mrb[0].mxu0
        %2173 = vmatprep.mubr.f32.mxu0 0.0
        %2174 = vmatmul.mubr.f32.gmra.mrb[0].mxu0 %v2086
        %v2175 = vpop.f32.mrb[0].mxu0
        %v2176 = vadd.f32 0.0, %v2175
        %v2177 = vpop.f32.mrb[0].mxu0
        %2178 = vmatprep.mubr.f32.mxu0 0.0
        %2179 = vmatmul.mubr.f32.gmra.mrb[0].mxu0 %v2089
        %v2180 = vpop.f32.mrb[0].mxu0
        %v2181 = vadd.f32 0.0, %v2180
        %v2182 = vpop.f32.mrb[0].mxu0
        %2183 = vmatprep.mubr.f32.mxu0 0.0
        %2184 = vmatmul.mubr.f32.gmra.mrb[0].mxu0 %v2092
        %v2185 = vpop.f32.mrb[0].mxu0
        %v2186 = vadd.f32 0.0, %v2185
        %v2187 = vpop.f32.mrb[0].mxu0
        %2188 = vdwg.mxu0
        %v2189 = vmul.f32 %v2161, %v2052
        %v2190 = vmul.f32 %v2166, %v2053
        %v2191 = vmul.f32 %v2171, %v2054
        %v2192 = vmul.f32 %v2176, %v2055
        %v2193 = vmul.f32 %v2181, %v2056
        %v2194 = vmul.f32 %v2186, %v2057
        %v2196 = vsel %vm971, %v2189, 0
        %v2199 = vsel %vm971, %v2190, 0
        %v2202 = vsel %vm971, %v2191, 0
        %v2205 = vsel %vm971, %v2192, 0
        %v2208 = vsel %vm971, %v2193, 0
        %v2211 = vsel %vm971, %v2194, 0
        %2213 = vmatprep.subr.mxu0 0.0
        %2214 = vmatpush1.msra.mxu0 %v738
        %2215 = vmatprep.subr.mxu0 0.0
        %2216 = vmatpush1.msra.mxu0 0.0
        %2217 = vmatprep.subr.mxu0 0.0
        %2218 = vmatpush1.msra.mxu0 0.0
        %2219 = vmatprep.subr.mxu0 0.0
        %2220 = vmatpush1.msra.mxu0 0.0
        %2221 = vmatprep.subr.mxu0 0.0
        %2222 = vmatpush1.msra.mxu0 0.0
        %2223 = vmatprep.subr.mxu0 0.0
        %2224 = vmatpush1.msra.mxu0 0.0
        %2225 = vmatprep.subr.mxu0 0.0
        %2226 = vmatpush1.msra.mxu0 0.0
        %2227 = vmatprep.subr.mxu0 0.0
        %2228 = vmatpush1.msra.mxu0 0.0
        %2229 = vmatprep.subr.mxu0 0.0
        %2230 = vmatpush1.msra.mxu0 0.0
        %2231 = vmatprep.subr.mxu0 0.0
        %2232 = vmatpush1.msra.mxu0 0.0
        %2233 = vmatprep.subr.mxu0 0.0
        %2234 = vmatpush1.msra.mxu0 0.0
        %2235 = vmatprep.subr.mxu0 0.0
        %2236 = vmatpush1.msra.mxu0 0.0
        %2237 = vmatprep.subr.mxu0 0.0
        %2238 = vmatpush1.msra.mxu0 0.0
        %2239 = vmatprep.subr.mxu0 0.0
        %2240 = vmatpush1.msra.mxu0 0.0
        %2241 = vmatprep.subr.mxu0 0.0
        %2242 = vmatpush1.msra.mxu0 0.0
        %2243 = vmatprep.subr.mxu0 0.0
        %2244 = vmatpush1.msra.mxu0 0.0
        %2245 = vmatprep.subr.mxu0 0.0
        %2246 = vmatpush1.msra.mxu0 0.0
        %2247 = vmatprep.subr.mxu0 0.0
        %2248 = vmatpush1.msra.mxu0 0.0
        %2249 = vmatprep.subr.mxu0 0.0
        %2250 = vmatpush1.msra.mxu0 0.0
        %2251 = vmatprep.subr.mxu0 0.0
        %2252 = vmatpush1.msra.mxu0 0.0
        %2253 = vmatprep.subr.mxu0 0.0
        %2254 = vmatpush1.msra.mxu0 0.0
        %2255 = vmatprep.subr.mxu0 0.0
        %2256 = vmatpush1.msra.mxu0 0.0
        %2257 = vmatprep.subr.mxu0 0.0
        %2258 = vmatpush1.msra.mxu0 0.0
        %2259 = vmatprep.subr.mxu0 0.0
        %2260 = vmatpush1.msra.mxu0 0.0
        %2261 = vmatprep.subr.mxu0 0.0
        %2262 = vmatpush1.msra.mxu0 0.0
        %2263 = vmatprep.subr.mxu0 0.0
        %2264 = vmatpush1.msra.mxu0 0.0
        %2265 = vmatprep.subr.mxu0 0.0
        %2266 = vmatpush1.msra.mxu0 0.0
        %2267 = vmatprep.subr.mxu0 0.0
        %2268 = vmatpush1.msra.mxu0 0.0
        %2269 = vmatprep.subr.mxu0 0.0
        %2270 = vmatpush1.msra.mxu0 0.0
        %2271 = vmatprep.subr.mxu0 0.0
        %2272 = vmatpush1.msra.mxu0 0.0
        %2273 = vmatprep.subr.mxu0 0.0
        %2274 = vmatpush1.msra.mxu0 0.0
        %2275 = vmatprep.subr.mxu0 0.0
        %2276 = vmatpush1.msra.mxu0 0.0
        %2277 = vmatprep.mubr.f32.mxu0 0.0
        %2278 = vmatmul.mubr.f32.gmra.mrb[0].mxu0 %v2196
        %v2279 = vpop.f32.mrb[0].mxu0
        %v2280 = vadd.f32 0.0, %v2279
        %v2281 = vpop.f32.mrb[0].mxu0
        %2282 = vmatprep.mubr.f32.mxu0 0.0
        %2283 = vmatmul.mubr.f32.gmra.mrb[0].mxu0 %v2199
        %v2284 = vpop.f32.mrb[0].mxu0
        %v2285 = vadd.f32 0.0, %v2284
        %v2286 = vpop.f32.mrb[0].mxu0
        %2287 = vmatprep.mubr.f32.mxu0 0.0
        %2288 = vmatmul.mubr.f32.gmra.mrb[0].mxu0 %v2202
        %v2289 = vpop.f32.mrb[0].mxu0
        %v2290 = vadd.f32 0.0, %v2289
        %v2291 = vpop.f32.mrb[0].mxu0
        %2292 = vmatprep.mubr.f32.mxu0 0.0
        %2293 = vmatmul.mubr.f32.gmra.mrb[0].mxu0 %v2205
        %v2294 = vpop.f32.mrb[0].mxu0
        %v2295 = vadd.f32 0.0, %v2294
        %v2296 = vpop.f32.mrb[0].mxu0
        %2297 = vmatprep.mubr.f32.mxu0 0.0
        %2298 = vmatmul.mubr.f32.gmra.mrb[0].mxu0 %v2208
        %v2299 = vpop.f32.mrb[0].mxu0
        %v2300 = vadd.f32 0.0, %v2299
        %v2301 = vpop.f32.mrb[0].mxu0
        %2302 = vmatprep.mubr.f32.mxu0 0.0
        %2303 = vmatmul.mubr.f32.gmra.mrb[0].mxu0 %v2211
        %v2304 = vpop.f32.mrb[0].mxu0
        %v2305 = vadd.f32 0.0, %v2304
        %v2306 = vpop.f32.mrb[0].mxu0
        %2307 = vdwg.mxu0
        %v2308 = vadd.f32 %v1827, %v2280
        %v2309 = vadd.f32 %v1832, %v2285
        %v2310 = vadd.f32 %v1837, %v2290
        %v2311 = vadd.f32 %v1842, %v2295
        %v2312 = vadd.f32 %v1847, %v2300
        %v2313 = vadd.f32 %v1852, %v2305
        %2314 = vrot.lane.b32.xlu0 %v925, 104
        %v2315 = vpop.permute.xlu0 %2314
        %2316 = vrot.lane.b32.xlu0 %v930, 104
        %v2317 = vpop.permute.xlu0 %2316
        %2318 = vrot.lane.b32.xlu0 %v935, 104
        %v2319 = vpop.permute.xlu0 %2318
        %2320 = vrot.lane.b32.xlu0 %v940, 104
        %v2321 = vpop.permute.xlu0 %2320
        %2322 = vrot.lane.b32.xlu0 %v945, 104
        %v2323 = vpop.permute.xlu0 %2322
        %2324 = vrot.lane.b32.xlu0 %v950, 104
        %v2325 = vpop.permute.xlu0 %2324
        %2326 = vrot.lane.b32.xlu0 %v925, 72
        %v2327 = vpop.permute.xlu0 %2326
        %2328 = vrot.lane.b32.xlu0 %v930, 72
        %v2329 = vpop.permute.xlu0 %2328
        %2330 = vrot.lane.b32.xlu0 %v935, 72
        %v2331 = vpop.permute.xlu0 %2330
        %2332 = vrot.lane.b32.xlu0 %v940, 72
        %v2333 = vpop.permute.xlu0 %2332
        %2334 = vrot.lane.b32.xlu0 %v945, 72
        %v2335 = vpop.permute.xlu0 %2334
        %2336 = vrot.lane.b32.xlu0 %v950, 72
        %v2337 = vpop.permute.xlu0 %2336
        %v2338 = vsel %vm971, %v2315, 0
        %v2340 = vsel %vm971, %v2317, 0
        %v2342 = vsel %vm971, %v2319, 0
        %v2344 = vsel %vm971, %v2321, 0
        %v2346 = vsel %vm971, %v2323, 0
        %v2348 = vsel %vm971, %v2325, 0
        %v2350 = vsel %vm971, %v2327, 0
        %v2352 = vsel %vm971, %v2329, 0
        %v2354 = vsel %vm971, %v2331, 0
        %v2356 = vsel %vm971, %v2333, 0
        %v2358 = vsel %vm971, %v2335, 0
        %v2360 = vsel %vm971, %v2337, 0
        %2362 = vmatprep.subr.mxu0 0.0
        %2363 = vmatpush1.xpose.msra.mxu0 %v2350
        %2364 = vmatprep.subr.mxu0 0.0
        %2365 = vmatpush1.xpose.msra.mxu0 %v2352
        %2366 = vmatprep.subr.mxu0 0.0
        %2367 = vmatpush1.xpose.msra.mxu0 %v2354
        %2368 = vmatprep.subr.mxu0 0.0
        %2369 = vmatpush1.xpose.msra.mxu0 %v2356
        %2370 = vmatprep.subr.mxu0 0.0
        %2371 = vmatpush1.xpose.msra.mxu0 %v2358
        %2372 = vmatprep.subr.mxu0 0.0
        %2373 = vmatpush1.xpose.msra.mxu0 %v2360
        %2374 = vmatprep.subr.mxu0 0.0
        %2375 = vmatpush1.xpose.msra.mxu0 0.0
        %2376 = vmatprep.subr.mxu0 0.0
        %2377 = vmatpush1.xpose.msra.mxu0 0.0
        %2378 = vmatprep.subr.mxu0 0.0
        %2379 = vmatpush1.xpose.msra.mxu0 0.0
        %2380 = vmatprep.subr.mxu0 0.0
        %2381 = vmatpush1.xpose.msra.mxu0 0.0
        %2382 = vmatprep.subr.mxu0 0.0
        %2383 = vmatpush1.xpose.msra.mxu0 0.0
        %2384 = vmatprep.subr.mxu0 0.0
        %2385 = vmatpush1.xpose.msra.mxu0 0.0
        %2386 = vmatprep.subr.mxu0 0.0
        %2387 = vmatpush1.xpose.msra.mxu0 0.0
        %2388 = vmatprep.subr.mxu0 0.0
        %2389 = vmatpush1.xpose.msra.mxu0 0.0
        %2390 = vmatprep.subr.mxu0 0.0
        %2391 = vmatpush1.xpose.msra.mxu0 0.0
        %2392 = vmatprep.subr.mxu0 0.0
        %2393 = vmatpush1.xpose.msra.mxu0 0.0
        %2394 = vmatprep.subr.mxu0 0.0
        %2395 = vmatpush1.xpose.msra.mxu0 0.0
        %2396 = vmatprep.subr.mxu0 0.0
        %2397 = vmatpush1.xpose.msra.mxu0 0.0
        %2398 = vmatprep.subr.mxu0 0.0
        %2399 = vmatpush1.xpose.msra.mxu0 0.0
        %2400 = vmatprep.subr.mxu0 0.0
        %2401 = vmatpush1.xpose.msra.mxu0 0.0
        %2402 = vmatprep.subr.mxu0 0.0
        %2403 = vmatpush1.xpose.msra.mxu0 0.0
        %2404 = vmatprep.subr.mxu0 0.0
        %2405 = vmatpush1.xpose.msra.mxu0 0.0
        %2406 = vmatprep.subr.mxu0 0.0
        %2407 = vmatpush1.xpose.msra.mxu0 0.0
        %2408 = vmatprep.subr.mxu0 0.0
        %2409 = vmatpush1.xpose.msra.mxu0 0.0
        %2410 = vmatprep.subr.mxu0 0.0
        %2411 = vmatpush1.xpose.msra.mxu0 0.0
        %2412 = vmatprep.subr.mxu0 0.0
        %2413 = vmatpush1.xpose.msra.mxu0 0.0
        %2414 = vmatprep.subr.mxu0 0.0
        %2415 = vmatpush1.xpose.msra.mxu0 0.0
        %2416 = vmatprep.subr.mxu0 0.0
        %2417 = vmatpush1.xpose.msra.mxu0 0.0
        %2418 = vmatprep.subr.mxu0 0.0
        %2419 = vmatpush1.xpose.msra.mxu0 0.0
        %2420 = vmatprep.subr.mxu0 0.0
        %2421 = vmatpush1.xpose.msra.mxu0 0.0
        %2422 = vmatprep.subr.mxu0 0.0
        %2423 = vmatpush1.xpose.msra.mxu0 0.0
        %2424 = vmatprep.subr.mxu0 0.0
        %2425 = vmatpush1.xpose.msra.mxu0 0.0
        %2426 = vmatprep.mubr.f32.mxu0 0.0
        %2427 = vmatmul.mubr.f32.gmra.mrb[0].mxu0 %v2338
        %v2428 = vpop.f32.mrb[0].mxu0
        %v2429 = vadd.f32 %v719, %v2428
        %v2430 = vpop.f32.mrb[0].mxu0
        %2431 = vmatprep.mubr.f32.mxu0 0.0
        %2432 = vmatmul.mubr.f32.gmra.mrb[0].mxu0 %v2340
        %v2433 = vpop.f32.mrb[0].mxu0
        %v2434 = vadd.f32 %v720, %v2433
        %v2435 = vpop.f32.mrb[0].mxu0
        %2436 = vmatprep.mubr.f32.mxu0 0.0
        %2437 = vmatmul.mubr.f32.gmra.mrb[0].mxu0 %v2342
        %v2438 = vpop.f32.mrb[0].mxu0
        %v2439 = vadd.f32 %v721, %v2438
        %v2440 = vpop.f32.mrb[0].mxu0
        %2441 = vmatprep.mubr.f32.mxu0 0.0
        %2442 = vmatmul.mubr.f32.gmra.mrb[0].mxu0 %v2344
        %v2443 = vpop.f32.mrb[0].mxu0
        %v2444 = vadd.f32 %v722, %v2443
        %v2445 = vpop.f32.mrb[0].mxu0
        %2446 = vmatprep.mubr.f32.mxu0 0.0
        %2447 = vmatmul.mubr.f32.gmra.mrb[0].mxu0 %v2346
        %v2448 = vpop.f32.mrb[0].mxu0
        %v2449 = vadd.f32 %v723, %v2448
        %v2450 = vpop.f32.mrb[0].mxu0
        %2451 = vmatprep.mubr.f32.mxu0 0.0
        %2452 = vmatmul.mubr.f32.gmra.mrb[0].mxu0 %v2348
        %v2453 = vpop.f32.mrb[0].mxu0
        %v2454 = vadd.f32 %v724, %v2453
        %v2455 = vpop.f32.mrb[0].mxu0
        %2456 = vdwg.mxu0
        %v2457 = vsel %vm1091, %v2429, -inf
        %2458 = vmax.xlane.f32.xlu0 %v2457
        %v2459 = vpop.xlane.xlu0 %2458
        %v2460 = vsel %vm1091, %v2434, -inf
        %2461 = vmax.xlane.f32.xlu0 %v2460
        %v2462 = vpop.xlane.xlu0 %2461
        %v2463 = vsel %vm1091, %v2439, -inf
        %2464 = vmax.xlane.f32.xlu0 %v2463
        %v2465 = vpop.xlane.xlu0 %2464
        %v2466 = vsel %vm1091, %v2444, -inf
        %2467 = vmax.xlane.f32.xlu0 %v2466
        %v2468 = vpop.xlane.xlu0 %2467
        %v2469 = vsel %vm1091, %v2449, -inf
        %2470 = vmax.xlane.f32.xlu0 %v2469
        %v2471 = vpop.xlane.xlu0 %2470
        %v2472 = vsel %vm1091, %v2454, -inf
        %2473 = vmax.xlane.f32.xlu0 %v2472
        %v2474 = vpop.xlane.xlu0 %2473
        %v2475 = vsub.f32 %v2429, %v2459
        %v2476 = vsub.f32 %v2434, %v2462
        %v2477 = vsub.f32 %v2439, %v2465
        %v2478 = vsub.f32 %v2444, %v2468
        %v2479 = vsub.f32 %v2449, %v2471
        %v2480 = vsub.f32 %v2454, %v2474
        %v2481 = vmul.f32 %v2475, 1.442695
        %v2482 = vpow.pop %v2481
        %v2483 = vmul.f32 %v2476, 1.442695
        %v2484 = vpow.pop %v2483
        %v2485 = vmul.f32 %v2477, 1.442695
        %v2486 = vpow.pop %v2485
        %v2487 = vmul.f32 %v2478, 1.442695
        %v2488 = vpow.pop %v2487
        %v2489 = vmul.f32 %v2479, 1.442695
        %v2490 = vpow.pop %v2489
        %v2491 = vmul.f32 %v2480, 1.442695
        %v2492 = vpow.pop %v2491
        %v2493 = vsel %vm1091, %v2482, 0.0
        %2494 = vadd.xlane.f32.xlu0 %v2493
        %v2495 = vpop.xlane.xlu0 %2494
        %v2496 = vsel %vm1091, %v2484, 0.0
        %2497 = vadd.xlane.f32.xlu0 %v2496
        %v2498 = vpop.xlane.xlu0 %2497
        %v2499 = vsel %vm1091, %v2486, 0.0
        %2500 = vadd.xlane.f32.xlu0 %v2499
        %v2501 = vpop.xlane.xlu0 %2500
        %v2502 = vsel %vm1091, %v2488, 0.0
        %2503 = vadd.xlane.f32.xlu0 %v2502
        %v2504 = vpop.xlane.xlu0 %2503
        %v2505 = vsel %vm1091, %v2490, 0.0
        %2506 = vadd.xlane.f32.xlu0 %v2505
        %v2507 = vpop.xlane.xlu0 %2506
        %v2508 = vsel %vm1091, %v2492, 0.0
        %2509 = vadd.xlane.f32.xlu0 %v2508
        %v2510 = vpop.xlane.xlu0 %2509
        %v2511 = vrcp.pop %v2495
        %v2512 = vrcp.pop %v2498
        %v2513 = vrcp.pop %v2501
        %v2514 = vrcp.pop %v2504
        %v2515 = vrcp.pop %v2507
        %v2516 = vrcp.pop %v2510
        %2517 = vrot.lane.b32.xlu0 %v925, 40
        %v2518 = vpop.permute.xlu0 %2517
        %2519 = vrot.lane.b32.xlu0 %v930, 40
        %v2520 = vpop.permute.xlu0 %2519
        %2521 = vrot.lane.b32.xlu0 %v935, 40
        %v2522 = vpop.permute.xlu0 %2521
        %2523 = vrot.lane.b32.xlu0 %v940, 40
        %v2524 = vpop.permute.xlu0 %2523
        %2525 = vrot.lane.b32.xlu0 %v945, 40
        %v2526 = vpop.permute.xlu0 %2525
        %2527 = vrot.lane.b32.xlu0 %v950, 40
        %v2528 = vpop.permute.xlu0 %2527
        %v2536 = vsel %vm1091, %v2482, 0
        %v2539 = vsel %vm1091, %v2484, 0
        %v2542 = vsel %vm1091, %v2486, 0
        %v2545 = vsel %vm1091, %v2488, 0
        %v2548 = vsel %vm1091, %v2490, 0
        %v2551 = vsel %vm1091, %v2492, 0
        %2553 = vmatprep.subr.mxu0 0.0
        %2554 = vmatpush1.msra.mxu0 %v2518
        %2555 = vmatprep.subr.mxu0 0.0
        %2556 = vmatpush1.msra.mxu0 %v2520
        %2557 = vmatprep.subr.mxu0 0.0
        %2558 = vmatpush1.msra.mxu0 %v2522
        %2559 = vmatprep.subr.mxu0 0.0
        %2560 = vmatpush1.msra.mxu0 %v2524
        %2561 = vmatprep.subr.mxu0 0.0
        %2562 = vmatpush1.msra.mxu0 %v2526
        %2563 = vmatprep.subr.mxu0 0.0
        %2564 = vmatpush1.msra.mxu0 %v2528
        %2565 = vmatprep.subr.mxu0 0.0
        %2566 = vmatpush1.msra.mxu0 0.0
        %2567 = vmatprep.subr.mxu0 0.0
        %2568 = vmatpush1.msra.mxu0 0.0
        %2569 = vmatprep.subr.mxu0 0.0
        %2570 = vmatpush1.msra.mxu0 0.0
        %2571 = vmatprep.subr.mxu0 0.0
        %2572 = vmatpush1.msra.mxu0 0.0
        %2573 = vmatprep.subr.mxu0 0.0
        %2574 = vmatpush1.msra.mxu0 0.0
        %2575 = vmatprep.subr.mxu0 0.0
        %2576 = vmatpush1.msra.mxu0 0.0
        %2577 = vmatprep.subr.mxu0 0.0
        %2578 = vmatpush1.msra.mxu0 0.0
        %2579 = vmatprep.subr.mxu0 0.0
        %2580 = vmatpush1.msra.mxu0 0.0
        %2581 = vmatprep.subr.mxu0 0.0
        %2582 = vmatpush1.msra.mxu0 0.0
        %2583 = vmatprep.subr.mxu0 0.0
        %2584 = vmatpush1.msra.mxu0 0.0
        %2585 = vmatprep.subr.mxu0 0.0
        %2586 = vmatpush1.msra.mxu0 0.0
        %2587 = vmatprep.subr.mxu0 0.0
        %2588 = vmatpush1.msra.mxu0 0.0
        %2589 = vmatprep.subr.mxu0 0.0
        %2590 = vmatpush1.msra.mxu0 0.0
        %2591 = vmatprep.subr.mxu0 0.0
        %2592 = vmatpush1.msra.mxu0 0.0
        %2593 = vmatprep.subr.mxu0 0.0
        %2594 = vmatpush1.msra.mxu0 0.0
        %2595 = vmatprep.subr.mxu0 0.0
        %2596 = vmatpush1.msra.mxu0 0.0
        %2597 = vmatprep.subr.mxu0 0.0
        %2598 = vmatpush1.msra.mxu0 0.0
        %2599 = vmatprep.subr.mxu0 0.0
        %2600 = vmatpush1.msra.mxu0 0.0
        %2601 = vmatprep.subr.mxu0 0.0
        %2602 = vmatpush1.msra.mxu0 0.0
        %2603 = vmatprep.subr.mxu0 0.0
        %2604 = vmatpush1.msra.mxu0 0.0
        %2605 = vmatprep.subr.mxu0 0.0
        %2606 = vmatpush1.msra.mxu0 0.0
        %2607 = vmatprep.subr.mxu0 0.0
        %2608 = vmatpush1.msra.mxu0 0.0
        %2609 = vmatprep.subr.mxu0 0.0
        %2610 = vmatpush1.msra.mxu0 0.0
        %2611 = vmatprep.subr.mxu0 0.0
        %2612 = vmatpush1.msra.mxu0 0.0
        %2613 = vmatprep.subr.mxu0 0.0
        %2614 = vmatpush1.msra.mxu0 0.0
        %2615 = vmatprep.subr.mxu0 0.0
        %2616 = vmatpush1.msra.mxu0 0.0
        %2617 = vmatprep.mubr.f32.mxu0 0.0
        %2618 = vmatmul.mubr.f32.gmra.mrb[0].mxu0 %v2536
        %v2619 = vpop.f32.mrb[0].mxu0
        %v2620 = vadd.f32 0.0, %v2619
        %v2621 = vpop.f32.mrb[0].mxu0
        %2622 = vmatprep.mubr.f32.mxu0 0.0
        %2623 = vmatmul.mubr.f32.gmra.mrb[0].mxu0 %v2539
        %v2624 = vpop.f32.mrb[0].mxu0
        %v2625 = vadd.f32 0.0, %v2624
        %v2626 = vpop.f32.mrb[0].mxu0
        %2627 = vmatprep.mubr.f32.mxu0 0.0
        %2628 = vmatmul.mubr.f32.gmra.mrb[0].mxu0 %v2542
        %v2629 = vpop.f32.mrb[0].mxu0
        %v2630 = vadd.f32 0.0, %v2629
        %v2631 = vpop.f32.mrb[0].mxu0
        %2632 = vmatprep.mubr.f32.mxu0 0.0
        %2633 = vmatmul.mubr.f32.gmra.mrb[0].mxu0 %v2545
        %v2634 = vpop.f32.mrb[0].mxu0
        %v2635 = vadd.f32 0.0, %v2634
        %v2636 = vpop.f32.mrb[0].mxu0
        %2637 = vmatprep.mubr.f32.mxu0 0.0
        %2638 = vmatmul.mubr.f32.gmra.mrb[0].mxu0 %v2548
        %v2639 = vpop.f32.mrb[0].mxu0
        %v2640 = vadd.f32 0.0, %v2639
        %v2641 = vpop.f32.mrb[0].mxu0
        %2642 = vmatprep.mubr.f32.mxu0 0.0
        %2643 = vmatmul.mubr.f32.gmra.mrb[0].mxu0 %v2551
        %v2644 = vpop.f32.mrb[0].mxu0
        %v2645 = vadd.f32 0.0, %v2644
        %v2646 = vpop.f32.mrb[0].mxu0
        %2647 = vdwg.mxu0
        %v2648 = vmul.f32 %v2620, %v2511
        %v2649 = vmul.f32 %v2625, %v2512
        %v2650 = vmul.f32 %v2630, %v2513
        %v2651 = vmul.f32 %v2635, %v2514
        %v2652 = vmul.f32 %v2640, %v2515
        %v2653 = vmul.f32 %v2645, %v2516
        %v2655 = vsel %vm971, %v2648, 0
        %v2658 = vsel %vm971, %v2649, 0
        %v2661 = vsel %vm971, %v2650, 0
        %v2664 = vsel %vm971, %v2651, 0
        %v2667 = vsel %vm971, %v2652, 0
        %v2670 = vsel %vm971, %v2653, 0
        %2672 = vmatprep.subr.mxu0 0.0
        %2673 = vmatpush1.msra.mxu0 %v739
        %2674 = vmatprep.subr.mxu0 0.0
        %2675 = vmatpush1.msra.mxu0 0.0
        %2676 = vmatprep.subr.mxu0 0.0
        %2677 = vmatpush1.msra.mxu0 0.0
        %2678 = vmatprep.subr.mxu0 0.0
        %2679 = vmatpush1.msra.mxu0 0.0
        %2680 = vmatprep.subr.mxu0 0.0
        %2681 = vmatpush1.msra.mxu0 0.0
        %2682 = vmatprep.subr.mxu0 0.0
        %2683 = vmatpush1.msra.mxu0 0.0
        %2684 = vmatprep.subr.mxu0 0.0
        %2685 = vmatpush1.msra.mxu0 0.0
        %2686 = vmatprep.subr.mxu0 0.0
        %2687 = vmatpush1.msra.mxu0 0.0
        %2688 = vmatprep.subr.mxu0 0.0
        %2689 = vmatpush1.msra.mxu0 0.0
        %2690 = vmatprep.subr.mxu0 0.0
        %2691 = vmatpush1.msra.mxu0 0.0
        %2692 = vmatprep.subr.mxu0 0.0
        %2693 = vmatpush1.msra.mxu0 0.0
        %2694 = vmatprep.subr.mxu0 0.0
        %2695 = vmatpush1.msra.mxu0 0.0
        %2696 = vmatprep.subr.mxu0 0.0
        %2697 = vmatpush1.msra.mxu0 0.0
        %2698 = vmatprep.subr.mxu0 0.0
        %2699 = vmatpush1.msra.mxu0 0.0
        %2700 = vmatprep.subr.mxu0 0.0
        %2701 = vmatpush1.msra.mxu0 0.0
        %2702 = vmatprep.subr.mxu0 0.0
        %2703 = vmatpush1.msra.mxu0 0.0
        %2704 = vmatprep.subr.mxu0 0.0
        %2705 = vmatpush1.msra.mxu0 0.0
        %2706 = vmatprep.subr.mxu0 0.0
        %2707 = vmatpush1.msra.mxu0 0.0
        %2708 = vmatprep.subr.mxu0 0.0
        %2709 = vmatpush1.msra.mxu0 0.0
        %2710 = vmatprep.subr.mxu0 0.0
        %2711 = vmatpush1.msra.mxu0 0.0
        %2712 = vmatprep.subr.mxu0 0.0
        %2713 = vmatpush1.msra.mxu0 0.0
        %2714 = vmatprep.subr.mxu0 0.0
        %2715 = vmatpush1.msra.mxu0 0.0
        %2716 = vmatprep.subr.mxu0 0.0
        %2717 = vmatpush1.msra.mxu0 0.0
        %2718 = vmatprep.subr.mxu0 0.0
        %2719 = vmatpush1.msra.mxu0 0.0
        %2720 = vmatprep.subr.mxu0 0.0
        %2721 = vmatpush1.msra.mxu0 0.0
        %2722 = vmatprep.subr.mxu0 0.0
        %2723 = vmatpush1.msra.mxu0 0.0
        %2724 = vmatprep.subr.mxu0 0.0
        %2725 = vmatpush1.msra.mxu0 0.0
        %2726 = vmatprep.subr.mxu0 0.0
        %2727 = vmatpush1.msra.mxu0 0.0
        %2728 = vmatprep.subr.mxu0 0.0
        %2729 = vmatpush1.msra.mxu0 0.0
        %2730 = vmatprep.subr.mxu0 0.0
        %2731 = vmatpush1.msra.mxu0 0.0
        %2732 = vmatprep.subr.mxu0 0.0
        %2733 = vmatpush1.msra.mxu0 0.0
        %2734 = vmatprep.subr.mxu0 0.0
        %2735 = vmatpush1.msra.mxu0 0.0
        %2736 = vmatprep.mubr.f32.mxu0 0.0
        %2737 = vmatmul.mubr.f32.gmra.mrb[0].mxu0 %v2655
        %v2738 = vpop.f32.mrb[0].mxu0
        %v2739 = vadd.f32 0.0, %v2738
        %v2740 = vpop.f32.mrb[0].mxu0
        %2741 = vmatprep.mubr.f32.mxu0 0.0
        %2742 = vmatmul.mubr.f32.gmra.mrb[0].mxu0 %v2658
        %v2743 = vpop.f32.mrb[0].mxu0
        %v2744 = vadd.f32 0.0, %v2743
        %v2745 = vpop.f32.mrb[0].mxu0
        %2746 = vmatprep.mubr.f32.mxu0 0.0
        %2747 = vmatmul.mubr.f32.gmra.mrb[0].mxu0 %v2661
        %v2748 = vpop.f32.mrb[0].mxu0
        %v2749 = vadd.f32 0.0, %v2748
        %v2750 = vpop.f32.mrb[0].mxu0
        %2751 = vmatprep.mubr.f32.mxu0 0.0
        %2752 = vmatmul.mubr.f32.gmra.mrb[0].mxu0 %v2664
        %v2753 = vpop.f32.mrb[0].mxu0
        %v2754 = vadd.f32 0.0, %v2753
        %v2755 = vpop.f32.mrb[0].mxu0
        %2756 = vmatprep.mubr.f32.mxu0 0.0
        %2757 = vmatmul.mubr.f32.gmra.mrb[0].mxu0 %v2667
        %v2758 = vpop.f32.mrb[0].mxu0
        %v2759 = vadd.f32 0.0, %v2758
        %v2760 = vpop.f32.mrb[0].mxu0
        %2761 = vmatprep.mubr.f32.mxu0 0.0
        %2762 = vmatmul.mubr.f32.gmra.mrb[0].mxu0 %v2670
        %v2763 = vpop.f32.mrb[0].mxu0
        %v2764 = vadd.f32 0.0, %v2763
        %v2765 = vpop.f32.mrb[0].mxu0
        %2766 = vdwg.mxu0
        %v2767 = vadd.f32 %v2308, %v2739
        %v2768 = vadd.f32 %v2309, %v2744
        %v2769 = vadd.f32 %v2310, %v2749
        %v2770 = vadd.f32 %v2311, %v2754
        %v2771 = vadd.f32 %v2312, %v2759
        %v2772 = vadd.f32 %v2313, %v2764
        %v2773 = vadd.f32 %v691, %v2767
        %v2774 = vadd.f32 %v696, %v2768
        %v2775 = vadd.f32 %v701, %v2769
        %v2776 = vadd.f32 %v706, %v2770
        %v2777 = vadd.f32 %v711, %v2771
        %v2778 = vadd.f32 %v716, %v2772
        %v2779 = vlaneseq
        %v2780 = vshrl.u32 %v2779, 7
        %v2781 = vsub.s32 0, %v2780
        %v2782 = vrot.slane %v727, %v2781
        %v2783 = vadd.f32 %v2773, %v2782
        %v2784 = vadd.f32 %v2774, %v2782
        %v2785 = vadd.f32 %v2775, %v2782
        %v2786 = vadd.f32 %v2776, %v2782
        %v2787 = vadd.f32 %v2777, %v2782
        %v2788 = vadd.f32 %v2778, %v2782
        %v2789 = vsel %vm740, %v2783, 0.0
        %2790 = vadd.xlane.f32.xlu0 %v2789
        %v2791 = vpop.xlane.xlu0 %2790
        %v2792 = vsel %vm740, %v2784, 0.0
        %2793 = vadd.xlane.f32.xlu0 %v2792
        %v2794 = vpop.xlane.xlu0 %2793
        %v2795 = vsel %vm740, %v2785, 0.0
        %2796 = vadd.xlane.f32.xlu0 %v2795
        %v2797 = vpop.xlane.xlu0 %2796
        %v2798 = vsel %vm740, %v2786, 0.0
        %2799 = vadd.xlane.f32.xlu0 %v2798
        %v2800 = vpop.xlane.xlu0 %2799
        %v2801 = vsel %vm740, %v2787, 0.0
        %2802 = vadd.xlane.f32.xlu0 %v2801
        %v2803 = vpop.xlane.xlu0 %2802
        %v2804 = vsel %vm740, %v2788, 0.0
        %2805 = vadd.xlane.f32.xlu0 %v2804
        %v2806 = vpop.xlane.xlu0 %2805
        %v2807 = vmul.f32 %v2791, %v759
        %v2808 = vmul.f32 %v2794, %v759
        %v2809 = vmul.f32 %v2797, %v759
        %v2810 = vmul.f32 %v2800, %v759
        %v2811 = vmul.f32 %v2803, %v759
        %v2812 = vmul.f32 %v2806, %v759
        %v2813 = vsub.f32 %v2783, %v2807
        %v2814 = vsub.f32 %v2784, %v2808
        %v2815 = vsub.f32 %v2785, %v2809
        %v2816 = vsub.f32 %v2786, %v2810
        %v2817 = vsub.f32 %v2787, %v2811
        %v2818 = vsub.f32 %v2788, %v2812
        %v2819 = vmul.f32 %v2813, %v2813
        %v2820 = vmul.f32 %v2814, %v2814
        %v2821 = vmul.f32 %v2815, %v2815
        %v2822 = vmul.f32 %v2816, %v2816
        %v2823 = vmul.f32 %v2817, %v2817
        %v2824 = vmul.f32 %v2818, %v2818
        %v2825 = vsel %vm740, %v2819, 0.0
        %2826 = vadd.xlane.f32.xlu0 %v2825
        %v2827 = vpop.xlane.xlu0 %2826
        %v2828 = vsel %vm740, %v2820, 0.0
        %2829 = vadd.xlane.f32.xlu0 %v2828
        %v2830 = vpop.xlane.xlu0 %2829
        %v2831 = vsel %vm740, %v2821, 0.0
        %2832 = vadd.xlane.f32.xlu0 %v2831
        %v2833 = vpop.xlane.xlu0 %2832
        %v2834 = vsel %vm740, %v2822, 0.0
        %2835 = vadd.xlane.f32.xlu0 %v2834
        %v2836 = vpop.xlane.xlu0 %2835
        %v2837 = vsel %vm740, %v2823, 0.0
        %2838 = vadd.xlane.f32.xlu0 %v2837
        %v2839 = vpop.xlane.xlu0 %2838
        %v2840 = vsel %vm740, %v2824, 0.0
        %2841 = vadd.xlane.f32.xlu0 %v2840
        %v2842 = vpop.xlane.xlu0 %2841
        %v2843 = vmul.f32 %v2827, %v759
        %v2844 = vmul.f32 %v2830, %v759
        %v2845 = vmul.f32 %v2833, %v759
        %v2846 = vmul.f32 %v2836, %v759
        %v2847 = vmul.f32 %v2839, %v759
        %v2848 = vmul.f32 %v2842, %v759
        %v2849 = vadd.f32 %v2843, 1e-05
        %v2850 = vadd.f32 %v2844, 1e-05
        %v2851 = vadd.f32 %v2845, 1e-05
        %v2852 = vadd.f32 %v2846, 1e-05
        %v2853 = vadd.f32 %v2847, 1e-05
        %v2854 = vadd.f32 %v2848, 1e-05
        %v2855 = vrsqrt.pop %v2849
        %v2856 = vrsqrt.pop %v2850
        %v2857 = vrsqrt.pop %v2851
        %v2858 = vrsqrt.pop %v2852
        %v2859 = vrsqrt.pop %v2853
        %v2860 = vrsqrt.pop %v2854
        %v2861 = vmul.f32 %v2813, %v2855
        %v2862 = vmul.f32 %v2814, %v2856
        %v2863 = vmul.f32 %v2815, %v2857
        %v2864 = vmul.f32 %v2816, %v2858
        %v2865 = vmul.f32 %v2817, %v2859
        %v2866 = vmul.f32 %v2818, %v2860
        %v2867 = vlaneseq
        %v2868 = vshrl.u32 %v2867, 7
        %v2869 = vsub.s32 0, %v2868
        %v2870 = vrot.slane %v728, %v2869
        %v2871 = vmul.f32 %v2861, %v2870
        %v2872 = vmul.f32 %v2862, %v2870
        %v2873 = vmul.f32 %v2863, %v2870
        %v2874 = vmul.f32 %v2864, %v2870
        %v2875 = vmul.f32 %v2865, %v2870
        %v2876 = vmul.f32 %v2866, %v2870
        %v2877 = vlaneseq
        %v2878 = vshrl.u32 %v2877, 7
        %v2879 = vsub.s32 0, %v2878
        %v2880 = vrot.slane %v729, %v2879
        %v2881 = vadd.f32 %v2871, %v2880
        %v2882 = vadd.f32 %v2872, %v2880
        %v2883 = vadd.f32 %v2873, %v2880
        %v2884 = vadd.f32 %v2874, %v2880
        %v2885 = vadd.f32 %v2875, %v2880
        %v2886 = vadd.f32 %v2876, %v2880
        %v2887 = vld [vmem:[%s7] sm:$0xff]
        %v2888 = vld [vmem:[%s7 + $0x8] sm:$0xff]
        %v2889 = vld [vmem:[%s7 + $0x10] sm:$0xff]
        %v2890 = vld [vmem:[%s7 + $0x18] sm:$0xff]
        %v2891 = vlaneseq
        %v2892 = vshrl.u32 %v2891, 7
        %v2893 = vsub.s32 0, %v2892
        %v2894 = vrot.slane %v730, %v2893
        %v2896 = vsel %vm740, %v2881, 0
        %v2899 = vsel %vm740, %v2882, 0
        %v2902 = vsel %vm740, %v2883, 0
        %v2905 = vsel %vm740, %v2884, 0
        %v2908 = vsel %vm740, %v2885, 0
        %v2911 = vsel %vm740, %v2886, 0
        %2913 = vmatprep.subr.mxu0 0.0
        %2914 = vmatpush1.msra.mxu0 %v2887
        %2915 = vmatprep.subr.mxu0 0.0
        %2916 = vmatpush1.msra.mxu0 %v2888
        %2917 = vmatprep.subr.mxu0 0.0
        %2918 = vmatpush1.msra.mxu0 %v2889
        %2919 = vmatprep.subr.mxu0 0.0
        %2920 = vmatpush1.msra.mxu0 %v2890
        %2921 = vmatprep.subr.mxu0 0.0
        %2922 = vmatpush1.msra.mxu0 0.0
        %2923 = vmatprep.subr.mxu0 0.0
        %2924 = vmatpush1.msra.mxu0 0.0
        %2925 = vmatprep.subr.mxu0 0.0
        %2926 = vmatpush1.msra.mxu0 0.0
        %2927 = vmatprep.subr.mxu0 0.0
        %2928 = vmatpush1.msra.mxu0 0.0
        %2929 = vmatprep.subr.mxu0 0.0
        %2930 = vmatpush1.msra.mxu0 0.0
        %2931 = vmatprep.subr.mxu0 0.0
        %2932 = vmatpush1.msra.mxu0 0.0
        %2933 = vmatprep.subr.mxu0 0.0
        %2934 = vmatpush1.msra.mxu0 0.0
        %2935 = vmatprep.subr.mxu0 0.0
        %2936 = vmatpush1.msra.mxu0 0.0
        %2937 = vmatprep.subr.mxu0 0.0
        %2938 = vmatpush1.msra.mxu0 0.0
        %2939 = vmatprep.subr.mxu0 0.0
        %2940 = vmatpush1.msra.mxu0 0.0
        %2941 = vmatprep.subr.mxu0 0.0
        %2942 = vmatpush1.msra.mxu0 0.0
        %2943 = vmatprep.subr.mxu0 0.0
        %2944 = vmatpush1.msra.mxu0 0.0
        %2945 = vmatprep.subr.mxu0 0.0
        %2946 = vmatpush1.msra.mxu0 0.0
        %2947 = vmatprep.subr.mxu0 0.0
        %2948 = vmatpush1.msra.mxu0 0.0
        %2949 = vmatprep.subr.mxu0 0.0
        %2950 = vmatpush1.msra.mxu0 0.0
        %2951 = vmatprep.subr.mxu0 0.0
        %2952 = vmatpush1.msra.mxu0 0.0
        %2953 = vmatprep.subr.mxu0 0.0
        %2954 = vmatpush1.msra.mxu0 0.0
        %2955 = vmatprep.subr.mxu0 0.0
        %2956 = vmatpush1.msra.mxu0 0.0
        %2957 = vmatprep.subr.mxu0 0.0
        %2958 = vmatpush1.msra.mxu0 0.0
        %2959 = vmatprep.subr.mxu0 0.0
        %2960 = vmatpush1.msra.mxu0 0.0
        %2961 = vmatprep.subr.mxu0 0.0
        %2962 = vmatpush1.msra.mxu0 0.0
        %2963 = vmatprep.subr.mxu0 0.0
        %2964 = vmatpush1.msra.mxu0 0.0
        %2965 = vmatprep.subr.mxu0 0.0
        %2966 = vmatpush1.msra.mxu0 0.0
        %2967 = vmatprep.subr.mxu0 0.0
        %2968 = vmatpush1.msra.mxu0 0.0
        %2969 = vmatprep.subr.mxu0 0.0
        %2970 = vmatpush1.msra.mxu0 0.0
        %2971 = vmatprep.subr.mxu0 0.0
        %2972 = vmatpush1.msra.mxu0 0.0
        %2973 = vmatprep.subr.mxu0 0.0
        %2974 = vmatpush1.msra.mxu0 0.0
        %2975 = vmatprep.subr.mxu0 0.0
        %2976 = vmatpush1.msra.mxu0 0.0
        %2977 = vmatprep.mubr.f32.mxu0 0.0
        %2978 = vmatmul.mubr.f32.gmra.mrb[0].mxu0 %v2896
        %v2979 = vpop.f32.mrb[0].mxu0
        %v2980 = vadd.f32 %v2894, %v2979
        %v2981 = vpop.f32.mrb[0].mxu0
        %2982 = vmatprep.mubr.f32.mxu0 0.0
        %2983 = vmatmul.mubr.f32.gmra.mrb[0].mxu0 %v2899
        %v2984 = vpop.f32.mrb[0].mxu0
        %v2985 = vadd.f32 %v2894, %v2984
        %v2986 = vpop.f32.mrb[0].mxu0
        %2987 = vmatprep.mubr.f32.mxu0 0.0
        %2988 = vmatmul.mubr.f32.gmra.mrb[0].mxu0 %v2902
        %v2989 = vpop.f32.mrb[0].mxu0
        %v2990 = vadd.f32 %v2894, %v2989
        %v2991 = vpop.f32.mrb[0].mxu0
        %2992 = vmatprep.mubr.f32.mxu0 0.0
        %2993 = vmatmul.mubr.f32.gmra.mrb[0].mxu0 %v2905
        %v2994 = vpop.f32.mrb[0].mxu0
        %v2995 = vadd.f32 %v2894, %v2994
        %v2996 = vpop.f32.mrb[0].mxu0
        %2997 = vmatprep.mubr.f32.mxu0 0.0
        %2998 = vmatmul.mubr.f32.gmra.mrb[0].mxu0 %v2908
        %v2999 = vpop.f32.mrb[0].mxu0
        %v3000 = vadd.f32 %v2894, %v2999
        %v3001 = vpop.f32.mrb[0].mxu0
        %3002 = vmatprep.mubr.f32.mxu0 0.0
        %3003 = vmatmul.mubr.f32.gmra.mrb[0].mxu0 %v2911
        %v3004 = vpop.f32.mrb[0].mxu0
        %v3005 = vadd.f32 %v2894, %v3004
        %v3006 = vpop.f32.mrb[0].mxu0
        %3007 = vdwg.mxu0
        %v3008 = vmax.f32 %v2980, 0.0
        %v3009 = vmax.f32 %v2985, 0.0
        %v3010 = vmax.f32 %v2990, 0.0
        %v3011 = vmax.f32 %v2995, 0.0
        %v3012 = vmax.f32 %v3000, 0.0
        %v3013 = vmax.f32 %v3005, 0.0
        %v3014 = vld [vmem:[%s8] sm:$0xff]
        %v3015 = vld [vmem:[%s8 + $0x8] sm:$0xff]
        %v3016 = vld [vmem:[%s8 + $0x10] sm:$0xff]
        %v3017 = vld [vmem:[%s8 + $0x18] sm:$0xff]
        %v3018 = vld [vmem:[%s8 + $0x20] sm:$0xff]
        %v3019 = vld [vmem:[%s8 + $0x28] sm:$0xff]
        %v3020 = vld [vmem:[%s8 + $0x30] sm:$0xff]
        %v3021 = vld [vmem:[%s8 + $0x38] sm:$0xff]
        %v3022 = vld [vmem:[%s8 + $0x40] sm:$0xff]
        %v3023 = vld [vmem:[%s8 + $0x48] sm:$0xff]
        %v3024 = vld [vmem:[%s8 + $0x50] sm:$0xff]
        %v3025 = vld [vmem:[%s8 + $0x58] sm:$0xff]
        %v3026 = vld [vmem:[%s8 + $0x60] sm:$0xff]
        %v3027 = vld [vmem:[%s8 + $0x68] sm:$0xff]
        %v3028 = vld [vmem:[%s8 + $0x70] sm:$0xff]
        %v3029 = vld [vmem:[%s8 + $0x78] sm:$0xff]
        %3030 = vmatprep.subr.mxu0 0.0
        %3031 = vmatpush1.msra.mxu0 %v3014
        %3032 = vmatprep.subr.mxu0 0.0
        %3033 = vmatpush1.msra.mxu0 %v3015
        %3034 = vmatprep.subr.mxu0 0.0
        %3035 = vmatpush1.msra.mxu0 %v3016
        %3036 = vmatprep.subr.mxu0 0.0
        %3037 = vmatpush1.msra.mxu0 %v3017
        %3038 = vmatprep.subr.mxu0 0.0
        %3039 = vmatpush1.msra.mxu0 %v3018
        %3040 = vmatprep.subr.mxu0 0.0
        %3041 = vmatpush1.msra.mxu0 %v3019
        %3042 = vmatprep.subr.mxu0 0.0
        %3043 = vmatpush1.msra.mxu0 %v3020
        %3044 = vmatprep.subr.mxu0 0.0
        %3045 = vmatpush1.msra.mxu0 %v3021
        %3046 = vmatprep.subr.mxu0 0.0
        %3047 = vmatpush1.msra.mxu0 %v3022
        %3048 = vmatprep.subr.mxu0 0.0
        %3049 = vmatpush1.msra.mxu0 %v3023
        %3050 = vmatprep.subr.mxu0 0.0
        %3051 = vmatpush1.msra.mxu0 %v3024
        %3052 = vmatprep.subr.mxu0 0.0
        %3053 = vmatpush1.msra.mxu0 %v3025
        %3054 = vmatprep.subr.mxu0 0.0
        %3055 = vmatpush1.msra.mxu0 %v3026
        %3056 = vmatprep.subr.mxu0 0.0
        %3057 = vmatpush1.msra.mxu0 %v3027
        %3058 = vmatprep.subr.mxu0 0.0
        %3059 = vmatpush1.msra.mxu0 %v3028
        %3060 = vmatprep.subr.mxu0 0.0
        %3061 = vmatpush1.msra.mxu0 %v3029
        %3062 = vmatprep.subr.mxu0 0.0
        %3063 = vmatpush1.msra.mxu0 0.0
        %3064 = vmatprep.subr.mxu0 0.0
        %3065 = vmatpush1.msra.mxu0 0.0
        %3066 = vmatprep.subr.mxu0 0.0
        %3067 = vmatpush1.msra.mxu0 0.0
        %3068 = vmatprep.subr.mxu0 0.0
        %3069 = vmatpush1.msra.mxu0 0.0
        %3070 = vmatprep.subr.mxu0 0.0
        %3071 = vmatpush1.msra.mxu0 0.0
        %3072 = vmatprep.subr.mxu0 0.0
        %3073 = vmatpush1.msra.mxu0 0.0
        %3074 = vmatprep.subr.mxu0 0.0
        %3075 = vmatpush1.msra.mxu0 0.0
        %3076 = vmatprep.subr.mxu0 0.0
        %3077 = vmatpush1.msra.mxu0 0.0
        %3078 = vmatprep.subr.mxu0 0.0
        %3079 = vmatpush1.msra.mxu0 0.0
        %3080 = vmatprep.subr.mxu0 0.0
        %3081 = vmatpush1.msra.mxu0 0.0
        %3082 = vmatprep.subr.mxu0 0.0
        %3083 = vmatpush1.msra.mxu0 0.0
        %3084 = vmatprep.subr.mxu0 0.0
        %3085 = vmatpush1.msra.mxu0 0.0
        %3086 = vmatprep.subr.mxu0 0.0
        %3087 = vmatpush1.msra.mxu0 0.0
        %3088 = vmatprep.subr.mxu0 0.0
        %3089 = vmatpush1.msra.mxu0 0.0
        %3090 = vmatprep.subr.mxu0 0.0
        %3091 = vmatpush1.msra.mxu0 0.0
        %3092 = vmatprep.subr.mxu0 0.0
        %3093 = vmatpush1.msra.mxu0 0.0
        %3094 = vmatprep.mubr.f32.mxu0 0.0
        %3095 = vmatmul.mubr.f32.gmra.mrb[0].mxu0 %v3008
        %v3096 = vpop.f32.mrb[0].mxu0
        %v3097 = vadd.f32 0.0, %v3096
        %v3098 = vpop.f32.mrb[0].mxu0
        %3099 = vmatprep.mubr.f32.mxu0 0.0
        %3100 = vmatmul.mubr.f32.gmra.mrb[0].mxu0 %v3009
        %v3101 = vpop.f32.mrb[0].mxu0
        %v3102 = vadd.f32 0.0, %v3101
        %v3103 = vpop.f32.mrb[0].mxu0
        %3104 = vmatprep.mubr.f32.mxu0 0.0
        %3105 = vmatmul.mubr.f32.gmra.mrb[0].mxu0 %v3010
        %v3106 = vpop.f32.mrb[0].mxu0
        %v3107 = vadd.f32 0.0, %v3106
        %v3108 = vpop.f32.mrb[0].mxu0
        %3109 = vmatprep.mubr.f32.mxu0 0.0
        %3110 = vmatmul.mubr.f32.gmra.mrb[0].mxu0 %v3011
        %v3111 = vpop.f32.mrb[0].mxu0
        %v3112 = vadd.f32 0.0, %v3111
        %v3113 = vpop.f32.mrb[0].mxu0
        %3114 = vmatprep.mubr.f32.mxu0 0.0
        %3115 = vmatmul.mubr.f32.gmra.mrb[0].mxu0 %v3012
        %v3116 = vpop.f32.mrb[0].mxu0
        %v3117 = vadd.f32 0.0, %v3116
        %v3118 = vpop.f32.mrb[0].mxu0
        %3119 = vmatprep.mubr.f32.mxu0 0.0
        %3120 = vmatmul.mubr.f32.gmra.mrb[0].mxu0 %v3013
        %v3121 = vpop.f32.mrb[0].mxu0
        %v3122 = vadd.f32 0.0, %v3121
        %v3123 = vpop.f32.mrb[0].mxu0
        %3124 = vdwg.mxu0
        %v3125 = vadd.f32 %v2783, %v3097
        %v3126 = vadd.f32 %v2784, %v3102
        %v3127 = vadd.f32 %v2785, %v3107
        %v3128 = vadd.f32 %v2786, %v3112
        %v3129 = vadd.f32 %v2787, %v3117
        %v3130 = vadd.f32 %v2788, %v3122
        %v3131 = vlaneseq
        %v3132 = vshrl.u32 %v3131, 7
        %v3133 = vsub.s32 0, %v3132
        %v3134 = vrot.slane %v731, %v3133
        %v3135 = vadd.f32 %v3125, %v3134
        %v3136 = vadd.f32 %v3126, %v3134
        %v3137 = vadd.f32 %v3127, %v3134
        %v3138 = vadd.f32 %v3128, %v3134
        %v3139 = vadd.f32 %v3129, %v3134
        %v3140 = vadd.f32 %v3130, %v3134
        %v3141 = vld [vmem:[%s4 + $0x7] sm:$0x1]
        %v3142 = vld [vmem:[%s4 + $0x8] sm:$0x1]
        %v3143 = vld [vmem:[%s4 + $0x9] sm:$0x1]
        %v3144 = vld [vmem:[%s4 + $0xa] sm:$0x1]
        %v3145 = vld [vmem:[%s4 + $0xb] sm:$0x1]
        %v3146 = vld [vmem:[%s4 + $0xc] sm:$0x1]
        %v3147 = vld [vmem:[%s4 + $0xd] sm:$0x1]
        %s3148 = scalar_lea.vmem %s5, 32
        %v3149 = vld [vmem:[%s3148] sm:$0xff]
        %v3150 = vld [vmem:[%s3148 + $0x8] sm:$0xff]
        %v3151 = vld [vmem:[%s3148 + $0x10] sm:$0xff]
        %v3152 = vld [vmem:[%s3148 + $0x18] sm:$0xff]
        %s3153 = scalar_lea.vmem %s6, 32
        %v3154 = vld [vmem:[%s3153] sm:$0xff]
        %v3155 = vld [vmem:[%s3153 + $0x8] sm:$0xff]
        %v3156 = vld [vmem:[%s3153 + $0x10] sm:$0xff]
        %v3157 = vld [vmem:[%s3153 + $0x18] sm:$0xff]
        %v3158 = vsel %vm740, %v3135, 0.0
        %3159 = vadd.xlane.f32.xlu0 %v3158
        %v3160 = vpop.xlane.xlu0 %3159
        %v3161 = vsel %vm740, %v3136, 0.0
        %3162 = vadd.xlane.f32.xlu0 %v3161
        %v3163 = vpop.xlane.xlu0 %3162
        %v3164 = vsel %vm740, %v3137, 0.0
        %3165 = vadd.xlane.f32.xlu0 %v3164
        %v3166 = vpop.xlane.xlu0 %3165
        %v3167 = vsel %vm740, %v3138, 0.0
        %3168 = vadd.xlane.f32.xlu0 %v3167
        %v3169 = vpop.xlane.xlu0 %3168
        %v3170 = vsel %vm740, %v3139, 0.0
        %3171 = vadd.xlane.f32.xlu0 %v3170
        %v3172 = vpop.xlane.xlu0 %3171
        %v3173 = vsel %vm740, %v3140, 0.0
        %3174 = vadd.xlane.f32.xlu0 %v3173
        %v3175 = vpop.xlane.xlu0 %3174
        %v3176 = vmul.f32 %v3160, %v759
        %v3177 = vmul.f32 %v3163, %v759
        %v3178 = vmul.f32 %v3166, %v759
        %v3179 = vmul.f32 %v3169, %v759
        %v3180 = vmul.f32 %v3172, %v759
        %v3181 = vmul.f32 %v3175, %v759
        %v3182 = vsub.f32 %v3135, %v3176
        %v3183 = vsub.f32 %v3136, %v3177
        %v3184 = vsub.f32 %v3137, %v3178
        %v3185 = vsub.f32 %v3138, %v3179
        %v3186 = vsub.f32 %v3139, %v3180
        %v3187 = vsub.f32 %v3140, %v3181
        %v3188 = vmul.f32 %v3182, %v3182
        %v3189 = vmul.f32 %v3183, %v3183
        %v3190 = vmul.f32 %v3184, %v3184
        %v3191 = vmul.f32 %v3185, %v3185
        %v3192 = vmul.f32 %v3186, %v3186
        %v3193 = vmul.f32 %v3187, %v3187
        %v3194 = vsel %vm740, %v3188, 0.0
        %3195 = vadd.xlane.f32.xlu0 %v3194
        %v3196 = vpop.xlane.xlu0 %3195
        %v3197 = vsel %vm740, %v3189, 0.0
        %3198 = vadd.xlane.f32.xlu0 %v3197
        %v3199 = vpop.xlane.xlu0 %3198
        %v3200 = vsel %vm740, %v3190, 0.0
        %3201 = vadd.xlane.f32.xlu0 %v3200
        %v3202 = vpop.xlane.xlu0 %3201
        %v3203 = vsel %vm740, %v3191, 0.0
        %3204 = vadd.xlane.f32.xlu0 %v3203
        %v3205 = vpop.xlane.xlu0 %3204
        %v3206 = vsel %vm740, %v3192, 0.0
        %3207 = vadd.xlane.f32.xlu0 %v3206
        %v3208 = vpop.xlane.xlu0 %3207
        %v3209 = vsel %vm740, %v3193, 0.0
        %3210 = vadd.xlane.f32.xlu0 %v3209
        %v3211 = vpop.xlane.xlu0 %3210
        %v3212 = vmul.f32 %v3196, %v759
        %v3213 = vmul.f32 %v3199, %v759
        %v3214 = vmul.f32 %v3202, %v759
        %v3215 = vmul.f32 %v3205, %v759
        %v3216 = vmul.f32 %v3208, %v759
        %v3217 = vmul.f32 %v3211, %v759
        %v3218 = vadd.f32 %v3212, 1e-05
        %v3219 = vadd.f32 %v3213, 1e-05
        %v3220 = vadd.f32 %v3214, 1e-05
        %v3221 = vadd.f32 %v3215, 1e-05
        %v3222 = vadd.f32 %v3216, 1e-05
        %v3223 = vadd.f32 %v3217, 1e-05
        %v3224 = vrsqrt.pop %v3218
        %v3225 = vrsqrt.pop %v3219
        %v3226 = vrsqrt.pop %v3220
        %v3227 = vrsqrt.pop %v3221
        %v3228 = vrsqrt.pop %v3222
        %v3229 = vrsqrt.pop %v3223
        %v3230 = vmul.f32 %v3182, %v3224
        %v3231 = vmul.f32 %v3183, %v3225
        %v3232 = vmul.f32 %v3184, %v3226
        %v3233 = vmul.f32 %v3185, %v3227
        %v3234 = vmul.f32 %v3186, %v3228
        %v3235 = vmul.f32 %v3187, %v3229
        %v3236 = vlaneseq
        %v3237 = vshrl.u32 %v3236, 7
        %v3238 = vsub.s32 0, %v3237
        %v3239 = vrot.slane %v3141, %v3238
        %v3240 = vmul.f32 %v3230, %v3239
        %v3241 = vmul.f32 %v3231, %v3239
        %v3242 = vmul.f32 %v3232, %v3239
        %v3243 = vmul.f32 %v3233, %v3239
        %v3244 = vmul.f32 %v3234, %v3239
        %v3245 = vmul.f32 %v3235, %v3239
        %v3246 = vlaneseq
        %v3247 = vshrl.u32 %v3246, 7
        %v3248 = vsub.s32 0, %v3247
        %v3249 = vrot.slane %v3142, %v3248
        %v3250 = vadd.f32 %v3240, %v3249
        %v3251 = vadd.f32 %v3241, %v3249
        %v3252 = vadd.f32 %v3242, %v3249
        %v3253 = vadd.f32 %v3243, %v3249
        %v3254 = vadd.f32 %v3244, %v3249
        %v3255 = vadd.f32 %v3245, %v3249
        %v3257 = vsel %vm740, %v3250, 0
        %v3260 = vsel %vm740, %v3251, 0
        %v3263 = vsel %vm740, %v3252, 0
        %v3266 = vsel %vm740, %v3253, 0
        %v3269 = vsel %vm740, %v3254, 0
        %v3272 = vsel %vm740, %v3255, 0
        %3274 = vmatprep.subr.mxu0 0.0
        %3275 = vmatpush1.msra.mxu0 %v3149
        %3276 = vmatprep.subr.mxu0 0.0
        %3277 = vmatpush1.msra.mxu0 %v3150
        %3278 = vmatprep.subr.mxu0 0.0
        %3279 = vmatpush1.msra.mxu0 %v3151
        %3280 = vmatprep.subr.mxu0 0.0
        %3281 = vmatpush1.msra.mxu0 %v3152
        %3282 = vmatprep.subr.mxu0 0.0
        %3283 = vmatpush1.msra.mxu0 0.0
        %3284 = vmatprep.subr.mxu0 0.0
        %3285 = vmatpush1.msra.mxu0 0.0
        %3286 = vmatprep.subr.mxu0 0.0
        %3287 = vmatpush1.msra.mxu0 0.0
        %3288 = vmatprep.subr.mxu0 0.0
        %3289 = vmatpush1.msra.mxu0 0.0
        %3290 = vmatprep.subr.mxu0 0.0
        %3291 = vmatpush1.msra.mxu0 0.0
        %3292 = vmatprep.subr.mxu0 0.0
        %3293 = vmatpush1.msra.mxu0 0.0
        %3294 = vmatprep.subr.mxu0 0.0
        %3295 = vmatpush1.msra.mxu0 0.0
        %3296 = vmatprep.subr.mxu0 0.0
        %3297 = vmatpush1.msra.mxu0 0.0
        %3298 = vmatprep.subr.mxu0 0.0
        %3299 = vmatpush1.msra.mxu0 0.0
        %3300 = vmatprep.subr.mxu0 0.0
        %3301 = vmatpush1.msra.mxu0 0.0
        %3302 = vmatprep.subr.mxu0 0.0
        %3303 = vmatpush1.msra.mxu0 0.0
        %3304 = vmatprep.subr.mxu0 0.0
        %3305 = vmatpush1.msra.mxu0 0.0
        %3306 = vmatprep.subr.mxu0 0.0
        %3307 = vmatpush1.msra.mxu0 0.0
        %3308 = vmatprep.subr.mxu0 0.0
        %3309 = vmatpush1.msra.mxu0 0.0
        %3310 = vmatprep.subr.mxu0 0.0
        %3311 = vmatpush1.msra.mxu0 0.0
        %3312 = vmatprep.subr.mxu0 0.0
        %3313 = vmatpush1.msra.mxu0 0.0
        %3314 = vmatprep.subr.mxu0 0.0
        %3315 = vmatpush1.msra.mxu0 0.0
        %3316 = vmatprep.subr.mxu0 0.0
        %3317 = vmatpush1.msra.mxu0 0.0
        %3318 = vmatprep.subr.mxu0 0.0
        %3319 = vmatpush1.msra.mxu0 0.0
        %3320 = vmatprep.subr.mxu0 0.0
        %3321 = vmatpush1.msra.mxu0 0.0
        %3322 = vmatprep.subr.mxu0 0.0
        %3323 = vmatpush1.msra.mxu0 0.0
        %3324 = vmatprep.subr.mxu0 0.0
        %3325 = vmatpush1.msra.mxu0 0.0
        %3326 = vmatprep.subr.mxu0 0.0
        %3327 = vmatpush1.msra.mxu0 0.0
        %3328 = vmatprep.subr.mxu0 0.0
        %3329 = vmatpush1.msra.mxu0 0.0
        %3330 = vmatprep.subr.mxu0 0.0
        %3331 = vmatpush1.msra.mxu0 0.0
        %3332 = vmatprep.subr.mxu0 0.0
        %3333 = vmatpush1.msra.mxu0 0.0
        %3334 = vmatprep.subr.mxu0 0.0
        %3335 = vmatpush1.msra.mxu0 0.0
        %3336 = vmatprep.subr.mxu0 0.0
        %3337 = vmatpush1.msra.mxu0 0.0
        %3338 = vmatprep.mubr.f32.mxu0 0.0
        %3339 = vmatmul.mubr.f32.gmra.mrb[0].mxu0 %v3257
        %v3340 = vpop.f32.mrb[0].mxu0
        %v3341 = vadd.f32 0.0, %v3340
        %v3342 = vpop.f32.mrb[0].mxu0
        %3343 = vmatprep.mubr.f32.mxu0 0.0
        %3344 = vmatmul.mubr.f32.gmra.mrb[0].mxu0 %v3260
        %v3345 = vpop.f32.mrb[0].mxu0
        %v3346 = vadd.f32 0.0, %v3345
        %v3347 = vpop.f32.mrb[0].mxu0
        %3348 = vmatprep.mubr.f32.mxu0 0.0
        %3349 = vmatmul.mubr.f32.gmra.mrb[0].mxu0 %v3263
        %v3350 = vpop.f32.mrb[0].mxu0
        %v3351 = vadd.f32 0.0, %v3350
        %v3352 = vpop.f32.mrb[0].mxu0
        %3353 = vmatprep.mubr.f32.mxu0 0.0
        %3354 = vmatmul.mubr.f32.gmra.mrb[0].mxu0 %v3266
        %v3355 = vpop.f32.mrb[0].mxu0
        %v3356 = vadd.f32 0.0, %v3355
        %v3357 = vpop.f32.mrb[0].mxu0
        %3358 = vmatprep.mubr.f32.mxu0 0.0
        %3359 = vmatmul.mubr.f32.gmra.mrb[0].mxu0 %v3269
        %v3360 = vpop.f32.mrb[0].mxu0
        %v3361 = vadd.f32 0.0, %v3360
        %v3362 = vpop.f32.mrb[0].mxu0
        %3363 = vmatprep.mubr.f32.mxu0 0.0
        %3364 = vmatmul.mubr.f32.gmra.mrb[0].mxu0 %v3272
        %v3365 = vpop.f32.mrb[0].mxu0
        %v3366 = vadd.f32 0.0, %v3365
        %v3367 = vpop.f32.mrb[0].mxu0
        %3368 = vdwg.mxu0
        %3375 = vrot.lane.b32.xlu0 %v3341, 96
        %v3376 = vpop.permute.xlu0 %3375
        %3377 = vrot.lane.b32.xlu0 %v3346, 96
        %v3378 = vpop.permute.xlu0 %3377
        %3379 = vrot.lane.b32.xlu0 %v3351, 96
        %v3380 = vpop.permute.xlu0 %3379
        %3381 = vrot.lane.b32.xlu0 %v3356, 96
        %v3382 = vpop.permute.xlu0 %3381
        %3383 = vrot.lane.b32.xlu0 %v3361, 96
        %v3384 = vpop.permute.xlu0 %3383
        %3385 = vrot.lane.b32.xlu0 %v3366, 96
        %v3386 = vpop.permute.xlu0 %3385
        %v3387 = vsel %vm971, %v3341, 0
        %v3389 = vsel %vm971, %v3346, 0
        %v3391 = vsel %vm971, %v3351, 0
        %v3393 = vsel %vm971, %v3356, 0
        %v3395 = vsel %vm971, %v3361, 0
        %v3397 = vsel %vm971, %v3366, 0
        %v3399 = vsel %vm971, %v3376, 0
        %v3401 = vsel %vm971, %v3378, 0
        %v3403 = vsel %vm971, %v3380, 0
        %v3405 = vsel %vm971, %v3382, 0
        %v3407 = vsel %vm971, %v3384, 0
        %v3409 = vsel %vm971, %v3386, 0
        %3411 = vmatprep.subr.mxu0 0.0
        %3412 = vmatpush1.xpose.msra.mxu0 %v3399
        %3413 = vmatprep.subr.mxu0 0.0
        %3414 = vmatpush1.xpose.msra.mxu0 %v3401
        %3415 = vmatprep.subr.mxu0 0.0
        %3416 = vmatpush1.xpose.msra.mxu0 %v3403
        %3417 = vmatprep.subr.mxu0 0.0
        %3418 = vmatpush1.xpose.msra.mxu0 %v3405
        %3419 = vmatprep.subr.mxu0 0.0
        %3420 = vmatpush1.xpose.msra.mxu0 %v3407
        %3421 = vmatprep.subr.mxu0 0.0
        %3422 = vmatpush1.xpose.msra.mxu0 %v3409
        %3423 = vmatprep.subr.mxu0 0.0
        %3424 = vmatpush1.xpose.msra.mxu0 0.0
        %3425 = vmatprep.subr.mxu0 0.0
        %3426 = vmatpush1.xpose.msra.mxu0 0.0
        %3427 = vmatprep.subr.mxu0 0.0
        %3428 = vmatpush1.xpose.msra.mxu0 0.0
        %3429 = vmatprep.subr.mxu0 0.0
        %3430 = vmatpush1.xpose.msra.mxu0 0.0
        %3431 = vmatprep.subr.mxu0 0.0
        %3432 = vmatpush1.xpose.msra.mxu0 0.0
        %3433 = vmatprep.subr.mxu0 0.0
        %3434 = vmatpush1.xpose.msra.mxu0 0.0
        %3435 = vmatprep.subr.mxu0 0.0
        %3436 = vmatpush1.xpose.msra.mxu0 0.0
        %3437 = vmatprep.subr.mxu0 0.0
        %3438 = vmatpush1.xpose.msra.mxu0 0.0
        %3439 = vmatprep.subr.mxu0 0.0
        %3440 = vmatpush1.xpose.msra.mxu0 0.0
        %3441 = vmatprep.subr.mxu0 0.0
        %3442 = vmatpush1.xpose.msra.mxu0 0.0
        %3443 = vmatprep.subr.mxu0 0.0
        %3444 = vmatpush1.xpose.msra.mxu0 0.0
        %3445 = vmatprep.subr.mxu0 0.0
        %3446 = vmatpush1.xpose.msra.mxu0 0.0
        %3447 = vmatprep.subr.mxu0 0.0
        %3448 = vmatpush1.xpose.msra.mxu0 0.0
        %3449 = vmatprep.subr.mxu0 0.0
        %3450 = vmatpush1.xpose.msra.mxu0 0.0
        %3451 = vmatprep.subr.mxu0 0.0
        %3452 = vmatpush1.xpose.msra.mxu0 0.0
        %3453 = vmatprep.subr.mxu0 0.0
        %3454 = vmatpush1.xpose.msra.mxu0 0.0
        %3455 = vmatprep.subr.mxu0 0.0
        %3456 = vmatpush1.xpose.msra.mxu0 0.0
        %3457 = vmatprep.subr.mxu0 0.0
        %3458 = vmatpush1.xpose.msra.mxu0 0.0
        %3459 = vmatprep.subr.mxu0 0.0
        %3460 = vmatpush1.xpose.msra.mxu0 0.0
        %3461 = vmatprep.subr.mxu0 0.0
        %3462 = vmatpush1.xpose.msra.mxu0 0.0
        %3463 = vmatprep.subr.mxu0 0.0
        %3464 = vmatpush1.xpose.msra.mxu0 0.0
        %3465 = vmatprep.subr.mxu0 0.0
        %3466 = vmatpush1.xpose.msra.mxu0 0.0
        %3467 = vmatprep.subr.mxu0 0.0
        %3468 = vmatpush1.xpose.msra.mxu0 0.0
        %3469 = vmatprep.subr.mxu0 0.0
        %3470 = vmatpush1.xpose.msra.mxu0 0.0
        %3471 = vmatprep.subr.mxu0 0.0
        %3472 = vmatpush1.xpose.msra.mxu0 0.0
        %3473 = vmatprep.subr.mxu0 0.0
        %3474 = vmatpush1.xpose.msra.mxu0 0.0
        %3475 = vmatprep.mubr.f32.mxu0 0.0
        %3476 = vmatmul.mubr.f32.gmra.mrb[0].mxu0 %v3387
        %v3477 = vpop.f32.mrb[0].mxu0
        %v3478 = vadd.f32 %v719, %v3477
        %v3479 = vpop.f32.mrb[0].mxu0
        %3480 = vmatprep.mubr.f32.mxu0 0.0
        %3481 = vmatmul.mubr.f32.gmra.mrb[0].mxu0 %v3389
        %v3482 = vpop.f32.mrb[0].mxu0
        %v3483 = vadd.f32 %v720, %v3482
        %v3484 = vpop.f32.mrb[0].mxu0
        %3485 = vmatprep.mubr.f32.mxu0 0.0
        %3486 = vmatmul.mubr.f32.gmra.mrb[0].mxu0 %v3391
        %v3487 = vpop.f32.mrb[0].mxu0
        %v3488 = vadd.f32 %v721, %v3487
        %v3489 = vpop.f32.mrb[0].mxu0
        %3490 = vmatprep.mubr.f32.mxu0 0.0
        %3491 = vmatmul.mubr.f32.gmra.mrb[0].mxu0 %v3393
        %v3492 = vpop.f32.mrb[0].mxu0
        %v3493 = vadd.f32 %v722, %v3492
        %v3494 = vpop.f32.mrb[0].mxu0
        %3495 = vmatprep.mubr.f32.mxu0 0.0
        %3496 = vmatmul.mubr.f32.gmra.mrb[0].mxu0 %v3395
        %v3497 = vpop.f32.mrb[0].mxu0
        %v3498 = vadd.f32 %v723, %v3497
        %v3499 = vpop.f32.mrb[0].mxu0
        %3500 = vmatprep.mubr.f32.mxu0 0.0
        %3501 = vmatmul.mubr.f32.gmra.mrb[0].mxu0 %v3397
        %v3502 = vpop.f32.mrb[0].mxu0
        %v3503 = vadd.f32 %v724, %v3502
        %v3504 = vpop.f32.mrb[0].mxu0
        %3505 = vdwg.mxu0
        %v3506 = vsel %vm1091, %v3478, -inf
        %3507 = vmax.xlane.f32.xlu0 %v3506
        %v3508 = vpop.xlane.xlu0 %3507
        %v3509 = vsel %vm1091, %v3483, -inf
        %3510 = vmax.xlane.f32.xlu0 %v3509
        %v3511 = vpop.xlane.xlu0 %3510
        %v3512 = vsel %vm1091, %v3488, -inf
        %3513 = vmax.xlane.f32.xlu0 %v3512
        %v3514 = vpop.xlane.xlu0 %3513
        %v3515 = vsel %vm1091, %v3493, -inf
        %3516 = vmax.xlane.f32.xlu0 %v3515
        %v3517 = vpop.xlane.xlu0 %3516
        %v3518 = vsel %vm1091, %v3498, -inf
        %3519 = vmax.xlane.f32.xlu0 %v3518
        %v3520 = vpop.xlane.xlu0 %3519
        %v3521 = vsel %vm1091, %v3503, -inf
        %3522 = vmax.xlane.f32.xlu0 %v3521
        %v3523 = vpop.xlane.xlu0 %3522
        %v3524 = vsub.f32 %v3478, %v3508
        %v3525 = vsub.f32 %v3483, %v3511
        %v3526 = vsub.f32 %v3488, %v3514
        %v3527 = vsub.f32 %v3493, %v3517
        %v3528 = vsub.f32 %v3498, %v3520
        %v3529 = vsub.f32 %v3503, %v3523
        %v3530 = vmul.f32 %v3524, 1.442695
        %v3531 = vpow.pop %v3530
        %v3532 = vmul.f32 %v3525, 1.442695
        %v3533 = vpow.pop %v3532
        %v3534 = vmul.f32 %v3526, 1.442695
        %v3535 = vpow.pop %v3534
        %v3536 = vmul.f32 %v3527, 1.442695
        %v3537 = vpow.pop %v3536
        %v3538 = vmul.f32 %v3528, 1.442695
        %v3539 = vpow.pop %v3538
        %v3540 = vmul.f32 %v3529, 1.442695
        %v3541 = vpow.pop %v3540
        %v3542 = vsel %vm1091, %v3531, 0.0
        %3543 = vadd.xlane.f32.xlu0 %v3542
        %v3544 = vpop.xlane.xlu0 %3543
        %v3545 = vsel %vm1091, %v3533, 0.0
        %3546 = vadd.xlane.f32.xlu0 %v3545
        %v3547 = vpop.xlane.xlu0 %3546
        %v3548 = vsel %vm1091, %v3535, 0.0
        %3549 = vadd.xlane.f32.xlu0 %v3548
        %v3550 = vpop.xlane.xlu0 %3549
        %v3551 = vsel %vm1091, %v3537, 0.0
        %3552 = vadd.xlane.f32.xlu0 %v3551
        %v3553 = vpop.xlane.xlu0 %3552
        %v3554 = vsel %vm1091, %v3539, 0.0
        %3555 = vadd.xlane.f32.xlu0 %v3554
        %v3556 = vpop.xlane.xlu0 %3555
        %v3557 = vsel %vm1091, %v3541, 0.0
        %3558 = vadd.xlane.f32.xlu0 %v3557
        %v3559 = vpop.xlane.xlu0 %3558
        %v3560 = vrcp.pop %v3544
        %v3561 = vrcp.pop %v3547
        %v3562 = vrcp.pop %v3550
        %v3563 = vrcp.pop %v3553
        %v3564 = vrcp.pop %v3556
        %v3565 = vrcp.pop %v3559
        %3566 = vrot.lane.b32.xlu0 %v3341, 64
        %v3567 = vpop.permute.xlu0 %3566
        %3568 = vrot.lane.b32.xlu0 %v3346, 64
        %v3569 = vpop.permute.xlu0 %3568
        %3570 = vrot.lane.b32.xlu0 %v3351, 64
        %v3571 = vpop.permute.xlu0 %3570
        %3572 = vrot.lane.b32.xlu0 %v3356, 64
        %v3573 = vpop.permute.xlu0 %3572
        %3574 = vrot.lane.b32.xlu0 %v3361, 64
        %v3575 = vpop.permute.xlu0 %3574
        %3576 = vrot.lane.b32.xlu0 %v3366, 64
        %v3577 = vpop.permute.xlu0 %3576
        %v3585 = vsel %vm1091, %v3531, 0
        %v3588 = vsel %vm1091, %v3533, 0
        %v3591 = vsel %vm1091, %v3535, 0
        %v3594 = vsel %vm1091, %v3537, 0
        %v3597 = vsel %vm1091, %v3539, 0
        %v3600 = vsel %vm1091, %v3541, 0
        %3602 = vmatprep.subr.mxu0 0.0
        %3603 = vmatpush1.msra.mxu0 %v3567
        %3604 = vmatprep.subr.mxu0 0.0
        %3605 = vmatpush1.msra.mxu0 %v3569
        %3606 = vmatprep.subr.mxu0 0.0
        %3607 = vmatpush1.msra.mxu0 %v3571
        %3608 = vmatprep.subr.mxu0 0.0
        %3609 = vmatpush1.msra.mxu0 %v3573
        %3610 = vmatprep.subr.mxu0 0.0
        %3611 = vmatpush1.msra.mxu0 %v3575
        %3612 = vmatprep.subr.mxu0 0.0
        %3613 = vmatpush1.msra.mxu0 %v3577
        %3614 = vmatprep.subr.mxu0 0.0
        %3615 = vmatpush1.msra.mxu0 0.0
        %3616 = vmatprep.subr.mxu0 0.0
        %3617 = vmatpush1.msra.mxu0 0.0
        %3618 = vmatprep.subr.mxu0 0.0
        %3619 = vmatpush1.msra.mxu0 0.0
        %3620 = vmatprep.subr.mxu0 0.0
        %3621 = vmatpush1.msra.mxu0 0.0
        %3622 = vmatprep.subr.mxu0 0.0
        %3623 = vmatpush1.msra.mxu0 0.0
        %3624 = vmatprep.subr.mxu0 0.0
        %3625 = vmatpush1.msra.mxu0 0.0
        %3626 = vmatprep.subr.mxu0 0.0
        %3627 = vmatpush1.msra.mxu0 0.0
        %3628 = vmatprep.subr.mxu0 0.0
        %3629 = vmatpush1.msra.mxu0 0.0
        %3630 = vmatprep.subr.mxu0 0.0
        %3631 = vmatpush1.msra.mxu0 0.0
        %3632 = vmatprep.subr.mxu0 0.0
        %3633 = vmatpush1.msra.mxu0 0.0
        %3634 = vmatprep.subr.mxu0 0.0
        %3635 = vmatpush1.msra.mxu0 0.0
        %3636 = vmatprep.subr.mxu0 0.0
        %3637 = vmatpush1.msra.mxu0 0.0
        %3638 = vmatprep.subr.mxu0 0.0
        %3639 = vmatpush1.msra.mxu0 0.0
        %3640 = vmatprep.subr.mxu0 0.0
        %3641 = vmatpush1.msra.mxu0 0.0
        %3642 = vmatprep.subr.mxu0 0.0
        %3643 = vmatpush1.msra.mxu0 0.0
        %3644 = vmatprep.subr.mxu0 0.0
        %3645 = vmatpush1.msra.mxu0 0.0
        %3646 = vmatprep.subr.mxu0 0.0
        %3647 = vmatpush1.msra.mxu0 0.0
        %3648 = vmatprep.subr.mxu0 0.0
        %3649 = vmatpush1.msra.mxu0 0.0
        %3650 = vmatprep.subr.mxu0 0.0
        %3651 = vmatpush1.msra.mxu0 0.0
        %3652 = vmatprep.subr.mxu0 0.0
        %3653 = vmatpush1.msra.mxu0 0.0
        %3654 = vmatprep.subr.mxu0 0.0
        %3655 = vmatpush1.msra.mxu0 0.0
        %3656 = vmatprep.subr.mxu0 0.0
        %3657 = vmatpush1.msra.mxu0 0.0
        %3658 = vmatprep.subr.mxu0 0.0
        %3659 = vmatpush1.msra.mxu0 0.0
        %3660 = vmatprep.subr.mxu0 0.0
        %3661 = vmatpush1.msra.mxu0 0.0
        %3662 = vmatprep.subr.mxu0 0.0
        %3663 = vmatpush1.msra.mxu0 0.0
        %3664 = vmatprep.subr.mxu0 0.0
        %3665 = vmatpush1.msra.mxu0 0.0
        %3666 = vmatprep.mubr.f32.mxu0 0.0
        %3667 = vmatmul.mubr.f32.gmra.mrb[0].mxu0 %v3585
        %v3668 = vpop.f32.mrb[0].mxu0
        %v3669 = vadd.f32 0.0, %v3668
        %v3670 = vpop.f32.mrb[0].mxu0
        %3671 = vmatprep.mubr.f32.mxu0 0.0
        %3672 = vmatmul.mubr.f32.gmra.mrb[0].mxu0 %v3588
        %v3673 = vpop.f32.mrb[0].mxu0
        %v3674 = vadd.f32 0.0, %v3673
        %v3675 = vpop.f32.mrb[0].mxu0
        %3676 = vmatprep.mubr.f32.mxu0 0.0
        %3677 = vmatmul.mubr.f32.gmra.mrb[0].mxu0 %v3591
        %v3678 = vpop.f32.mrb[0].mxu0
        %v3679 = vadd.f32 0.0, %v3678
        %v3680 = vpop.f32.mrb[0].mxu0
        %3681 = vmatprep.mubr.f32.mxu0 0.0
        %3682 = vmatmul.mubr.f32.gmra.mrb[0].mxu0 %v3594
        %v3683 = vpop.f32.mrb[0].mxu0
        %v3684 = vadd.f32 0.0, %v3683
        %v3685 = vpop.f32.mrb[0].mxu0
        %3686 = vmatprep.mubr.f32.mxu0 0.0
        %3687 = vmatmul.mubr.f32.gmra.mrb[0].mxu0 %v3597
        %v3688 = vpop.f32.mrb[0].mxu0
        %v3689 = vadd.f32 0.0, %v3688
        %v3690 = vpop.f32.mrb[0].mxu0
        %3691 = vmatprep.mubr.f32.mxu0 0.0
        %3692 = vmatmul.mubr.f32.gmra.mrb[0].mxu0 %v3600
        %v3693 = vpop.f32.mrb[0].mxu0
        %v3694 = vadd.f32 0.0, %v3693
        %v3695 = vpop.f32.mrb[0].mxu0
        %3696 = vdwg.mxu0
        %v3697 = vmul.f32 %v3669, %v3560
        %v3698 = vmul.f32 %v3674, %v3561
        %v3699 = vmul.f32 %v3679, %v3562
        %v3700 = vmul.f32 %v3684, %v3563
        %v3701 = vmul.f32 %v3689, %v3564
        %v3702 = vmul.f32 %v3694, %v3565
        %3703 = vrot.lane.b32.xlu0 %v3341, 120
        %v3704 = vpop.permute.xlu0 %3703
        %3705 = vrot.lane.b32.xlu0 %v3346, 120
        %v3706 = vpop.permute.xlu0 %3705
        %3707 = vrot.lane.b32.xlu0 %v3351, 120
        %v3708 = vpop.permute.xlu0 %3707
        %3709 = vrot.lane.b32.xlu0 %v3356, 120
        %v3710 = vpop.permute.xlu0 %3709
        %3711 = vrot.lane.b32.xlu0 %v3361, 120
        %v3712 = vpop.permute.xlu0 %3711
        %3713 = vrot.lane.b32.xlu0 %v3366, 120
        %v3714 = vpop.permute.xlu0 %3713
        %3715 = vrot.lane.b32.xlu0 %v3341, 88
        %v3716 = vpop.permute.xlu0 %3715
        %3717 = vrot.lane.b32.xlu0 %v3346, 88
        %v3718 = vpop.permute.xlu0 %3717
        %3719 = vrot.lane.b32.xlu0 %v3351, 88
        %v3720 = vpop.permute.xlu0 %3719
        %3721 = vrot.lane.b32.xlu0 %v3356, 88
        %v3722 = vpop.permute.xlu0 %3721
        %3723 = vrot.lane.b32.xlu0 %v3361, 88
        %v3724 = vpop.permute.xlu0 %3723
        %3725 = vrot.lane.b32.xlu0 %v3366, 88
        %v3726 = vpop.permute.xlu0 %3725
        %v3727 = vsel %vm971, %v3704, 0
        %v3729 = vsel %vm971, %v3706, 0
        %v3731 = vsel %vm971, %v3708, 0
        %v3733 = vsel %vm971, %v3710, 0
        %v3735 = vsel %vm971, %v3712, 0
        %v3737 = vsel %vm971, %v3714, 0
        %v3739 = vsel %vm971, %v3716, 0
        %v3741 = vsel %vm971, %v3718, 0
        %v3743 = vsel %vm971, %v3720, 0
        %v3745 = vsel %vm971, %v3722, 0
        %v3747 = vsel %vm971, %v3724, 0
        %v3749 = vsel %vm971, %v3726, 0
        %3751 = vmatprep.subr.mxu0 0.0
        %3752 = vmatpush1.xpose.msra.mxu0 %v3739
        %3753 = vmatprep.subr.mxu0 0.0
        %3754 = vmatpush1.xpose.msra.mxu0 %v3741
        %3755 = vmatprep.subr.mxu0 0.0
        %3756 = vmatpush1.xpose.msra.mxu0 %v3743
        %3757 = vmatprep.subr.mxu0 0.0
        %3758 = vmatpush1.xpose.msra.mxu0 %v3745
        %3759 = vmatprep.subr.mxu0 0.0
        %3760 = vmatpush1.xpose.msra.mxu0 %v3747
        %3761 = vmatprep.subr.mxu0 0.0
        %3762 = vmatpush1.xpose.msra.mxu0 %v3749
        %3763 = vmatprep.subr.mxu0 0.0
        %3764 = vmatpush1.xpose.msra.mxu0 0.0
        %3765 = vmatprep.subr.mxu0 0.0
        %3766 = vmatpush1.xpose.msra.mxu0 0.0
        %3767 = vmatprep.subr.mxu0 0.0
        %3768 = vmatpush1.xpose.msra.mxu0 0.0
        %3769 = vmatprep.subr.mxu0 0.0
        %3770 = vmatpush1.xpose.msra.mxu0 0.0
        %3771 = vmatprep.subr.mxu0 0.0
        %3772 = vmatpush1.xpose.msra.mxu0 0.0
        %3773 = vmatprep.subr.mxu0 0.0
        %3774 = vmatpush1.xpose.msra.mxu0 0.0
        %3775 = vmatprep.subr.mxu0 0.0
        %3776 = vmatpush1.xpose.msra.mxu0 0.0
        %3777 = vmatprep.subr.mxu0 0.0
        %3778 = vmatpush1.xpose.msra.mxu0 0.0
        %3779 = vmatprep.subr.mxu0 0.0
        %3780 = vmatpush1.xpose.msra.mxu0 0.0
        %3781 = vmatprep.subr.mxu0 0.0
        %3782 = vmatpush1.xpose.msra.mxu0 0.0
        %3783 = vmatprep.subr.mxu0 0.0
        %3784 = vmatpush1.xpose.msra.mxu0 0.0
        %3785 = vmatprep.subr.mxu0 0.0
        %3786 = vmatpush1.xpose.msra.mxu0 0.0
        %3787 = vmatprep.subr.mxu0 0.0
        %3788 = vmatpush1.xpose.msra.mxu0 0.0
        %3789 = vmatprep.subr.mxu0 0.0
        %3790 = vmatpush1.xpose.msra.mxu0 0.0
        %3791 = vmatprep.subr.mxu0 0.0
        %3792 = vmatpush1.xpose.msra.mxu0 0.0
        %3793 = vmatprep.subr.mxu0 0.0
        %3794 = vmatpush1.xpose.msra.mxu0 0.0
        %3795 = vmatprep.subr.mxu0 0.0
        %3796 = vmatpush1.xpose.msra.mxu0 0.0
        %3797 = vmatprep.subr.mxu0 0.0
        %3798 = vmatpush1.xpose.msra.mxu0 0.0
        %3799 = vmatprep.subr.mxu0 0.0
        %3800 = vmatpush1.xpose.msra.mxu0 0.0
        %3801 = vmatprep.subr.mxu0 0.0
        %3802 = vmatpush1.xpose.msra.mxu0 0.0
        %3803 = vmatprep.subr.mxu0 0.0
        %3804 = vmatpush1.xpose.msra.mxu0 0.0
        %3805 = vmatprep.subr.mxu0 0.0
        %3806 = vmatpush1.xpose.msra.mxu0 0.0
        %3807 = vmatprep.subr.mxu0 0.0
        %3808 = vmatpush1.xpose.msra.mxu0 0.0
        %3809 = vmatprep.subr.mxu0 0.0
        %3810 = vmatpush1.xpose.msra.mxu0 0.0
        %3811 = vmatprep.subr.mxu0 0.0
        %3812 = vmatpush1.xpose.msra.mxu0 0.0
        %3813 = vmatprep.subr.mxu0 0.0
        %3814 = vmatpush1.xpose.msra.mxu0 0.0
        %3815 = vmatprep.mubr.f32.mxu0 0.0
        %3816 = vmatmul.mubr.f32.gmra.mrb[0].mxu0 %v3727
        %v3817 = vpop.f32.mrb[0].mxu0
        %v3818 = vadd.f32 %v719, %v3817
        %v3819 = vpop.f32.mrb[0].mxu0
        %3820 = vmatprep.mubr.f32.mxu0 0.0
        %3821 = vmatmul.mubr.f32.gmra.mrb[0].mxu0 %v3729
        %v3822 = vpop.f32.mrb[0].mxu0
        %v3823 = vadd.f32 %v720, %v3822
        %v3824 = vpop.f32.mrb[0].mxu0
        %3825 = vmatprep.mubr.f32.mxu0 0.0
        %3826 = vmatmul.mubr.f32.gmra.mrb[0].mxu0 %v3731
        %v3827 = vpop.f32.mrb[0].mxu0
        %v3828 = vadd.f32 %v721, %v3827
        %v3829 = vpop.f32.mrb[0].mxu0
        %3830 = vmatprep.mubr.f32.mxu0 0.0
        %3831 = vmatmul.mubr.f32.gmra.mrb[0].mxu0 %v3733
        %v3832 = vpop.f32.mrb[0].mxu0
        %v3833 = vadd.f32 %v722, %v3832
        %v3834 = vpop.f32.mrb[0].mxu0
        %3835 = vmatprep.mubr.f32.mxu0 0.0
        %3836 = vmatmul.mubr.f32.gmra.mrb[0].mxu0 %v3735
        %v3837 = vpop.f32.mrb[0].mxu0
        %v3838 = vadd.f32 %v723, %v3837
        %v3839 = vpop.f32.mrb[0].mxu0
        %3840 = vmatprep.mubr.f32.mxu0 0.0
        %3841 = vmatmul.mubr.f32.gmra.mrb[0].mxu0 %v3737
        %v3842 = vpop.f32.mrb[0].mxu0
        %v3843 = vadd.f32 %v724, %v3842
        %v3844 = vpop.f32.mrb[0].mxu0
        %3845 = vdwg.mxu0
        %v3846 = vsel %vm1091, %v3818, -inf
        %3847 = vmax.xlane.f32.xlu0 %v3846
        %v3848 = vpop.xlane.xlu0 %3847
        %v3849 = vsel %vm1091, %v3823, -inf
        %3850 = vmax.xlane.f32.xlu0 %v3849
        %v3851 = vpop.xlane.xlu0 %3850
        %v3852 = vsel %vm1091, %v3828, -inf
        %3853 = vmax.xlane.f32.xlu0 %v3852
        %v3854 = vpop.xlane.xlu0 %3853
        %v3855 = vsel %vm1091, %v3833, -inf
        %3856 = vmax.xlane.f32.xlu0 %v3855
        %v3857 = vpop.xlane.xlu0 %3856
        %v3858 = vsel %vm1091, %v3838, -inf
        %3859 = vmax.xlane.f32.xlu0 %v3858
        %v3860 = vpop.xlane.xlu0 %3859
        %v3861 = vsel %vm1091, %v3843, -inf
        %3862 = vmax.xlane.f32.xlu0 %v3861
        %v3863 = vpop.xlane.xlu0 %3862
        %v3864 = vsub.f32 %v3818, %v3848
        %v3865 = vsub.f32 %v3823, %v3851
        %v3866 = vsub.f32 %v3828, %v3854
        %v3867 = vsub.f32 %v3833, %v3857
        %v3868 = vsub.f32 %v3838, %v3860
        %v3869 = vsub.f32 %v3843, %v3863
        %v3870 = vmul.f32 %v3864, 1.442695
        %v3871 = vpow.pop %v3870
        %v3872 = vmul.f32 %v3865, 1.442695
        %v3873 = vpow.pop %v3872
        %v3874 = vmul.f32 %v3866, 1.442695
        %v3875 = vpow.pop %v3874
        %v3876 = vmul.f32 %v3867, 1.442695
        %v3877 = vpow.pop %v3876
        %v3878 = vmul.f32 %v3868, 1.442695
        %v3879 = vpow.pop %v3878
        %v3880 = vmul.f32 %v3869, 1.442695
        %v3881 = vpow.pop %v3880
        %v3882 = vsel %vm1091, %v3871, 0.0
        %3883 = vadd.xlane.f32.xlu0 %v3882
        %v3884 = vpop.xlane.xlu0 %3883
        %v3885 = vsel %vm1091, %v3873, 0.0
        %3886 = vadd.xlane.f32.xlu0 %v3885
        %v3887 = vpop.xlane.xlu0 %3886
        %v3888 = vsel %vm1091, %v3875, 0.0
        %3889 = vadd.xlane.f32.xlu0 %v3888
        %v3890 = vpop.xlane.xlu0 %3889
        %v3891 = vsel %vm1091, %v3877, 0.0
        %3892 = vadd.xlane.f32.xlu0 %v3891
        %v3893 = vpop.xlane.xlu0 %3892
        %v3894 = vsel %vm1091, %v3879, 0.0
        %3895 = vadd.xlane.f32.xlu0 %v3894
        %v3896 = vpop.xlane.xlu0 %3895
        %v3897 = vsel %vm1091, %v3881, 0.0
        %3898 = vadd.xlane.f32.xlu0 %v3897
        %v3899 = vpop.xlane.xlu0 %3898
        %v3900 = vrcp.pop %v3884
        %v3901 = vrcp.pop %v3887
        %v3902 = vrcp.pop %v3890
        %v3903 = vrcp.pop %v3893
        %v3904 = vrcp.pop %v3896
        %v3905 = vrcp.pop %v3899
        %3906 = vrot.lane.b32.xlu0 %v3341, 56
        %v3907 = vpop.permute.xlu0 %3906
        %3908 = vrot.lane.b32.xlu0 %v3346, 56
        %v3909 = vpop.permute.xlu0 %3908
        %3910 = vrot.lane.b32.xlu0 %v3351, 56
        %v3911 = vpop.permute.xlu0 %3910
        %3912 = vrot.lane.b32.xlu0 %v3356, 56
        %v3913 = vpop.permute.xlu0 %3912
        %3914 = vrot.lane.b32.xlu0 %v3361, 56
        %v3915 = vpop.permute.xlu0 %3914
        %3916 = vrot.lane.b32.xlu0 %v3366, 56
        %v3917 = vpop.permute.xlu0 %3916
        %v3925 = vsel %vm1091, %v3871, 0
        %v3928 = vsel %vm1091, %v3873, 0
        %v3931 = vsel %vm1091, %v3875, 0
        %v3934 = vsel %vm1091, %v3877, 0
        %v3937 = vsel %vm1091, %v3879, 0
        %v3940 = vsel %vm1091, %v3881, 0
        %3942 = vmatprep.subr.mxu0 0.0
        %3943 = vmatpush1.msra.mxu0 %v3907
        %3944 = vmatprep.subr.mxu0 0.0
        %3945 = vmatpush1.msra.mxu0 %v3909
        %3946 = vmatprep.subr.mxu0 0.0
        %3947 = vmatpush1.msra.mxu0 %v3911
        %3948 = vmatprep.subr.mxu0 0.0
        %3949 = vmatpush1.msra.mxu0 %v3913
        %3950 = vmatprep.subr.mxu0 0.0
        %3951 = vmatpush1.msra.mxu0 %v3915
        %3952 = vmatprep.subr.mxu0 0.0
        %3953 = vmatpush1.msra.mxu0 %v3917
        %3954 = vmatprep.subr.mxu0 0.0
        %3955 = vmatpush1.msra.mxu0 0.0
        %3956 = vmatprep.subr.mxu0 0.0
        %3957 = vmatpush1.msra.mxu0 0.0
        %3958 = vmatprep.subr.mxu0 0.0
        %3959 = vmatpush1.msra.mxu0 0.0
        %3960 = vmatprep.subr.mxu0 0.0
        %3961 = vmatpush1.msra.mxu0 0.0
        %3962 = vmatprep.subr.mxu0 0.0
        %3963 = vmatpush1.msra.mxu0 0.0
        %3964 = vmatprep.subr.mxu0 0.0
        %3965 = vmatpush1.msra.mxu0 0.0
        %3966 = vmatprep.subr.mxu0 0.0
        %3967 = vmatpush1.msra.mxu0 0.0
        %3968 = vmatprep.subr.mxu0 0.0
        %3969 = vmatpush1.msra.mxu0 0.0
        %3970 = vmatprep.subr.mxu0 0.0
        %3971 = vmatpush1.msra.mxu0 0.0
        %3972 = vmatprep.subr.mxu0 0.0
        %3973 = vmatpush1.msra.mxu0 0.0
        %3974 = vmatprep.subr.mxu0 0.0
        %3975 = vmatpush1.msra.mxu0 0.0
        %3976 = vmatprep.subr.mxu0 0.0
        %3977 = vmatpush1.msra.mxu0 0.0
        %3978 = vmatprep.subr.mxu0 0.0
        %3979 = vmatpush1.msra.mxu0 0.0
        %3980 = vmatprep.subr.mxu0 0.0
        %3981 = vmatpush1.msra.mxu0 0.0
        %3982 = vmatprep.subr.mxu0 0.0
        %3983 = vmatpush1.msra.mxu0 0.0
        %3984 = vmatprep.subr.mxu0 0.0
        %3985 = vmatpush1.msra.mxu0 0.0
        %3986 = vmatprep.subr.mxu0 0.0
        %3987 = vmatpush1.msra.mxu0 0.0
        %3988 = vmatprep.subr.mxu0 0.0
        %3989 = vmatpush1.msra.mxu0 0.0
        %3990 = vmatprep.subr.mxu0 0.0
        %3991 = vmatpush1.msra.mxu0 0.0
        %3992 = vmatprep.subr.mxu0 0.0
        %3993 = vmatpush1.msra.mxu0 0.0
        %3994 = vmatprep.subr.mxu0 0.0
        %3995 = vmatpush1.msra.mxu0 0.0
        %3996 = vmatprep.subr.mxu0 0.0
        %3997 = vmatpush1.msra.mxu0 0.0
        %3998 = vmatprep.subr.mxu0 0.0
        %3999 = vmatpush1.msra.mxu0 0.0
        %4000 = vmatprep.subr.mxu0 0.0
        %4001 = vmatpush1.msra.mxu0 0.0
        %4002 = vmatprep.subr.mxu0 0.0
        %4003 = vmatpush1.msra.mxu0 0.0
        %4004 = vmatprep.subr.mxu0 0.0
        %4005 = vmatpush1.msra.mxu0 0.0
        %4006 = vmatprep.mubr.f32.mxu0 0.0
        %4007 = vmatmul.mubr.f32.gmra.mrb[0].mxu0 %v3925
        %v4008 = vpop.f32.mrb[0].mxu0
        %v4009 = vadd.f32 0.0, %v4008
        %v4010 = vpop.f32.mrb[0].mxu0
        %4011 = vmatprep.mubr.f32.mxu0 0.0
        %4012 = vmatmul.mubr.f32.gmra.mrb[0].mxu0 %v3928
        %v4013 = vpop.f32.mrb[0].mxu0
        %v4014 = vadd.f32 0.0, %v4013
        %v4015 = vpop.f32.mrb[0].mxu0
        %4016 = vmatprep.mubr.f32.mxu0 0.0
        %4017 = vmatmul.mubr.f32.gmra.mrb[0].mxu0 %v3931
        %v4018 = vpop.f32.mrb[0].mxu0
        %v4019 = vadd.f32 0.0, %v4018
        %v4020 = vpop.f32.mrb[0].mxu0
        %4021 = vmatprep.mubr.f32.mxu0 0.0
        %4022 = vmatmul.mubr.f32.gmra.mrb[0].mxu0 %v3934
        %v4023 = vpop.f32.mrb[0].mxu0
        %v4024 = vadd.f32 0.0, %v4023
        %v4025 = vpop.f32.mrb[0].mxu0
        %4026 = vmatprep.mubr.f32.mxu0 0.0
        %4027 = vmatmul.mubr.f32.gmra.mrb[0].mxu0 %v3937
        %v4028 = vpop.f32.mrb[0].mxu0
        %v4029 = vadd.f32 0.0, %v4028
        %v4030 = vpop.f32.mrb[0].mxu0
        %4031 = vmatprep.mubr.f32.mxu0 0.0
        %4032 = vmatmul.mubr.f32.gmra.mrb[0].mxu0 %v3940
        %v4033 = vpop.f32.mrb[0].mxu0
        %v4034 = vadd.f32 0.0, %v4033
        %v4035 = vpop.f32.mrb[0].mxu0
        %4036 = vdwg.mxu0
        %v4037 = vmul.f32 %v4009, %v3900
        %v4038 = vmul.f32 %v4014, %v3901
        %v4039 = vmul.f32 %v4019, %v3902
        %v4040 = vmul.f32 %v4024, %v3903
        %v4041 = vmul.f32 %v4029, %v3904
        %v4042 = vmul.f32 %v4034, %v3905
        %v4044 = vsel %vm971, %v4037, 0
        %v4047 = vsel %vm971, %v4038, 0
        %v4050 = vsel %vm971, %v4039, 0
        %v4053 = vsel %vm971, %v4040, 0
        %v4056 = vsel %vm971, %v4041, 0
        %v4059 = vsel %vm971, %v4042, 0
        %4061 = vmatprep.subr.mxu0 0.0
        %4062 = vmatpush1.msra.mxu0 %v3155
        %4063 = vmatprep.subr.mxu0 0.0
        %4064 = vmatpush1.msra.mxu0 0.0
        %4065 = vmatprep.subr.mxu0 0.0
        %4066 = vmatpush1.msra.mxu0 0.0
        %4067 = vmatprep.subr.mxu0 0.0
        %4068 = vmatpush1.msra.mxu0 0.0
        %4069 = vmatprep.subr.mxu0 0.0
        %4070 = vmatpush1.msra.mxu0 0.0
        %4071 = vmatprep.subr.mxu0 0.0
        %4072 = vmatpush1.msra.mxu0 0.0
        %4073 = vmatprep.subr.mxu0 0.0
        %4074 = vmatpush1.msra.mxu0 0.0
        %4075 = vmatprep.subr.mxu0 0.0
        %4076 = vmatpush1.msra.mxu0 0.0
        %4077 = vmatprep.subr.mxu0 0.0
        %4078 = vmatpush1.msra.mxu0 0.0
        %4079 = vmatprep.subr.mxu0 0.0
        %4080 = vmatpush1.msra.mxu0 0.0
        %4081 = vmatprep.subr.mxu0 0.0
        %4082 = vmatpush1.msra.mxu0 0.0
        %4083 = vmatprep.subr.mxu0 0.0
        %4084 = vmatpush1.msra.mxu0 0.0
        %4085 = vmatprep.subr.mxu0 0.0
        %4086 = vmatpush1.msra.mxu0 0.0
        %4087 = vmatprep.subr.mxu0 0.0
        %4088 = vmatpush1.msra.mxu0 0.0
        %4089 = vmatprep.subr.mxu0 0.0
        %4090 = vmatpush1.msra.mxu0 0.0
        %4091 = vmatprep.subr.mxu0 0.0
        %4092 = vmatpush1.msra.mxu0 0.0
        %4093 = vmatprep.subr.mxu0 0.0
        %4094 = vmatpush1.msra.mxu0 0.0
        %4095 = vmatprep.subr.mxu0 0.0
        %4096 = vmatpush1.msra.mxu0 0.0
        %4097 = vmatprep.subr.mxu0 0.0
        %4098 = vmatpush1.msra.mxu0 0.0
        %4099 = vmatprep.subr.mxu0 0.0
        %4100 = vmatpush1.msra.mxu0 0.0
        %4101 = vmatprep.subr.mxu0 0.0
        %4102 = vmatpush1.msra.mxu0 0.0
        %4103 = vmatprep.subr.mxu0 0.0
        %4104 = vmatpush1.msra.mxu0 0.0
        %4105 = vmatprep.subr.mxu0 0.0
        %4106 = vmatpush1.msra.mxu0 0.0
        %4107 = vmatprep.subr.mxu0 0.0
        %4108 = vmatpush1.msra.mxu0 0.0
        %4109 = vmatprep.subr.mxu0 0.0
        %4110 = vmatpush1.msra.mxu0 0.0
        %4111 = vmatprep.subr.mxu0 0.0
        %4112 = vmatpush1.msra.mxu0 0.0
        %4113 = vmatprep.subr.mxu0 0.0
        %4114 = vmatpush1.msra.mxu0 0.0
        %4115 = vmatprep.subr.mxu0 0.0
        %4116 = vmatpush1.msra.mxu0 0.0
        %4117 = vmatprep.subr.mxu0 0.0
        %4118 = vmatpush1.msra.mxu0 0.0
        %4119 = vmatprep.subr.mxu0 0.0
        %4120 = vmatpush1.msra.mxu0 0.0
        %4121 = vmatprep.subr.mxu0 0.0
        %4122 = vmatpush1.msra.mxu0 0.0
        %4123 = vmatprep.subr.mxu0 0.0
        %4124 = vmatpush1.msra.mxu0 0.0
        %4125 = vmatprep.mubr.f32.mxu0 0.0
        %4126 = vmatmul.mubr.f32.gmra.mrb[0].mxu0 %v4044
        %v4127 = vpop.f32.mrb[0].mxu0
        %v4128 = vadd.f32 0.0, %v4127
        %v4129 = vpop.f32.mrb[0].mxu0
        %4130 = vmatprep.mubr.f32.mxu0 0.0
        %4131 = vmatmul.mubr.f32.gmra.mrb[0].mxu0 %v4047
        %v4132 = vpop.f32.mrb[0].mxu0
        %v4133 = vadd.f32 0.0, %v4132
        %v4134 = vpop.f32.mrb[0].mxu0
        %4135 = vmatprep.mubr.f32.mxu0 0.0
        %4136 = vmatmul.mubr.f32.gmra.mrb[0].mxu0 %v4050
        %v4137 = vpop.f32.mrb[0].mxu0
        %v4138 = vadd.f32 0.0, %v4137
        %v4139 = vpop.f32.mrb[0].mxu0
        %4140 = vmatprep.mubr.f32.mxu0 0.0
        %4141 = vmatmul.mubr.f32.gmra.mrb[0].mxu0 %v4053
        %v4142 = vpop.f32.mrb[0].mxu0
        %v4143 = vadd.f32 0.0, %v4142
        %v4144 = vpop.f32.mrb[0].mxu0
        %4145 = vmatprep.mubr.f32.mxu0 0.0
        %4146 = vmatmul.mubr.f32.gmra.mrb[0].mxu0 %v4056
        %v4147 = vpop.f32.mrb[0].mxu0
        %v4148 = vadd.f32 0.0, %v4147
        %v4149 = vpop.f32.mrb[0].mxu0
        %4150 = vmatprep.mubr.f32.mxu0 0.0
        %4151 = vmatmul.mubr.f32.gmra.mrb[0].mxu0 %v4059
        %v4152 = vpop.f32.mrb[0].mxu0
        %v4153 = vadd.f32 0.0, %v4152
        %v4154 = vpop.f32.mrb[0].mxu0
        %4155 = vdwg.mxu0
        %v4157 = vsel %vm971, %v3697, 0
        %v4160 = vsel %vm971, %v3698, 0
        %v4163 = vsel %vm971, %v3699, 0
        %v4166 = vsel %vm971, %v3700, 0
        %v4169 = vsel %vm971, %v3701, 0
        %v4172 = vsel %vm971, %v3702, 0
        %4174 = vmatprep.subr.mxu0 0.0
        %4175 = vmatpush1.msra.mxu0 %v3154
        %4176 = vmatprep.subr.mxu0 0.0
        %4177 = vmatpush1.msra.mxu0 0.0
        %4178 = vmatprep.subr.mxu0 0.0
        %4179 = vmatpush1.msra.mxu0 0.0
        %4180 = vmatprep.subr.mxu0 0.0
        %4181 = vmatpush1.msra.mxu0 0.0
        %4182 = vmatprep.subr.mxu0 0.0
        %4183 = vmatpush1.msra.mxu0 0.0
        %4184 = vmatprep.subr.mxu0 0.0
        %4185 = vmatpush1.msra.mxu0 0.0
        %4186 = vmatprep.subr.mxu0 0.0
        %4187 = vmatpush1.msra.mxu0 0.0
        %4188 = vmatprep.subr.mxu0 0.0
        %4189 = vmatpush1.msra.mxu0 0.0
        %4190 = vmatprep.subr.mxu0 0.0
        %4191 = vmatpush1.msra.mxu0 0.0
        %4192 = vmatprep.subr.mxu0 0.0
        %4193 = vmatpush1.msra.mxu0 0.0
        %4194 = vmatprep.subr.mxu0 0.0
        %4195 = vmatpush1.msra.mxu0 0.0
        %4196 = vmatprep.subr.mxu0 0.0
        %4197 = vmatpush1.msra.mxu0 0.0
        %4198 = vmatprep.subr.mxu0 0.0
        %4199 = vmatpush1.msra.mxu0 0.0
        %4200 = vmatprep.subr.mxu0 0.0
        %4201 = vmatpush1.msra.mxu0 0.0
        %4202 = vmatprep.subr.mxu0 0.0
        %4203 = vmatpush1.msra.mxu0 0.0
        %4204 = vmatprep.subr.mxu0 0.0
        %4205 = vmatpush1.msra.mxu0 0.0
        %4206 = vmatprep.subr.mxu0 0.0
        %4207 = vmatpush1.msra.mxu0 0.0
        %4208 = vmatprep.subr.mxu0 0.0
        %4209 = vmatpush1.msra.mxu0 0.0
        %4210 = vmatprep.subr.mxu0 0.0
        %4211 = vmatpush1.msra.mxu0 0.0
        %4212 = vmatprep.subr.mxu0 0.0
        %4213 = vmatpush1.msra.mxu0 0.0
        %4214 = vmatprep.subr.mxu0 0.0
        %4215 = vmatpush1.msra.mxu0 0.0
        %4216 = vmatprep.subr.mxu0 0.0
        %4217 = vmatpush1.msra.mxu0 0.0
        %4218 = vmatprep.subr.mxu0 0.0
        %4219 = vmatpush1.msra.mxu0 0.0
        %4220 = vmatprep.subr.mxu0 0.0
        %4221 = vmatpush1.msra.mxu0 0.0
        %4222 = vmatprep.subr.mxu0 0.0
        %4223 = vmatpush1.msra.mxu0 0.0
        %4224 = vmatprep.subr.mxu0 0.0
        %4225 = vmatpush1.msra.mxu0 0.0
        %4226 = vmatprep.subr.mxu0 0.0
        %4227 = vmatpush1.msra.mxu0 0.0
        %4228 = vmatprep.subr.mxu0 0.0
        %4229 = vmatpush1.msra.mxu0 0.0
        %4230 = vmatprep.subr.mxu0 0.0
        %4231 = vmatpush1.msra.mxu0 0.0
        %4232 = vmatprep.subr.mxu0 0.0
        %4233 = vmatpush1.msra.mxu0 0.0
        %4234 = vmatprep.subr.mxu0 0.0
        %4235 = vmatpush1.msra.mxu0 0.0
        %4236 = vmatprep.subr.mxu0 0.0
        %4237 = vmatpush1.msra.mxu0 0.0
        %4238 = vmatprep.mubr.f32.mxu0 0.0
        %4239 = vmatmul.mubr.f32.gmra.mrb[0].mxu0 %v4157
        %v4240 = vpop.f32.mrb[0].mxu0
        %v4241 = vadd.f32 %v4128, %v4240
        %v4242 = vpop.f32.mrb[0].mxu0
        %4243 = vmatprep.mubr.f32.mxu0 0.0
        %4244 = vmatmul.mubr.f32.gmra.mrb[0].mxu0 %v4160
        %v4245 = vpop.f32.mrb[0].mxu0
        %v4246 = vadd.f32 %v4133, %v4245
        %v4247 = vpop.f32.mrb[0].mxu0
        %4248 = vmatprep.mubr.f32.mxu0 0.0
        %4249 = vmatmul.mubr.f32.gmra.mrb[0].mxu0 %v4163
        %v4250 = vpop.f32.mrb[0].mxu0
        %v4251 = vadd.f32 %v4138, %v4250
        %v4252 = vpop.f32.mrb[0].mxu0
        %4253 = vmatprep.mubr.f32.mxu0 0.0
        %4254 = vmatmul.mubr.f32.gmra.mrb[0].mxu0 %v4166
        %v4255 = vpop.f32.mrb[0].mxu0
        %v4256 = vadd.f32 %v4143, %v4255
        %v4257 = vpop.f32.mrb[0].mxu0
        %4258 = vmatprep.mubr.f32.mxu0 0.0
        %4259 = vmatmul.mubr.f32.gmra.mrb[0].mxu0 %v4169
        %v4260 = vpop.f32.mrb[0].mxu0
        %v4261 = vadd.f32 %v4148, %v4260
        %v4262 = vpop.f32.mrb[0].mxu0
        %4263 = vmatprep.mubr.f32.mxu0 0.0
        %4264 = vmatmul.mubr.f32.gmra.mrb[0].mxu0 %v4172
        %v4265 = vpop.f32.mrb[0].mxu0
        %v4266 = vadd.f32 %v4153, %v4265
        %v4267 = vpop.f32.mrb[0].mxu0
        %4268 = vdwg.mxu0
        %4269 = vrot.lane.b32.xlu0 %v3341, 112
        %v4270 = vpop.permute.xlu0 %4269
        %4271 = vrot.lane.b32.xlu0 %v3346, 112
        %v4272 = vpop.permute.xlu0 %4271
        %4273 = vrot.lane.b32.xlu0 %v3351, 112
        %v4274 = vpop.permute.xlu0 %4273
        %4275 = vrot.lane.b32.xlu0 %v3356, 112
        %v4276 = vpop.permute.xlu0 %4275
        %4277 = vrot.lane.b32.xlu0 %v3361, 112
        %v4278 = vpop.permute.xlu0 %4277
        %4279 = vrot.lane.b32.xlu0 %v3366, 112
        %v4280 = vpop.permute.xlu0 %4279
        %4281 = vrot.lane.b32.xlu0 %v3341, 80
        %v4282 = vpop.permute.xlu0 %4281
        %4283 = vrot.lane.b32.xlu0 %v3346, 80
        %v4284 = vpop.permute.xlu0 %4283
        %4285 = vrot.lane.b32.xlu0 %v3351, 80
        %v4286 = vpop.permute.xlu0 %4285
        %4287 = vrot.lane.b32.xlu0 %v3356, 80
        %v4288 = vpop.permute.xlu0 %4287
        %4289 = vrot.lane.b32.xlu0 %v3361, 80
        %v4290 = vpop.permute.xlu0 %4289
        %4291 = vrot.lane.b32.xlu0 %v3366, 80
        %v4292 = vpop.permute.xlu0 %4291
        %v4293 = vsel %vm971, %v4270, 0
        %v4295 = vsel %vm971, %v4272, 0
        %v4297 = vsel %vm971, %v4274, 0
        %v4299 = vsel %vm971, %v4276, 0
        %v4301 = vsel %vm971, %v4278, 0
        %v4303 = vsel %vm971, %v4280, 0
        %v4305 = vsel %vm971, %v4282, 0
        %v4307 = vsel %vm971, %v4284, 0
        %v4309 = vsel %vm971, %v4286, 0
        %v4311 = vsel %vm971, %v4288, 0
        %v4313 = vsel %vm971, %v4290, 0
        %v4315 = vsel %vm971, %v4292, 0
        %4317 = vmatprep.subr.mxu0 0.0
        %4318 = vmatpush1.xpose.msra.mxu0 %v4305
        %4319 = vmatprep.subr.mxu0 0.0
        %4320 = vmatpush1.xpose.msra.mxu0 %v4307
        %4321 = vmatprep.subr.mxu0 0.0
        %4322 = vmatpush1.xpose.msra.mxu0 %v4309
        %4323 = vmatprep.subr.mxu0 0.0
        %4324 = vmatpush1.xpose.msra.mxu0 %v4311
        %4325 = vmatprep.subr.mxu0 0.0
        %4326 = vmatpush1.xpose.msra.mxu0 %v4313
        %4327 = vmatprep.subr.mxu0 0.0
        %4328 = vmatpush1.xpose.msra.mxu0 %v4315
        %4329 = vmatprep.subr.mxu0 0.0
        %4330 = vmatpush1.xpose.msra.mxu0 0.0
        %4331 = vmatprep.subr.mxu0 0.0
        %4332 = vmatpush1.xpose.msra.mxu0 0.0
        %4333 = vmatprep.subr.mxu0 0.0
        %4334 = vmatpush1.xpose.msra.mxu0 0.0
        %4335 = vmatprep.subr.mxu0 0.0
        %4336 = vmatpush1.xpose.msra.mxu0 0.0
        %4337 = vmatprep.subr.mxu0 0.0
        %4338 = vmatpush1.xpose.msra.mxu0 0.0
        %4339 = vmatprep.subr.mxu0 0.0
        %4340 = vmatpush1.xpose.msra.mxu0 0.0
        %4341 = vmatprep.subr.mxu0 0.0
        %4342 = vmatpush1.xpose.msra.mxu0 0.0
        %4343 = vmatprep.subr.mxu0 0.0
        %4344 = vmatpush1.xpose.msra.mxu0 0.0
        %4345 = vmatprep.subr.mxu0 0.0
        %4346 = vmatpush1.xpose.msra.mxu0 0.0
        %4347 = vmatprep.subr.mxu0 0.0
        %4348 = vmatpush1.xpose.msra.mxu0 0.0
        %4349 = vmatprep.subr.mxu0 0.0
        %4350 = vmatpush1.xpose.msra.mxu0 0.0
        %4351 = vmatprep.subr.mxu0 0.0
        %4352 = vmatpush1.xpose.msra.mxu0 0.0
        %4353 = vmatprep.subr.mxu0 0.0
        %4354 = vmatpush1.xpose.msra.mxu0 0.0
        %4355 = vmatprep.subr.mxu0 0.0
        %4356 = vmatpush1.xpose.msra.mxu0 0.0
        %4357 = vmatprep.subr.mxu0 0.0
        %4358 = vmatpush1.xpose.msra.mxu0 0.0
        %4359 = vmatprep.subr.mxu0 0.0
        %4360 = vmatpush1.xpose.msra.mxu0 0.0
        %4361 = vmatprep.subr.mxu0 0.0
        %4362 = vmatpush1.xpose.msra.mxu0 0.0
        %4363 = vmatprep.subr.mxu0 0.0
        %4364 = vmatpush1.xpose.msra.mxu0 0.0
        %4365 = vmatprep.subr.mxu0 0.0
        %4366 = vmatpush1.xpose.msra.mxu0 0.0
        %4367 = vmatprep.subr.mxu0 0.0
        %4368 = vmatpush1.xpose.msra.mxu0 0.0
        %4369 = vmatprep.subr.mxu0 0.0
        %4370 = vmatpush1.xpose.msra.mxu0 0.0
        %4371 = vmatprep.subr.mxu0 0.0
        %4372 = vmatpush1.xpose.msra.mxu0 0.0
        %4373 = vmatprep.subr.mxu0 0.0
        %4374 = vmatpush1.xpose.msra.mxu0 0.0
        %4375 = vmatprep.subr.mxu0 0.0
        %4376 = vmatpush1.xpose.msra.mxu0 0.0
        %4377 = vmatprep.subr.mxu0 0.0
        %4378 = vmatpush1.xpose.msra.mxu0 0.0
        %4379 = vmatprep.subr.mxu0 0.0
        %4380 = vmatpush1.xpose.msra.mxu0 0.0
        %4381 = vmatprep.mubr.f32.mxu0 0.0
        %4382 = vmatmul.mubr.f32.gmra.mrb[0].mxu0 %v4293
        %v4383 = vpop.f32.mrb[0].mxu0
        %v4384 = vadd.f32 %v719, %v4383
        %v4385 = vpop.f32.mrb[0].mxu0
        %4386 = vmatprep.mubr.f32.mxu0 0.0
        %4387 = vmatmul.mubr.f32.gmra.mrb[0].mxu0 %v4295
        %v4388 = vpop.f32.mrb[0].mxu0
        %v4389 = vadd.f32 %v720, %v4388
        %v4390 = vpop.f32.mrb[0].mxu0
        %4391 = vmatprep.mubr.f32.mxu0 0.0
        %4392 = vmatmul.mubr.f32.gmra.mrb[0].mxu0 %v4297
        %v4393 = vpop.f32.mrb[0].mxu0
        %v4394 = vadd.f32 %v721, %v4393
        %v4395 = vpop.f32.mrb[0].mxu0
        %4396 = vmatprep.mubr.f32.mxu0 0.0
        %4397 = vmatmul.mubr.f32.gmra.mrb[0].mxu0 %v4299
        %v4398 = vpop.f32.mrb[0].mxu0
        %v4399 = vadd.f32 %v722, %v4398
        %v4400 = vpop.f32.mrb[0].mxu0
        %4401 = vmatprep.mubr.f32.mxu0 0.0
        %4402 = vmatmul.mubr.f32.gmra.mrb[0].mxu0 %v4301
        %v4403 = vpop.f32.mrb[0].mxu0
        %v4404 = vadd.f32 %v723, %v4403
        %v4405 = vpop.f32.mrb[0].mxu0
        %4406 = vmatprep.mubr.f32.mxu0 0.0
        %4407 = vmatmul.mubr.f32.gmra.mrb[0].mxu0 %v4303
        %v4408 = vpop.f32.mrb[0].mxu0
        %v4409 = vadd.f32 %v724, %v4408
        %v4410 = vpop.f32.mrb[0].mxu0
        %4411 = vdwg.mxu0
        %v4412 = vsel %vm1091, %v4384, -inf
        %4413 = vmax.xlane.f32.xlu0 %v4412
        %v4414 = vpop.xlane.xlu0 %4413
        %v4415 = vsel %vm1091, %v4389, -inf
        %4416 = vmax.xlane.f32.xlu0 %v4415
        %v4417 = vpop.xlane.xlu0 %4416
        %v4418 = vsel %vm1091, %v4394, -inf
        %4419 = vmax.xlane.f32.xlu0 %v4418
        %v4420 = vpop.xlane.xlu0 %4419
        %v4421 = vsel %vm1091, %v4399, -inf
        %4422 = vmax.xlane.f32.xlu0 %v4421
        %v4423 = vpop.xlane.xlu0 %4422
        %v4424 = vsel %vm1091, %v4404, -inf
        %4425 = vmax.xlane.f32.xlu0 %v4424
        %v4426 = vpop.xlane.xlu0 %4425
        %v4427 = vsel %vm1091, %v4409, -inf
        %4428 = vmax.xlane.f32.xlu0 %v4427
        %v4429 = vpop.xlane.xlu0 %4428
        %v4430 = vsub.f32 %v4384, %v4414
        %v4431 = vsub.f32 %v4389, %v4417
        %v4432 = vsub.f32 %v4394, %v4420
        %v4433 = vsub.f32 %v4399, %v4423
        %v4434 = vsub.f32 %v4404, %v4426
        %v4435 = vsub.f32 %v4409, %v4429
        %v4436 = vmul.f32 %v4430, 1.442695
        %v4437 = vpow.pop %v4436
        %v4438 = vmul.f32 %v4431, 1.442695
        %v4439 = vpow.pop %v4438
        %v4440 = vmul.f32 %v4432, 1.442695
        %v4441 = vpow.pop %v4440
        %v4442 = vmul.f32 %v4433, 1.442695
        %v4443 = vpow.pop %v4442
        %v4444 = vmul.f32 %v4434, 1.442695
        %v4445 = vpow.pop %v4444
        %v4446 = vmul.f32 %v4435, 1.442695
        %v4447 = vpow.pop %v4446
        %v4448 = vsel %vm1091, %v4437, 0.0
        %4449 = vadd.xlane.f32.xlu0 %v4448
        %v4450 = vpop.xlane.xlu0 %4449
        %v4451 = vsel %vm1091, %v4439, 0.0
        %4452 = vadd.xlane.f32.xlu0 %v4451
        %v4453 = vpop.xlane.xlu0 %4452
        %v4454 = vsel %vm1091, %v4441, 0.0
        %4455 = vadd.xlane.f32.xlu0 %v4454
        %v4456 = vpop.xlane.xlu0 %4455
        %v4457 = vsel %vm1091, %v4443, 0.0
        %4458 = vadd.xlane.f32.xlu0 %v4457
        %v4459 = vpop.xlane.xlu0 %4458
        %v4460 = vsel %vm1091, %v4445, 0.0
        %4461 = vadd.xlane.f32.xlu0 %v4460
        %v4462 = vpop.xlane.xlu0 %4461
        %v4463 = vsel %vm1091, %v4447, 0.0
        %4464 = vadd.xlane.f32.xlu0 %v4463
        %v4465 = vpop.xlane.xlu0 %4464
        %v4466 = vrcp.pop %v4450
        %v4467 = vrcp.pop %v4453
        %v4468 = vrcp.pop %v4456
        %v4469 = vrcp.pop %v4459
        %v4470 = vrcp.pop %v4462
        %v4471 = vrcp.pop %v4465
        %4472 = vrot.lane.b32.xlu0 %v3341, 48
        %v4473 = vpop.permute.xlu0 %4472
        %4474 = vrot.lane.b32.xlu0 %v3346, 48
        %v4475 = vpop.permute.xlu0 %4474
        %4476 = vrot.lane.b32.xlu0 %v3351, 48
        %v4477 = vpop.permute.xlu0 %4476
        %4478 = vrot.lane.b32.xlu0 %v3356, 48
        %v4479 = vpop.permute.xlu0 %4478
        %4480 = vrot.lane.b32.xlu0 %v3361, 48
        %v4481 = vpop.permute.xlu0 %4480
        %4482 = vrot.lane.b32.xlu0 %v3366, 48
        %v4483 = vpop.permute.xlu0 %4482
        %v4491 = vsel %vm1091, %v4437, 0
        %v4494 = vsel %vm1091, %v4439, 0
        %v4497 = vsel %vm1091, %v4441, 0
        %v4500 = vsel %vm1091, %v4443, 0
        %v4503 = vsel %vm1091, %v4445, 0
        %v4506 = vsel %vm1091, %v4447, 0
        %4508 = vmatprep.subr.mxu0 0.0
        %4509 = vmatpush1.msra.mxu0 %v4473
        %4510 = vmatprep.subr.mxu0 0.0
        %4511 = vmatpush1.msra.mxu0 %v4475
        %4512 = vmatprep.subr.mxu0 0.0
        %4513 = vmatpush1.msra.mxu0 %v4477
        %4514 = vmatprep.subr.mxu0 0.0
        %4515 = vmatpush1.msra.mxu0 %v4479
        %4516 = vmatprep.subr.mxu0 0.0
        %4517 = vmatpush1.msra.mxu0 %v4481
        %4518 = vmatprep.subr.mxu0 0.0
        %4519 = vmatpush1.msra.mxu0 %v4483
        %4520 = vmatprep.subr.mxu0 0.0
        %4521 = vmatpush1.msra.mxu0 0.0
        %4522 = vmatprep.subr.mxu0 0.0
        %4523 = vmatpush1.msra.mxu0 0.0
        %4524 = vmatprep.subr.mxu0 0.0
        %4525 = vmatpush1.msra.mxu0 0.0
        %4526 = vmatprep.subr.mxu0 0.0
        %4527 = vmatpush1.msra.mxu0 0.0
        %4528 = vmatprep.subr.mxu0 0.0
        %4529 = vmatpush1.msra.mxu0 0.0
        %4530 = vmatprep.subr.mxu0 0.0
        %4531 = vmatpush1.msra.mxu0 0.0
        %4532 = vmatprep.subr.mxu0 0.0
        %4533 = vmatpush1.msra.mxu0 0.0
        %4534 = vmatprep.subr.mxu0 0.0
        %4535 = vmatpush1.msra.mxu0 0.0
        %4536 = vmatprep.subr.mxu0 0.0
        %4537 = vmatpush1.msra.mxu0 0.0
        %4538 = vmatprep.subr.mxu0 0.0
        %4539 = vmatpush1.msra.mxu0 0.0
        %4540 = vmatprep.subr.mxu0 0.0
        %4541 = vmatpush1.msra.mxu0 0.0
        %4542 = vmatprep.subr.mxu0 0.0
        %4543 = vmatpush1.msra.mxu0 0.0
        %4544 = vmatprep.subr.mxu0 0.0
        %4545 = vmatpush1.msra.mxu0 0.0
        %4546 = vmatprep.subr.mxu0 0.0
        %4547 = vmatpush1.msra.mxu0 0.0
        %4548 = vmatprep.subr.mxu0 0.0
        %4549 = vmatpush1.msra.mxu0 0.0
        %4550 = vmatprep.subr.mxu0 0.0
        %4551 = vmatpush1.msra.mxu0 0.0
        %4552 = vmatprep.subr.mxu0 0.0
        %4553 = vmatpush1.msra.mxu0 0.0
        %4554 = vmatprep.subr.mxu0 0.0
        %4555 = vmatpush1.msra.mxu0 0.0
        %4556 = vmatprep.subr.mxu0 0.0
        %4557 = vmatpush1.msra.mxu0 0.0
        %4558 = vmatprep.subr.mxu0 0.0
        %4559 = vmatpush1.msra.mxu0 0.0
        %4560 = vmatprep.subr.mxu0 0.0
        %4561 = vmatpush1.msra.mxu0 0.0
        %4562 = vmatprep.subr.mxu0 0.0
        %4563 = vmatpush1.msra.mxu0 0.0
        %4564 = vmatprep.subr.mxu0 0.0
        %4565 = vmatpush1.msra.mxu0 0.0
        %4566 = vmatprep.subr.mxu0 0.0
        %4567 = vmatpush1.msra.mxu0 0.0
        %4568 = vmatprep.subr.mxu0 0.0
        %4569 = vmatpush1.msra.mxu0 0.0
        %4570 = vmatprep.subr.mxu0 0.0
        %4571 = vmatpush1.msra.mxu0 0.0
        %4572 = vmatprep.mubr.f32.mxu0 0.0
        %4573 = vmatmul.mubr.f32.gmra.mrb[0].mxu0 %v4491
        %v4574 = vpop.f32.mrb[0].mxu0
        %v4575 = vadd.f32 0.0, %v4574
        %v4576 = vpop.f32.mrb[0].mxu0
        %4577 = vmatprep.mubr.f32.mxu0 0.0
        %4578 = vmatmul.mubr.f32.gmra.mrb[0].mxu0 %v4494
        %v4579 = vpop.f32.mrb[0].mxu0
        %v4580 = vadd.f32 0.0, %v4579
        %v4581 = vpop.f32.mrb[0].mxu0
        %4582 = vmatprep.mubr.f32.mxu0 0.0
        %4583 = vmatmul.mubr.f32.gmra.mrb[0].mxu0 %v4497
        %v4584 = vpop.f32.mrb[0].mxu0
        %v4585 = vadd.f32 0.0, %v4584
        %v4586 = vpop.f32.mrb[0].mxu0
        %4587 = vmatprep.mubr.f32.mxu0 0.0
        %4588 = vmatmul.mubr.f32.gmra.mrb[0].mxu0 %v4500
        %v4589 = vpop.f32.mrb[0].mxu0
        %v4590 = vadd.f32 0.0, %v4589
        %v4591 = vpop.f32.mrb[0].mxu0
        %4592 = vmatprep.mubr.f32.mxu0 0.0
        %4593 = vmatmul.mubr.f32.gmra.mrb[0].mxu0 %v4503
        %v4594 = vpop.f32.mrb[0].mxu0
        %v4595 = vadd.f32 0.0, %v4594
        %v4596 = vpop.f32.mrb[0].mxu0
        %4597 = vmatprep.mubr.f32.mxu0 0.0
        %4598 = vmatmul.mubr.f32.gmra.mrb[0].mxu0 %v4506
        %v4599 = vpop.f32.mrb[0].mxu0
        %v4600 = vadd.f32 0.0, %v4599
        %v4601 = vpop.f32.mrb[0].mxu0
        %4602 = vdwg.mxu0
        %v4603 = vmul.f32 %v4575, %v4466
        %v4604 = vmul.f32 %v4580, %v4467
        %v4605 = vmul.f32 %v4585, %v4468
        %v4606 = vmul.f32 %v4590, %v4469
        %v4607 = vmul.f32 %v4595, %v4470
        %v4608 = vmul.f32 %v4600, %v4471
        %v4610 = vsel %vm971, %v4603, 0
        %v4613 = vsel %vm971, %v4604, 0
        %v4616 = vsel %vm971, %v4605, 0
        %v4619 = vsel %vm971, %v4606, 0
        %v4622 = vsel %vm971, %v4607, 0
        %v4625 = vsel %vm971, %v4608, 0
        %4627 = vmatprep.subr.mxu0 0.0
        %4628 = vmatpush1.msra.mxu0 %v3156
        %4629 = vmatprep.subr.mxu0 0.0
        %4630 = vmatpush1.msra.mxu0 0.0
        %4631 = vmatprep.subr.mxu0 0.0
        %4632 = vmatpush1.msra.mxu0 0.0
        %4633 = vmatprep.subr.mxu0 0.0
        %4634 = vmatpush1.msra.mxu0 0.0
        %4635 = vmatprep.subr.mxu0 0.0
        %4636 = vmatpush1.msra.mxu0 0.0
        %4637 = vmatprep.subr.mxu0 0.0
        %4638 = vmatpush1.msra.mxu0 0.0
        %4639 = vmatprep.subr.mxu0 0.0
        %4640 = vmatpush1.msra.mxu0 0.0
        %4641 = vmatprep.subr.mxu0 0.0
        %4642 = vmatpush1.msra.mxu0 0.0
        %4643 = vmatprep.subr.mxu0 0.0
        %4644 = vmatpush1.msra.mxu0 0.0
        %4645 = vmatprep.subr.mxu0 0.0
        %4646 = vmatpush1.msra.mxu0 0.0
        %4647 = vmatprep.subr.mxu0 0.0
        %4648 = vmatpush1.msra.mxu0 0.0
        %4649 = vmatprep.subr.mxu0 0.0
        %4650 = vmatpush1.msra.mxu0 0.0
        %4651 = vmatprep.subr.mxu0 0.0
        %4652 = vmatpush1.msra.mxu0 0.0
        %4653 = vmatprep.subr.mxu0 0.0
        %4654 = vmatpush1.msra.mxu0 0.0
        %4655 = vmatprep.subr.mxu0 0.0
        %4656 = vmatpush1.msra.mxu0 0.0
        %4657 = vmatprep.subr.mxu0 0.0
        %4658 = vmatpush1.msra.mxu0 0.0
        %4659 = vmatprep.subr.mxu0 0.0
        %4660 = vmatpush1.msra.mxu0 0.0
        %4661 = vmatprep.subr.mxu0 0.0
        %4662 = vmatpush1.msra.mxu0 0.0
        %4663 = vmatprep.subr.mxu0 0.0
        %4664 = vmatpush1.msra.mxu0 0.0
        %4665 = vmatprep.subr.mxu0 0.0
        %4666 = vmatpush1.msra.mxu0 0.0
        %4667 = vmatprep.subr.mxu0 0.0
        %4668 = vmatpush1.msra.mxu0 0.0
        %4669 = vmatprep.subr.mxu0 0.0
        %4670 = vmatpush1.msra.mxu0 0.0
        %4671 = vmatprep.subr.mxu0 0.0
        %4672 = vmatpush1.msra.mxu0 0.0
        %4673 = vmatprep.subr.mxu0 0.0
        %4674 = vmatpush1.msra.mxu0 0.0
        %4675 = vmatprep.subr.mxu0 0.0
        %4676 = vmatpush1.msra.mxu0 0.0
        %4677 = vmatprep.subr.mxu0 0.0
        %4678 = vmatpush1.msra.mxu0 0.0
        %4679 = vmatprep.subr.mxu0 0.0
        %4680 = vmatpush1.msra.mxu0 0.0
        %4681 = vmatprep.subr.mxu0 0.0
        %4682 = vmatpush1.msra.mxu0 0.0
        %4683 = vmatprep.subr.mxu0 0.0
        %4684 = vmatpush1.msra.mxu0 0.0
        %4685 = vmatprep.subr.mxu0 0.0
        %4686 = vmatpush1.msra.mxu0 0.0
        %4687 = vmatprep.subr.mxu0 0.0
        %4688 = vmatpush1.msra.mxu0 0.0
        %4689 = vmatprep.subr.mxu0 0.0
        %4690 = vmatpush1.msra.mxu0 0.0
        %4691 = vmatprep.mubr.f32.mxu0 0.0
        %4692 = vmatmul.mubr.f32.gmra.mrb[0].mxu0 %v4610
        %v4693 = vpop.f32.mrb[0].mxu0
        %v4694 = vadd.f32 0.0, %v4693
        %v4695 = vpop.f32.mrb[0].mxu0
        %4696 = vmatprep.mubr.f32.mxu0 0.0
        %4697 = vmatmul.mubr.f32.gmra.mrb[0].mxu0 %v4613
        %v4698 = vpop.f32.mrb[0].mxu0
        %v4699 = vadd.f32 0.0, %v4698
        %v4700 = vpop.f32.mrb[0].mxu0
        %4701 = vmatprep.mubr.f32.mxu0 0.0
        %4702 = vmatmul.mubr.f32.gmra.mrb[0].mxu0 %v4616
        %v4703 = vpop.f32.mrb[0].mxu0
        %v4704 = vadd.f32 0.0, %v4703
        %v4705 = vpop.f32.mrb[0].mxu0
        %4706 = vmatprep.mubr.f32.mxu0 0.0
        %4707 = vmatmul.mubr.f32.gmra.mrb[0].mxu0 %v4619
        %v4708 = vpop.f32.mrb[0].mxu0
        %v4709 = vadd.f32 0.0, %v4708
        %v4710 = vpop.f32.mrb[0].mxu0
        %4711 = vmatprep.mubr.f32.mxu0 0.0
        %4712 = vmatmul.mubr.f32.gmra.mrb[0].mxu0 %v4622
        %v4713 = vpop.f32.mrb[0].mxu0
        %v4714 = vadd.f32 0.0, %v4713
        %v4715 = vpop.f32.mrb[0].mxu0
        %4716 = vmatprep.mubr.f32.mxu0 0.0
        %4717 = vmatmul.mubr.f32.gmra.mrb[0].mxu0 %v4625
        %v4718 = vpop.f32.mrb[0].mxu0
        %v4719 = vadd.f32 0.0, %v4718
        %v4720 = vpop.f32.mrb[0].mxu0
        %4721 = vdwg.mxu0
        %v4722 = vadd.f32 %v4241, %v4694
        %v4723 = vadd.f32 %v4246, %v4699
        %v4724 = vadd.f32 %v4251, %v4704
        %v4725 = vadd.f32 %v4256, %v4709
        %v4726 = vadd.f32 %v4261, %v4714
        %v4727 = vadd.f32 %v4266, %v4719
        %4728 = vrot.lane.b32.xlu0 %v3341, 104
        %v4729 = vpop.permute.xlu0 %4728
        %4730 = vrot.lane.b32.xlu0 %v3346, 104
        %v4731 = vpop.permute.xlu0 %4730
        %4732 = vrot.lane.b32.xlu0 %v3351, 104
        %v4733 = vpop.permute.xlu0 %4732
        %4734 = vrot.lane.b32.xlu0 %v3356, 104
        %v4735 = vpop.permute.xlu0 %4734
        %4736 = vrot.lane.b32.xlu0 %v3361, 104
        %v4737 = vpop.permute.xlu0 %4736
        %4738 = vrot.lane.b32.xlu0 %v3366, 104
        %v4739 = vpop.permute.xlu0 %4738
        %4740 = vrot.lane.b32.xlu0 %v3341, 72
        %v4741 = vpop.permute.xlu0 %4740
        %4742 = vrot.lane.b32.xlu0 %v3346, 72
        %v4743 = vpop.permute.xlu0 %4742
        %4744 = vrot.lane.b32.xlu0 %v3351, 72
        %v4745 = vpop.permute.xlu0 %4744
        %4746 = vrot.lane.b32.xlu0 %v3356, 72
        %v4747 = vpop.permute.xlu0 %4746
        %4748 = vrot.lane.b32.xlu0 %v3361, 72
        %v4749 = vpop.permute.xlu0 %4748
        %4750 = vrot.lane.b32.xlu0 %v3366, 72
        %v4751 = vpop.permute.xlu0 %4750
        %v4752 = vsel %vm971, %v4729, 0
        %v4754 = vsel %vm971, %v4731, 0
        %v4756 = vsel %vm971, %v4733, 0
        %v4758 = vsel %vm971, %v4735, 0
        %v4760 = vsel %vm971, %v4737, 0
        %v4762 = vsel %vm971, %v4739, 0
        %v4764 = vsel %vm971, %v4741, 0
        %v4766 = vsel %vm971, %v4743, 0
        %v4768 = vsel %vm971, %v4745, 0
        %v4770 = vsel %vm971, %v4747, 0
        %v4772 = vsel %vm971, %v4749, 0
        %v4774 = vsel %vm971, %v4751, 0
        %4776 = vmatprep.subr.mxu0 0.0
        %4777 = vmatpush1.xpose.msra.mxu0 %v4764
        %4778 = vmatprep.subr.mxu0 0.0
        %4779 = vmatpush1.xpose.msra.mxu0 %v4766
        %4780 = vmatprep.subr.mxu0 0.0
        %4781 = vmatpush1.xpose.msra.mxu0 %v4768
        %4782 = vmatprep.subr.mxu0 0.0
        %4783 = vmatpush1.xpose.msra.mxu0 %v4770
        %4784 = vmatprep.subr.mxu0 0.0
        %4785 = vmatpush1.xpose.msra.mxu0 %v4772
        %4786 = vmatprep.subr.mxu0 0.0
        %4787 = vmatpush1.xpose.msra.mxu0 %v4774
        %4788 = vmatprep.subr.mxu0 0.0
        %4789 = vmatpush1.xpose.msra.mxu0 0.0
        %4790 = vmatprep.subr.mxu0 0.0
        %4791 = vmatpush1.xpose.msra.mxu0 0.0
        %4792 = vmatprep.subr.mxu0 0.0
        %4793 = vmatpush1.xpose.msra.mxu0 0.0
        %4794 = vmatprep.subr.mxu0 0.0
        %4795 = vmatpush1.xpose.msra.mxu0 0.0
        %4796 = vmatprep.subr.mxu0 0.0
        %4797 = vmatpush1.xpose.msra.mxu0 0.0
        %4798 = vmatprep.subr.mxu0 0.0
        %4799 = vmatpush1.xpose.msra.mxu0 0.0
        %4800 = vmatprep.subr.mxu0 0.0
        %4801 = vmatpush1.xpose.msra.mxu0 0.0
        %4802 = vmatprep.subr.mxu0 0.0
        %4803 = vmatpush1.xpose.msra.mxu0 0.0
        %4804 = vmatprep.subr.mxu0 0.0
        %4805 = vmatpush1.xpose.msra.mxu0 0.0
        %4806 = vmatprep.subr.mxu0 0.0
        %4807 = vmatpush1.xpose.msra.mxu0 0.0
        %4808 = vmatprep.subr.mxu0 0.0
        %4809 = vmatpush1.xpose.msra.mxu0 0.0
        %4810 = vmatprep.subr.mxu0 0.0
        %4811 = vmatpush1.xpose.msra.mxu0 0.0
        %4812 = vmatprep.subr.mxu0 0.0
        %4813 = vmatpush1.xpose.msra.mxu0 0.0
        %4814 = vmatprep.subr.mxu0 0.0
        %4815 = vmatpush1.xpose.msra.mxu0 0.0
        %4816 = vmatprep.subr.mxu0 0.0
        %4817 = vmatpush1.xpose.msra.mxu0 0.0
        %4818 = vmatprep.subr.mxu0 0.0
        %4819 = vmatpush1.xpose.msra.mxu0 0.0
        %4820 = vmatprep.subr.mxu0 0.0
        %4821 = vmatpush1.xpose.msra.mxu0 0.0
        %4822 = vmatprep.subr.mxu0 0.0
        %4823 = vmatpush1.xpose.msra.mxu0 0.0
        %4824 = vmatprep.subr.mxu0 0.0
        %4825 = vmatpush1.xpose.msra.mxu0 0.0
        %4826 = vmatprep.subr.mxu0 0.0
        %4827 = vmatpush1.xpose.msra.mxu0 0.0
        %4828 = vmatprep.subr.mxu0 0.0
        %4829 = vmatpush1.xpose.msra.mxu0 0.0
        %4830 = vmatprep.subr.mxu0 0.0
        %4831 = vmatpush1.xpose.msra.mxu0 0.0
        %4832 = vmatprep.subr.mxu0 0.0
        %4833 = vmatpush1.xpose.msra.mxu0 0.0
        %4834 = vmatprep.subr.mxu0 0.0
        %4835 = vmatpush1.xpose.msra.mxu0 0.0
        %4836 = vmatprep.subr.mxu0 0.0
        %4837 = vmatpush1.xpose.msra.mxu0 0.0
        %4838 = vmatprep.subr.mxu0 0.0
        %4839 = vmatpush1.xpose.msra.mxu0 0.0
        %4840 = vmatprep.mubr.f32.mxu0 0.0
        %4841 = vmatmul.mubr.f32.gmra.mrb[0].mxu0 %v4752
        %v4842 = vpop.f32.mrb[0].mxu0
        %v4843 = vadd.f32 %v719, %v4842
        %v4844 = vpop.f32.mrb[0].mxu0
        %4845 = vmatprep.mubr.f32.mxu0 0.0
        %4846 = vmatmul.mubr.f32.gmra.mrb[0].mxu0 %v4754
        %v4847 = vpop.f32.mrb[0].mxu0
        %v4848 = vadd.f32 %v720, %v4847
        %v4849 = vpop.f32.mrb[0].mxu0
        %4850 = vmatprep.mubr.f32.mxu0 0.0
        %4851 = vmatmul.mubr.f32.gmra.mrb[0].mxu0 %v4756
        %v4852 = vpop.f32.mrb[0].mxu0
        %v4853 = vadd.f32 %v721, %v4852
        %v4854 = vpop.f32.mrb[0].mxu0
        %4855 = vmatprep.mubr.f32.mxu0 0.0
        %4856 = vmatmul.mubr.f32.gmra.mrb[0].mxu0 %v4758
        %v4857 = vpop.f32.mrb[0].mxu0
        %v4858 = vadd.f32 %v722, %v4857
        %v4859 = vpop.f32.mrb[0].mxu0
        %4860 = vmatprep.mubr.f32.mxu0 0.0
        %4861 = vmatmul.mubr.f32.gmra.mrb[0].mxu0 %v4760
        %v4862 = vpop.f32.mrb[0].mxu0
        %v4863 = vadd.f32 %v723, %v4862
        %v4864 = vpop.f32.mrb[0].mxu0
        %4865 = vmatprep.mubr.f32.mxu0 0.0
        %4866 = vmatmul.mubr.f32.gmra.mrb[0].mxu0 %v4762
        %v4867 = vpop.f32.mrb[0].mxu0
        %v4868 = vadd.f32 %v724, %v4867
        %v4869 = vpop.f32.mrb[0].mxu0
        %4870 = vdwg.mxu0
        %v4871 = vsel %vm1091, %v4843, -inf
        %4872 = vmax.xlane.f32.xlu0 %v4871
        %v4873 = vpop.xlane.xlu0 %4872
        %v4874 = vsel %vm1091, %v4848, -inf
        %4875 = vmax.xlane.f32.xlu0 %v4874
        %v4876 = vpop.xlane.xlu0 %4875
        %v4877 = vsel %vm1091, %v4853, -inf
        %4878 = vmax.xlane.f32.xlu0 %v4877
        %v4879 = vpop.xlane.xlu0 %4878
        %v4880 = vsel %vm1091, %v4858, -inf
        %4881 = vmax.xlane.f32.xlu0 %v4880
        %v4882 = vpop.xlane.xlu0 %4881
        %v4883 = vsel %vm1091, %v4863, -inf
        %4884 = vmax.xlane.f32.xlu0 %v4883
        %v4885 = vpop.xlane.xlu0 %4884
        %v4886 = vsel %vm1091, %v4868, -inf
        %4887 = vmax.xlane.f32.xlu0 %v4886
        %v4888 = vpop.xlane.xlu0 %4887
        %v4889 = vsub.f32 %v4843, %v4873
        %v4890 = vsub.f32 %v4848, %v4876
        %v4891 = vsub.f32 %v4853, %v4879
        %v4892 = vsub.f32 %v4858, %v4882
        %v4893 = vsub.f32 %v4863, %v4885
        %v4894 = vsub.f32 %v4868, %v4888
        %v4895 = vmul.f32 %v4889, 1.442695
        %v4896 = vpow.pop %v4895
        %v4897 = vmul.f32 %v4890, 1.442695
        %v4898 = vpow.pop %v4897
        %v4899 = vmul.f32 %v4891, 1.442695
        %v4900 = vpow.pop %v4899
        %v4901 = vmul.f32 %v4892, 1.442695
        %v4902 = vpow.pop %v4901
        %v4903 = vmul.f32 %v4893, 1.442695
        %v4904 = vpow.pop %v4903
        %v4905 = vmul.f32 %v4894, 1.442695
        %v4906 = vpow.pop %v4905
        %v4907 = vsel %vm1091, %v4896, 0.0
        %4908 = vadd.xlane.f32.xlu0 %v4907
        %v4909 = vpop.xlane.xlu0 %4908
        %v4910 = vsel %vm1091, %v4898, 0.0
        %4911 = vadd.xlane.f32.xlu0 %v4910
        %v4912 = vpop.xlane.xlu0 %4911
        %v4913 = vsel %vm1091, %v4900, 0.0
        %4914 = vadd.xlane.f32.xlu0 %v4913
        %v4915 = vpop.xlane.xlu0 %4914
        %v4916 = vsel %vm1091, %v4902, 0.0
        %4917 = vadd.xlane.f32.xlu0 %v4916
        %v4918 = vpop.xlane.xlu0 %4917
        %v4919 = vsel %vm1091, %v4904, 0.0
        %4920 = vadd.xlane.f32.xlu0 %v4919
        %v4921 = vpop.xlane.xlu0 %4920
        %v4922 = vsel %vm1091, %v4906, 0.0
        %4923 = vadd.xlane.f32.xlu0 %v4922
        %v4924 = vpop.xlane.xlu0 %4923
        %v4925 = vrcp.pop %v4909
        %v4926 = vrcp.pop %v4912
        %v4927 = vrcp.pop %v4915
        %v4928 = vrcp.pop %v4918
        %v4929 = vrcp.pop %v4921
        %v4930 = vrcp.pop %v4924
        %4931 = vrot.lane.b32.xlu0 %v3341, 40
        %v4932 = vpop.permute.xlu0 %4931
        %4933 = vrot.lane.b32.xlu0 %v3346, 40
        %v4934 = vpop.permute.xlu0 %4933
        %4935 = vrot.lane.b32.xlu0 %v3351, 40
        %v4936 = vpop.permute.xlu0 %4935
        %4937 = vrot.lane.b32.xlu0 %v3356, 40
        %v4938 = vpop.permute.xlu0 %4937
        %4939 = vrot.lane.b32.xlu0 %v3361, 40
        %v4940 = vpop.permute.xlu0 %4939
        %4941 = vrot.lane.b32.xlu0 %v3366, 40
        %v4942 = vpop.permute.xlu0 %4941
        %v4950 = vsel %vm1091, %v4896, 0
        %v4953 = vsel %vm1091, %v4898, 0
        %v4956 = vsel %vm1091, %v4900, 0
        %v4959 = vsel %vm1091, %v4902, 0
        %v4962 = vsel %vm1091, %v4904, 0
        %v4965 = vsel %vm1091, %v4906, 0
        %4967 = vmatprep.subr.mxu0 0.0
        %4968 = vmatpush1.msra.mxu0 %v4932
        %4969 = vmatprep.subr.mxu0 0.0
        %4970 = vmatpush1.msra.mxu0 %v4934
        %4971 = vmatprep.subr.mxu0 0.0
        %4972 = vmatpush1.msra.mxu0 %v4936
        %4973 = vmatprep.subr.mxu0 0.0
        %4974 = vmatpush1.msra.mxu0 %v4938
        %4975 = vmatprep.subr.mxu0 0.0
        %4976 = vmatpush1.msra.mxu0 %v4940
        %4977 = vmatprep.subr.mxu0 0.0
        %4978 = vmatpush1.msra.mxu0 %v4942
        %4979 = vmatprep.subr.mxu0 0.0
        %4980 = vmatpush1.msra.mxu0 0.0
        %4981 = vmatprep.subr.mxu0 0.0
        %4982 = vmatpush1.msra.mxu0 0.0
        %4983 = vmatprep.subr.mxu0 0.0
        %4984 = vmatpush1.msra.mxu0 0.0
        %4985 = vmatprep.subr.mxu0 0.0
        %4986 = vmatpush1.msra.mxu0 0.0
        %4987 = vmatprep.subr.mxu0 0.0
        %4988 = vmatpush1.msra.mxu0 0.0
        %4989 = vmatprep.subr.mxu0 0.0
        %4990 = vmatpush1.msra.mxu0 0.0
        %4991 = vmatprep.subr.mxu0 0.0
        %4992 = vmatpush1.msra.mxu0 0.0
        %4993 = vmatprep.subr.mxu0 0.0
        %4994 = vmatpush1.msra.mxu0 0.0
        %4995 = vmatprep.subr.mxu0 0.0
        %4996 = vmatpush1.msra.mxu0 0.0
        %4997 = vmatprep.subr.mxu0 0.0
        %4998 = vmatpush1.msra.mxu0 0.0
        %4999 = vmatprep.subr.mxu0 0.0
        %5000 = vmatpush1.msra.mxu0 0.0
        %5001 = vmatprep.subr.mxu0 0.0
        %5002 = vmatpush1.msra.mxu0 0.0
        %5003 = vmatprep.subr.mxu0 0.0
        %5004 = vmatpush1.msra.mxu0 0.0
        %5005 = vmatprep.subr.mxu0 0.0
        %5006 = vmatpush1.msra.mxu0 0.0
        %5007 = vmatprep.subr.mxu0 0.0
        %5008 = vmatpush1.msra.mxu0 0.0
        %5009 = vmatprep.subr.mxu0 0.0
        %5010 = vmatpush1.msra.mxu0 0.0
        %5011 = vmatprep.subr.mxu0 0.0
        %5012 = vmatpush1.msra.mxu0 0.0
        %5013 = vmatprep.subr.mxu0 0.0
        %5014 = vmatpush1.msra.mxu0 0.0
        %5015 = vmatprep.subr.mxu0 0.0
        %5016 = vmatpush1.msra.mxu0 0.0
        %5017 = vmatprep.subr.mxu0 0.0
        %5018 = vmatpush1.msra.mxu0 0.0
        %5019 = vmatprep.subr.mxu0 0.0
        %5020 = vmatpush1.msra.mxu0 0.0
        %5021 = vmatprep.subr.mxu0 0.0
        %5022 = vmatpush1.msra.mxu0 0.0
        %5023 = vmatprep.subr.mxu0 0.0
        %5024 = vmatpush1.msra.mxu0 0.0
        %5025 = vmatprep.subr.mxu0 0.0
        %5026 = vmatpush1.msra.mxu0 0.0
        %5027 = vmatprep.subr.mxu0 0.0
        %5028 = vmatpush1.msra.mxu0 0.0
        %5029 = vmatprep.subr.mxu0 0.0
        %5030 = vmatpush1.msra.mxu0 0.0
        %5031 = vmatprep.mubr.f32.mxu0 0.0
        %5032 = vmatmul.mubr.f32.gmra.mrb[0].mxu0 %v4950
        %v5033 = vpop.f32.mrb[0].mxu0
        %v5034 = vadd.f32 0.0, %v5033
        %v5035 = vpop.f32.mrb[0].mxu0
        %5036 = vmatprep.mubr.f32.mxu0 0.0
        %5037 = vmatmul.mubr.f32.gmra.mrb[0].mxu0 %v4953
        %v5038 = vpop.f32.mrb[0].mxu0
        %v5039 = vadd.f32 0.0, %v5038
        %v5040 = vpop.f32.mrb[0].mxu0
        %5041 = vmatprep.mubr.f32.mxu0 0.0
        %5042 = vmatmul.mubr.f32.gmra.mrb[0].mxu0 %v4956
        %v5043 = vpop.f32.mrb[0].mxu0
        %v5044 = vadd.f32 0.0, %v5043
        %v5045 = vpop.f32.mrb[0].mxu0
        %5046 = vmatprep.mubr.f32.mxu0 0.0
        %5047 = vmatmul.mubr.f32.gmra.mrb[0].mxu0 %v4959
        %v5048 = vpop.f32.mrb[0].mxu0
        %v5049 = vadd.f32 0.0, %v5048
        %v5050 = vpop.f32.mrb[0].mxu0
        %5051 = vmatprep.mubr.f32.mxu0 0.0
        %5052 = vmatmul.mubr.f32.gmra.mrb[0].mxu0 %v4962
        %v5053 = vpop.f32.mrb[0].mxu0
        %v5054 = vadd.f32 0.0, %v5053
        %v5055 = vpop.f32.mrb[0].mxu0
        %5056 = vmatprep.mubr.f32.mxu0 0.0
        %5057 = vmatmul.mubr.f32.gmra.mrb[0].mxu0 %v4965
        %v5058 = vpop.f32.mrb[0].mxu0
        %v5059 = vadd.f32 0.0, %v5058
        %v5060 = vpop.f32.mrb[0].mxu0
        %5061 = vdwg.mxu0
        %v5062 = vmul.f32 %v5034, %v4925
        %v5063 = vmul.f32 %v5039, %v4926
        %v5064 = vmul.f32 %v5044, %v4927
        %v5065 = vmul.f32 %v5049, %v4928
        %v5066 = vmul.f32 %v5054, %v4929
        %v5067 = vmul.f32 %v5059, %v4930
        %v5069 = vsel %vm971, %v5062, 0
        %v5072 = vsel %vm971, %v5063, 0
        %v5075 = vsel %vm971, %v5064, 0
        %v5078 = vsel %vm971, %v5065, 0
        %v5081 = vsel %vm971, %v5066, 0
        %v5084 = vsel %vm971, %v5067, 0
        %5086 = vmatprep.subr.mxu0 0.0
        %5087 = vmatpush1.msra.mxu0 %v3157
        %5088 = vmatprep.subr.mxu0 0.0
        %5089 = vmatpush1.msra.mxu0 0.0
        %5090 = vmatprep.subr.mxu0 0.0
        %5091 = vmatpush1.msra.mxu0 0.0
        %5092 = vmatprep.subr.mxu0 0.0
        %5093 = vmatpush1.msra.mxu0 0.0
        %5094 = vmatprep.subr.mxu0 0.0
        %5095 = vmatpush1.msra.mxu0 0.0
        %5096 = vmatprep.subr.mxu0 0.0
        %5097 = vmatpush1.msra.mxu0 0.0
        %5098 = vmatprep.subr.mxu0 0.0
        %5099 = vmatpush1.msra.mxu0 0.0
        %5100 = vmatprep.subr.mxu0 0.0
        %5101 = vmatpush1.msra.mxu0 0.0
        %5102 = vmatprep.subr.mxu0 0.0
        %5103 = vmatpush1.msra.mxu0 0.0
        %5104 = vmatprep.subr.mxu0 0.0
        %5105 = vmatpush1.msra.mxu0 0.0
        %5106 = vmatprep.subr.mxu0 0.0
        %5107 = vmatpush1.msra.mxu0 0.0
        %5108 = vmatprep.subr.mxu0 0.0
        %5109 = vmatpush1.msra.mxu0 0.0
        %5110 = vmatprep.subr.mxu0 0.0
        %5111 = vmatpush1.msra.mxu0 0.0
        %5112 = vmatprep.subr.mxu0 0.0
        %5113 = vmatpush1.msra.mxu0 0.0
        %5114 = vmatprep.subr.mxu0 0.0
        %5115 = vmatpush1.msra.mxu0 0.0
        %5116 = vmatprep.subr.mxu0 0.0
        %5117 = vmatpush1.msra.mxu0 0.0
        %5118 = vmatprep.subr.mxu0 0.0
        %5119 = vmatpush1.msra.mxu0 0.0
        %5120 = vmatprep.subr.mxu0 0.0
        %5121 = vmatpush1.msra.mxu0 0.0
        %5122 = vmatprep.subr.mxu0 0.0
        %5123 = vmatpush1.msra.mxu0 0.0
        %5124 = vmatprep.subr.mxu0 0.0
        %5125 = vmatpush1.msra.mxu0 0.0
        %5126 = vmatprep.subr.mxu0 0.0
        %5127 = vmatpush1.msra.mxu0 0.0
        %5128 = vmatprep.subr.mxu0 0.0
        %5129 = vmatpush1.msra.mxu0 0.0
        %5130 = vmatprep.subr.mxu0 0.0
        %5131 = vmatpush1.msra.mxu0 0.0
        %5132 = vmatprep.subr.mxu0 0.0
        %5133 = vmatpush1.msra.mxu0 0.0
        %5134 = vmatprep.subr.mxu0 0.0
        %5135 = vmatpush1.msra.mxu0 0.0
        %5136 = vmatprep.subr.mxu0 0.0
        %5137 = vmatpush1.msra.mxu0 0.0
        %5138 = vmatprep.subr.mxu0 0.0
        %5139 = vmatpush1.msra.mxu0 0.0
        %5140 = vmatprep.subr.mxu0 0.0
        %5141 = vmatpush1.msra.mxu0 0.0
        %5142 = vmatprep.subr.mxu0 0.0
        %5143 = vmatpush1.msra.mxu0 0.0
        %5144 = vmatprep.subr.mxu0 0.0
        %5145 = vmatpush1.msra.mxu0 0.0
        %5146 = vmatprep.subr.mxu0 0.0
        %5147 = vmatpush1.msra.mxu0 0.0
        %5148 = vmatprep.subr.mxu0 0.0
        %5149 = vmatpush1.msra.mxu0 0.0
        %5150 = vmatprep.mubr.f32.mxu0 0.0
        %5151 = vmatmul.mubr.f32.gmra.mrb[0].mxu0 %v5069
        %v5152 = vpop.f32.mrb[0].mxu0
        %v5153 = vadd.f32 0.0, %v5152
        %v5154 = vpop.f32.mrb[0].mxu0
        %5155 = vmatprep.mubr.f32.mxu0 0.0
        %5156 = vmatmul.mubr.f32.gmra.mrb[0].mxu0 %v5072
        %v5157 = vpop.f32.mrb[0].mxu0
        %v5158 = vadd.f32 0.0, %v5157
        %v5159 = vpop.f32.mrb[0].mxu0
        %5160 = vmatprep.mubr.f32.mxu0 0.0
        %5161 = vmatmul.mubr.f32.gmra.mrb[0].mxu0 %v5075
        %v5162 = vpop.f32.mrb[0].mxu0
        %v5163 = vadd.f32 0.0, %v5162
        %v5164 = vpop.f32.mrb[0].mxu0
        %5165 = vmatprep.mubr.f32.mxu0 0.0
        %5166 = vmatmul.mubr.f32.gmra.mrb[0].mxu0 %v5078
        %v5167 = vpop.f32.mrb[0].mxu0
        %v5168 = vadd.f32 0.0, %v5167
        %v5169 = vpop.f32.mrb[0].mxu0
        %5170 = vmatprep.mubr.f32.mxu0 0.0
        %5171 = vmatmul.mubr.f32.gmra.mrb[0].mxu0 %v5081
        %v5172 = vpop.f32.mrb[0].mxu0
        %v5173 = vadd.f32 0.0, %v5172
        %v5174 = vpop.f32.mrb[0].mxu0
        %5175 = vmatprep.mubr.f32.mxu0 0.0
        %5176 = vmatmul.mubr.f32.gmra.mrb[0].mxu0 %v5084
        %v5177 = vpop.f32.mrb[0].mxu0
        %v5178 = vadd.f32 0.0, %v5177
        %v5179 = vpop.f32.mrb[0].mxu0
        %5180 = vdwg.mxu0
        %v5181 = vadd.f32 %v4722, %v5153
        %v5182 = vadd.f32 %v4723, %v5158
        %v5183 = vadd.f32 %v4724, %v5163
        %v5184 = vadd.f32 %v4725, %v5168
        %v5185 = vadd.f32 %v4726, %v5173
        %v5186 = vadd.f32 %v4727, %v5178
        %v5187 = vadd.f32 %v3135, %v5181
        %v5188 = vadd.f32 %v3136, %v5182
        %v5189 = vadd.f32 %v3137, %v5183
        %v5190 = vadd.f32 %v3138, %v5184
        %v5191 = vadd.f32 %v3139, %v5185
        %v5192 = vadd.f32 %v3140, %v5186
        %v5193 = vlaneseq
        %v5194 = vshrl.u32 %v5193, 7
        %v5195 = vsub.s32 0, %v5194
        %v5196 = vrot.slane %v3143, %v5195
        %v5197 = vadd.f32 %v5187, %v5196
        %v5198 = vadd.f32 %v5188, %v5196
        %v5199 = vadd.f32 %v5189, %v5196
        %v5200 = vadd.f32 %v5190, %v5196
        %v5201 = vadd.f32 %v5191, %v5196
        %v5202 = vadd.f32 %v5192, %v5196
        %v5203 = vsel %vm740, %v5197, 0.0
        %5204 = vadd.xlane.f32.xlu0 %v5203
        %v5205 = vpop.xlane.xlu0 %5204
        %v5206 = vsel %vm740, %v5198, 0.0
        %5207 = vadd.xlane.f32.xlu0 %v5206
        %v5208 = vpop.xlane.xlu0 %5207
        %v5209 = vsel %vm740, %v5199, 0.0
        %5210 = vadd.xlane.f32.xlu0 %v5209
        %v5211 = vpop.xlane.xlu0 %5210
        %v5212 = vsel %vm740, %v5200, 0.0
        %5213 = vadd.xlane.f32.xlu0 %v5212
        %v5214 = vpop.xlane.xlu0 %5213
        %v5215 = vsel %vm740, %v5201, 0.0
        %5216 = vadd.xlane.f32.xlu0 %v5215
        %v5217 = vpop.xlane.xlu0 %5216
        %v5218 = vsel %vm740, %v5202, 0.0
        %5219 = vadd.xlane.f32.xlu0 %v5218
        %v5220 = vpop.xlane.xlu0 %5219
        %v5221 = vmul.f32 %v5205, %v759
        %v5222 = vmul.f32 %v5208, %v759
        %v5223 = vmul.f32 %v5211, %v759
        %v5224 = vmul.f32 %v5214, %v759
        %v5225 = vmul.f32 %v5217, %v759
        %v5226 = vmul.f32 %v5220, %v759
        %v5227 = vsub.f32 %v5197, %v5221
        %v5228 = vsub.f32 %v5198, %v5222
        %v5229 = vsub.f32 %v5199, %v5223
        %v5230 = vsub.f32 %v5200, %v5224
        %v5231 = vsub.f32 %v5201, %v5225
        %v5232 = vsub.f32 %v5202, %v5226
        %v5233 = vmul.f32 %v5227, %v5227
        %v5234 = vmul.f32 %v5228, %v5228
        %v5235 = vmul.f32 %v5229, %v5229
        %v5236 = vmul.f32 %v5230, %v5230
        %v5237 = vmul.f32 %v5231, %v5231
        %v5238 = vmul.f32 %v5232, %v5232
        %v5239 = vsel %vm740, %v5233, 0.0
        %5240 = vadd.xlane.f32.xlu0 %v5239
        %v5241 = vpop.xlane.xlu0 %5240
        %v5242 = vsel %vm740, %v5234, 0.0
        %5243 = vadd.xlane.f32.xlu0 %v5242
        %v5244 = vpop.xlane.xlu0 %5243
        %v5245 = vsel %vm740, %v5235, 0.0
        %5246 = vadd.xlane.f32.xlu0 %v5245
        %v5247 = vpop.xlane.xlu0 %5246
        %v5248 = vsel %vm740, %v5236, 0.0
        %5249 = vadd.xlane.f32.xlu0 %v5248
        %v5250 = vpop.xlane.xlu0 %5249
        %v5251 = vsel %vm740, %v5237, 0.0
        %5252 = vadd.xlane.f32.xlu0 %v5251
        %v5253 = vpop.xlane.xlu0 %5252
        %v5254 = vsel %vm740, %v5238, 0.0
        %5255 = vadd.xlane.f32.xlu0 %v5254
        %v5256 = vpop.xlane.xlu0 %5255
        %v5257 = vmul.f32 %v5241, %v759
        %v5258 = vmul.f32 %v5244, %v759
        %v5259 = vmul.f32 %v5247, %v759
        %v5260 = vmul.f32 %v5250, %v759
        %v5261 = vmul.f32 %v5253, %v759
        %v5262 = vmul.f32 %v5256, %v759
        %v5263 = vadd.f32 %v5257, 1e-05
        %v5264 = vadd.f32 %v5258, 1e-05
        %v5265 = vadd.f32 %v5259, 1e-05
        %v5266 = vadd.f32 %v5260, 1e-05
        %v5267 = vadd.f32 %v5261, 1e-05
        %v5268 = vadd.f32 %v5262, 1e-05
        %v5269 = vrsqrt.pop %v5263
        %v5270 = vrsqrt.pop %v5264
        %v5271 = vrsqrt.pop %v5265
        %v5272 = vrsqrt.pop %v5266
        %v5273 = vrsqrt.pop %v5267
        %v5274 = vrsqrt.pop %v5268
        %v5275 = vmul.f32 %v5227, %v5269
        %v5276 = vmul.f32 %v5228, %v5270
        %v5277 = vmul.f32 %v5229, %v5271
        %v5278 = vmul.f32 %v5230, %v5272
        %v5279 = vmul.f32 %v5231, %v5273
        %v5280 = vmul.f32 %v5232, %v5274
        %v5281 = vlaneseq
        %v5282 = vshrl.u32 %v5281, 7
        %v5283 = vsub.s32 0, %v5282
        %v5284 = vrot.slane %v3144, %v5283
        %v5285 = vmul.f32 %v5275, %v5284
        %v5286 = vmul.f32 %v5276, %v5284
        %v5287 = vmul.f32 %v5277, %v5284
        %v5288 = vmul.f32 %v5278, %v5284
        %v5289 = vmul.f32 %v5279, %v5284
        %v5290 = vmul.f32 %v5280, %v5284
        %v5291 = vlaneseq
        %v5292 = vshrl.u32 %v5291, 7
        %v5293 = vsub.s32 0, %v5292
        %v5294 = vrot.slane %v3145, %v5293
        %v5295 = vadd.f32 %v5285, %v5294
        %v5296 = vadd.f32 %v5286, %v5294
        %v5297 = vadd.f32 %v5287, %v5294
        %v5298 = vadd.f32 %v5288, %v5294
        %v5299 = vadd.f32 %v5289, %v5294
        %v5300 = vadd.f32 %v5290, %v5294
        %s5301 = scalar_lea.vmem %s7, 32
        %v5302 = vld [vmem:[%s5301] sm:$0xff]
        %v5303 = vld [vmem:[%s5301 + $0x8] sm:$0xff]
        %v5304 = vld [vmem:[%s5301 + $0x10] sm:$0xff]
        %v5305 = vld [vmem:[%s5301 + $0x18] sm:$0xff]
        %v5306 = vlaneseq
        %v5307 = vshrl.u32 %v5306, 7
        %v5308 = vsub.s32 0, %v5307
        %v5309 = vrot.slane %v3146, %v5308
        %v5311 = vsel %vm740, %v5295, 0
        %v5314 = vsel %vm740, %v5296, 0
        %v5317 = vsel %vm740, %v5297, 0
        %v5320 = vsel %vm740, %v5298, 0
        %v5323 = vsel %vm740, %v5299, 0
        %v5326 = vsel %vm740, %v5300, 0
        %5328 = vmatprep.subr.mxu0 0.0
        %5329 = vmatpush1.msra.mxu0 %v5302
        %5330 = vmatprep.subr.mxu0 0.0
        %5331 = vmatpush1.msra.mxu0 %v5303
        %5332 = vmatprep.subr.mxu0 0.0
        %5333 = vmatpush1.msra.mxu0 %v5304
        %5334 = vmatprep.subr.mxu0 0.0
        %5335 = vmatpush1.msra.mxu0 %v5305
        %5336 = vmatprep.subr.mxu0 0.0
        %5337 = vmatpush1.msra.mxu0 0.0
        %5338 = vmatprep.subr.mxu0 0.0
        %5339 = vmatpush1.msra.mxu0 0.0
        %5340 = vmatprep.subr.mxu0 0.0
        %5341 = vmatpush1.msra.mxu0 0.0
        %5342 = vmatprep.subr.mxu0 0.0
        %5343 = vmatpush1.msra.mxu0 0.0
        %5344 = vmatprep.subr.mxu0 0.0
        %5345 = vmatpush1.msra.mxu0 0.0
        %5346 = vmatprep.subr.mxu0 0.0
        %5347 = vmatpush1.msra.mxu0 0.0
        %5348 = vmatprep.subr.mxu0 0.0
        %5349 = vmatpush1.msra.mxu0 0.0
        %5350 = vmatprep.subr.mxu0 0.0
        %5351 = vmatpush1.msra.mxu0 0.0
        %5352 = vmatprep.subr.mxu0 0.0
        %5353 = vmatpush1.msra.mxu0 0.0
        %5354 = vmatprep.subr.mxu0 0.0
        %5355 = vmatpush1.msra.mxu0 0.0
        %5356 = vmatprep.subr.mxu0 0.0
        %5357 = vmatpush1.msra.mxu0 0.0
        %5358 = vmatprep.subr.mxu0 0.0
        %5359 = vmatpush1.msra.mxu0 0.0
        %5360 = vmatprep.subr.mxu0 0.0
        %5361 = vmatpush1.msra.mxu0 0.0
        %5362 = vmatprep.subr.mxu0 0.0
        %5363 = vmatpush1.msra.mxu0 0.0
        %5364 = vmatprep.subr.mxu0 0.0
        %5365 = vmatpush1.msra.mxu0 0.0
        %5366 = vmatprep.subr.mxu0 0.0
        %5367 = vmatpush1.msra.mxu0 0.0
        %5368 = vmatprep.subr.mxu0 0.0
        %5369 = vmatpush1.msra.mxu0 0.0
        %5370 = vmatprep.subr.mxu0 0.0
        %5371 = vmatpush1.msra.mxu0 0.0
        %5372 = vmatprep.subr.mxu0 0.0
        %5373 = vmatpush1.msra.mxu0 0.0
        %5374 = vmatprep.subr.mxu0 0.0
        %5375 = vmatpush1.msra.mxu0 0.0
        %5376 = vmatprep.subr.mxu0 0.0
        %5377 = vmatpush1.msra.mxu0 0.0
        %5378 = vmatprep.subr.mxu0 0.0
        %5379 = vmatpush1.msra.mxu0 0.0
        %5380 = vmatprep.subr.mxu0 0.0
        %5381 = vmatpush1.msra.mxu0 0.0
        %5382 = vmatprep.subr.mxu0 0.0
        %5383 = vmatpush1.msra.mxu0 0.0
        %5384 = vmatprep.subr.mxu0 0.0
        %5385 = vmatpush1.msra.mxu0 0.0
        %5386 = vmatprep.subr.mxu0 0.0
        %5387 = vmatpush1.msra.mxu0 0.0
        %5388 = vmatprep.subr.mxu0 0.0
        %5389 = vmatpush1.msra.mxu0 0.0
        %5390 = vmatprep.subr.mxu0 0.0
        %5391 = vmatpush1.msra.mxu0 0.0
        %5392 = vmatprep.mubr.f32.mxu0 0.0
        %5393 = vmatmul.mubr.f32.gmra.mrb[0].mxu0 %v5311
        %v5394 = vpop.f32.mrb[0].mxu0
        %v5395 = vadd.f32 %v5309, %v5394
        %v5396 = vpop.f32.mrb[0].mxu0
        %5397 = vmatprep.mubr.f32.mxu0 0.0
        %5398 = vmatmul.mubr.f32.gmra.mrb[0].mxu0 %v5314
        %v5399 = vpop.f32.mrb[0].mxu0
        %v5400 = vadd.f32 %v5309, %v5399
        %v5401 = vpop.f32.mrb[0].mxu0
        %5402 = vmatprep.mubr.f32.mxu0 0.0
        %5403 = vmatmul.mubr.f32.gmra.mrb[0].mxu0 %v5317
        %v5404 = vpop.f32.mrb[0].mxu0
        %v5405 = vadd.f32 %v5309, %v5404
        %v5406 = vpop.f32.mrb[0].mxu0
        %5407 = vmatprep.mubr.f32.mxu0 0.0
        %5408 = vmatmul.mubr.f32.gmra.mrb[0].mxu0 %v5320
        %v5409 = vpop.f32.mrb[0].mxu0
        %v5410 = vadd.f32 %v5309, %v5409
        %v5411 = vpop.f32.mrb[0].mxu0
        %5412 = vmatprep.mubr.f32.mxu0 0.0
        %5413 = vmatmul.mubr.f32.gmra.mrb[0].mxu0 %v5323
        %v5414 = vpop.f32.mrb[0].mxu0
        %v5415 = vadd.f32 %v5309, %v5414
        %v5416 = vpop.f32.mrb[0].mxu0
        %5417 = vmatprep.mubr.f32.mxu0 0.0
        %5418 = vmatmul.mubr.f32.gmra.mrb[0].mxu0 %v5326
        %v5419 = vpop.f32.mrb[0].mxu0
        %v5420 = vadd.f32 %v5309, %v5419
        %v5421 = vpop.f32.mrb[0].mxu0
        %5422 = vdwg.mxu0
        %v5423 = vmax.f32 %v5395, 0.0
        %v5424 = vmax.f32 %v5400, 0.0
        %v5425 = vmax.f32 %v5405, 0.0
        %v5426 = vmax.f32 %v5410, 0.0
        %v5427 = vmax.f32 %v5415, 0.0
        %v5428 = vmax.f32 %v5420, 0.0
        %s5429 = scalar_lea.vmem %s8, 128
        %v5430 = vld [vmem:[%s5429] sm:$0xff]
        %v5431 = vld [vmem:[%s5429 + $0x8] sm:$0xff]
        %v5432 = vld [vmem:[%s5429 + $0x10] sm:$0xff]
        %v5433 = vld [vmem:[%s5429 + $0x18] sm:$0xff]
        %v5434 = vld [vmem:[%s5429 + $0x20] sm:$0xff]
        %v5435 = vld [vmem:[%s5429 + $0x28] sm:$0xff]
        %v5436 = vld [vmem:[%s5429 + $0x30] sm:$0xff]
        %v5437 = vld [vmem:[%s5429 + $0x38] sm:$0xff]
        %v5438 = vld [vmem:[%s5429 + $0x40] sm:$0xff]
        %v5439 = vld [vmem:[%s5429 + $0x48] sm:$0xff]
        %v5440 = vld [vmem:[%s5429 + $0x50] sm:$0xff]
        %v5441 = vld [vmem:[%s5429 + $0x58] sm:$0xff]
        %v5442 = vld [vmem:[%s5429 + $0x60] sm:$0xff]
        %v5443 = vld [vmem:[%s5429 + $0x68] sm:$0xff]
        %v5444 = vld [vmem:[%s5429 + $0x70] sm:$0xff]
        %v5445 = vld [vmem:[%s5429 + $0x78] sm:$0xff]
        %5446 = vmatprep.subr.mxu0 0.0
        %5447 = vmatpush1.msra.mxu0 %v5430
        %5448 = vmatprep.subr.mxu0 0.0
        %5449 = vmatpush1.msra.mxu0 %v5431
        %5450 = vmatprep.subr.mxu0 0.0
        %5451 = vmatpush1.msra.mxu0 %v5432
        %5452 = vmatprep.subr.mxu0 0.0
        %5453 = vmatpush1.msra.mxu0 %v5433
        %5454 = vmatprep.subr.mxu0 0.0
        %5455 = vmatpush1.msra.mxu0 %v5434
        %5456 = vmatprep.subr.mxu0 0.0
        %5457 = vmatpush1.msra.mxu0 %v5435
        %5458 = vmatprep.subr.mxu0 0.0
        %5459 = vmatpush1.msra.mxu0 %v5436
        %5460 = vmatprep.subr.mxu0 0.0
        %5461 = vmatpush1.msra.mxu0 %v5437
        %5462 = vmatprep.subr.mxu0 0.0
        %5463 = vmatpush1.msra.mxu0 %v5438
        %5464 = vmatprep.subr.mxu0 0.0
        %5465 = vmatpush1.msra.mxu0 %v5439
        %5466 = vmatprep.subr.mxu0 0.0
        %5467 = vmatpush1.msra.mxu0 %v5440
        %5468 = vmatprep.subr.mxu0 0.0
        %5469 = vmatpush1.msra.mxu0 %v5441
        %5470 = vmatprep.subr.mxu0 0.0
        %5471 = vmatpush1.msra.mxu0 %v5442
        %5472 = vmatprep.subr.mxu0 0.0
        %5473 = vmatpush1.msra.mxu0 %v5443
        %5474 = vmatprep.subr.mxu0 0.0
        %5475 = vmatpush1.msra.mxu0 %v5444
        %5476 = vmatprep.subr.mxu0 0.0
        %5477 = vmatpush1.msra.mxu0 %v5445
        %5478 = vmatprep.subr.mxu0 0.0
        %5479 = vmatpush1.msra.mxu0 0.0
        %5480 = vmatprep.subr.mxu0 0.0
        %5481 = vmatpush1.msra.mxu0 0.0
        %5482 = vmatprep.subr.mxu0 0.0
        %5483 = vmatpush1.msra.mxu0 0.0
        %5484 = vmatprep.subr.mxu0 0.0
        %5485 = vmatpush1.msra.mxu0 0.0
        %5486 = vmatprep.subr.mxu0 0.0
        %5487 = vmatpush1.msra.mxu0 0.0
        %5488 = vmatprep.subr.mxu0 0.0
        %5489 = vmatpush1.msra.mxu0 0.0
        %5490 = vmatprep.subr.mxu0 0.0
        %5491 = vmatpush1.msra.mxu0 0.0
        %5492 = vmatprep.subr.mxu0 0.0
        %5493 = vmatpush1.msra.mxu0 0.0
        %5494 = vmatprep.subr.mxu0 0.0
        %5495 = vmatpush1.msra.mxu0 0.0
        %5496 = vmatprep.subr.mxu0 0.0
        %5497 = vmatpush1.msra.mxu0 0.0
        %5498 = vmatprep.subr.mxu0 0.0
        %5499 = vmatpush1.msra.mxu0 0.0
        %5500 = vmatprep.subr.mxu0 0.0
        %5501 = vmatpush1.msra.mxu0 0.0
        %5502 = vmatprep.subr.mxu0 0.0
        %5503 = vmatpush1.msra.mxu0 0.0
        %5504 = vmatprep.subr.mxu0 0.0
        %5505 = vmatpush1.msra.mxu0 0.0
        %5506 = vmatprep.subr.mxu0 0.0
        %5507 = vmatpush1.msra.mxu0 0.0
        %5508 = vmatprep.subr.mxu0 0.0
        %5509 = vmatpush1.msra.mxu0 0.0
        %5510 = vmatprep.mubr.f32.mxu0 0.0
        %5511 = vmatmul.mubr.f32.gmra.mrb[0].mxu0 %v5423
        %v5512 = vpop.f32.mrb[0].mxu0
        %v5513 = vadd.f32 0.0, %v5512
        %v5514 = vpop.f32.mrb[0].mxu0
        %5515 = vmatprep.mubr.f32.mxu0 0.0
        %5516 = vmatmul.mubr.f32.gmra.mrb[0].mxu0 %v5424
        %v5517 = vpop.f32.mrb[0].mxu0
        %v5518 = vadd.f32 0.0, %v5517
        %v5519 = vpop.f32.mrb[0].mxu0
        %5520 = vmatprep.mubr.f32.mxu0 0.0
        %5521 = vmatmul.mubr.f32.gmra.mrb[0].mxu0 %v5425
        %v5522 = vpop.f32.mrb[0].mxu0
        %v5523 = vadd.f32 0.0, %v5522
        %v5524 = vpop.f32.mrb[0].mxu0
        %5525 = vmatprep.mubr.f32.mxu0 0.0
        %5526 = vmatmul.mubr.f32.gmra.mrb[0].mxu0 %v5426
        %v5527 = vpop.f32.mrb[0].mxu0
        %v5528 = vadd.f32 0.0, %v5527
        %v5529 = vpop.f32.mrb[0].mxu0
        %5530 = vmatprep.mubr.f32.mxu0 0.0
        %5531 = vmatmul.mubr.f32.gmra.mrb[0].mxu0 %v5427
        %v5532 = vpop.f32.mrb[0].mxu0
        %v5533 = vadd.f32 0.0, %v5532
        %v5534 = vpop.f32.mrb[0].mxu0
        %5535 = vmatprep.mubr.f32.mxu0 0.0
        %5536 = vmatmul.mubr.f32.gmra.mrb[0].mxu0 %v5428
        %v5537 = vpop.f32.mrb[0].mxu0
        %v5538 = vadd.f32 0.0, %v5537
        %v5539 = vpop.f32.mrb[0].mxu0
        %5540 = vdwg.mxu0
        %v5541 = vadd.f32 %v5197, %v5513
        %v5542 = vadd.f32 %v5198, %v5518
        %v5543 = vadd.f32 %v5199, %v5523
        %v5544 = vadd.f32 %v5200, %v5528
        %v5545 = vadd.f32 %v5201, %v5533
        %v5546 = vadd.f32 %v5202, %v5538
        %v5547 = vlaneseq
        %v5548 = vshrl.u32 %v5547, 7
        %v5549 = vsub.s32 0, %v5548
        %v5550 = vrot.slane %v3147, %v5549
        %v5551 = vadd.f32 %v5541, %v5550
        %v5552 = vadd.f32 %v5542, %v5550
        %v5553 = vadd.f32 %v5543, %v5550
        %v5554 = vadd.f32 %v5544, %v5550
        %v5555 = vadd.f32 %v5545, %v5550
        %v5556 = vadd.f32 %v5546, %v5550
        %v5557 = vld [vmem:[%s4 + $0xe] sm:$0x1]
        %v5558 = vld [vmem:[%s4 + $0xf] sm:$0x1]
        %v5559 = vsel %vm740, %v5551, 0.0
        %5560 = vadd.xlane.f32.xlu0 %v5559
        %v5561 = vpop.xlane.xlu0 %5560
        %v5562 = vsel %vm740, %v5552, 0.0
        %5563 = vadd.xlane.f32.xlu0 %v5562
        %v5564 = vpop.xlane.xlu0 %5563
        %v5565 = vsel %vm740, %v5553, 0.0
        %5566 = vadd.xlane.f32.xlu0 %v5565
        %v5567 = vpop.xlane.xlu0 %5566
        %v5568 = vsel %vm740, %v5554, 0.0
        %5569 = vadd.xlane.f32.xlu0 %v5568
        %v5570 = vpop.xlane.xlu0 %5569
        %v5571 = vsel %vm740, %v5555, 0.0
        %5572 = vadd.xlane.f32.xlu0 %v5571
        %v5573 = vpop.xlane.xlu0 %5572
        %v5574 = vsel %vm740, %v5556, 0.0
        %5575 = vadd.xlane.f32.xlu0 %v5574
        %v5576 = vpop.xlane.xlu0 %5575
        %v5577 = vmul.f32 %v5561, %v759
        %v5578 = vmul.f32 %v5564, %v759
        %v5579 = vmul.f32 %v5567, %v759
        %v5580 = vmul.f32 %v5570, %v759
        %v5581 = vmul.f32 %v5573, %v759
        %v5582 = vmul.f32 %v5576, %v759
        %v5583 = vsub.f32 %v5551, %v5577
        %v5584 = vsub.f32 %v5552, %v5578
        %v5585 = vsub.f32 %v5553, %v5579
        %v5586 = vsub.f32 %v5554, %v5580
        %v5587 = vsub.f32 %v5555, %v5581
        %v5588 = vsub.f32 %v5556, %v5582
        %v5589 = vmul.f32 %v5583, %v5583
        %v5590 = vmul.f32 %v5584, %v5584
        %v5591 = vmul.f32 %v5585, %v5585
        %v5592 = vmul.f32 %v5586, %v5586
        %v5593 = vmul.f32 %v5587, %v5587
        %v5594 = vmul.f32 %v5588, %v5588
        %v5595 = vsel %vm740, %v5589, 0.0
        %5596 = vadd.xlane.f32.xlu0 %v5595
        %v5597 = vpop.xlane.xlu0 %5596
        %v5598 = vsel %vm740, %v5590, 0.0
        %5599 = vadd.xlane.f32.xlu0 %v5598
        %v5600 = vpop.xlane.xlu0 %5599
        %v5601 = vsel %vm740, %v5591, 0.0
        %5602 = vadd.xlane.f32.xlu0 %v5601
        %v5603 = vpop.xlane.xlu0 %5602
        %v5604 = vsel %vm740, %v5592, 0.0
        %5605 = vadd.xlane.f32.xlu0 %v5604
        %v5606 = vpop.xlane.xlu0 %5605
        %v5607 = vsel %vm740, %v5593, 0.0
        %5608 = vadd.xlane.f32.xlu0 %v5607
        %v5609 = vpop.xlane.xlu0 %5608
        %v5610 = vsel %vm740, %v5594, 0.0
        %5611 = vadd.xlane.f32.xlu0 %v5610
        %v5612 = vpop.xlane.xlu0 %5611
        %v5613 = vmul.f32 %v5597, %v759
        %v5614 = vmul.f32 %v5600, %v759
        %v5615 = vmul.f32 %v5603, %v759
        %v5616 = vmul.f32 %v5606, %v759
        %v5617 = vmul.f32 %v5609, %v759
        %v5618 = vmul.f32 %v5612, %v759
        %v5619 = vadd.f32 %v5613, 1e-05
        %v5620 = vadd.f32 %v5614, 1e-05
        %v5621 = vadd.f32 %v5615, 1e-05
        %v5622 = vadd.f32 %v5616, 1e-05
        %v5623 = vadd.f32 %v5617, 1e-05
        %v5624 = vadd.f32 %v5618, 1e-05
        %v5625 = vrsqrt.pop %v5619
        %v5626 = vrsqrt.pop %v5620
        %v5627 = vrsqrt.pop %v5621
        %v5628 = vrsqrt.pop %v5622
        %v5629 = vrsqrt.pop %v5623
        %v5630 = vrsqrt.pop %v5624
        %v5631 = vmul.f32 %v5583, %v5625
        %v5632 = vmul.f32 %v5584, %v5626
        %v5633 = vmul.f32 %v5585, %v5627
        %v5634 = vmul.f32 %v5586, %v5628
        %v5635 = vmul.f32 %v5587, %v5629
        %v5636 = vmul.f32 %v5588, %v5630
        %v5637 = vlaneseq
        %v5638 = vshrl.u32 %v5637, 7
        %v5639 = vsub.s32 0, %v5638
        %v5640 = vrot.slane %v5557, %v5639
        %v5641 = vmul.f32 %v5631, %v5640
        %v5642 = vmul.f32 %v5632, %v5640
        %v5643 = vmul.f32 %v5633, %v5640
        %v5644 = vmul.f32 %v5634, %v5640
        %v5645 = vmul.f32 %v5635, %v5640
        %v5646 = vmul.f32 %v5636, %v5640
        %v5647 = vlaneseq
        %v5648 = vshrl.u32 %v5647, 7
        %v5649 = vsub.s32 0, %v5648
        %v5650 = vrot.slane %v5558, %v5649
        %v5651 = vadd.f32 %v5641, %v5650
        %v5652 = vadd.f32 %v5642, %v5650
        %v5653 = vadd.f32 %v5643, %v5650
        %v5654 = vadd.f32 %v5644, %v5650
        %v5655 = vadd.f32 %v5645, %v5650
        %v5656 = vadd.f32 %v5646, %v5650
        %v5657 = vld [vmem:[%s9] sm:$0xff]
        %v5658 = vld [vmem:[%s9 + $0x8] sm:$0xff]
        %v5659 = vld [vmem:[%s9 + $0x10] sm:$0xff]
        %v5660 = vld [vmem:[%s9 + $0x18] sm:$0xff]
        %v5661 = vld [vmem:[%s9 + $0x20] sm:$0xff]
        %v5662 = vld [vmem:[%s9 + $0x28] sm:$0xff]
        %v5663 = vld [vmem:[%s9 + $0x30] sm:$0xff]
        %v5664 = vld [vmem:[%s9 + $0x38] sm:$0xff]
        %v5665 = vld [vmem:[%s9 + $0x40] sm:$0xff]
        %v5666 = vld [vmem:[%s9 + $0x48] sm:$0xff]
        %v5667 = vld [vmem:[%s9 + $0x50] sm:$0xff]
        %v5668 = vld [vmem:[%s9 + $0x58] sm:$0xff]
        %v5669 = vld [vmem:[%s9 + $0x60] sm:$0xff]
        %v5670 = vld [vmem:[%s9 + $0x68] sm:$0xff]
        %v5671 = vld [vmem:[%s9 + $0x70] sm:$0xff]
        %v5672 = vld [vmem:[%s9 + $0x78] sm:$0xff]
        %s5673 = scalar_lea.vmem %s9, 128
        %v5674 = vld [vmem:[%s5673] ss:$8 sm:$0xf]
        %v5676 = vlaneseq
        %v5677 = vshrl.u32 %v5676, 7
        %v5678 = vsub.s32 0, %v5677
        %v5679 = vrot.slane %v5674, %v5678
        %v5680 = vlaneseq
        %v5681 = vshrl.u32 %v5680, 7
        %v5682 = vsub.s32 1, %v5681
        %v5683 = vrot.slane %v5674, %v5682
        %v5684 = vlaneseq
        %v5685 = vshrl.u32 %v5684, 7
        %v5686 = vsub.s32 2, %v5685
        %v5687 = vrot.slane %v5674, %v5686
        %v5688 = vlaneseq
        %v5689 = vshrl.u32 %v5688, 7
        %v5690 = vsub.s32 3, %v5689
        %v5691 = vrot.slane %v5674, %v5690
        %v5697 = vsel %vm740, %v5651, 0
        %v5700 = vsel %vm740, %v5652, 0
        %v5703 = vsel %vm740, %v5653, 0
        %v5706 = vsel %vm740, %v5654, 0
        %v5709 = vsel %vm740, %v5655, 0
        %v5712 = vsel %vm740, %v5656, 0
        %5714 = vmatprep.subr.mxu0 %v5658
        %5715 = vmatpush1.msra.mxu0 %v5657
        %5716 = vmatprep.subr.mxu0 %v5662
        %5717 = vmatpush1.msra.mxu0 %v5661
        %5718 = vmatprep.subr.mxu0 %v5666
        %5719 = vmatpush1.msra.mxu0 %v5665
        %5720 = vmatprep.subr.mxu0 %v5670
        %5721 = vmatpush1.msra.mxu0 %v5669
        %5722 = vmatprep.subr.mxu0 0.0
        %5723 = vmatpush1.msra.mxu0 0.0
        %5724 = vmatprep.subr.mxu0 0.0
        %5725 = vmatpush1.msra.mxu0 0.0
        %5726 = vmatprep.subr.mxu0 0.0
        %5727 = vmatpush1.msra.mxu0 0.0
        %5728 = vmatprep.subr.mxu0 0.0
        %5729 = vmatpush1.msra.mxu0 0.0
        %5730 = vmatprep.subr.mxu0 0.0
        %5731 = vmatpush1.msra.mxu0 0.0
        %5732 = vmatprep.subr.mxu0 0.0
        %5733 = vmatpush1.msra.mxu0 0.0
        %5734 = vmatprep.subr.mxu0 0.0
        %5735 = vmatpush1.msra.mxu0 0.0
        %5736 = vmatprep.subr.mxu0 0.0
        %5737 = vmatpush1.msra.mxu0 0.0
        %5738 = vmatprep.subr.mxu0 0.0
        %5739 = vmatpush1.msra.mxu0 0.0
        %5740 = vmatprep.subr.mxu0 0.0
        %5741 = vmatpush1.msra.mxu0 0.0
        %5742 = vmatprep.subr.mxu0 0.0
        %5743 = vmatpush1.msra.mxu0 0.0
        %5744 = vmatprep.subr.mxu0 0.0
        %5745 = vmatpush1.msra.mxu0 0.0
        %5746 = vmatprep.subr.mxu0 0.0
        %5747 = vmatpush1.msra.mxu0 0.0
        %5748 = vmatprep.subr.mxu0 0.0
        %5749 = vmatpush1.msra.mxu0 0.0
        %5750 = vmatprep.subr.mxu0 0.0
        %5751 = vmatpush1.msra.mxu0 0.0
        %5752 = vmatprep.subr.mxu0 0.0
        %5753 = vmatpush1.msra.mxu0 0.0
        %5754 = vmatprep.subr.mxu0 0.0
        %5755 = vmatpush1.msra.mxu0 0.0
        %5756 = vmatprep.subr.mxu0 0.0
        %5757 = vmatpush1.msra.mxu0 0.0
        %5758 = vmatprep.subr.mxu0 0.0
        %5759 = vmatpush1.msra.mxu0 0.0
        %5760 = vmatprep.subr.mxu0 0.0
        %5761 = vmatpush1.msra.mxu0 0.0
        %5762 = vmatprep.subr.mxu0 0.0
        %5763 = vmatpush1.msra.mxu0 0.0
        %5764 = vmatprep.subr.mxu0 0.0
        %5765 = vmatpush1.msra.mxu0 0.0
        %5766 = vmatprep.subr.mxu0 0.0
        %5767 = vmatpush1.msra.mxu0 0.0
        %5768 = vmatprep.subr.mxu0 0.0
        %5769 = vmatpush1.msra.mxu0 0.0
        %5770 = vmatprep.subr.mxu0 0.0
        %5771 = vmatpush1.msra.mxu0 0.0
        %5772 = vmatprep.subr.mxu0 0.0
        %5773 = vmatpush1.msra.mxu0 0.0
        %5774 = vmatprep.subr.mxu0 0.0
        %5775 = vmatpush1.msra.mxu0 0.0
        %5776 = vmatprep.subr.mxu0 0.0
        %5777 = vmatpush1.msra.mxu0 0.0
        %5778 = vmatprep.mubr.f32.mxu0 0.0
        %5779 = vmatmul.mubr.f32.gmra.mrb[0].mxu0 %v5697
        %v5780 = vpop.f32.mrb[0].mxu0
        %v5781 = vadd.f32 %v5679, %v5780
        %v5782 = vpop.f32.mrb[0].mxu0
        %v5783 = vadd.f32 %v5683, %v5782
        %5784 = vmatprep.mubr.f32.mxu0 0.0
        %5785 = vmatmul.mubr.f32.gmra.mrb[0].mxu0 %v5700
        %v5786 = vpop.f32.mrb[0].mxu0
        %v5787 = vadd.f32 %v5679, %v5786
        %v5788 = vpop.f32.mrb[0].mxu0
        %v5789 = vadd.f32 %v5683, %v5788
        %5790 = vmatprep.mubr.f32.mxu0 0.0
        %5791 = vmatmul.mubr.f32.gmra.mrb[0].mxu0 %v5703
        %v5792 = vpop.f32.mrb[0].mxu0
        %v5793 = vadd.f32 %v5679, %v5792
        %v5794 = vpop.f32.mrb[0].mxu0
        %v5795 = vadd.f32 %v5683, %v5794
        %5796 = vmatprep.mubr.f32.mxu0 0.0
        %5797 = vmatmul.mubr.f32.gmra.mrb[0].mxu0 %v5706
        %v5798 = vpop.f32.mrb[0].mxu0
        %v5799 = vadd.f32 %v5679, %v5798
        %v5800 = vpop.f32.mrb[0].mxu0
        %v5801 = vadd.f32 %v5683, %v5800
        %5802 = vmatprep.mubr.f32.mxu0 0.0
        %5803 = vmatmul.mubr.f32.gmra.mrb[0].mxu0 %v5709
        %v5804 = vpop.f32.mrb[0].mxu0
        %v5805 = vadd.f32 %v5679, %v5804
        %v5806 = vpop.f32.mrb[0].mxu0
        %v5807 = vadd.f32 %v5683, %v5806
        %5808 = vmatprep.mubr.f32.mxu0 0.0
        %5809 = vmatmul.mubr.f32.gmra.mrb[0].mxu0 %v5712
        %v5810 = vpop.f32.mrb[0].mxu0
        %v5811 = vadd.f32 %v5679, %v5810
        %v5812 = vpop.f32.mrb[0].mxu0
        %v5813 = vadd.f32 %v5683, %v5812
        %5814 = vdwg.mxu0
        %5815 = vmatprep.subr.mxu0 %v5660
        %5816 = vmatpush1.msra.mxu0 %v5659
        %5817 = vmatprep.subr.mxu0 %v5664
        %5818 = vmatpush1.msra.mxu0 %v5663
        %5819 = vmatprep.subr.mxu0 %v5668
        %5820 = vmatpush1.msra.mxu0 %v5667
        %5821 = vmatprep.subr.mxu0 %v5672
        %5822 = vmatpush1.msra.mxu0 %v5671
        %5823 = vmatprep.subr.mxu0 0.0
        %5824 = vmatpush1.msra.mxu0 0.0
        %5825 = vmatprep.subr.mxu0 0.0
        %5826 = vmatpush1.msra.mxu0 0.0
        %5827 = vmatprep.subr.mxu0 0.0
        %5828 = vmatpush1.msra.mxu0 0.0
        %5829 = vmatprep.subr.mxu0 0.0
        %5830 = vmatpush1.msra.mxu0 0.0
        %5831 = vmatprep.subr.mxu0 0.0
        %5832 = vmatpush1.msra.mxu0 0.0
        %5833 = vmatprep.subr.mxu0 0.0
        %5834 = vmatpush1.msra.mxu0 0.0
        %5835 = vmatprep.subr.mxu0 0.0
        %5836 = vmatpush1.msra.mxu0 0.0
        %5837 = vmatprep.subr.mxu0 0.0
        %5838 = vmatpush1.msra.mxu0 0.0
        %5839 = vmatprep.subr.mxu0 0.0
        %5840 = vmatpush1.msra.mxu0 0.0
        %5841 = vmatprep.subr.mxu0 0.0
        %5842 = vmatpush1.msra.mxu0 0.0
        %5843 = vmatprep.subr.mxu0 0.0
        %5844 = vmatpush1.msra.mxu0 0.0
        %5845 = vmatprep.subr.mxu0 0.0
        %5846 = vmatpush1.msra.mxu0 0.0
        %5847 = vmatprep.subr.mxu0 0.0
        %5848 = vmatpush1.msra.mxu0 0.0
        %5849 = vmatprep.subr.mxu0 0.0
        %5850 = vmatpush1.msra.mxu0 0.0
        %5851 = vmatprep.subr.mxu0 0.0
        %5852 = vmatpush1.msra.mxu0 0.0
        %5853 = vmatprep.subr.mxu0 0.0
        %5854 = vmatpush1.msra.mxu0 0.0
        %5855 = vmatprep.subr.mxu0 0.0
        %5856 = vmatpush1.msra.mxu0 0.0
        %5857 = vmatprep.subr.mxu0 0.0
        %5858 = vmatpush1.msra.mxu0 0.0
        %5859 = vmatprep.subr.mxu0 0.0
        %5860 = vmatpush1.msra.mxu0 0.0
        %5861 = vmatprep.subr.mxu0 0.0
        %5862 = vmatpush1.msra.mxu0 0.0
        %5863 = vmatprep.subr.mxu0 0.0
        %5864 = vmatpush1.msra.mxu0 0.0
        %5865 = vmatprep.subr.mxu0 0.0
        %5866 = vmatpush1.msra.mxu0 0.0
        %5867 = vmatprep.subr.mxu0 0.0
        %5868 = vmatpush1.msra.mxu0 0.0
        %5869 = vmatprep.subr.mxu0 0.0
        %5870 = vmatpush1.msra.mxu0 0.0
        %5871 = vmatprep.subr.mxu0 0.0
        %5872 = vmatpush1.msra.mxu0 0.0
        %5873 = vmatprep.subr.mxu0 0.0
        %5874 = vmatpush1.msra.mxu0 0.0
        %5875 = vmatprep.subr.mxu0 0.0
        %5876 = vmatpush1.msra.mxu0 0.0
        %5877 = vmatprep.subr.mxu0 0.0
        %5878 = vmatpush1.msra.mxu0 0.0
        %5879 = vmatprep.mubr.f32.mxu0 0.0
        %5880 = vmatmul.mubr.f32.gmra.mrb[0].mxu0 %v5697
        %v5881 = vpop.f32.mrb[0].mxu0
        %v5882 = vadd.f32 %v5687, %v5881
        %v5883 = vpop.f32.mrb[0].mxu0
        %v5884 = vadd.f32 %v5691, %v5883
        %5885 = vmatprep.mubr.f32.mxu0 0.0
        %5886 = vmatmul.mubr.f32.gmra.mrb[0].mxu0 %v5700
        %v5887 = vpop.f32.mrb[0].mxu0
        %v5888 = vadd.f32 %v5687, %v5887
        %v5889 = vpop.f32.mrb[0].mxu0
        %v5890 = vadd.f32 %v5691, %v5889
        %5891 = vmatprep.mubr.f32.mxu0 0.0
        %5892 = vmatmul.mubr.f32.gmra.mrb[0].mxu0 %v5703
        %v5893 = vpop.f32.mrb[0].mxu0
        %v5894 = vadd.f32 %v5687, %v5893
        %v5895 = vpop.f32.mrb[0].mxu0
        %v5896 = vadd.f32 %v5691, %v5895
        %5897 = vmatprep.mubr.f32.mxu0 0.0
        %5898 = vmatmul.mubr.f32.gmra.mrb[0].mxu0 %v5706
        %v5899 = vpop.f32.mrb[0].mxu0
        %v5900 = vadd.f32 %v5687, %v5899
        %v5901 = vpop.f32.mrb[0].mxu0
        %v5902 = vadd.f32 %v5691, %v5901
        %5903 = vmatprep.mubr.f32.mxu0 0.0
        %5904 = vmatmul.mubr.f32.gmra.mrb[0].mxu0 %v5709
        %v5905 = vpop.f32.mrb[0].mxu0
        %v5906 = vadd.f32 %v5687, %v5905
        %v5907 = vpop.f32.mrb[0].mxu0
        %v5908 = vadd.f32 %v5691, %v5907
        %5909 = vmatprep.mubr.f32.mxu0 0.0
        %5910 = vmatmul.mubr.f32.gmra.mrb[0].mxu0 %v5712
        %v5911 = vpop.f32.mrb[0].mxu0
        %v5912 = vadd.f32 %v5687, %v5911
        %v5913 = vpop.f32.mrb[0].mxu0
        %v5914 = vadd.f32 %v5691, %v5913
        %5915 = vdwg.mxu0
        %5916 = vst [vmem:[%s352] sm:$0xff] %v5781
        %5917 = vst [vmem:[%s352 + $0x8] sm:$0xff] %v5783
        %5918 = vst [vmem:[%s352 + $0x10] sm:$0xff] %v5882
        %5919 = vst [vmem:[%s352 + $0x18] sm:$0xff] %v5884
        %5920 = vst [vmem:[%s352 + $0x20] sm:$0xff] %v5787
        %5921 = vst [vmem:[%s352 + $0x28] sm:$0xff] %v5789
        %5922 = vst [vmem:[%s352 + $0x30] sm:$0xff] %v5888
        %5923 = vst [vmem:[%s352 + $0x38] sm:$0xff] %v5890
        %5924 = vst [vmem:[%s352 + $0x40] sm:$0xff] %v5793
        %5925 = vst [vmem:[%s352 + $0x48] sm:$0xff] %v5795
        %5926 = vst [vmem:[%s352 + $0x50] sm:$0xff] %v5894
        %5927 = vst [vmem:[%s352 + $0x58] sm:$0xff] %v5896
        %5928 = vst [vmem:[%s352 + $0x60] sm:$0xff] %v5799
        %5929 = vst [vmem:[%s352 + $0x68] sm:$0xff] %v5801
        %5930 = vst [vmem:[%s352 + $0x70] sm:$0xff] %v5900
        %5931 = vst [vmem:[%s352 + $0x78] sm:$0xff] %v5902
        %5932 = vst [vmem:[%s352 + $0x80] sm:$0xff] %v5805
        %5933 = vst [vmem:[%s352 + $0x88] sm:$0xff] %v5807
        %5934 = vst [vmem:[%s352 + $0x90] sm:$0xff] %v5906
        %5935 = vst [vmem:[%s352 + $0x98] sm:$0xff] %v5908
        %5936 = vst [vmem:[%s352 + $0xa0] sm:$0xff] %v5811
        %5937 = vst [vmem:[%s352 + $0xa8] sm:$0xff] %v5813
        %5938 = vst [vmem:[%s352 + $0xb0] sm:$0xff] %v5912
        %5939 = vst [vmem:[%s352 + $0xb8] sm:$0xff] %v5914
        %s5940 = sand.u32 %s247, 1
        %s5941 = scalar_lea.sflag [#allocation3], %s5940
        %s5942 = sand.u32 %s247, 1
        %s5943 = smul.addr %s5942, 192
        %s5944 = scalar_lea.vmem [#allocation2], %s5943
        // Predicated region
        $region61: #{bigram_lm_forward.1} parent=59 // pred_check
          %p5945 = pneg %p257
        $region62: #{bigram_lm_forward.1} parent=59 // pred_check_branch
          %5947 = sbr.rel (%p5945) target = $region64
        $region63: #{bigram_lm_forward.1} parent=59 // pred_region
          %s5949 = ssub.s32 3072, 3072
          %5950 = vsyncadd %s5941, %s5949
          %s5951 = smul.addr %s24, 24
          %s5952 = smul.addr %s5951, 128
          %s5953 = scalar_lea.hbm %s10, %s5952
          %s5954 = sshll.u32 %s5944, 4
          %s5955 = int_to_ptr.vmem [resolvable:$true] %s5954
          %5960 = dma.vmem_to_hbm [thread:$0]  %s5955, 3072, %s5953, %s5941, 512, 512, 32
        $region64: #{bigram_lm_forward.1} parent=59 // pred_fallthru
          _
      $region60: #{bigram_lm_forward.1} parent=5 // pred_fallthru
        _
      %p5961 = scmp.le.s32.totalorder 2, %s19
      // Predicated region
      $region65: #{bigram_lm_forward.1} parent=5 // pred_check
        %p5962 = pneg %p5961
      $region66: #{bigram_lm_forward.1} parent=5 // pred_check_branch
        %5964 = sbr.rel (%p5962) target = $region68
      $region67: #{bigram_lm_forward.1} parent=5 // pred_region
        %s5965 = ssub.s32 %s19, 2
        // Predicated region
        $region69: #{bigram_lm_forward.1} parent=67 // pred_check
          %p5966 = pneg %p263
        $region70: #{bigram_lm_forward.1} parent=67 // pred_check_branch
          %5968 = sbr.rel (%p5966) target = $region72
        $region71: #{bigram_lm_forward.1} parent=67 // pred_region
          %s5969 = sand.u32 %s248, 1
          %s5970 = scalar_lea.sflag [#allocation3], %s5969
          %s5971 = sand.u32 %s248, 1
          %s5972 = smul.addr %s5971, 192
          %s5973 = scalar_lea.vmem [#allocation2], %s5972
          %5974 = dma.done %s5970, 3072
        $region72: #{bigram_lm_forward.1} parent=67 // pred_fallthru
          _
      $region68: #{bigram_lm_forward.1} parent=5 // pred_fallthru
        _
    $region6: #{bigram_lm_forward.1} parent=1 // loop_footer
      %s23 = sadd.s32 1, %s19
    $region7: #{bigram_lm_forward.1} parent=1 // loop_footer_branch
      %18 = sbr.rel target = $region3
    $region8: #{bigram_lm_forward.1} parent=1 // loop_exit
      _
    %5975 = vsyncpa [#allocation3], 1
    %s5976 = scalar_lea.sflag [#allocation3], 1
    %5977 = vsyncpa %s5976, 1

</llo_original>
